<compile_context>
chip_gen: v5e
topology: v5e:2x2
jax: 0.10.0
libtpu: 0.0.40
codegen_flags: <defaults>
</compile_context>

<pallas_src>
import numpy as np

import jax
import jax.numpy as jnp
from jax.experimental import pallas as pl
from jax.experimental.pallas import tpu as pltpu

BN_EPS = 1e-5
LANE = 128


def _round_up(x, m):
    return (x + m - 1) // m * m


def _pad_channels(x, c_pad):
    c = x.shape[-1]
    if c == c_pad:
        return x
    cfg = [(0, 0)] * (x.ndim - 1) + [(0, c_pad - c)]
    return jnp.pad(x, cfg)


def _weight_to_gemm(w_oihw, cinp, coutp):
    """(Cout, Cin, KH, KW) -> (KH*KW, Cin_pad, Cout_pad) bf16, tap-major (kh, kw)."""
    cout, cin, kh, kw = w_oihw.shape
    w = jnp.transpose(w_oihw, (2, 3, 1, 0)).reshape(kh * kw, cin, cout)
    w = jnp.pad(w, ((0, 0), (0, cinp - cin), (0, coutp - cout)))
    return w.astype(jnp.bfloat16)


# --------------------------------------------------------------------------
# Input preparation: pad + (stride>1) residue regroup + flatten, so that each
# conv tap is a contiguous row window of the flattened image (implicit GEMM).
# --------------------------------------------------------------------------
def _prepare_conv_input(x, ksize, stride, padding, tm_target=512):
    N, H, W, Cp = x.shape
    Ho = (H + 2 * padding - ksize) // stride + 1
    Wo = (W + 2 * padding - ksize) // stride + 1
    Hr, Wr = H + 2 * padding, W + 2 * padding
    xp = jnp.pad(x, ((0, 0), (padding, padding), (padding, padding), (0, 0)))

    if stride == 1:
        row_off = list(range(ksize))
        col_off = list(range(ksize))
        xr = xp
    else:
        def residue_layout(length):
            counts = [len(range(r, length, stride)) for r in range(stride)]
            perm = np.concatenate([np.arange(r, length, stride)
                                   for r in range(stride)])
            base = np.concatenate([[0], np.cumsum(counts)[:-1]])
            return perm, base

        hperm, hbase = residue_layout(Hr)
        wperm, wbase = residue_layout(Wr)
        xr = jnp.take(jnp.take(xp, jnp.asarray(hperm, dtype=jnp.int32), axis=1),
                      jnp.asarray(wperm, dtype=jnp.int32), axis=2)
        row_off = [int(hbase[k % stride]) + k // stride for k in range(ksize)]
        col_off = [int(wbase[k % stride]) + k // stride for k in range(ksize)]

    offsets = [r * Wr + c for r in row_off for c in col_off]

    # Rows [0, m_valid) of the "big" output grid contain every valid output at
    # position p = ho*Wr + wo (ho < Ho, wo < Wo); the rest is masked garbage.
    m_valid = (Ho - 1) * Wr + Wo
    tm = min(tm_target, _round_up(m_valid, 16))
    m_pad = _round_up(m_valid, tm)

    x_flat = xr.reshape(N, Hr * Wr, Cp)
    l_need = m_pad + max(offsets)
    if l_need > Hr * Wr:
        x_flat = jnp.pad(x_flat, ((0, 0), (0, l_need - Hr * Wr), (0, 0)))

    return x_flat, dict(Ho=Ho, Wo=Wo, Wr=Wr, tm=tm, m_pad=m_pad, offsets=offsets)


# --------------------------------------------------------------------------
# Pallas kernel: implicit-GEMM conv (+ optional fused 1x1 shortcut) + BN stats
# --------------------------------------------------------------------------
def _make_conv_kernel(offsets, tm, fuse_sc):
    center = len(offsets) // 2  # tap (kh=1, kw=1) of a 3x3 kernel

    def body(x_ref, w_ref, mask_ref, y_ref, st_ref, acc_ref, sc_refs):
        row0 = pl.program_id(1) * tm
        for t, off in enumerate(offsets):
            # Contiguous (tm, Cin_pad) window; bf16 on the MXU, f32 accumulate.
            xt = x_ref[0, pl.ds(row0 + off, tm), :].astype(jnp.bfloat16)
            d = jnp.dot(xt, w_ref[t], preferred_element_type=jnp.float32)
            if t == 0:
                acc_ref[...] = d
            else:
                acc_ref[...] += d
            if sc_refs is not None and t == center:
                wsc_ref, _, _, accsc_ref = sc_refs
                accsc_ref[...] = jnp.dot(xt, wsc_ref[0],
                                         preferred_element_type=jnp.float32)

        mask = mask_ref[...]                       # (tm, 1), 1.0 on valid rows
        acc = acc_ref[...] * mask
        y_ref[0] = acc.astype(y_ref.dtype)
        # Masked partial BatchNorm statistics for this (image, M-tile).
        st_ref[0, 0, 0:1, :] = jnp.sum(acc, axis=0, keepdims=True)
        st_ref[0, 0, 1:2, :] = jnp.sum(acc * acc, axis=0, keepdims=True)
        if sc_refs is not None:
            _, ysc_ref, stsc_ref, accsc_ref = sc_refs
            asc = accsc_ref[...] * mask
            ysc_ref[0] = asc.astype(ysc_ref.dtype)
            stsc_ref[0, 0, 0:1, :] = jnp.sum(asc, axis=0, keepdims=True)
            stsc_ref[0, 0, 1:2, :] = jnp.sum(asc * asc, axis=0, keepdims=True)

    if fuse_sc:
        def kernel(x_ref, w_ref, mask_ref, wsc_ref,
                   y_ref, st_ref, ysc_ref, stsc_ref, acc_ref, accsc_ref):
            body(x_ref, w_ref, mask_ref, y_ref, st_ref, acc_ref,
                 (wsc_ref, ysc_ref, stsc_ref, accsc_ref))
    else:
        def kernel(x_ref, w_ref, mask_ref, y_ref, st_ref, acc_ref):
            body(x_ref, w_ref, mask_ref, y_ref, st_ref, acc_ref, None)
    return kernel


def conv_bn_stats(x_nhwc, w_oihw, stride, padding, w_sc_oihw=None,
                  tile_n=LANE, tm_target=512):
    """Implicit-GEMM conv; returns pre-BN output(s) plus partial BN stats."""
    N, H, W, Cin = x_nhwc.shape
    Cout, w_cin, KH, KW = w_oihw.shape
    Cinp = _round_up(Cin, LANE)
    Coutp = _round_up(Cout, LANE)
    assert w_cin <= Cinp

    # TODO(synk): keep the flattened activation in bf16 once unaligned packed
    # sublane loads are in use; f32 here + in-kernel bf16 cast keeps the MXU
    # in bf16 mode while every tap load stays a plain 32-bit row window.
    x_flat, meta = _prepare_conv_input(
        _pad_channels(x_nhwc, Cinp).astype(jnp.float32), KH, stride, padding,
        tm_target=tm_target)
    Ho, Wo, Wr = meta["Ho"], meta["Wo"], meta["Wr"]
    tm, m_pad, offsets = meta["tm"], meta["m_pad"], meta["offsets"]
    L = x_flat.shape[1]
    n_mt = m_pad // tm
    n_ct = Coutp // tile_n      # NOTE: use tile_n=256 on v6e for its 2x256 MXU
    fuse_sc = w_sc_oihw is not None

    wg = _weight_to_gemm(w_oihw, Cinp, Coutp)

    # Validity mask over rows of the padded "big" output grid (precomputed so
    # the kernel needs no integer div/mod).
    p = np.arange(m_pad)
    mask_np = ((p % Wr) < Wo) & ((p // Wr) < Ho)
    mask = jnp.asarray(mask_np.astype(np.float32)).reshape(m_pad, 1)

    args = [x_flat, wg, mask]
    # TODO(synk): for very large images, halo-tile the row axis with manual
    # DMA instead of giving each grid step the whole (padded) image.
    in_specs = [
        pl.BlockSpec((1, L, Cinp), lambda n, m, j: (n, 0, 0)),
        pl.BlockSpec((KH * KW, Cinp, tile_n), lambda n, m, j: (0, 0, j)),
        pl.BlockSpec((tm, 1), lambda n, m, j: (m, 0)),
    ]
    out_shape = [jax.ShapeDtypeStruct((N, m_pad, Coutp), jnp.bfloat16),
                 jax.ShapeDtypeStruct((N, n_mt, 2, Coutp), jnp.float32)]
    out_specs = [pl.BlockSpec((1, tm, tile_n), lambda n, m, j: (n, m, j)),
                 pl.BlockSpec((1, 1, 2, tile_n), lambda n, m, j: (n, m, 0, j))]
    scratch = [pltpu.VMEM((tm, tile_n), jnp.float32)]

    if fuse_sc:
        wsc = _weight_to_gemm(w_sc_oihw, Cinp, Coutp)
        args.append(wsc)
        in_specs.append(pl.BlockSpec((1, Cinp, tile_n), lambda n, m, j: (0, 0, j)))
        out_shape += [jax.ShapeDtypeStruct((N, m_pad, Coutp), jnp.bfloat16),
                      jax.ShapeDtypeStruct((N, n_mt, 2, Coutp), jnp.float32)]
        out_specs += [pl.BlockSpec((1, tm, tile_n), lambda n, m, j: (n, m, j)),
                      pl.BlockSpec((1, 1, 2, tile_n), lambda n, m, j: (n, m, 0, j))]
        scratch.append(pltpu.VMEM((tm, tile_n), jnp.float32))

    taps = KH * KW + (1 if fuse_sc else 0)
    flops = int(2 * N * m_pad * Cinp * Coutp * taps)
    bytes_accessed = int(
        sum(int(np.prod(a.shape)) * a.dtype.itemsize for a in args)
        + sum(int(np.prod(s.shape)) * np.dtype(s.dtype).itemsize for s in out_shape))

    outs = pl.pallas_call(
        _make_conv_kernel(offsets, tm, fuse_sc),
        out_shape=tuple(out_shape),
        grid=(N, n_mt, n_ct),
        in_specs=in_specs,
        out_specs=tuple(out_specs),
        scratch_shapes=scratch,
        compiler_params=pltpu.CompilerParams(
            dimension_semantics=("parallel", "parallel", "parallel"),
            vmem_limit_bytes=32 * 1024 * 1024),
        cost_estimate=pl.CostEstimate(flops=flops, transcendentals=0,
                                      bytes_accessed=bytes_accessed),
    )(*args)
    return outs, meta


def _extract_valid(y, Ho, Wo, Wr):
    """(N, m_pad, Cp) big-grid rows -> dense (N, Ho*Wo, Cp)."""
    N, Mp, Cp = y.shape
    need = Ho * Wr
    if Mp < need:
        y = jnp.pad(y, ((0, 0), (0, need - Mp), (0, 0)))
    else:
        y = y[:, :need]
    return y.reshape(N, Ho, Wr, Cp)[:, :, :Wo, :].reshape(N, Ho * Wo, Cp)


def _bn_scale_shift(stats, gamma, beta, count, coutp, eps=BN_EPS):
    """Fold partial (sum, sumsq) into per-channel BN scale/shift (O(C) glue)."""
    s = jnp.sum(stats, axis=(0, 1))                   # (2, Coutp)
    mean = s[0] / count
    var = jnp.maximum(s[1] / count - mean * mean, 0.0)
    inv = jax.lax.rsqrt(var + eps)
    g = jnp.pad(gamma.astype(jnp.float32), (0, coutp - gamma.shape[0]))
    b = jnp.pad(beta.astype(jnp.float32), (0, coutp - beta.shape[0]))
    scale = g * inv
    shift = b - mean * scale
    return scale, shift


# --------------------------------------------------------------------------
# Pallas kernel: fused BN-apply (+ residual) + ReLU
# --------------------------------------------------------------------------
def _make_bn_act_kernel(mode):
    if mode == "plain":
        def kernel(y_ref, a_ref, b_ref, o_ref):
            o = y_ref[0].astype(jnp.float32) * a_ref[...] + b_ref[...]
            o_ref[0] = jnp.maximum(o, 0.0).astype(o_ref.dtype)
    elif mode == "res_raw":
        def kernel(y_ref, a_ref, b_ref, z_ref, o_ref):
            o = (y_ref[0].astype(jnp.float32) * a_ref[...] + b_ref[...]
                 + z_ref[0].astype(jnp.float32))
            o_ref[0] = jnp.maximum(o, 0.0).astype(o_ref.dtype)
    else:  # "res_affine": BN applied to both branches, fused with add + relu
        def kernel(y_ref, a_ref, b_ref, z_ref, az_ref, bz_ref, o_ref):
            o = (y_ref[0].astype(jnp.float32) * a_ref[...] + b_ref[...]
                 + z_ref[0].astype(jnp.float32) * az_ref[...] + bz_ref[...])
            o_ref[0] = jnp.maximum(o, 0.0).astype(o_ref.dtype)
    return kernel


def bn_act(y, scale, shift, z=None, z_scale=None, z_shift=None,
           out_dtype=jnp.float32, tile_n=LANE):
    """Fused BatchNorm-apply (+ residual) + ReLU over (N, M, Cp) tensors."""
    N, Mo, Cp = y.shape
    n_ct = Cp // tile_n
    vec = lambda v: v.reshape(1, Cp).astype(jnp.float32)
    row_spec = pl.BlockSpec((1, Mo, tile_n), lambda n, j: (n, 0, j))
    ch_spec = pl.BlockSpec((1, tile_n), lambda n, j: (0, j))

    args = [y, vec(scale), vec(shift)]
    in_specs = [row_spec, ch_spec, ch_spec]
    if z is None:
        mode = "plain"
    elif z_scale is None:
        mode = "res_raw"
        args.append(z)
        in_specs.append(row_spec)
    else:
        mode = "res_affine"
        args += [z, vec(z_scale), vec(z_shift)]
        in_specs += [row_spec, ch_spec, ch_spec]

    return pl.pallas_call(
        _make_bn_act_kernel(mode),
        out_shape=jax.ShapeDtypeStruct((N, Mo, Cp), out_dtype),
        grid=(N, n_ct),
        in_specs=in_specs,
        out_specs=row_spec,
        compiler_params=pltpu.CompilerParams(
            dimension_semantics=("parallel", "parallel"),
            vmem_limit_bytes=32 * 1024 * 1024),
    )(*args)


# --------------------------------------------------------------------------
# BasicBlock forward (Pallas path)
# --------------------------------------------------------------------------
def basic_block_pallas(x_nchw, params, stride):
    x = jnp.transpose(x_nchw, (0, 2, 3, 1)).astype(jnp.float32)   # NCHW -> NHWC
    N = x.shape[0]
    Cout = params["w1"].shape[0]
    Coutp = _round_up(Cout, LANE)
    has_proj = "w_sc" in params

    # conv1 (3x3, stride, pad 1) [+ fused 1x1 projection shortcut] -> y + stats
    outs, meta = conv_bn_stats(x, params["w1"], stride, 1,
                               w_sc_oihw=params["w_sc"] if has_proj else None)
    Ho, Wo, Wr1 = meta["Ho"], meta["Wo"], meta["Wr"]
    Mo = Ho * Wo
    if has_proj:
        y1, st1, ysc, stsc = outs
    else:
        y1, st1 = outs

    # BN1 + ReLU (pass 2)
    a1, b1 = _bn_scale_shift(st1, params["g1"], params["b1"], N * Mo, Coutp)
    y1d = _extract_valid(y1, Ho, Wo, Wr1)
    out1 = bn_act(y1d, a1, b1, out_dtype=jnp.float32)

    # conv2 (3x3, stride 1, pad 1) -> y2 + stats
    out1_img = out1.reshape(N, Ho, Wo, Coutp)
    (y2, st2), meta2 = conv_bn_stats(out1_img, params["w2"], 1, 1)
    a2, b2 = _bn_scale_shift(st2, params["g2"], params["b2"], N * Mo, Coutp)
    y2d = _extract_valid(y2, Ho, Wo, meta2["Wr"])

    # BN2 + shortcut add + ReLU, fully fused
    if has_proj:
        asc, bsc = _bn_scale_shift(stsc, params["g_sc"], params["b_sc"],
                                   N * Mo, Coutp)
        yscd = _extract_valid(ysc, Ho, Wo, Wr1)
        out = bn_act(y2d, a2, b2, z=yscd, z_scale=asc, z_shift=bsc,
                     out_dtype=jnp.float32)
    else:
        zid = _pad_channels(x, Coutp).reshape(N, Mo, Coutp)
        out = bn_act(y2d, a2, b2, z=zid, out_dtype=jnp.float32)

    out = out[..., :Cout].reshape(N, Ho, Wo, Cout)
    return jnp.transpose(out, (0, 3, 1, 2))                       # -> NCHW


# --------------------------------------------------------------------------
# Pure-JAX reference (same semantics as the PyTorch module in train() mode)
# --------------------------------------------------------------------------
def _conv_ref(x_nhwc, w_oihw, stride, padding):
    w_hwio = jnp.transpose(w_oihw, (2, 3, 1, 0))
    return jax.lax.conv_general_dilated(
        x_nhwc, w_hwio, window_strides=(stride, stride),
        padding=[(padding, padding)] * 2,
        dimension_numbers=("NHWC", "HWIO", "NHWC"))


def _bn_ref(y, g, b, eps=BN_EPS):
    mean = y.mean(axis=(0, 1, 2), keepdims=True)
    var = ((y - mean) ** 2).mean(axis=(0, 1, 2), keepdims=True)
    return (y - mean) * jax.lax.rsqrt(var + eps) * g + b


def basic_block_ref(x_nchw, params, stride):
    x = jnp.transpose(x_nchw, (0, 2, 3, 1)).astype(jnp.float32)
    out = jnp.maximum(_bn_ref(_conv_ref(x, params["w1"], stride, 1),
                              params["g1"], params["b1"]), 0.0)
    out = _bn_ref(_conv_ref(out, params["w2"], 1, 1), params["g2"], params["b2"])
    if "w_sc" in params:
        sc = _bn_ref(_conv_ref(x, params["w_sc"], stride, 0),
                     params["g_sc"], params["b_sc"])
    else:
        sc = x
    out = jnp.maximum(out + sc, 0.0)
    return jnp.transpose(out, (0, 3, 1, 2))


# --------------------------------------------------------------------------
# Deterministic parameter init (shapes mirror the module's __init__)
# --------------------------------------------------------------------------
def init_params(key, cin, cout, stride):
    ks = jax.random.split(key, 8)
    p = {
        "w1": jax.random.normal(ks[0], (cout, cin, 3, 3), jnp.float32) * 0.2,
        "g1": 1.0 + 0.1 * jax.random.normal(ks[1], (cout,), jnp.float32),
        "b1": 0.1 * jax.random.normal(ks[2], (cout,), jnp.float32),
        "w2": jax.random.normal(ks[3], (cout, cout, 3, 3), jnp.float32) * 0.2,
        "g2": 1.0 + 0.1 * jax.random.normal(ks[4], (cout,), jnp.float32),
        "b2": 0.1 * jax.random.normal(ks[5], (cout,), jnp.float32),
    }
    if stride != 1 or cin != cout:
        p["w_sc"] = jax.random.normal(ks[6], (cout, cin, 1, 1), jnp.float32) * 0.2
        p["g_sc"] = jnp.ones((cout,), jnp.float32)
        p["b_sc"] = 0.1 * jax.random.normal(ks[7], (cout,), jnp.float32)
    return p


if __name__ == "__main__":
    key = jax.random.PRNGKey(0)
    kx, kp, kx2, kp2 = jax.random.split(key, 4)

    fwd = jax.jit(basic_block_pallas, static_argnames=("stride",))

    # Case A: projection shortcut (stride=2, 4 -> 8 channels). x: (2, 4, 16, 16)
    x_a = jax.random.normal(kx, (2, 4, 16, 16), jnp.float32)
    params_a = init_params(kp, cin=4, cout=8, stride=2)
    out_a = jax.block_until_ready(fwd(x_a, params_a, stride=2))
    ref_a = basic_block_ref(x_a, params_a, stride=2)
    assert out_a.shape == (2, 8, 8, 8), out_a.shape
    assert jnp.allclose(out_a, ref_a, rtol=5e-2, atol=5e-2), \
        float(jnp.max(jnp.abs(out_a - ref_a)))

    # Case B: identity shortcut (stride=1, 8 -> 8 channels). x: (2, 8, 16, 16)
    x_b = jax.random.normal(kx2, (2, 8, 16, 16), jnp.float32)
    params_b = init_params(kp2, cin=8, cout=8, stride=1)
    out_b = jax.block_until_ready(fwd(x_b, params_b, stride=1))
    ref_b = basic_block_ref(x_b, params_b, stride=1)
    assert out_b.shape == (2, 8, 16, 16), out_b.shape
    assert jnp.allclose(out_b, ref_b, rtol=5e-2, atol=5e-2), \
        float(jnp.max(jnp.abs(out_b - ref_b)))

    print("KERNEL_OK")
</pallas_src>

<mosaic_0001>
module attributes {stable_mosaic.version = 11 : i64} {
  func.func @kernel(%arg0: i32, %arg1: i32, %arg2: i32, %arg3: memref<1x324x128xf32, #tpu.memory_space<vmem>>, %arg4: memref<9x128x128xbf16, #tpu.memory_space<vmem>>, %arg5: memref<144x1xf32, #tpu.memory_space<vmem>>, %arg6: memref<1x128x128xbf16, #tpu.memory_space<vmem>>, %arg7: memref<1x144x128xbf16, #tpu.memory_space<vmem>>, %arg8: memref<1x1x2x128xf32, #tpu.memory_space<vmem>>, %arg9: memref<1x144x128xbf16, #tpu.memory_space<vmem>>, %arg10: memref<1x1x2x128xf32, #tpu.memory_space<vmem>>, %arg11: memref<144x128xf32, #tpu.memory_space<vmem>>, %arg12: memref<144x128xf32, #tpu.memory_space<vmem>>) attributes {dimension_semantics = [#tpu.dimension_semantics<parallel>, #tpu.dimension_semantics<parallel>, #tpu.dimension_semantics<parallel>], iteration_bounds = array<i64: 2, 1, 1>, scalar_prefetch = 0 : i64, scratch_operands = 2 : i64, tpu.core_type = #tpu.core_type<tc>, window_params = [{transform_indices = @transform_0, window_bounds = array<i64: 1, 324, 128>}, {transform_indices = @transform_1, window_bounds = array<i64: 9, 128, 128>}, {transform_indices = @transform_2, window_bounds = array<i64: 144, 1>}, {transform_indices = @transform_3, window_bounds = array<i64: 1, 128, 128>}, {transform_indices = @transform_4, window_bounds = array<i64: 1, 144, 128>}, {transform_indices = @transform_5, window_bounds = array<i64: 1, 1, 2, 128>}, {transform_indices = @transform_6, window_bounds = array<i64: 1, 144, 128>}, {transform_indices = @transform_7, window_bounds = array<i64: 1, 1, 2, 128>}]} {
    %c144_i32 = arith.constant 144 : i32
    %0 = arith.muli %arg1, %c144_i32 : i32
    %c0_i32 = arith.constant 0 : i32
    %1 = arith.addi %0, %c0_i32 : i32
    %c0 = arith.constant 0 : index
    %2 = arith.index_cast %1 : i32 to index
    %c0_0 = arith.constant 0 : index
    %3 = vector.load %arg3[%c0, %2, %c0_0] : memref<1x324x128xf32, #tpu.memory_space<vmem>>, vector<1x144x128xf32>
    %4 = vector.shape_cast %3 : vector<1x144x128xf32> to vector<144x128xf32>
    %5 = arith.truncf %4 : vector<144x128xf32> to vector<144x128xbf16>
    %c0_1 = arith.constant 0 : index
    %c0_2 = arith.constant 0 : index
    %c0_3 = arith.constant 0 : index
    %6 = vector.load %arg4[%c0_1, %c0_2, %c0_3] : memref<9x128x128xbf16, #tpu.memory_space<vmem>>, vector<1x128x128xbf16>
    %7 = vector.shape_cast %6 : vector<1x128x128xbf16> to vector<128x128xbf16>
    %cst = arith.constant dense<0.000000e+00> : vector<144x128xf32>
    %8 = tpu.matmul %5, %7, %cst {dimension_numbers = #tpu.dot_dimension_numbers<[1], [0], [0], [1], [0, 0, 1, 1], [], []>} : vector<144x128xbf16>, vector<128x128xbf16>, vector<144x128xf32> -> vector<144x128xf32>
    %c0_4 = arith.constant 0 : index
    %c0_5 = arith.constant 0 : index
    %9 = vector.load %arg11[%c0_4, %c0_5] : memref<144x128xf32, #tpu.memory_space<vmem>>, vector<144x128xf32>
    tpu.vector_store %arg11[%c0_4, %c0_5], %8 {strides = array<i32>} : memref<144x128xf32, #tpu.memory_space<vmem>>, vector<144x128xf32>,
    %c9_i32 = arith.constant 9 : i32
    %10 = arith.addi %0, %c9_i32 : i32
    %c0_6 = arith.constant 0 : index
    %11 = arith.index_cast %10 : i32 to index
    %c0_7 = arith.constant 0 : index
    %12 = vector.load %arg3[%c0_6, %11, %c0_7] : memref<1x324x128xf32, #tpu.memory_space<vmem>>, vector<1x144x128xf32>
    %13 = vector.shape_cast %12 : vector<1x144x128xf32> to vector<144x128xf32>
    %14 = arith.truncf %13 : vector<144x128xf32> to vector<144x128xbf16>
    %c1 = arith.constant 1 : index
    %c0_8 = arith.constant 0 : index
    %c0_9 = arith.constant 0 : index
    %15 = vector.load %arg4[%c1, %c0_8, %c0_9] : memref<9x128x128xbf16, #tpu.memory_space<vmem>>, vector<1x128x128xbf16>
    %16 = vector.shape_cast %15 : vector<1x128x128xbf16> to vector<128x128xbf16>
    %cst_10 = arith.constant dense<0.000000e+00> : vector<144x128xf32>
    %17 = tpu.matmul %14, %16, %cst_10 {dimension_numbers = #tpu.dot_dimension_numbers<[1], [0], [0], [1], [0, 0, 1, 1], [], []>} : vector<144x128xbf16>, vector<128x128xbf16>, vector<144x128xf32> -> vector<144x128xf32>
    %c0_11 = arith.constant 0 : index
    %c0_12 = arith.constant 0 : index
    %18 = vector.load %arg11[%c0_11, %c0_12] : memref<144x128xf32, #tpu.memory_space<vmem>>, vector<144x128xf32>
    %19 = arith.addf %18, %17 : vector<144x128xf32>
    %c0_13 = arith.constant 0 : index
    %c0_14 = arith.constant 0 : index
    %20 = vector.load %arg11[%c0_13, %c0_14] : memref<144x128xf32, #tpu.memory_space<vmem>>, vector<144x128xf32>
    tpu.vector_store %arg11[%c0_13, %c0_14], %19 {strides = array<i32>} : memref<144x128xf32, #tpu.memory_space<vmem>>, vector<144x128xf32>,
    %c1_i32 = arith.constant 1 : i32
    %21 = arith.addi %0, %c1_i32 : i32
    %c0_15 = arith.constant 0 : index
    %22 = arith.index_cast %21 : i32 to index
    %c0_16 = arith.constant 0 : index
    %23 = vector.load %arg3[%c0_15, %22, %c0_16] : memref<1x324x128xf32, #tpu.memory_space<vmem>>, vector<1x144x128xf32>
    %24 = vector.shape_cast %23 : vector<1x144x128xf32> to vector<144x128xf32>
    %25 = arith.truncf %24 : vector<144x128xf32> to vector<144x128xbf16>
    %c2 = arith.constant 2 : index
    %c0_17 = arith.constant 0 : index
    %c0_18 = arith.constant 0 : index
    %26 = vector.load %arg4[%c2, %c0_17, %c0_18] : memref<9x128x128xbf16, #tpu.memory_space<vmem>>, vector<1x128x128xbf16>
    %27 = vector.shape_cast %26 : vector<1x128x128xbf16> to vector<128x128xbf16>
    %cst_19 = arith.constant dense<0.000000e+00> : vector<144x128xf32>
    %28 = tpu.matmul %25, %27, %cst_19 {dimension_numbers = #tpu.dot_dimension_numbers<[1], [0], [0], [1], [0, 0, 1, 1], [], []>} : vector<144x128xbf16>, vector<128x128xbf16>, vector<144x128xf32> -> vector<144x128xf32>
    %c0_20 = arith.constant 0 : index
    %c0_21 = arith.constant 0 : index
    %29 = vector.load %arg11[%c0_20, %c0_21] : memref<144x128xf32, #tpu.memory_space<vmem>>, vector<144x128xf32>
    %30 = arith.addf %29, %28 : vector<144x128xf32>
    %c0_22 = arith.constant 0 : index
    %c0_23 = arith.constant 0 : index
    %31 = vector.load %arg11[%c0_22, %c0_23] : memref<144x128xf32, #tpu.memory_space<vmem>>, vector<144x128xf32>
    tpu.vector_store %arg11[%c0_22, %c0_23], %30 {strides = array<i32>} : memref<144x128xf32, #tpu.memory_space<vmem>>, vector<144x128xf32>,
    %c162_i32 = arith.constant 162 : i32
    %32 = arith.addi %0, %c162_i32 : i32
    %c0_24 = arith.constant 0 : index
    %33 = arith.index_cast %32 : i32 to index
    %c0_25 = arith.constant 0 : index
    %34 = vector.load %arg3[%c0_24, %33, %c0_25] : memref<1x324x128xf32, #tpu.memory_space<vmem>>, vector<1x144x128xf32>
    %35 = vector.shape_cast %34 : vector<1x144x128xf32> to vector<144x128xf32>
    %36 = arith.truncf %35 : vector<144x128xf32> to vector<144x128xbf16>
    %c3 = arith.constant 3 : index
    %c0_26 = arith.constant 0 : index
    %c0_27 = arith.constant 0 : index
    %37 = vector.load %arg4[%c3, %c0_26, %c0_27] : memref<9x128x128xbf16, #tpu.memory_space<vmem>>, vector<1x128x128xbf16>
    %38 = vector.shape_cast %37 : vector<1x128x128xbf16> to vector<128x128xbf16>
    %cst_28 = arith.constant dense<0.000000e+00> : vector<144x128xf32>
    %39 = tpu.matmul %36, %38, %cst_28 {dimension_numbers = #tpu.dot_dimension_numbers<[1], [0], [0], [1], [0, 0, 1, 1], [], []>} : vector<144x128xbf16>, vector<128x128xbf16>, vector<144x128xf32> -> vector<144x128xf32>
    %c0_29 = arith.constant 0 : index
    %c0_30 = arith.constant 0 : index
    %40 = vector.load %arg11[%c0_29, %c0_30] : memref<144x128xf32, #tpu.memory_space<vmem>>, vector<144x128xf32>
    %41 = arith.addf %40, %39 : vector<144x128xf32>
    %c0_31 = arith.constant 0 : index
    %c0_32 = arith.constant 0 : index
    %42 = vector.load %arg11[%c0_31, %c0_32] : memref<144x128xf32, #tpu.memory_space<vmem>>, vector<144x128xf32>
    tpu.vector_store %arg11[%c0_31, %c0_32], %41 {strides = array<i32>} : memref<144x128xf32, #tpu.memory_space<vmem>>, vector<144x128xf32>,
    %c171_i32 = arith.constant 171 : i32
    %43 = arith.addi %0, %c171_i32 : i32
    %c0_33 = arith.constant 0 : index
    %44 = arith.index_cast %43 : i32 to index
    %c0_34 = arith.constant 0 : index
    %45 = vector.load %arg3[%c0_33, %44, %c0_34] : memref<1x324x128xf32, #tpu.memory_space<vmem>>, vector<1x144x128xf32>
    %46 = vector.shape_cast %45 : vector<1x144x128xf32> to vector<144x128xf32>
    %47 = arith.truncf %46 : vector<144x128xf32> to vector<144x128xbf16>
    %c4 = arith.constant 4 : index
    %c0_35 = arith.constant 0 : index
    %c0_36 = arith.constant 0 : index
    %48 = vector.load %arg4[%c4, %c0_35, %c0_36] : memref<9x128x128xbf16, #tpu.memory_space<vmem>>, vector<1x128x128xbf16>
    %49 = vector.shape_cast %48 : vector<1x128x128xbf16> to vector<128x128xbf16>
    %cst_37 = arith.constant dense<0.000000e+00> : vector<144x128xf32>
    %50 = tpu.matmul %47, %49, %cst_37 {dimension_numbers = #tpu.dot_dimension_numbers<[1], [0], [0], [1], [0, 0, 1, 1], [], []>} : vector<144x128xbf16>, vector<128x128xbf16>, vector<144x128xf32> -> vector<144x128xf32>
    %c0_38 = arith.constant 0 : index
    %c0_39 = arith.constant 0 : index
    %51 = vector.load %arg11[%c0_38, %c0_39] : memref<144x128xf32, #tpu.memory_space<vmem>>, vector<144x128xf32>
    %52 = arith.addf %51, %50 : vector<144x128xf32>
    %c0_40 = arith.constant 0 : index
    %c0_41 = arith.constant 0 : index
    %53 = vector.load %arg11[%c0_40, %c0_41] : memref<144x128xf32, #tpu.memory_space<vmem>>, vector<144x128xf32>
    tpu.vector_store %arg11[%c0_40, %c0_41], %52 {strides = array<i32>} : memref<144x128xf32, #tpu.memory_space<vmem>>, vector<144x128xf32>,
    %c0_42 = arith.constant 0 : index
    %c0_43 = arith.constant 0 : index
    %c0_44 = arith.constant 0 : index
    %54 = vector.load %arg6[%c0_42, %c0_43, %c0_44] : memref<1x128x128xbf16, #tpu.memory_space<vmem>>, vector<1x128x128xbf16>
    %55 = vector.shape_cast %54 : vector<1x128x128xbf16> to vector<128x128xbf16>
    %cst_45 = arith.constant dense<0.000000e+00> : vector<144x128xf32>
    %56 = tpu.matmul %47, %55, %cst_45 {dimension_numbers = #tpu.dot_dimension_numbers<[1], [0], [0], [1], [0, 0, 1, 1], [], []>} : vector<144x128xbf16>, vector<128x128xbf16>, vector<144x128xf32> -> vector<144x128xf32>
    %c0_46 = arith.constant 0 : index
    %c0_47 = arith.constant 0 : index
    %57 = vector.load %arg12[%c0_46, %c0_47] : memref<144x128xf32, #tpu.memory_space<vmem>>, vector<144x128xf32>
    tpu.vector_store %arg12[%c0_46, %c0_47], %56 {strides = array<i32>} : memref<144x128xf32, #tpu.memory_space<vmem>>, vector<144x128xf32>,
    %c163_i32 = arith.constant 163 : i32
    %58 = arith.addi %0, %c163_i32 : i32
    %c0_48 = arith.constant 0 : index
    %59 = arith.index_cast %58 : i32 to index
    %c0_49 = arith.constant 0 : index
    %60 = vector.load %arg3[%c0_48, %59, %c0_49] : memref<1x324x128xf32, #tpu.memory_space<vmem>>, vector<1x144x128xf32>
    %61 = vector.shape_cast %60 : vector<1x144x128xf32> to vector<144x128xf32>
    %62 = arith.truncf %61 : vector<144x128xf32> to vector<144x128xbf16>
    %c5 = arith.constant 5 : index
    %c0_50 = arith.constant 0 : index
    %c0_51 = arith.constant 0 : index
    %63 = vector.load %arg4[%c5, %c0_50, %c0_51] : memref<9x128x128xbf16, #tpu.memory_space<vmem>>, vector<1x128x128xbf16>
    %64 = vector.shape_cast %63 : vector<1x128x128xbf16> to vector<128x128xbf16>
    %cst_52 = arith.constant dense<0.000000e+00> : vector<144x128xf32>
    %65 = tpu.matmul %62, %64, %cst_52 {dimension_numbers = #tpu.dot_dimension_numbers<[1], [0], [0], [1], [0, 0, 1, 1], [], []>} : vector<144x128xbf16>, vector<128x128xbf16>, vector<144x128xf32> -> vector<144x128xf32>
    %c0_53 = arith.constant 0 : index
    %c0_54 = arith.constant 0 : index
    %66 = vector.load %arg11[%c0_53, %c0_54] : memref<144x128xf32, #tpu.memory_space<vmem>>, vector<144x128xf32>
    %67 = arith.addf %66, %65 : vector<144x128xf32>
    %c0_55 = arith.constant 0 : index
    %c0_56 = arith.constant 0 : index
    %68 = vector.load %arg11[%c0_55, %c0_56] : memref<144x128xf32, #tpu.memory_space<vmem>>, vector<144x128xf32>
    tpu.vector_store %arg11[%c0_55, %c0_56], %67 {strides = array<i32>} : memref<144x128xf32, #tpu.memory_space<vmem>>, vector<144x128xf32>,
    %c18_i32 = arith.constant 18 : i32
    %69 = arith.addi %0, %c18_i32 : i32
    %c0_57 = arith.constant 0 : index
    %70 = arith.index_cast %69 : i32 to index
    %c0_58 = arith.constant 0 : index
    %71 = vector.load %arg3[%c0_57, %70, %c0_58] : memref<1x324x128xf32, #tpu.memory_space<vmem>>, vector<1x144x128xf32>
    %72 = vector.shape_cast %71 : vector<1x144x128xf32> to vector<144x128xf32>
    %73 = arith.truncf %72 : vector<144x128xf32> to vector<144x128xbf16>
    %c6 = arith.constant 6 : index
    %c0_59 = arith.constant 0 : index
    %c0_60 = arith.constant 0 : index
    %74 = vector.load %arg4[%c6, %c0_59, %c0_60] : memref<9x128x128xbf16, #tpu.memory_space<vmem>>, vector<1x128x128xbf16>
    %75 = vector.shape_cast %74 : vector<1x128x128xbf16> to vector<128x128xbf16>
    %cst_61 = arith.constant dense<0.000000e+00> : vector<144x128xf32>
    %76 = tpu.matmul %73, %75, %cst_61 {dimension_numbers = #tpu.dot_dimension_numbers<[1], [0], [0], [1], [0, 0, 1, 1], [], []>} : vector<144x128xbf16>, vector<128x128xbf16>, vector<144x128xf32> -> vector<144x128xf32>
    %c0_62 = arith.constant 0 : index
    %c0_63 = arith.constant 0 : index
    %77 = vector.load %arg11[%c0_62, %c0_63] : memref<144x128xf32, #tpu.memory_space<vmem>>, vector<144x128xf32>
    %78 = arith.addf %77, %76 : vector<144x128xf32>
    %c0_64 = arith.constant 0 : index
    %c0_65 = arith.constant 0 : index
    %79 = vector.load %arg11[%c0_64, %c0_65] : memref<144x128xf32, #tpu.memory_space<vmem>>, vector<144x128xf32>
    tpu.vector_store %arg11[%c0_64, %c0_65], %78 {strides = array<i32>} : memref<144x128xf32, #tpu.memory_space<vmem>>, vector<144x128xf32>,
    %c27_i32 = arith.constant 27 : i32
    %80 = arith.addi %0, %c27_i32 : i32
    %c0_66 = arith.constant 0 : index
    %81 = arith.index_cast %80 : i32 to index
    %c0_67 = arith.constant 0 : index
    %82 = vector.load %arg3[%c0_66, %81, %c0_67] : memref<1x324x128xf32, #tpu.memory_space<vmem>>, vector<1x144x128xf32>
    %83 = vector.shape_cast %82 : vector<1x144x128xf32> to vector<144x128xf32>
    %84 = arith.truncf %83 : vector<144x128xf32> to vector<144x128xbf16>
    %c7 = arith.constant 7 : index
    %c0_68 = arith.constant 0 : index
    %c0_69 = arith.constant 0 : index
    %85 = vector.load %arg4[%c7, %c0_68, %c0_69] : memref<9x128x128xbf16, #tpu.memory_space<vmem>>, vector<1x128x128xbf16>
    %86 = vector.shape_cast %85 : vector<1x128x128xbf16> to vector<128x128xbf16>
    %cst_70 = arith.constant dense<0.000000e+00> : vector<144x128xf32>
    %87 = tpu.matmul %84, %86, %cst_70 {dimension_numbers = #tpu.dot_dimension_numbers<[1], [0], [0], [1], [0, 0, 1, 1], [], []>} : vector<144x128xbf16>, vector<128x128xbf16>, vector<144x128xf32> -> vector<144x128xf32>
    %c0_71 = arith.constant 0 : index
    %c0_72 = arith.constant 0 : index
    %88 = vector.load %arg11[%c0_71, %c0_72] : memref<144x128xf32, #tpu.memory_space<vmem>>, vector<144x128xf32>
    %89 = arith.addf %88, %87 : vector<144x128xf32>
    %c0_73 = arith.constant 0 : index
    %c0_74 = arith.constant 0 : index
    %90 = vector.load %arg11[%c0_73, %c0_74] : memref<144x128xf32, #tpu.memory_space<vmem>>, vector<144x128xf32>
    tpu.vector_store %arg11[%c0_73, %c0_74], %89 {strides = array<i32>} : memref<144x128xf32, #tpu.memory_space<vmem>>, vector<144x128xf32>,
    %c19_i32 = arith.constant 19 : i32
    %91 = arith.addi %0, %c19_i32 : i32
    %c0_75 = arith.constant 0 : index
    %92 = arith.index_cast %91 : i32 to index
    %c0_76 = arith.constant 0 : index
    %93 = vector.load %arg3[%c0_75, %92, %c0_76] : memref<1x324x128xf32, #tpu.memory_space<vmem>>, vector<1x144x128xf32>
    %94 = vector.shape_cast %93 : vector<1x144x128xf32> to vector<144x128xf32>
    %95 = arith.truncf %94 : vector<144x128xf32> to vector<144x128xbf16>
    %c8 = arith.constant 8 : index
    %c0_77 = arith.constant 0 : index
    %c0_78 = arith.constant 0 : index
    %96 = vector.load %arg4[%c8, %c0_77, %c0_78] : memref<9x128x128xbf16, #tpu.memory_space<vmem>>, vector<1x128x128xbf16>
    %97 = vector.shape_cast %96 : vector<1x128x128xbf16> to vector<128x128xbf16>
    %cst_79 = arith.constant dense<0.000000e+00> : vector<144x128xf32>
    %98 = tpu.matmul %95, %97, %cst_79 {dimension_numbers = #tpu.dot_dimension_numbers<[1], [0], [0], [1], [0, 0, 1, 1], [], []>} : vector<144x128xbf16>, vector<128x128xbf16>, vector<144x128xf32> -> vector<144x128xf32>
    %c0_80 = arith.constant 0 : index
    %c0_81 = arith.constant 0 : index
    %99 = vector.load %arg11[%c0_80, %c0_81] : memref<144x128xf32, #tpu.memory_space<vmem>>, vector<144x128xf32>
    %100 = arith.addf %99, %98 : vector<144x128xf32>
    %c0_82 = arith.constant 0 : index
    %c0_83 = arith.constant 0 : index
    %101 = vector.load %arg11[%c0_82, %c0_83] : memref<144x128xf32, #tpu.memory_space<vmem>>, vector<144x128xf32>
    tpu.vector_store %arg11[%c0_82, %c0_83], %100 {strides = array<i32>} : memref<144x128xf32, #tpu.memory_space<vmem>>, vector<144x128xf32>,
    %c0_84 = arith.constant 0 : index
    %c0_85 = arith.constant 0 : index
    %102 = vector.load %arg5[%c0_84, %c0_85] : memref<144x1xf32, #tpu.memory_space<vmem>>, vector<144x1xf32>
    %c0_86 = arith.constant 0 : index
    %c0_87 = arith.constant 0 : index
    %103 = vector.load %arg11[%c0_86, %c0_87] : memref<144x128xf32, #tpu.memory_space<vmem>>, vector<144x128xf32>
    %104 = vector.broadcast %102 : vector<144x1xf32> to vector<144x128xf32>
    %105 = arith.mulf %103, %104 : vector<144x128xf32>
    %106 = arith.truncf %105 : vector<144x128xf32> to vector<144x128xbf16>
    %c0_88 = arith.constant 0 : index
    %c0_89 = arith.constant 0 : index
    %c0_90 = arith.constant 0 : index
    %107 = vector.load %arg7[%c0_88, %c0_89, %c0_90] : memref<1x144x128xbf16, #tpu.memory_space<vmem>>, vector<1x144x128xbf16>
    %108 = vector.shape_cast %107 : vector<1x144x128xbf16> to vector<144x128xbf16>
    %109 = vector.shape_cast %106 : vector<144x128xbf16> to vector<1x144x128xbf16>
    tpu.vector_store %arg7[%c0_88, %c0_89, %c0_90], %109 {strides = array<i32>} : memref<1x144x128xbf16, #tpu.memory_space<vmem>>, vector<1x144x128xbf16>,
    %cst_91 = arith.constant dense<0.000000e+00> : vector<128xf32>
    %110 = vector.multi_reduction <add>, %105, %cst_91 [0] : vector<144x128xf32> to vector<128xf32>
    %111 = vector.shape_cast %110 : vector<128xf32> to vector<1x128xf32>
    %c0_92 = arith.constant 0 : index
    %c0_93 = arith.constant 0 : index
    %c0_94 = arith.constant 0 : index
    %c0_95 = arith.constant 0 : index
    %112 = vector.load %arg8[%c0_92, %c0_93, %c0_94, %c0_95] : memref<1x1x2x128xf32, #tpu.memory_space<vmem>>, vector<1x1x1x128xf32>
    %113 = vector.shape_cast %112 : vector<1x1x1x128xf32> to vector<1x128xf32>
    %114 = vector.shape_cast %111 : vector<1x128xf32> to vector<1x1x1x128xf32>
    tpu.vector_store %arg8[%c0_92, %c0_93, %c0_94, %c0_95], %114 {strides = array<i32>} : memref<1x1x2x128xf32, #tpu.memory_space<vmem>>, vector<1x1x1x128xf32>,
    %115 = arith.mulf %105, %105 : vector<144x128xf32>
    %cst_96 = arith.constant dense<0.000000e+00> : vector<128xf32>
    %116 = vector.multi_reduction <add>, %115, %cst_96 [0] : vector<144x128xf32> to vector<128xf32>
    %117 = vector.shape_cast %116 : vector<128xf32> to vector<1x128xf32>
    %c0_97 = arith.constant 0 : index
    %c0_98 = arith.constant 0 : index
    %c1_99 = arith.constant 1 : index
    %c0_100 = arith.constant 0 : index
    %118 = vector.load %arg8[%c0_97, %c0_98, %c1_99, %c0_100] : memref<1x1x2x128xf32, #tpu.memory_space<vmem>>, vector<1x1x1x128xf32>
    %119 = vector.shape_cast %118 : vector<1x1x1x128xf32> to vector<1x128xf32>
    %120 = vector.shape_cast %117 : vector<1x128xf32> to vector<1x1x1x128xf32>
    tpu.vector_store %arg8[%c0_97, %c0_98, %c1_99, %c0_100], %120 {strides = array<i32>} : memref<1x1x2x128xf32, #tpu.memory_space<vmem>>, vector<1x1x1x128xf32>,
    %c0_101 = arith.constant 0 : index
    %c0_102 = arith.constant 0 : index
    %121 = vector.load %arg12[%c0_101, %c0_102] : memref<144x128xf32, #tpu.memory_space<vmem>>, vector<144x128xf32>
    %122 = vector.broadcast %102 : vector<144x1xf32> to vector<144x128xf32>
    %123 = arith.mulf %121, %122 : vector<144x128xf32>
    %124 = arith.truncf %123 : vector<144x128xf32> to vector<144x128xbf16>
    %c0_103 = arith.constant 0 : index
    %c0_104 = arith.constant 0 : index
    %c0_105 = arith.constant 0 : index
    %125 = vector.load %arg9[%c0_103, %c0_104, %c0_105] : memref<1x144x128xbf16, #tpu.memory_space<vmem>>, vector<1x144x128xbf16>
    %126 = vector.shape_cast %125 : vector<1x144x128xbf16> to vector<144x128xbf16>
    %127 = vector.shape_cast %124 : vector<144x128xbf16> to vector<1x144x128xbf16>
    tpu.vector_store %arg9[%c0_103, %c0_104, %c0_105], %127 {strides = array<i32>} : memref<1x144x128xbf16, #tpu.memory_space<vmem>>, vector<1x144x128xbf16>,
    %cst_106 = arith.constant dense<0.000000e+00> : vector<128xf32>
    %128 = vector.multi_reduction <add>, %123, %cst_106 [0] : vector<144x128xf32> to vector<128xf32>
    %129 = vector.shape_cast %128 : vector<128xf32> to vector<1x128xf32>
    %c0_107 = arith.constant 0 : index
    %c0_108 = arith.constant 0 : index
    %c0_109 = arith.constant 0 : index
    %c0_110 = arith.constant 0 : index
    %130 = vector.load %arg10[%c0_107, %c0_108, %c0_109, %c0_110] : memref<1x1x2x128xf32, #tpu.memory_space<vmem>>, vector<1x1x1x128xf32>
    %131 = vector.shape_cast %130 : vector<1x1x1x128xf32> to vector<1x128xf32>
    %132 = vector.shape_cast %129 : vector<1x128xf32> to vector<1x1x1x128xf32>
    tpu.vector_store %arg10[%c0_107, %c0_108, %c0_109, %c0_110], %132 {strides = array<i32>} : memref<1x1x2x128xf32, #tpu.memory_space<vmem>>, vector<1x1x1x128xf32>,
    %133 = arith.mulf %123, %123 : vector<144x128xf32>
    %cst_111 = arith.constant dense<0.000000e+00> : vector<128xf32>
    %134 = vector.multi_reduction <add>, %133, %cst_111 [0] : vector<144x128xf32> to vector<128xf32>
    %135 = vector.shape_cast %134 : vector<128xf32> to vector<1x128xf32>
    %c0_112 = arith.constant 0 : index
    %c0_113 = arith.constant 0 : index
    %c1_114 = arith.constant 1 : index
    %c0_115 = arith.constant 0 : index
    %136 = vector.load %arg10[%c0_112, %c0_113, %c1_114, %c0_115] : memref<1x1x2x128xf32, #tpu.memory_space<vmem>>, vector<1x1x1x128xf32>
    %137 = vector.shape_cast %136 : vector<1x1x1x128xf32> to vector<1x128xf32>
    %138 = vector.shape_cast %135 : vector<1x128xf32> to vector<1x1x1x128xf32>
    tpu.vector_store %arg10[%c0_112, %c0_113, %c1_114, %c0_115], %138 {strides = array<i32>} : memref<1x1x2x128xf32, #tpu.memory_space<vmem>>, vector<1x1x1x128xf32>,
    return
  }
  func.func @transform_0(%arg0: i32, %arg1: i32, %arg2: i32) -> (i32, i32, i32) {
    %c0_i32 = arith.constant 0 : i32
    %c0_i32_0 = arith.constant 0 : i32
    %c0_i32_1 = arith.constant 0 : i32
    return %arg0, %c0_i32, %c0_i32_0 : i32, i32, i32
  }
  func.func @transform_1(%arg0: i32, %arg1: i32, %arg2: i32) -> (i32, i32, i32) {
    %c0_i32 = arith.constant 0 : i32
    %c0_i32_0 = arith.constant 0 : i32
    %c0_i32_1 = arith.constant 0 : i32
    return %c0_i32, %c0_i32_0, %arg2 : i32, i32, i32
  }
  func.func @transform_2(%arg0: i32, %arg1: i32, %arg2: i32) -> (i32, i32) {
    %c0_i32 = arith.constant 0 : i32
    %c0_i32_0 = arith.constant 0 : i32
    return %arg1, %c0_i32 : i32, i32
  }
  func.func @transform_3(%arg0: i32, %arg1: i32, %arg2: i32) -> (i32, i32, i32) {
    %c0_i32 = arith.constant 0 : i32
    %c0_i32_0 = arith.constant 0 : i32
    %c0_i32_1 = arith.constant 0 : i32
    return %c0_i32, %c0_i32_0, %arg2 : i32, i32, i32
  }
  func.func @transform_4(%arg0: i32, %arg1: i32, %arg2: i32) -> (i32, i32, i32) {
    %c0_i32 = arith.constant 0 : i32
    return %arg0, %arg1, %arg2 : i32, i32, i32
  }
  func.func @transform_5(%arg0: i32, %arg1: i32, %arg2: i32) -> (i32, i32, i32, i32) {
    %c0_i32 = arith.constant 0 : i32
    %c0_i32_0 = arith.constant 0 : i32
    return %arg0, %arg1, %c0_i32, %arg2 : i32, i32, i32, i32
  }
  func.func @transform_6(%arg0: i32, %arg1: i32, %arg2: i32) -> (i32, i32, i32) {
    %c0_i32 = arith.constant 0 : i32
    return %arg0, %arg1, %arg2 : i32, i32, i32
  }
  func.func @transform_7(%arg0: i32, %arg1: i32, %arg2: i32) -> (i32, i32, i32, i32) {
    %c0_i32 = arith.constant 0 : i32
    %c0_i32_0 = arith.constant 0 : i32
    return %arg0, %arg1, %c0_i32, %arg2 : i32, i32, i32, i32
  }
}

module attributes {stable_mosaic.version = 11 : i64} {
  func.func @kernel(%arg0: i32, %arg1: i32, %arg2: memref<1x64x128xbf16, #tpu.memory_space<vmem>>, %arg3: memref<1x128xf32, #tpu.memory_space<vmem>>, %arg4: memref<1x128xf32, #tpu.memory_space<vmem>>, %arg5: memref<1x64x128xf32, #tpu.memory_space<vmem>>) attributes {dimension_semantics = [#tpu.dimension_semantics<parallel>, #tpu.dimension_semantics<parallel>], iteration_bounds = array<i64: 2, 1>, scalar_prefetch = 0 : i64, scratch_operands = 0 : i64, tpu.core_type = #tpu.core_type<tc>, window_params = [{transform_indices = @transform_0, window_bounds = array<i64: 1, 64, 128>}, {transform_indices = @transform_1, window_bounds = array<i64: 1, 128>}, {transform_indices = @transform_2, window_bounds = array<i64: 1, 128>}, {transform_indices = @transform_3, window_bounds = array<i64: 1, 64, 128>}]} {
    %c0 = arith.constant 0 : index
    %c0_0 = arith.constant 0 : index
    %c0_1 = arith.constant 0 : index
    %0 = vector.load %arg2[%c0, %c0_0, %c0_1] : memref<1x64x128xbf16, #tpu.memory_space<vmem>>, vector<1x64x128xbf16>
    %1 = vector.shape_cast %0 : vector<1x64x128xbf16> to vector<64x128xbf16>
    %2 = arith.extf %1 : vector<64x128xbf16> to vector<64x128xf32>
    %c0_2 = arith.constant 0 : index
    %c0_3 = arith.constant 0 : index
    %3 = vector.load %arg3[%c0_2, %c0_3] : memref<1x128xf32, #tpu.memory_space<vmem>>, vector<1x128xf32>
    %4 = vector.broadcast %3 : vector<1x128xf32> to vector<64x128xf32>
    %5 = arith.mulf %2, %4 : vector<64x128xf32>
    %c0_4 = arith.constant 0 : index
    %c0_5 = arith.constant 0 : index
    %6 = vector.load %arg4[%c0_4, %c0_5] : memref<1x128xf32, #tpu.memory_space<vmem>>, vector<1x128xf32>
    %7 = vector.broadcast %6 : vector<1x128xf32> to vector<64x128xf32>
    %8 = arith.addf %5, %7 : vector<64x128xf32>
    %cst = arith.constant 0.000000e+00 : f32
    %9 = vector.broadcast %cst : f32 to vector<64x128xf32>
    %10 = arith.maximumf %8, %9 : vector<64x128xf32>
    %c0_6 = arith.constant 0 : index
    %c0_7 = arith.constant 0 : index
    %c0_8 = arith.constant 0 : index
    %11 = vector.load %arg5[%c0_6, %c0_7, %c0_8] : memref<1x64x128xf32, #tpu.memory_space<vmem>>, vector<1x64x128xf32>
    %12 = vector.shape_cast %11 : vector<1x64x128xf32> to vector<64x128xf32>
    %13 = vector.shape_cast %10 : vector<64x128xf32> to vector<1x64x128xf32>
    tpu.vector_store %arg5[%c0_6, %c0_7, %c0_8], %13 {strides = array<i32>} : memref<1x64x128xf32, #tpu.memory_space<vmem>>, vector<1x64x128xf32>,
    return
  }
  func.func @transform_0(%arg0: i32, %arg1: i32) -> (i32, i32, i32) {
    %c0_i32 = arith.constant 0 : i32
    %c0_i32_0 = arith.constant 0 : i32
    return %arg0, %c0_i32, %arg1 : i32, i32, i32
  }
  func.func @transform_1(%arg0: i32, %arg1: i32) -> (i32, i32) {
    %c0_i32 = arith.constant 0 : i32
    %c0_i32_0 = arith.constant 0 : i32
    return %c0_i32, %arg1 : i32, i32
  }
  func.func @transform_2(%arg0: i32, %arg1: i32) -> (i32, i32) {
    %c0_i32 = arith.constant 0 : i32
    %c0_i32_0 = arith.constant 0 : i32
    return %c0_i32, %arg1 : i32, i32
  }
  func.func @transform_3(%arg0: i32, %arg1: i32) -> (i32, i32, i32) {
    %c0_i32 = arith.constant 0 : i32
    %c0_i32_0 = arith.constant 0 : i32
    return %arg0, %c0_i32, %arg1 : i32, i32, i32
  }
}

module attributes {stable_mosaic.version = 11 : i64} {
  func.func @kernel(%arg0: i32, %arg1: i32, %arg2: memref<1x64x128xbf16, #tpu.memory_space<vmem>>, %arg3: memref<1x128xf32, #tpu.memory_space<vmem>>, %arg4: memref<1x128xf32, #tpu.memory_space<vmem>>, %arg5: memref<1x64x128xbf16, #tpu.memory_space<vmem>>, %arg6: memref<1x128xf32, #tpu.memory_space<vmem>>, %arg7: memref<1x128xf32, #tpu.memory_space<vmem>>, %arg8: memref<1x64x128xf32, #tpu.memory_space<vmem>>) attributes {dimension_semantics = [#tpu.dimension_semantics<parallel>, #tpu.dimension_semantics<parallel>], iteration_bounds = array<i64: 2, 1>, scalar_prefetch = 0 : i64, scratch_operands = 0 : i64, tpu.core_type = #tpu.core_type<tc>, window_params = [{transform_indices = @transform_0, window_bounds = array<i64: 1, 64, 128>}, {transform_indices = @transform_1, window_bounds = array<i64: 1, 128>}, {transform_indices = @transform_2, window_bounds = array<i64: 1, 128>}, {transform_indices = @transform_3, window_bounds = array<i64: 1, 64, 128>}, {transform_indices = @transform_4, window_bounds = array<i64: 1, 128>}, {transform_indices = @transform_5, window_bounds = array<i64: 1, 128>}, {transform_indices = @transform_6, window_bounds = array<i64: 1, 64, 128>}]} {
    %c0 = arith.constant 0 : index
    %c0_0 = arith.constant 0 : index
    %c0_1 = arith.constant 0 : index
    %0 = vector.load %arg2[%c0, %c0_0, %c0_1] : memref<1x64x128xbf16, #tpu.memory_space<vmem>>, vector<1x64x128xbf16>
    %1 = vector.shape_cast %0 : vector<1x64x128xbf16> to vector<64x128xbf16>
    %2 = arith.extf %1 : vector<64x128xbf16> to vector<64x128xf32>
    %c0_2 = arith.constant 0 : index
    %c0_3 = arith.constant 0 : index
    %3 = vector.load %arg3[%c0_2, %c0_3] : memref<1x128xf32, #tpu.memory_space<vmem>>, vector<1x128xf32>
    %4 = vector.broadcast %3 : vector<1x128xf32> to vector<64x128xf32>
    %5 = arith.mulf %2, %4 : vector<64x128xf32>
    %c0_4 = arith.constant 0 : index
    %c0_5 = arith.constant 0 : index
    %6 = vector.load %arg4[%c0_4, %c0_5] : memref<1x128xf32, #tpu.memory_space<vmem>>, vector<1x128xf32>
    %7 = vector.broadcast %6 : vector<1x128xf32> to vector<64x128xf32>
    %8 = arith.addf %5, %7 : vector<64x128xf32>
    %c0_6 = arith.constant 0 : index
    %c0_7 = arith.constant 0 : index
    %c0_8 = arith.constant 0 : index
    %9 = vector.load %arg5[%c0_6, %c0_7, %c0_8] : memref<1x64x128xbf16, #tpu.memory_space<vmem>>, vector<1x64x128xbf16>
    %10 = vector.shape_cast %9 : vector<1x64x128xbf16> to vector<64x128xbf16>
    %11 = arith.extf %10 : vector<64x128xbf16> to vector<64x128xf32>
    %c0_9 = arith.constant 0 : index
    %c0_10 = arith.constant 0 : index
    %12 = vector.load %arg6[%c0_9, %c0_10] : memref<1x128xf32, #tpu.memory_space<vmem>>, vector<1x128xf32>
    %13 = vector.broadcast %12 : vector<1x128xf32> to vector<64x128xf32>
    %14 = arith.mulf %11, %13 : vector<64x128xf32>
    %15 = arith.addf %8, %14 : vector<64x128xf32>
    %c0_11 = arith.constant 0 : index
    %c0_12 = arith.constant 0 : index
    %16 = vector.load %arg7[%c0_11, %c0_12] : memref<1x128xf32, #tpu.memory_space<vmem>>, vector<1x128xf32>
    %17 = vector.broadcast %16 : vector<1x128xf32> to vector<64x128xf32>
    %18 = arith.addf %15, %17 : vector<64x128xf32>
    %cst = arith.constant 0.000000e+00 : f32
    %19 = vector.broadcast %cst : f32 to vector<64x128xf32>
    %20 = arith.maximumf %18, %19 : vector<64x128xf32>
    %c0_13 = arith.constant 0 : index
    %c0_14 = arith.constant 0 : index
    %c0_15 = arith.constant 0 : index
    %21 = vector.load %arg8[%c0_13, %c0_14, %c0_15] : memref<1x64x128xf32, #tpu.memory_space<vmem>>, vector<1x64x128xf32>
    %22 = vector.shape_cast %21 : vector<1x64x128xf32> to vector<64x128xf32>
    %23 = vector.shape_cast %20 : vector<64x128xf32> to vector<1x64x128xf32>
    tpu.vector_store %arg8[%c0_13, %c0_14, %c0_15], %23 {strides = array<i32>} : memref<1x64x128xf32, #tpu.memory_space<vmem>>, vector<1x64x128xf32>,
    return
  }
  func.func @transform_0(%arg0: i32, %arg1: i32) -> (i32, i32, i32) {
    %c0_i32 = arith.constant 0 : i32
    %c0_i32_0 = arith.constant 0 : i32
    return %arg0, %c0_i32, %arg1 : i32, i32, i32
  }
  func.func @transform_1(%arg0: i32, %arg1: i32) -> (i32, i32) {
    %c0_i32 = arith.constant 0 : i32
    %c0_i32_0 = arith.constant 0 : i32
    return %c0_i32, %arg1 : i32, i32
  }
  func.func @transform_2(%arg0: i32, %arg1: i32) -> (i32, i32) {
    %c0_i32 = arith.constant 0 : i32
    %c0_i32_0 = arith.constant 0 : i32
    return %c0_i32, %arg1 : i32, i32
  }
  func.func @transform_3(%arg0: i32, %arg1: i32) -> (i32, i32, i32) {
    %c0_i32 = arith.constant 0 : i32
    %c0_i32_0 = arith.constant 0 : i32
    return %arg0, %c0_i32, %arg1 : i32, i32, i32
  }
  func.func @transform_4(%arg0: i32, %arg1: i32) -> (i32, i32) {
    %c0_i32 = arith.constant 0 : i32
    %c0_i32_0 = arith.constant 0 : i32
    return %c0_i32, %arg1 : i32, i32
  }
  func.func @transform_5(%arg0: i32, %arg1: i32) -> (i32, i32) {
    %c0_i32 = arith.constant 0 : i32
    %c0_i32_0 = arith.constant 0 : i32
    return %c0_i32, %arg1 : i32, i32
  }
  func.func @transform_6(%arg0: i32, %arg1: i32) -> (i32, i32, i32) {
    %c0_i32 = arith.constant 0 : i32
    %c0_i32_0 = arith.constant 0 : i32
    return %arg0, %c0_i32, %arg1 : i32, i32, i32
  }
}

module attributes {stable_mosaic.version = 11 : i64} {
  func.func @kernel(%arg0: i32, %arg1: i32, %arg2: i32, %arg3: memref<1x102x128xf32, #tpu.memory_space<vmem>>, %arg4: memref<9x128x128xbf16, #tpu.memory_space<vmem>>, %arg5: memref<80x1xf32, #tpu.memory_space<vmem>>, %arg6: memref<1x80x128xbf16, #tpu.memory_space<vmem>>, %arg7: memref<1x1x2x128xf32, #tpu.memory_space<vmem>>, %arg8: memref<80x128xf32, #tpu.memory_space<vmem>>) attributes {dimension_semantics = [#tpu.dimension_semantics<parallel>, #tpu.dimension_semantics<parallel>, #tpu.dimension_semantics<parallel>], iteration_bounds = array<i64: 2, 1, 1>, scalar_prefetch = 0 : i64, scratch_operands = 1 : i64, tpu.core_type = #tpu.core_type<tc>, window_params = [{transform_indices = @transform_0, window_bounds = array<i64: 1, 102, 128>}, {transform_indices = @transform_1, window_bounds = array<i64: 9, 128, 128>}, {transform_indices = @transform_2, window_bounds = array<i64: 80, 1>}, {transform_indices = @transform_3, window_bounds = array<i64: 1, 80, 128>}, {transform_indices = @transform_4, window_bounds = array<i64: 1, 1, 2, 128>}]} {
    %c80_i32 = arith.constant 80 : i32
    %0 = arith.muli %arg1, %c80_i32 : i32
    %c0_i32 = arith.constant 0 : i32
    %1 = arith.addi %0, %c0_i32 : i32
    %c0 = arith.constant 0 : index
    %2 = arith.index_cast %1 : i32 to index
    %c0_0 = arith.constant 0 : index
    %3 = vector.load %arg3[%c0, %2, %c0_0] : memref<1x102x128xf32, #tpu.memory_space<vmem>>, vector<1x80x128xf32>
    %4 = vector.shape_cast %3 : vector<1x80x128xf32> to vector<80x128xf32>
    %5 = arith.truncf %4 : vector<80x128xf32> to vector<80x128xbf16>
    %c0_1 = arith.constant 0 : index
    %c0_2 = arith.constant 0 : index
    %c0_3 = arith.constant 0 : index
    %6 = vector.load %arg4[%c0_1, %c0_2, %c0_3] : memref<9x128x128xbf16, #tpu.memory_space<vmem>>, vector<1x128x128xbf16>
    %7 = vector.shape_cast %6 : vector<1x128x128xbf16> to vector<128x128xbf16>
    %cst = arith.constant dense<0.000000e+00> : vector<80x128xf32>
    %8 = tpu.matmul %5, %7, %cst {dimension_numbers = #tpu.dot_dimension_numbers<[1], [0], [0], [1], [0, 0, 1, 1], [], []>} : vector<80x128xbf16>, vector<128x128xbf16>, vector<80x128xf32> -> vector<80x128xf32>
    %c0_4 = arith.constant 0 : index
    %c0_5 = arith.constant 0 : index
    %9 = vector.load %arg8[%c0_4, %c0_5] : memref<80x128xf32, #tpu.memory_space<vmem>>, vector<80x128xf32>
    tpu.vector_store %arg8[%c0_4, %c0_5], %8 {strides = array<i32>} : memref<80x128xf32, #tpu.memory_space<vmem>>, vector<80x128xf32>,
    %c1_i32 = arith.constant 1 : i32
    %10 = arith.addi %0, %c1_i32 : i32
    %c0_6 = arith.constant 0 : index
    %11 = arith.index_cast %10 : i32 to index
    %c0_7 = arith.constant 0 : index
    %12 = vector.load %arg3[%c0_6, %11, %c0_7] : memref<1x102x128xf32, #tpu.memory_space<vmem>>, vector<1x80x128xf32>
    %13 = vector.shape_cast %12 : vector<1x80x128xf32> to vector<80x128xf32>
    %14 = arith.truncf %13 : vector<80x128xf32> to vector<80x128xbf16>
    %c1 = arith.constant 1 : index
    %c0_8 = arith.constant 0 : index
    %c0_9 = arith.constant 0 : index
    %15 = vector.load %arg4[%c1, %c0_8, %c0_9] : memref<9x128x128xbf16, #tpu.memory_space<vmem>>, vector<1x128x128xbf16>
    %16 = vector.shape_cast %15 : vector<1x128x128xbf16> to vector<128x128xbf16>
    %cst_10 = arith.constant dense<0.000000e+00> : vector<80x128xf32>
    %17 = tpu.matmul %14, %16, %cst_10 {dimension_numbers = #tpu.dot_dimension_numbers<[1], [0], [0], [1], [0, 0, 1, 1], [], []>} : vector<80x128xbf16>, vector<128x128xbf16>, vector<80x128xf32> -> vector<80x128xf32>
    %c0_11 = arith.constant 0 : index
    %c0_12 = arith.constant 0 : index
    %18 = vector.load %arg8[%c0_11, %c0_12] : memref<80x128xf32, #tpu.memory_space<vmem>>, vector<80x128xf32>
    %19 = arith.addf %18, %17 : vector<80x128xf32>
    %c0_13 = arith.constant 0 : index
    %c0_14 = arith.constant 0 : index
    %20 = vector.load %arg8[%c0_13, %c0_14] : memref<80x128xf32, #tpu.memory_space<vmem>>, vector<80x128xf32>
    tpu.vector_store %arg8[%c0_13, %c0_14], %19 {strides = array<i32>} : memref<80x128xf32, #tpu.memory_space<vmem>>, vector<80x128xf32>,
    %c2_i32 = arith.constant 2 : i32
    %21 = arith.addi %0, %c2_i32 : i32
    %c0_15 = arith.constant 0 : index
    %22 = arith.index_cast %21 : i32 to index
    %c0_16 = arith.constant 0 : index
    %23 = vector.load %arg3[%c0_15, %22, %c0_16] : memref<1x102x128xf32, #tpu.memory_space<vmem>>, vector<1x80x128xf32>
    %24 = vector.shape_cast %23 : vector<1x80x128xf32> to vector<80x128xf32>
    %25 = arith.truncf %24 : vector<80x128xf32> to vector<80x128xbf16>
    %c2 = arith.constant 2 : index
    %c0_17 = arith.constant 0 : index
    %c0_18 = arith.constant 0 : index
    %26 = vector.load %arg4[%c2, %c0_17, %c0_18] : memref<9x128x128xbf16, #tpu.memory_space<vmem>>, vector<1x128x128xbf16>
    %27 = vector.shape_cast %26 : vector<1x128x128xbf16> to vector<128x128xbf16>
    %cst_19 = arith.constant dense<0.000000e+00> : vector<80x128xf32>
    %28 = tpu.matmul %25, %27, %cst_19 {dimension_numbers = #tpu.dot_dimension_numbers<[1], [0], [0], [1], [0, 0, 1, 1], [], []>} : vector<80x128xbf16>, vector<128x128xbf16>, vector<80x128xf32> -> vector<80x128xf32>
    %c0_20 = arith.constant 0 : index
    %c0_21 = arith.constant 0 : index
    %29 = vector.load %arg8[%c0_20, %c0_21] : memref<80x128xf32, #tpu.memory_space<vmem>>, vector<80x128xf32>
    %30 = arith.addf %29, %28 : vector<80x128xf32>
    %c0_22 = arith.constant 0 : index
    %c0_23 = arith.constant 0 : index
    %31 = vector.load %arg8[%c0_22, %c0_23] : memref<80x128xf32, #tpu.memory_space<vmem>>, vector<80x128xf32>
    tpu.vector_store %arg8[%c0_22, %c0_23], %30 {strides = array<i32>} : memref<80x128xf32, #tpu.memory_space<vmem>>, vector<80x128xf32>,
    %c10_i32 = arith.constant 10 : i32
    %32 = arith.addi %0, %c10_i32 : i32
    %c0_24 = arith.constant 0 : index
    %33 = arith.index_cast %32 : i32 to index
    %c0_25 = arith.constant 0 : index
    %34 = vector.load %arg3[%c0_24, %33, %c0_25] : memref<1x102x128xf32, #tpu.memory_space<vmem>>, vector<1x80x128xf32>
    %35 = vector.shape_cast %34 : vector<1x80x128xf32> to vector<80x128xf32>
    %36 = arith.truncf %35 : vector<80x128xf32> to vector<80x128xbf16>
    %c3 = arith.constant 3 : index
    %c0_26 = arith.constant 0 : index
    %c0_27 = arith.constant 0 : index
    %37 = vector.load %arg4[%c3, %c0_26, %c0_27] : memref<9x128x128xbf16, #tpu.memory_space<vmem>>, vector<1x128x128xbf16>
    %38 = vector.shape_cast %37 : vector<1x128x128xbf16> to vector<128x128xbf16>
    %cst_28 = arith.constant dense<0.000000e+00> : vector<80x128xf32>
    %39 = tpu.matmul %36, %38, %cst_28 {dimension_numbers = #tpu.dot_dimension_numbers<[1], [0], [0], [1], [0, 0, 1, 1], [], []>} : vector<80x128xbf16>, vector<128x128xbf16>, vector<80x128xf32> -> vector<80x128xf32>
    %c0_29 = arith.constant 0 : index
    %c0_30 = arith.constant 0 : index
    %40 = vector.load %arg8[%c0_29, %c0_30] : memref<80x128xf32, #tpu.memory_space<vmem>>, vector<80x128xf32>
    %41 = arith.addf %40, %39 : vector<80x128xf32>
    %c0_31 = arith.constant 0 : index
    %c0_32 = arith.constant 0 : index
    %42 = vector.load %arg8[%c0_31, %c0_32] : memref<80x128xf32, #tpu.memory_space<vmem>>, vector<80x128xf32>
    tpu.vector_store %arg8[%c0_31, %c0_32], %41 {strides = array<i32>} : memref<80x128xf32, #tpu.memory_space<vmem>>, vector<80x128xf32>,
    %c11_i32 = arith.constant 11 : i32
    %43 = arith.addi %0, %c11_i32 : i32
    %c0_33 = arith.constant 0 : index
    %44 = arith.index_cast %43 : i32 to index
    %c0_34 = arith.constant 0 : index
    %45 = vector.load %arg3[%c0_33, %44, %c0_34] : memref<1x102x128xf32, #tpu.memory_space<vmem>>, vector<1x80x128xf32>
    %46 = vector.shape_cast %45 : vector<1x80x128xf32> to vector<80x128xf32>
    %47 = arith.truncf %46 : vector<80x128xf32> to vector<80x128xbf16>
    %c4 = arith.constant 4 : index
    %c0_35 = arith.constant 0 : index
    %c0_36 = arith.constant 0 : index
    %48 = vector.load %arg4[%c4, %c0_35, %c0_36] : memref<9x128x128xbf16, #tpu.memory_space<vmem>>, vector<1x128x128xbf16>
    %49 = vector.shape_cast %48 : vector<1x128x128xbf16> to vector<128x128xbf16>
    %cst_37 = arith.constant dense<0.000000e+00> : vector<80x128xf32>
    %50 = tpu.matmul %47, %49, %cst_37 {dimension_numbers = #tpu.dot_dimension_numbers<[1], [0], [0], [1], [0, 0, 1, 1], [], []>} : vector<80x128xbf16>, vector<128x128xbf16>, vector<80x128xf32> -> vector<80x128xf32>
    %c0_38 = arith.constant 0 : index
    %c0_39 = arith.constant 0 : index
    %51 = vector.load %arg8[%c0_38, %c0_39] : memref<80x128xf32, #tpu.memory_space<vmem>>, vector<80x128xf32>
    %52 = arith.addf %51, %50 : vector<80x128xf32>
    %c0_40 = arith.constant 0 : index
    %c0_41 = arith.constant 0 : index
    %53 = vector.load %arg8[%c0_40, %c0_41] : memref<80x128xf32, #tpu.memory_space<vmem>>, vector<80x128xf32>
    tpu.vector_store %arg8[%c0_40, %c0_41], %52 {strides = array<i32>} : memref<80x128xf32, #tpu.memory_space<vmem>>, vector<80x128xf32>,
    %c12_i32 = arith.constant 12 : i32
    %54 = arith.addi %0, %c12_i32 : i32
    %c0_42 = arith.constant 0 : index
    %55 = arith.index_cast %54 : i32 to index
    %c0_43 = arith.constant 0 : index
    %56 = vector.load %arg3[%c0_42, %55, %c0_43] : memref<1x102x128xf32, #tpu.memory_space<vmem>>, vector<1x80x128xf32>
    %57 = vector.shape_cast %56 : vector<1x80x128xf32> to vector<80x128xf32>
    %58 = arith.truncf %57 : vector<80x128xf32> to vector<80x128xbf16>
    %c5 = arith.constant 5 : index
    %c0_44 = arith.constant 0 : index
    %c0_45 = arith.constant 0 : index
    %59 = vector.load %arg4[%c5, %c0_44, %c0_45] : memref<9x128x128xbf16, #tpu.memory_space<vmem>>, vector<1x128x128xbf16>
    %60 = vector.shape_cast %59 : vector<1x128x128xbf16> to vector<128x128xbf16>
    %cst_46 = arith.constant dense<0.000000e+00> : vector<80x128xf32>
    %61 = tpu.matmul %58, %60, %cst_46 {dimension_numbers = #tpu.dot_dimension_numbers<[1], [0], [0], [1], [0, 0, 1, 1], [], []>} : vector<80x128xbf16>, vector<128x128xbf16>, vector<80x128xf32> -> vector<80x128xf32>
    %c0_47 = arith.constant 0 : index
    %c0_48 = arith.constant 0 : index
    %62 = vector.load %arg8[%c0_47, %c0_48] : memref<80x128xf32, #tpu.memory_space<vmem>>, vector<80x128xf32>
    %63 = arith.addf %62, %61 : vector<80x128xf32>
    %c0_49 = arith.constant 0 : index
    %c0_50 = arith.constant 0 : index
    %64 = vector.load %arg8[%c0_49, %c0_50] : memref<80x128xf32, #tpu.memory_space<vmem>>, vector<80x128xf32>
    tpu.vector_store %arg8[%c0_49, %c0_50], %63 {strides = array<i32>} : memref<80x128xf32, #tpu.memory_space<vmem>>, vector<80x128xf32>,
    %c20_i32 = arith.constant 20 : i32
    %65 = arith.addi %0, %c20_i32 : i32
    %c0_51 = arith.constant 0 : index
    %66 = arith.index_cast %65 : i32 to index
    %c0_52 = arith.constant 0 : index
    %67 = vector.load %arg3[%c0_51, %66, %c0_52] : memref<1x102x128xf32, #tpu.memory_space<vmem>>, vector<1x80x128xf32>
    %68 = vector.shape_cast %67 : vector<1x80x128xf32> to vector<80x128xf32>
    %69 = arith.truncf %68 : vector<80x128xf32> to vector<80x128xbf16>
    %c6 = arith.constant 6 : index
    %c0_53 = arith.constant 0 : index
    %c0_54 = arith.constant 0 : index
    %70 = vector.load %arg4[%c6, %c0_53, %c0_54] : memref<9x128x128xbf16, #tpu.memory_space<vmem>>, vector<1x128x128xbf16>
    %71 = vector.shape_cast %70 : vector<1x128x128xbf16> to vector<128x128xbf16>
    %cst_55 = arith.constant dense<0.000000e+00> : vector<80x128xf32>
    %72 = tpu.matmul %69, %71, %cst_55 {dimension_numbers = #tpu.dot_dimension_numbers<[1], [0], [0], [1], [0, 0, 1, 1], [], []>} : vector<80x128xbf16>, vector<128x128xbf16>, vector<80x128xf32> -> vector<80x128xf32>
    %c0_56 = arith.constant 0 : index
    %c0_57 = arith.constant 0 : index
    %73 = vector.load %arg8[%c0_56, %c0_57] : memref<80x128xf32, #tpu.memory_space<vmem>>, vector<80x128xf32>
    %74 = arith.addf %73, %72 : vector<80x128xf32>
    %c0_58 = arith.constant 0 : index
    %c0_59 = arith.constant 0 : index
    %75 = vector.load %arg8[%c0_58, %c0_59] : memref<80x128xf32, #tpu.memory_space<vmem>>, vector<80x128xf32>
    tpu.vector_store %arg8[%c0_58, %c0_59], %74 {strides = array<i32>} : memref<80x128xf32, #tpu.memory_space<vmem>>, vector<80x128xf32>,
    %c21_i32 = arith.constant 21 : i32
    %76 = arith.addi %0, %c21_i32 : i32
    %c0_60 = arith.constant 0 : index
    %77 = arith.index_cast %76 : i32 to index
    %c0_61 = arith.constant 0 : index
    %78 = vector.load %arg3[%c0_60, %77, %c0_61] : memref<1x102x128xf32, #tpu.memory_space<vmem>>, vector<1x80x128xf32>
    %79 = vector.shape_cast %78 : vector<1x80x128xf32> to vector<80x128xf32>
    %80 = arith.truncf %79 : vector<80x128xf32> to vector<80x128xbf16>
    %c7 = arith.constant 7 : index
    %c0_62 = arith.constant 0 : index
    %c0_63 = arith.constant 0 : index
    %81 = vector.load %arg4[%c7, %c0_62, %c0_63] : memref<9x128x128xbf16, #tpu.memory_space<vmem>>, vector<1x128x128xbf16>
    %82 = vector.shape_cast %81 : vector<1x128x128xbf16> to vector<128x128xbf16>
    %cst_64 = arith.constant dense<0.000000e+00> : vector<80x128xf32>
    %83 = tpu.matmul %80, %82, %cst_64 {dimension_numbers = #tpu.dot_dimension_numbers<[1], [0], [0], [1], [0, 0, 1, 1], [], []>} : vector<80x128xbf16>, vector<128x128xbf16>, vector<80x128xf32> -> vector<80x128xf32>
    %c0_65 = arith.constant 0 : index
    %c0_66 = arith.constant 0 : index
    %84 = vector.load %arg8[%c0_65, %c0_66] : memref<80x128xf32, #tpu.memory_space<vmem>>, vector<80x128xf32>
    %85 = arith.addf %84, %83 : vector<80x128xf32>
    %c0_67 = arith.constant 0 : index
    %c0_68 = arith.constant 0 : index
    %86 = vector.load %arg8[%c0_67, %c0_68] : memref<80x128xf32, #tpu.memory_space<vmem>>, vector<80x128xf32>
    tpu.vector_store %arg8[%c0_67, %c0_68], %85 {strides = array<i32>} : memref<80x128xf32, #tpu.memory_space<vmem>>, vector<80x128xf32>,
    %c22_i32 = arith.constant 22 : i32
    %87 = arith.addi %0, %c22_i32 : i32
    %c0_69 = arith.constant 0 : index
    %88 = arith.index_cast %87 : i32 to index
    %c0_70 = arith.constant 0 : index
    %89 = vector.load %arg3[%c0_69, %88, %c0_70] : memref<1x102x128xf32, #tpu.memory_space<vmem>>, vector<1x80x128xf32>
    %90 = vector.shape_cast %89 : vector<1x80x128xf32> to vector<80x128xf32>
    %91 = arith.truncf %90 : vector<80x128xf32> to vector<80x128xbf16>
    %c8 = arith.constant 8 : index
    %c0_71 = arith.constant 0 : index
    %c0_72 = arith.constant 0 : index
    %92 = vector.load %arg4[%c8, %c0_71, %c0_72] : memref<9x128x128xbf16, #tpu.memory_space<vmem>>, vector<1x128x128xbf16>
    %93 = vector.shape_cast %92 : vector<1x128x128xbf16> to vector<128x128xbf16>
    %cst_73 = arith.constant dense<0.000000e+00> : vector<80x128xf32>
    %94 = tpu.matmul %91, %93, %cst_73 {dimension_numbers = #tpu.dot_dimension_numbers<[1], [0], [0], [1], [0, 0, 1, 1], [], []>} : vector<80x128xbf16>, vector<128x128xbf16>, vector<80x128xf32> -> vector<80x128xf32>
    %c0_74 = arith.constant 0 : index
    %c0_75 = arith.constant 0 : index
    %95 = vector.load %arg8[%c0_74, %c0_75] : memref<80x128xf32, #tpu.memory_space<vmem>>, vector<80x128xf32>
    %96 = arith.addf %95, %94 : vector<80x128xf32>
    %c0_76 = arith.constant 0 : index
    %c0_77 = arith.constant 0 : index
    %97 = vector.load %arg8[%c0_76, %c0_77] : memref<80x128xf32, #tpu.memory_space<vmem>>, vector<80x128xf32>
    tpu.vector_store %arg8[%c0_76, %c0_77], %96 {strides = array<i32>} : memref<80x128xf32, #tpu.memory_space<vmem>>, vector<80x128xf32>,
    %c0_78 = arith.constant 0 : index
    %c0_79 = arith.constant 0 : index
    %98 = vector.load %arg5[%c0_78, %c0_79] : memref<80x1xf32, #tpu.memory_space<vmem>>, vector<80x1xf32>
    %c0_80 = arith.constant 0 : index
    %c0_81 = arith.constant 0 : index
    %99 = vector.load %arg8[%c0_80, %c0_81] : memref<80x128xf32, #tpu.memory_space<vmem>>, vector<80x128xf32>
    %100 = vector.broadcast %98 : vector<80x1xf32> to vector<80x128xf32>
    %101 = arith.mulf %99, %100 : vector<80x128xf32>
    %102 = arith.truncf %101 : vector<80x128xf32> to vector<80x128xbf16>
    %c0_82 = arith.constant 0 : index
    %c0_83 = arith.constant 0 : index
    %c0_84 = arith.constant 0 : index
    %103 = vector.load %arg6[%c0_82, %c0_83, %c0_84] : memref<1x80x128xbf16, #tpu.memory_space<vmem>>, vector<1x80x128xbf16>
    %104 = vector.shape_cast %103 : vector<1x80x128xbf16> to vector<80x128xbf16>
    %105 = vector.shape_cast %102 : vector<80x128xbf16> to vector<1x80x128xbf16>
    tpu.vector_store %arg6[%c0_82, %c0_83, %c0_84], %105 {strides = array<i32>} : memref<1x80x128xbf16, #tpu.memory_space<vmem>>, vector<1x80x128xbf16>,
    %cst_85 = arith.constant dense<0.000000e+00> : vector<128xf32>
    %106 = vector.multi_reduction <add>, %101, %cst_85 [0] : vector<80x128xf32> to vector<128xf32>
    %107 = vector.shape_cast %106 : vector<128xf32> to vector<1x128xf32>
    %c0_86 = arith.constant 0 : index
    %c0_87 = arith.constant 0 : index
    %c0_88 = arith.constant 0 : index
    %c0_89 = arith.constant 0 : index
    %108 = vector.load %arg7[%c0_86, %c0_87, %c0_88, %c0_89] : memref<1x1x2x128xf32, #tpu.memory_space<vmem>>, vector<1x1x1x128xf32>
    %109 = vector.shape_cast %108 : vector<1x1x1x128xf32> to vector<1x128xf32>
    %110 = vector.shape_cast %107 : vector<1x128xf32> to vector<1x1x1x128xf32>
    tpu.vector_store %arg7[%c0_86, %c0_87, %c0_88, %c0_89], %110 {strides = array<i32>} : memref<1x1x2x128xf32, #tpu.memory_space<vmem>>, vector<1x1x1x128xf32>,
    %111 = arith.mulf %101, %101 : vector<80x128xf32>
    %cst_90 = arith.constant dense<0.000000e+00> : vector<128xf32>
    %112 = vector.multi_reduction <add>, %111, %cst_90 [0] : vector<80x128xf32> to vector<128xf32>
    %113 = vector.shape_cast %112 : vector<128xf32> to vector<1x128xf32>
    %c0_91 = arith.constant 0 : index
    %c0_92 = arith.constant 0 : index
    %c1_93 = arith.constant 1 : index
    %c0_94 = arith.constant 0 : index
    %114 = vector.load %arg7[%c0_91, %c0_92, %c1_93, %c0_94] : memref<1x1x2x128xf32, #tpu.memory_space<vmem>>, vector<1x1x1x128xf32>
    %115 = vector.shape_cast %114 : vector<1x1x1x128xf32> to vector<1x128xf32>
    %116 = vector.shape_cast %113 : vector<1x128xf32> to vector<1x1x1x128xf32>
    tpu.vector_store %arg7[%c0_91, %c0_92, %c1_93, %c0_94], %116 {strides = array<i32>} : memref<1x1x2x128xf32, #tpu.memory_space<vmem>>, vector<1x1x1x128xf32>,
    return
  }
  func.func @transform_0(%arg0: i32, %arg1: i32, %arg2: i32) -> (i32, i32, i32) {
    %c0_i32 = arith.constant 0 : i32
    %c0_i32_0 = arith.constant 0 : i32
    %c0_i32_1 = arith.constant 0 : i32
    return %arg0, %c0_i32, %c0_i32_0 : i32, i32, i32
  }
  func.func @transform_1(%arg0: i32, %arg1: i32, %arg2: i32) -> (i32, i32, i32) {
    %c0_i32 = arith.constant 0 : i32
    %c0_i32_0 = arith.constant 0 : i32
    %c0_i32_1 = arith.constant 0 : i32
    return %c0_i32, %c0_i32_0, %arg2 : i32, i32, i32
  }
  func.func @transform_2(%arg0: i32, %arg1: i32, %arg2: i32) -> (i32, i32) {
    %c0_i32 = arith.constant 0 : i32
    %c0_i32_0 = arith.constant 0 : i32
    return %arg1, %c0_i32 : i32, i32
  }
  func.func @transform_3(%arg0: i32, %arg1: i32, %arg2: i32) -> (i32, i32, i32) {
    %c0_i32 = arith.constant 0 : i32
    return %arg0, %arg1, %arg2 : i32, i32, i32
  }
  func.func @transform_4(%arg0: i32, %arg1: i32, %arg2: i32) -> (i32, i32, i32, i32) {
    %c0_i32 = arith.constant 0 : i32
    %c0_i32_0 = arith.constant 0 : i32
    return %arg0, %arg1, %c0_i32, %arg2 : i32, i32, i32, i32
  }
}

</mosaic_0001>

<llo_original>
// kernel: basic_block_pallas.5
$region0: #{basic_block_pallas.5}
  #allocation0 [shape = 'u32[]', space=smem, size = 0x4, offset = 0x4, fixed_abs, tag = 'smem constant byte address 0x4 - core index']
  #allocation1 [shape = 'u32[72,128]{1,0:T(1,128)}', space=vmem, size = 0x9000, scoped, tag = 'internal scratch']
  %s0 = inlined_call_operand.vmem [shape: bf16[2,64,128], index: 0, kind: input, shape index: {}]
  %s1 = inlined_call_operand.vmem [shape: f32[1,128], index: 1, kind: input, shape index: {}]
  %s2 = inlined_call_operand.vmem [shape: f32[1,128], index: 2, kind: input, shape index: {}]
  %s3 = inlined_call_operand.vmem [shape: f32[2,64,128], index: 3, kind: output, shape index: {}]
  %s4 = sld [smem:[#allocation0]]
  $region45: #{basic_block_pallas.5} parent=0
    _
  %s6 = ssub.s32 1, %s4
  %s7 = scalar_select 0, %s6, %s4
  loop: start=0, step=1, limit=4
  $region2: #{basic_block_pallas.5} parent=0 // loop_pre_header
    _
  $region3: #{basic_block_pallas.5} parent=0 // loop_header
    %s9 = sphi 0, %s13
    %p10 = scmp.ge.s32.totalorder %s9, 4
    %s16 = sphi 0, %s28
    %s17 = sphi 0, %s24
    %s18 = sphi 0, %s16
    %s19 = sphi 0, %s17
    %s20 = sphi 0, %s18
    %s21 = sphi 0, %s19
    %s33 = sphi 0, %s35
    %s36 = sphi 0, %s33
    %s37 = sphi 0, %s36
    %s53 = sphi 0, %s37
    %s59 = sphi 0, %s61
    %s62 = sphi 0, %s59
    %s63 = sphi 0, %s62
    %s79 = sphi 0, %s63
    %s85 = sphi 0, %s87
    %s88 = sphi 0, %s85
    %s89 = sphi 0, %s88
    %s105 = sphi 0, %s89
    %s113 = sphi 0, %s115
    %s116 = sphi 0, %s113
    %s117 = sphi 0, %s116
    %s133 = sphi 0, %s117
  $region4: #{basic_block_pallas.5} parent=0 // loop_header_branch
    %12 = sbr.rel (%p10) target = $region8
  $region5: #{basic_block_pallas.5} parent=0 // loop_body
    %s14 = ssub.s32 %s9, 1
    %s15 = ssub.s32 %s9, 2
    %s22 = sadd.s32 1, %s17
    %p23 = scmp.ge.s32.totalorder %s22, 1
    %s24 = scalar_select %p23, 0, %s22
    %s25 = sadd.s32 1, %s16
    %s26 = scalar_select %p23, %s25, %s16
    %p27 = scmp.ge.s32.totalorder %s26, 2
    %s28 = scalar_select %p27, 0, %s26
    %s29 = ssub.s32 %s16, %s28
    %s30 = ssub.s32 %s17, %s24
    %s31 = sor.u32 %s29, %s30
    %p32 = scmp.eq.s32.totalorder %s31, 0
    %s34 = sadd.s32 %s33, 1
    %s35 = scalar_select %p32, %s33, %s34
    %p38 = pneg %p32
    %p39 = scmp.eq.s32.totalorder %s9, 1
    %p40 = por %p38, %p39
    %p41 = scmp.ne.s32.totalorder %s33, %s36
    %p42 = scmp.eq.s32.totalorder %s9, 0
    %p43 = por %p41, %p42
    %p44 = scmp.ne.s32.totalorder %s33, %s36
    %p45 = scmp.eq.s32.totalorder %s14, 1
    %p46 = por %p44, %p45
    %p47 = scmp.ne.s32.totalorder %s36, %s37
    %p48 = scmp.eq.s32.totalorder %s14, 0
    %p49 = por %p47, %p48
    %p50 = scmp.ne.s32.totalorder %s36, %s37
    %p51 = scmp.eq.s32.totalorder %s15, 1
    %p52 = por %p50, %p51
    %p54 = scmp.ne.s32.totalorder %s37, %s53
    %p55 = scmp.eq.s32.totalorder %s15, 0
    %p56 = por %p54, %p55
    %s57 = ssub.s32 %s17, %s24
    %p58 = scmp.eq.s32.totalorder %s57, 0
    %s60 = sadd.s32 %s59, 1
    %s61 = scalar_select %p58, %s59, %s60
    %p64 = pneg %p58
    %p65 = scmp.eq.s32.totalorder %s9, 1
    %p66 = por %p64, %p65
    %p67 = scmp.ne.s32.totalorder %s59, %s62
    %p68 = scmp.eq.s32.totalorder %s9, 0
    %p69 = por %p67, %p68
    %p70 = scmp.ne.s32.totalorder %s59, %s62
    %p71 = scmp.eq.s32.totalorder %s14, 1
    %p72 = por %p70, %p71
    %p73 = scmp.ne.s32.totalorder %s62, %s63
    %p74 = scmp.eq.s32.totalorder %s14, 0
    %p75 = por %p73, %p74
    %p76 = scmp.ne.s32.totalorder %s62, %s63
    %p77 = scmp.eq.s32.totalorder %s15, 1
    %p78 = por %p76, %p77
    %p80 = scmp.ne.s32.totalorder %s63, %s79
    %p81 = scmp.eq.s32.totalorder %s15, 0
    %p82 = por %p80, %p81
    %s83 = ssub.s32 %s17, %s24
    %p84 = scmp.eq.s32.totalorder %s83, 0
    %s86 = sadd.s32 %s85, 1
    %s87 = scalar_select %p84, %s85, %s86
    %p90 = pneg %p84
    %p91 = scmp.eq.s32.totalorder %s9, 1
    %p92 = por %p90, %p91
    %p93 = scmp.ne.s32.totalorder %s85, %s88
    %p94 = scmp.eq.s32.totalorder %s9, 0
    %p95 = por %p93, %p94
    %p96 = scmp.ne.s32.totalorder %s85, %s88
    %p97 = scmp.eq.s32.totalorder %s14, 1
    %p98 = por %p96, %p97
    %p99 = scmp.ne.s32.totalorder %s88, %s89
    %p100 = scmp.eq.s32.totalorder %s14, 0
    %p101 = por %p99, %p100
    %p102 = scmp.ne.s32.totalorder %s88, %s89
    %p103 = scmp.eq.s32.totalorder %s15, 1
    %p104 = por %p102, %p103
    %p106 = scmp.ne.s32.totalorder %s89, %s105
    %p107 = scmp.eq.s32.totalorder %s15, 0
    %p108 = por %p106, %p107
    %s109 = ssub.s32 %s16, %s28
    %s110 = ssub.s32 %s17, %s24
    %s111 = sor.u32 %s109, %s110
    %p112 = scmp.eq.s32.totalorder %s111, 0
    %s114 = sadd.s32 %s113, 1
    %s115 = scalar_select %p112, %s113, %s114
    %p118 = pneg %p112
    %p119 = scmp.eq.s32.totalorder %s9, 1
    %p120 = por %p118, %p119
    %p121 = scmp.ne.s32.totalorder %s113, %s116
    %p122 = scmp.eq.s32.totalorder %s9, 0
    %p123 = por %p121, %p122
    %p124 = scmp.ne.s32.totalorder %s113, %s116
    %p125 = scmp.eq.s32.totalorder %s14, 1
    %p126 = por %p124, %p125
    %p127 = scmp.ne.s32.totalorder %s116, %s117
    %p128 = scmp.eq.s32.totalorder %s14, 0
    %p129 = por %p127, %p128
    %p130 = scmp.ne.s32.totalorder %s116, %s117
    %p131 = scmp.eq.s32.totalorder %s15, 1
    %p132 = por %p130, %p131
    %p134 = scmp.ne.s32.totalorder %s117, %s133
    %p135 = scmp.eq.s32.totalorder %s15, 0
    %p136 = por %p134, %p135
    %p137 = scmp.le.s32.totalorder 1, %s9
    %p138 = scmp.lt.s32.totalorder %s9, 3
    %p139 = pnand %p137, %p138
    %p140 = pneg %p139
    // Predicated region
    $region9: #{basic_block_pallas.5} parent=5 // pred_check
      _
    $region10: #{basic_block_pallas.5} parent=5 // pred_check_branch
      %142 = sbr.rel (%p139) target = $region12
    $region11: #{basic_block_pallas.5} parent=5 // pred_region
      %s143 = ssub.s32 %s9, 1
      // Predicated region
      $region13: #{basic_block_pallas.5} parent=11 // pred_check
        %p144 = pneg %p75
      $region14: #{basic_block_pallas.5} parent=11 // pred_check_branch
        %146 = sbr.rel (%p144) target = $region16
      $region15: #{basic_block_pallas.5} parent=11 // pred_region
        %p147 = scmp.lt.s32.totalorder %s19, 0
        %s148 = scalar_select %p147, %s19, 0
        %s149 = scalar_lea.vmem %s1, %s148
      $region16: #{basic_block_pallas.5} parent=11 // pred_fallthru
        _
      // Predicated region
      $region17: #{basic_block_pallas.5} parent=11 // pred_check
        %p150 = pneg %p101
      $region18: #{basic_block_pallas.5} parent=11 // pred_check_branch
        %152 = sbr.rel (%p150) target = $region20
      $region19: #{basic_block_pallas.5} parent=11 // pred_region
        %p153 = scmp.lt.s32.totalorder %s19, 0
        %s154 = scalar_select %p153, %s19, 0
        %s155 = scalar_lea.vmem %s2, %s154
      $region20: #{basic_block_pallas.5} parent=11 // pred_fallthru
        _
    $region12: #{basic_block_pallas.5} parent=5 // pred_fallthru
      _
    %p156 = scmp.lt.s32.totalorder %s9, 2
    // Predicated region
    $region21: #{basic_block_pallas.5} parent=5 // pred_check
      %p157 = pneg %p156
    $region22: #{basic_block_pallas.5} parent=5 // pred_check_branch
      %159 = sbr.rel (%p157) target = $region24
    $region23: #{basic_block_pallas.5} parent=5 // pred_region
      // Predicated region
      $region25: #{basic_block_pallas.5} parent=23 // pred_check
        %p160 = pneg %p43
      $region26: #{basic_block_pallas.5} parent=23 // pred_check_branch
        %162 = sbr.rel (%p160) target = $region28
      $region27: #{basic_block_pallas.5} parent=23 // pred_region
        %p163 = scmp.lt.s32.totalorder %s16, 1
        %s164 = scalar_select %p163, %s16, 1
        %p165 = scmp.lt.s32.totalorder %s17, 0
        %s166 = scalar_select %p165, %s17, 0
        %s167 = smul.addr %s164, 8
        %s168 = sadd.s32 %s166, %s167
        %s169 = smul.addr %s168, 4
        %s170 = scalar_lea.vmem %s0, %s169
      $region28: #{basic_block_pallas.5} parent=23 // pred_fallthru
        _
    $region24: #{basic_block_pallas.5} parent=5 // pred_fallthru
      _
    %p171 = scmp.le.s32.totalorder 1, %s9
    %p172 = scmp.lt.s32.totalorder %s9, 3
    %p173 = pnand %p171, %p172
    %p174 = pneg %p173
    // Predicated region
    $region29: #{basic_block_pallas.5} parent=5 // pred_check
      _
    $region30: #{basic_block_pallas.5} parent=5 // pred_check_branch
      %176 = sbr.rel (%p173) target = $region32
    $region31: #{basic_block_pallas.5} parent=5 // pred_region
      %s177 = ssub.s32 %s9, 1
      %p178 = scmp.lt.s32.totalorder %s18, 1
      %s179 = scalar_select %p178, %s18, 1
      %p180 = scmp.lt.s32.totalorder %s19, 0
      %s181 = scalar_select %p180, %s19, 0
      %s182 = smul.addr %s179, 8
      %s183 = sadd.s32 %s181, %s182
      %s184 = smul.addr %s183, 4
      %s185 = scalar_lea.vmem %s0, %s184
      %p186 = pneg %p49
      %p187 = pneg %p46
      %p188 = scmp.lt.s32.totalorder %s19, 0
      %s189 = scalar_select %p188, %s19, 0
      %s190 = scalar_lea.vmem %s1, %s189
      %p191 = pneg %p75
      %p192 = pneg %p72
      %p193 = scmp.lt.s32.totalorder %s19, 0
      %s194 = scalar_select %p193, %s19, 0
      %s195 = scalar_lea.vmem %s2, %s194
      %p196 = pneg %p101
      %p197 = pneg %p98
      %p198 = pneg %p129
      %p199 = pneg %p126
      %p200 = scmp.lt.s32.totalorder %s18, 1
      %s201 = scalar_select %p200, %s18, 1
      %p202 = scmp.lt.s32.totalorder %s19, 0
      %s203 = scalar_select %p202, %s19, 0
      %s204 = smul.addr %s201, 8
      %s205 = sadd.s32 %s203, %s204
      %s206 = smul.addr %s205, 8
      %s207 = scalar_lea.vmem %s3, %s206
      %p208 = scmp.lt.s32.totalorder %s18, 1
      %s209 = scalar_select %p208, %s18, 1
      %p210 = scmp.lt.s32.totalorder %s19, 0
      %s211 = scalar_select %p210, %s19, 0
      %s212 = smul.addr %s209, 8
      %s213 = sadd.s32 %s211, %s212
      %s214 = smul.addr %s213, 4
      %s215 = scalar_lea.vmem %s0, %s214
      %p216 = scmp.lt.s32.totalorder %s19, 0
      %s217 = scalar_select %p216, %s19, 0
      %s218 = scalar_lea.vmem %s1, %s217
      %p219 = scmp.lt.s32.totalorder %s19, 0
      %s220 = scalar_select %p219, %s19, 0
      %s221 = scalar_lea.vmem %s2, %s220
      %p222 = scmp.lt.s32.totalorder %s18, 1
      %s223 = scalar_select %p222, %s18, 1
      %p224 = scmp.lt.s32.totalorder %s19, 0
      %s225 = scalar_select %p224, %s19, 0
      %s226 = smul.addr %s223, 8
      %s227 = sadd.s32 %s225, %s226
      %s228 = smul.addr %s227, 8
      %s229 = scalar_lea.vmem %s3, %s228
      %v230 = vld [vmem:[%s215] sm:$0xf]
      %v231 = vld [vmem:[%s215 + $0x4] sm:$0xf]
      %v232 = vld [vmem:[%s215 + $0x8] sm:$0xf]
      %v233 = vld [vmem:[%s215 + $0xc] sm:$0xf]
      %v234 = vld [vmem:[%s215 + $0x10] sm:$0xf]
      %v235 = vld [vmem:[%s215 + $0x14] sm:$0xf]
      %v236 = vld [vmem:[%s215 + $0x18] sm:$0xf]
      %v237 = vld [vmem:[%s215 + $0x1c] sm:$0xf]
      %v238 = vunpack.c.l.bf16 %v230
      %v239 = vunpack.c.l.bf16 %v231
      %v240 = vunpack.c.l.bf16 %v232
      %v241 = vunpack.c.l.bf16 %v233
      %v242 = vunpack.c.l.bf16 %v234
      %v243 = vunpack.c.l.bf16 %v235
      %v244 = vunpack.c.l.bf16 %v236
      %v245 = vunpack.c.l.bf16 %v237
      %v246 = vld [vmem:[%s218] sm:$0x1]
      %v248 = vperm.slane %v246, 0
      %v250 = vmul.f32 %v238, %v248
      %v251 = vmul.f32 %v239, %v248
      %v252 = vmul.f32 %v240, %v248
      %v253 = vmul.f32 %v241, %v248
      %v254 = vmul.f32 %v242, %v248
      %v255 = vmul.f32 %v243, %v248
      %v256 = vmul.f32 %v244, %v248
      %v257 = vmul.f32 %v245, %v248
      %v258 = vld [vmem:[%s221] sm:$0x1]
      %v260 = vperm.slane %v258, 0
      %v262 = vadd.f32 %v250, %v260
      %v263 = vadd.f32 %v251, %v260
      %v264 = vadd.f32 %v252, %v260
      %v265 = vadd.f32 %v253, %v260
      %v266 = vadd.f32 %v254, %v260
      %v267 = vadd.f32 %v255, %v260
      %v268 = vadd.f32 %v256, %v260
      %v269 = vadd.f32 %v257, %v260
      %v270 = vmax.f32 %v262, 0.0
      %v271 = vmax.f32 %v263, 0.0
      %v272 = vmax.f32 %v264, 0.0
      %v273 = vmax.f32 %v265, 0.0
      %v274 = vmax.f32 %v266, 0.0
      %v275 = vmax.f32 %v267, 0.0
      %v276 = vmax.f32 %v268, 0.0
      %v277 = vmax.f32 %v269, 0.0
      %278 = vst [vmem:[%s229] sm:$0xff] %v270
      %279 = vst [vmem:[%s229 + $0x8] sm:$0xff] %v271
      %280 = vst [vmem:[%s229 + $0x10] sm:$0xff] %v272
      %281 = vst [vmem:[%s229 + $0x18] sm:$0xff] %v273
      %282 = vst [vmem:[%s229 + $0x20] sm:$0xff] %v274
      %283 = vst [vmem:[%s229 + $0x28] sm:$0xff] %v275
      %284 = vst [vmem:[%s229 + $0x30] sm:$0xff] %v276
      %285 = vst [vmem:[%s229 + $0x38] sm:$0xff] %v277
      %p286 = scmp.lt.s32.totalorder %s18, 1
      %s287 = scalar_select %p286, %s18, 1
      %p288 = scmp.lt.s32.totalorder %s19, 0
      %s289 = scalar_select %p288, %s19, 0
      %s290 = smul.addr %s287, 8
      %s291 = sadd.s32 %s289, %s290
      %s292 = smul.addr %s291, 8
      %s293 = scalar_lea.vmem %s3, %s292
      // Predicated region
      $region33: #{basic_block_pallas.5} parent=31 // pred_check
        %p294 = pneg %p126
      $region34: #{basic_block_pallas.5} parent=31 // pred_check_branch
        %296 = sbr.rel (%p294) target = $region36
      $region35: #{basic_block_pallas.5} parent=31 // pred_region
        _
      $region36: #{basic_block_pallas.5} parent=31 // pred_fallthru
        _
    $region32: #{basic_block_pallas.5} parent=5 // pred_fallthru
      _
    %p297 = scmp.le.s32.totalorder 2, %s9
    // Predicated region
    $region37: #{basic_block_pallas.5} parent=5 // pred_check
      %p298 = pneg %p297
    $region38: #{basic_block_pallas.5} parent=5 // pred_check_branch
      %300 = sbr.rel (%p298) target = $region40
    $region39: #{basic_block_pallas.5} parent=5 // pred_region
      %s301 = ssub.s32 %s9, 2
      // Predicated region
      $region41: #{basic_block_pallas.5} parent=39 // pred_check
        %p302 = pneg %p132
      $region42: #{basic_block_pallas.5} parent=39 // pred_check_branch
        %304 = sbr.rel (%p302) target = $region44
      $region43: #{basic_block_pallas.5} parent=39 // pred_region
        %p305 = scmp.lt.s32.totalorder %s20, 1
        %s306 = scalar_select %p305, %s20, 1
        %p307 = scmp.lt.s32.totalorder %s21, 0
        %s308 = scalar_select %p307, %s21, 0
        %s309 = smul.addr %s306, 8
        %s310 = sadd.s32 %s308, %s309
        %s311 = smul.addr %s310, 8
        %s312 = scalar_lea.vmem %s3, %s311
      $region44: #{basic_block_pallas.5} parent=39 // pred_fallthru
        _
    $region40: #{basic_block_pallas.5} parent=5 // pred_fallthru
      _
  $region6: #{basic_block_pallas.5} parent=0 // loop_footer
    %s13 = sadd.s32 1, %s9
  $region7: #{basic_block_pallas.5} parent=0 // loop_footer_branch
    %8 = sbr.rel target = $region3
  $region8: #{basic_block_pallas.5} parent=0 // loop_exit
    _

// kernel: basic_block_pallas.7
$region0: #{basic_block_pallas.7}
  #allocation0 [shape = 'u32[]', space=smem, size = 0x4, offset = 0x4, fixed_abs, tag = 'smem constant byte address 0x4 - core index']
  #allocation1 [shape = 'u32[72,128]{1,0:T(1,128)}', space=vmem, size = 0x9000, scoped, tag = 'internal scratch']
  %s0 = inlined_call_operand.vmem [shape: bf16[2,64,128], index: 0, kind: input, shape index: {}]
  %s1 = inlined_call_operand.vmem [shape: f32[1,128], index: 1, kind: input, shape index: {}]
  %s2 = inlined_call_operand.vmem [shape: f32[1,128], index: 2, kind: input, shape index: {}]
  %s3 = inlined_call_operand.vmem [shape: bf16[2,64,128], index: 3, kind: input, shape index: {}]
  %s4 = inlined_call_operand.vmem [shape: f32[1,128], index: 4, kind: input, shape index: {}]
  %s5 = inlined_call_operand.vmem [shape: f32[1,128], index: 5, kind: input, shape index: {}]
  %s6 = inlined_call_operand.vmem [shape: f32[2,64,128], index: 6, kind: output, shape index: {}]
  %s7 = sld [smem:[#allocation0]]
  $region57: #{basic_block_pallas.7} parent=0
    _
  %s9 = ssub.s32 1, %s7
  %s10 = scalar_select 0, %s9, %s7
  loop: start=0, step=1, limit=4
  $region2: #{basic_block_pallas.7} parent=0 // loop_pre_header
    _
  $region3: #{basic_block_pallas.7} parent=0 // loop_header
    %s12 = sphi 0, %s16
    %p13 = scmp.ge.s32.totalorder %s12, 4
    %s19 = sphi 0, %s31
    %s20 = sphi 0, %s27
    %s21 = sphi 0, %s19
    %s22 = sphi 0, %s20
    %s23 = sphi 0, %s21
    %s24 = sphi 0, %s22
    %s36 = sphi 0, %s38
    %s39 = sphi 0, %s36
    %s40 = sphi 0, %s39
    %s56 = sphi 0, %s40
    %s62 = sphi 0, %s64
    %s65 = sphi 0, %s62
    %s66 = sphi 0, %s65
    %s82 = sphi 0, %s66
    %s88 = sphi 0, %s90
    %s91 = sphi 0, %s88
    %s92 = sphi 0, %s91
    %s108 = sphi 0, %s92
    %s116 = sphi 0, %s118
    %s119 = sphi 0, %s116
    %s120 = sphi 0, %s119
    %s136 = sphi 0, %s120
    %s142 = sphi 0, %s144
    %s145 = sphi 0, %s142
    %s146 = sphi 0, %s145
    %s162 = sphi 0, %s146
    %s168 = sphi 0, %s170
    %s171 = sphi 0, %s168
    %s172 = sphi 0, %s171
    %s188 = sphi 0, %s172
    %s196 = sphi 0, %s198
    %s199 = sphi 0, %s196
    %s200 = sphi 0, %s199
    %s216 = sphi 0, %s200
  $region4: #{basic_block_pallas.7} parent=0 // loop_header_branch
    %15 = sbr.rel (%p13) target = $region8
  $region5: #{basic_block_pallas.7} parent=0 // loop_body
    %s17 = ssub.s32 %s12, 1
    %s18 = ssub.s32 %s12, 2
    %s25 = sadd.s32 1, %s20
    %p26 = scmp.ge.s32.totalorder %s25, 1
    %s27 = scalar_select %p26, 0, %s25
    %s28 = sadd.s32 1, %s19
    %s29 = scalar_select %p26, %s28, %s19
    %p30 = scmp.ge.s32.totalorder %s29, 2
    %s31 = scalar_select %p30, 0, %s29
    %s32 = ssub.s32 %s19, %s31
    %s33 = ssub.s32 %s20, %s27
    %s34 = sor.u32 %s32, %s33
    %p35 = scmp.eq.s32.totalorder %s34, 0
    %s37 = sadd.s32 %s36, 1
    %s38 = scalar_select %p35, %s36, %s37
    %p41 = pneg %p35
    %p42 = scmp.eq.s32.totalorder %s12, 1
    %p43 = por %p41, %p42
    %p44 = scmp.ne.s32.totalorder %s36, %s39
    %p45 = scmp.eq.s32.totalorder %s12, 0
    %p46 = por %p44, %p45
    %p47 = scmp.ne.s32.totalorder %s36, %s39
    %p48 = scmp.eq.s32.totalorder %s17, 1
    %p49 = por %p47, %p48
    %p50 = scmp.ne.s32.totalorder %s39, %s40
    %p51 = scmp.eq.s32.totalorder %s17, 0
    %p52 = por %p50, %p51
    %p53 = scmp.ne.s32.totalorder %s39, %s40
    %p54 = scmp.eq.s32.totalorder %s18, 1
    %p55 = por %p53, %p54
    %p57 = scmp.ne.s32.totalorder %s40, %s56
    %p58 = scmp.eq.s32.totalorder %s18, 0
    %p59 = por %p57, %p58
    %s60 = ssub.s32 %s20, %s27
    %p61 = scmp.eq.s32.totalorder %s60, 0
    %s63 = sadd.s32 %s62, 1
    %s64 = scalar_select %p61, %s62, %s63
    %p67 = pneg %p61
    %p68 = scmp.eq.s32.totalorder %s12, 1
    %p69 = por %p67, %p68
    %p70 = scmp.ne.s32.totalorder %s62, %s65
    %p71 = scmp.eq.s32.totalorder %s12, 0
    %p72 = por %p70, %p71
    %p73 = scmp.ne.s32.totalorder %s62, %s65
    %p74 = scmp.eq.s32.totalorder %s17, 1
    %p75 = por %p73, %p74
    %p76 = scmp.ne.s32.totalorder %s65, %s66
    %p77 = scmp.eq.s32.totalorder %s17, 0
    %p78 = por %p76, %p77
    %p79 = scmp.ne.s32.totalorder %s65, %s66
    %p80 = scmp.eq.s32.totalorder %s18, 1
    %p81 = por %p79, %p80
    %p83 = scmp.ne.s32.totalorder %s66, %s82
    %p84 = scmp.eq.s32.totalorder %s18, 0
    %p85 = por %p83, %p84
    %s86 = ssub.s32 %s20, %s27
    %p87 = scmp.eq.s32.totalorder %s86, 0
    %s89 = sadd.s32 %s88, 1
    %s90 = scalar_select %p87, %s88, %s89
    %p93 = pneg %p87
    %p94 = scmp.eq.s32.totalorder %s12, 1
    %p95 = por %p93, %p94
    %p96 = scmp.ne.s32.totalorder %s88, %s91
    %p97 = scmp.eq.s32.totalorder %s12, 0
    %p98 = por %p96, %p97
    %p99 = scmp.ne.s32.totalorder %s88, %s91
    %p100 = scmp.eq.s32.totalorder %s17, 1
    %p101 = por %p99, %p100
    %p102 = scmp.ne.s32.totalorder %s91, %s92
    %p103 = scmp.eq.s32.totalorder %s17, 0
    %p104 = por %p102, %p103
    %p105 = scmp.ne.s32.totalorder %s91, %s92
    %p106 = scmp.eq.s32.totalorder %s18, 1
    %p107 = por %p105, %p106
    %p109 = scmp.ne.s32.totalorder %s92, %s108
    %p110 = scmp.eq.s32.totalorder %s18, 0
    %p111 = por %p109, %p110
    %s112 = ssub.s32 %s19, %s31
    %s113 = ssub.s32 %s20, %s27
    %s114 = sor.u32 %s112, %s113
    %p115 = scmp.eq.s32.totalorder %s114, 0
    %s117 = sadd.s32 %s116, 1
    %s118 = scalar_select %p115, %s116, %s117
    %p121 = pneg %p115
    %p122 = scmp.eq.s32.totalorder %s12, 1
    %p123 = por %p121, %p122
    %p124 = scmp.ne.s32.totalorder %s116, %s119
    %p125 = scmp.eq.s32.totalorder %s12, 0
    %p126 = por %p124, %p125
    %p127 = scmp.ne.s32.totalorder %s116, %s119
    %p128 = scmp.eq.s32.totalorder %s17, 1
    %p129 = por %p127, %p128
    %p130 = scmp.ne.s32.totalorder %s119, %s120
    %p131 = scmp.eq.s32.totalorder %s17, 0
    %p132 = por %p130, %p131
    %p133 = scmp.ne.s32.totalorder %s119, %s120
    %p134 = scmp.eq.s32.totalorder %s18, 1
    %p135 = por %p133, %p134
    %p137 = scmp.ne.s32.totalorder %s120, %s136
    %p138 = scmp.eq.s32.totalorder %s18, 0
    %p139 = por %p137, %p138
    %s140 = ssub.s32 %s20, %s27
    %p141 = scmp.eq.s32.totalorder %s140, 0
    %s143 = sadd.s32 %s142, 1
    %s144 = scalar_select %p141, %s142, %s143
    %p147 = pneg %p141
    %p148 = scmp.eq.s32.totalorder %s12, 1
    %p149 = por %p147, %p148
    %p150 = scmp.ne.s32.totalorder %s142, %s145
    %p151 = scmp.eq.s32.totalorder %s12, 0
    %p152 = por %p150, %p151
    %p153 = scmp.ne.s32.totalorder %s142, %s145
    %p154 = scmp.eq.s32.totalorder %s17, 1
    %p155 = por %p153, %p154
    %p156 = scmp.ne.s32.totalorder %s145, %s146
    %p157 = scmp.eq.s32.totalorder %s17, 0
    %p158 = por %p156, %p157
    %p159 = scmp.ne.s32.totalorder %s145, %s146
    %p160 = scmp.eq.s32.totalorder %s18, 1
    %p161 = por %p159, %p160
    %p163 = scmp.ne.s32.totalorder %s146, %s162
    %p164 = scmp.eq.s32.totalorder %s18, 0
    %p165 = por %p163, %p164
    %s166 = ssub.s32 %s20, %s27
    %p167 = scmp.eq.s32.totalorder %s166, 0
    %s169 = sadd.s32 %s168, 1
    %s170 = scalar_select %p167, %s168, %s169
    %p173 = pneg %p167
    %p174 = scmp.eq.s32.totalorder %s12, 1
    %p175 = por %p173, %p174
    %p176 = scmp.ne.s32.totalorder %s168, %s171
    %p177 = scmp.eq.s32.totalorder %s12, 0
    %p178 = por %p176, %p177
    %p179 = scmp.ne.s32.totalorder %s168, %s171
    %p180 = scmp.eq.s32.totalorder %s17, 1
    %p181 = por %p179, %p180
    %p182 = scmp.ne.s32.totalorder %s171, %s172
    %p183 = scmp.eq.s32.totalorder %s17, 0
    %p184 = por %p182, %p183
    %p185 = scmp.ne.s32.totalorder %s171, %s172
    %p186 = scmp.eq.s32.totalorder %s18, 1
    %p187 = por %p185, %p186
    %p189 = scmp.ne.s32.totalorder %s172, %s188
    %p190 = scmp.eq.s32.totalorder %s18, 0
    %p191 = por %p189, %p190
    %s192 = ssub.s32 %s19, %s31
    %s193 = ssub.s32 %s20, %s27
    %s194 = sor.u32 %s192, %s193
    %p195 = scmp.eq.s32.totalorder %s194, 0
    %s197 = sadd.s32 %s196, 1
    %s198 = scalar_select %p195, %s196, %s197
    %p201 = pneg %p195
    %p202 = scmp.eq.s32.totalorder %s12, 1
    %p203 = por %p201, %p202
    %p204 = scmp.ne.s32.totalorder %s196, %s199
    %p205 = scmp.eq.s32.totalorder %s12, 0
    %p206 = por %p204, %p205
    %p207 = scmp.ne.s32.totalorder %s196, %s199
    %p208 = scmp.eq.s32.totalorder %s17, 1
    %p209 = por %p207, %p208
    %p210 = scmp.ne.s32.totalorder %s199, %s200
    %p211 = scmp.eq.s32.totalorder %s17, 0
    %p212 = por %p210, %p211
    %p213 = scmp.ne.s32.totalorder %s199, %s200
    %p214 = scmp.eq.s32.totalorder %s18, 1
    %p215 = por %p213, %p214
    %p217 = scmp.ne.s32.totalorder %s200, %s216
    %p218 = scmp.eq.s32.totalorder %s18, 0
    %p219 = por %p217, %p218
    %p220 = scmp.le.s32.totalorder 1, %s12
    %p221 = scmp.lt.s32.totalorder %s12, 3
    %p222 = pnand %p220, %p221
    %p223 = pneg %p222
    // Predicated region
    $region9: #{basic_block_pallas.7} parent=5 // pred_check
      _
    $region10: #{basic_block_pallas.7} parent=5 // pred_check_branch
      %225 = sbr.rel (%p222) target = $region12
    $region11: #{basic_block_pallas.7} parent=5 // pred_region
      %s226 = ssub.s32 %s12, 1
      // Predicated region
      $region13: #{basic_block_pallas.7} parent=11 // pred_check
        %p227 = pneg %p78
      $region14: #{basic_block_pallas.7} parent=11 // pred_check_branch
        %229 = sbr.rel (%p227) target = $region16
      $region15: #{basic_block_pallas.7} parent=11 // pred_region
        %p230 = scmp.lt.s32.totalorder %s22, 0
        %s231 = scalar_select %p230, %s22, 0
        %s232 = scalar_lea.vmem %s1, %s231
      $region16: #{basic_block_pallas.7} parent=11 // pred_fallthru
        _
      // Predicated region
      $region17: #{basic_block_pallas.7} parent=11 // pred_check
        %p233 = pneg %p104
      $region18: #{basic_block_pallas.7} parent=11 // pred_check_branch
        %235 = sbr.rel (%p233) target = $region20
      $region19: #{basic_block_pallas.7} parent=11 // pred_region
        %p236 = scmp.lt.s32.totalorder %s22, 0
        %s237 = scalar_select %p236, %s22, 0
        %s238 = scalar_lea.vmem %s2, %s237
      $region20: #{basic_block_pallas.7} parent=11 // pred_fallthru
        _
      // Predicated region
      $region21: #{basic_block_pallas.7} parent=11 // pred_check
        %p239 = pneg %p158
      $region22: #{basic_block_pallas.7} parent=11 // pred_check_branch
        %241 = sbr.rel (%p239) target = $region24
      $region23: #{basic_block_pallas.7} parent=11 // pred_region
        %p242 = scmp.lt.s32.totalorder %s22, 0
        %s243 = scalar_select %p242, %s22, 0
        %s244 = scalar_lea.vmem %s4, %s243
      $region24: #{basic_block_pallas.7} parent=11 // pred_fallthru
        _
      // Predicated region
      $region25: #{basic_block_pallas.7} parent=11 // pred_check
        %p245 = pneg %p184
      $region26: #{basic_block_pallas.7} parent=11 // pred_check_branch
        %247 = sbr.rel (%p245) target = $region28
      $region27: #{basic_block_pallas.7} parent=11 // pred_region
        %p248 = scmp.lt.s32.totalorder %s22, 0
        %s249 = scalar_select %p248, %s22, 0
        %s250 = scalar_lea.vmem %s5, %s249
      $region28: #{basic_block_pallas.7} parent=11 // pred_fallthru
        _
    $region12: #{basic_block_pallas.7} parent=5 // pred_fallthru
      _
    %p251 = scmp.lt.s32.totalorder %s12, 2
    // Predicated region
    $region29: #{basic_block_pallas.7} parent=5 // pred_check
      %p252 = pneg %p251
    $region30: #{basic_block_pallas.7} parent=5 // pred_check_branch
      %254 = sbr.rel (%p252) target = $region32
    $region31: #{basic_block_pallas.7} parent=5 // pred_region
      // Predicated region
      $region33: #{basic_block_pallas.7} parent=31 // pred_check
        %p255 = pneg %p46
      $region34: #{basic_block_pallas.7} parent=31 // pred_check_branch
        %257 = sbr.rel (%p255) target = $region36
      $region35: #{basic_block_pallas.7} parent=31 // pred_region
        %p258 = scmp.lt.s32.totalorder %s19, 1
        %s259 = scalar_select %p258, %s19, 1
        %p260 = scmp.lt.s32.totalorder %s20, 0
        %s261 = scalar_select %p260, %s20, 0
        %s262 = smul.addr %s259, 8
        %s263 = sadd.s32 %s261, %s262
        %s264 = smul.addr %s263, 4
        %s265 = scalar_lea.vmem %s0, %s264
      $region36: #{basic_block_pallas.7} parent=31 // pred_fallthru
        _
      // Predicated region
      $region37: #{basic_block_pallas.7} parent=31 // pred_check
        %p266 = pneg %p126
      $region38: #{basic_block_pallas.7} parent=31 // pred_check_branch
        %268 = sbr.rel (%p266) target = $region40
      $region39: #{basic_block_pallas.7} parent=31 // pred_region
        %p269 = scmp.lt.s32.totalorder %s19, 1
        %s270 = scalar_select %p269, %s19, 1
        %p271 = scmp.lt.s32.totalorder %s20, 0
        %s272 = scalar_select %p271, %s20, 0
        %s273 = smul.addr %s270, 8
        %s274 = sadd.s32 %s272, %s273
        %s275 = smul.addr %s274, 4
        %s276 = scalar_lea.vmem %s3, %s275
      $region40: #{basic_block_pallas.7} parent=31 // pred_fallthru
        _
    $region32: #{basic_block_pallas.7} parent=5 // pred_fallthru
      _
    %p277 = scmp.le.s32.totalorder 1, %s12
    %p278 = scmp.lt.s32.totalorder %s12, 3
    %p279 = pnand %p277, %p278
    %p280 = pneg %p279
    // Predicated region
    $region41: #{basic_block_pallas.7} parent=5 // pred_check
      _
    $region42: #{basic_block_pallas.7} parent=5 // pred_check_branch
      %282 = sbr.rel (%p279) target = $region44
    $region43: #{basic_block_pallas.7} parent=5 // pred_region
      %s283 = ssub.s32 %s12, 1
      %p284 = scmp.lt.s32.totalorder %s21, 1
      %s285 = scalar_select %p284, %s21, 1
      %p286 = scmp.lt.s32.totalorder %s22, 0
      %s287 = scalar_select %p286, %s22, 0
      %s288 = smul.addr %s285, 8
      %s289 = sadd.s32 %s287, %s288
      %s290 = smul.addr %s289, 4
      %s291 = scalar_lea.vmem %s0, %s290
      %p292 = pneg %p52
      %p293 = pneg %p49
      %p294 = scmp.lt.s32.totalorder %s22, 0
      %s295 = scalar_select %p294, %s22, 0
      %s296 = scalar_lea.vmem %s1, %s295
      %p297 = pneg %p78
      %p298 = pneg %p75
      %p299 = scmp.lt.s32.totalorder %s22, 0
      %s300 = scalar_select %p299, %s22, 0
      %s301 = scalar_lea.vmem %s2, %s300
      %p302 = pneg %p104
      %p303 = pneg %p101
      %p304 = scmp.lt.s32.totalorder %s21, 1
      %s305 = scalar_select %p304, %s21, 1
      %p306 = scmp.lt.s32.totalorder %s22, 0
      %s307 = scalar_select %p306, %s22, 0
      %s308 = smul.addr %s305, 8
      %s309 = sadd.s32 %s307, %s308
      %s310 = smul.addr %s309, 4
      %s311 = scalar_lea.vmem %s3, %s310
      %p312 = pneg %p132
      %p313 = pneg %p129
      %p314 = scmp.lt.s32.totalorder %s22, 0
      %s315 = scalar_select %p314, %s22, 0
      %s316 = scalar_lea.vmem %s4, %s315
      %p317 = pneg %p158
      %p318 = pneg %p155
      %p319 = scmp.lt.s32.totalorder %s22, 0
      %s320 = scalar_select %p319, %s22, 0
      %s321 = scalar_lea.vmem %s5, %s320
      %p322 = pneg %p184
      %p323 = pneg %p181
      %p324 = pneg %p212
      %p325 = pneg %p209
      %p326 = scmp.lt.s32.totalorder %s21, 1
      %s327 = scalar_select %p326, %s21, 1
      %p328 = scmp.lt.s32.totalorder %s22, 0
      %s329 = scalar_select %p328, %s22, 0
      %s330 = smul.addr %s327, 8
      %s331 = sadd.s32 %s329, %s330
      %s332 = smul.addr %s331, 8
      %s333 = scalar_lea.vmem %s6, %s332
      %p334 = scmp.lt.s32.totalorder %s21, 1
      %s335 = scalar_select %p334, %s21, 1
      %p336 = scmp.lt.s32.totalorder %s22, 0
      %s337 = scalar_select %p336, %s22, 0
      %s338 = smul.addr %s335, 8
      %s339 = sadd.s32 %s337, %s338
      %s340 = smul.addr %s339, 4
      %s341 = scalar_lea.vmem %s0, %s340
      %p342 = scmp.lt.s32.totalorder %s22, 0
      %s343 = scalar_select %p342, %s22, 0
      %s344 = scalar_lea.vmem %s1, %s343
      %p345 = scmp.lt.s32.totalorder %s22, 0
      %s346 = scalar_select %p345, %s22, 0
      %s347 = scalar_lea.vmem %s2, %s346
      %p348 = scmp.lt.s32.totalorder %s21, 1
      %s349 = scalar_select %p348, %s21, 1
      %p350 = scmp.lt.s32.totalorder %s22, 0
      %s351 = scalar_select %p350, %s22, 0
      %s352 = smul.addr %s349, 8
      %s353 = sadd.s32 %s351, %s352
      %s354 = smul.addr %s353, 4
      %s355 = scalar_lea.vmem %s3, %s354
      %p356 = scmp.lt.s32.totalorder %s22, 0
      %s357 = scalar_select %p356, %s22, 0
      %s358 = scalar_lea.vmem %s4, %s357
      %p359 = scmp.lt.s32.totalorder %s22, 0
      %s360 = scalar_select %p359, %s22, 0
      %s361 = scalar_lea.vmem %s5, %s360
      %p362 = scmp.lt.s32.totalorder %s21, 1
      %s363 = scalar_select %p362, %s21, 1
      %p364 = scmp.lt.s32.totalorder %s22, 0
      %s365 = scalar_select %p364, %s22, 0
      %s366 = smul.addr %s363, 8
      %s367 = sadd.s32 %s365, %s366
      %s368 = smul.addr %s367, 8
      %s369 = scalar_lea.vmem %s6, %s368
      %v370 = vld [vmem:[%s341] sm:$0xf]
      %v371 = vld [vmem:[%s341 + $0x4] sm:$0xf]
      %v372 = vld [vmem:[%s341 + $0x8] sm:$0xf]
      %v373 = vld [vmem:[%s341 + $0xc] sm:$0xf]
      %v374 = vld [vmem:[%s341 + $0x10] sm:$0xf]
      %v375 = vld [vmem:[%s341 + $0x14] sm:$0xf]
      %v376 = vld [vmem:[%s341 + $0x18] sm:$0xf]
      %v377 = vld [vmem:[%s341 + $0x1c] sm:$0xf]
      %v378 = vunpack.c.l.bf16 %v370
      %v379 = vunpack.c.l.bf16 %v371
      %v380 = vunpack.c.l.bf16 %v372
      %v381 = vunpack.c.l.bf16 %v373
      %v382 = vunpack.c.l.bf16 %v374
      %v383 = vunpack.c.l.bf16 %v375
      %v384 = vunpack.c.l.bf16 %v376
      %v385 = vunpack.c.l.bf16 %v377
      %v386 = vld [vmem:[%s344] sm:$0x1]
      %v388 = vperm.slane %v386, 0
      %v390 = vmul.f32 %v378, %v388
      %v391 = vmul.f32 %v379, %v388
      %v392 = vmul.f32 %v380, %v388
      %v393 = vmul.f32 %v381, %v388
      %v394 = vmul.f32 %v382, %v388
      %v395 = vmul.f32 %v383, %v388
      %v396 = vmul.f32 %v384, %v388
      %v397 = vmul.f32 %v385, %v388
      %v398 = vld [vmem:[%s347] sm:$0x1]
      %v400 = vperm.slane %v398, 0
      %v402 = vadd.f32 %v390, %v400
      %v403 = vadd.f32 %v391, %v400
      %v404 = vadd.f32 %v392, %v400
      %v405 = vadd.f32 %v393, %v400
      %v406 = vadd.f32 %v394, %v400
      %v407 = vadd.f32 %v395, %v400
      %v408 = vadd.f32 %v396, %v400
      %v409 = vadd.f32 %v397, %v400
      %v410 = vld [vmem:[%s355] sm:$0xf]
      %v411 = vld [vmem:[%s355 + $0x4] sm:$0xf]
      %v412 = vld [vmem:[%s355 + $0x8] sm:$0xf]
      %v413 = vld [vmem:[%s355 + $0xc] sm:$0xf]
      %v414 = vld [vmem:[%s355 + $0x10] sm:$0xf]
      %v415 = vld [vmem:[%s355 + $0x14] sm:$0xf]
      %v416 = vld [vmem:[%s355 + $0x18] sm:$0xf]
      %v417 = vld [vmem:[%s355 + $0x1c] sm:$0xf]
      %v418 = vunpack.c.l.bf16 %v410
      %v419 = vunpack.c.l.bf16 %v411
      %v420 = vunpack.c.l.bf16 %v412
      %v421 = vunpack.c.l.bf16 %v413
      %v422 = vunpack.c.l.bf16 %v414
      %v423 = vunpack.c.l.bf16 %v415
      %v424 = vunpack.c.l.bf16 %v416
      %v425 = vunpack.c.l.bf16 %v417
      %v426 = vld [vmem:[%s358] sm:$0x1]
      %v428 = vperm.slane %v426, 0
      %v430 = vmul.f32 %v418, %v428
      %v431 = vmul.f32 %v419, %v428
      %v432 = vmul.f32 %v420, %v428
      %v433 = vmul.f32 %v421, %v428
      %v434 = vmul.f32 %v422, %v428
      %v435 = vmul.f32 %v423, %v428
      %v436 = vmul.f32 %v424, %v428
      %v437 = vmul.f32 %v425, %v428
      %v438 = vadd.f32 %v402, %v430
      %v439 = vadd.f32 %v403, %v431
      %v440 = vadd.f32 %v404, %v432
      %v441 = vadd.f32 %v405, %v433
      %v442 = vadd.f32 %v406, %v434
      %v443 = vadd.f32 %v407, %v435
      %v444 = vadd.f32 %v408, %v436
      %v445 = vadd.f32 %v409, %v437
      %v446 = vld [vmem:[%s361] sm:$0x1]
      %v448 = vperm.slane %v446, 0
      %v450 = vadd.f32 %v438, %v448
      %v451 = vadd.f32 %v439, %v448
      %v452 = vadd.f32 %v440, %v448
      %v453 = vadd.f32 %v441, %v448
      %v454 = vadd.f32 %v442, %v448
      %v455 = vadd.f32 %v443, %v448
      %v456 = vadd.f32 %v444, %v448
      %v457 = vadd.f32 %v445, %v448
      %v458 = vmax.f32 %v450, 0.0
      %v459 = vmax.f32 %v451, 0.0
      %v460 = vmax.f32 %v452, 0.0
      %v461 = vmax.f32 %v453, 0.0
      %v462 = vmax.f32 %v454, 0.0
      %v463 = vmax.f32 %v455, 0.0
      %v464 = vmax.f32 %v456, 0.0
      %v465 = vmax.f32 %v457, 0.0
      %466 = vst [vmem:[%s369] sm:$0xff] %v458
      %467 = vst [vmem:[%s369 + $0x8] sm:$0xff] %v459
      %468 = vst [vmem:[%s369 + $0x10] sm:$0xff] %v460
      %469 = vst [vmem:[%s369 + $0x18] sm:$0xff] %v461
      %470 = vst [vmem:[%s369 + $0x20] sm:$0xff] %v462
      %471 = vst [vmem:[%s369 + $0x28] sm:$0xff] %v463
      %472 = vst [vmem:[%s369 + $0x30] sm:$0xff] %v464
      %473 = vst [vmem:[%s369 + $0x38] sm:$0xff] %v465
      %p474 = scmp.lt.s32.totalorder %s21, 1
      %s475 = scalar_select %p474, %s21, 1
      %p476 = scmp.lt.s32.totalorder %s22, 0
      %s477 = scalar_select %p476, %s22, 0
      %s478 = smul.addr %s475, 8
      %s479 = sadd.s32 %s477, %s478
      %s480 = smul.addr %s479, 8
      %s481 = scalar_lea.vmem %s6, %s480
      // Predicated region
      $region45: #{basic_block_pallas.7} parent=43 // pred_check
        %p482 = pneg %p209
      $region46: #{basic_block_pallas.7} parent=43 // pred_check_branch
        %484 = sbr.rel (%p482) target = $region48
      $region47: #{basic_block_pallas.7} parent=43 // pred_region
        _
      $region48: #{basic_block_pallas.7} parent=43 // pred_fallthru
        _
    $region44: #{basic_block_pallas.7} parent=5 // pred_fallthru
      _
    %p485 = scmp.le.s32.totalorder 2, %s12
    // Predicated region
    $region49: #{basic_block_pallas.7} parent=5 // pred_check
      %p486 = pneg %p485
    $region50: #{basic_block_pallas.7} parent=5 // pred_check_branch
      %488 = sbr.rel (%p486) target = $region52
    $region51: #{basic_block_pallas.7} parent=5 // pred_region
      %s489 = ssub.s32 %s12, 2
      // Predicated region
      $region53: #{basic_block_pallas.7} parent=51 // pred_check
        %p490 = pneg %p215
      $region54: #{basic_block_pallas.7} parent=51 // pred_check_branch
        %492 = sbr.rel (%p490) target = $region56
      $region55: #{basic_block_pallas.7} parent=51 // pred_region
        %p493 = scmp.lt.s32.totalorder %s23, 1
        %s494 = scalar_select %p493, %s23, 1
        %p495 = scmp.lt.s32.totalorder %s24, 0
        %s496 = scalar_select %p495, %s24, 0
        %s497 = smul.addr %s494, 8
        %s498 = sadd.s32 %s496, %s497
        %s499 = smul.addr %s498, 8
        %s500 = scalar_lea.vmem %s6, %s499
      $region56: #{basic_block_pallas.7} parent=51 // pred_fallthru
        _
    $region52: #{basic_block_pallas.7} parent=5 // pred_fallthru
      _
  $region6: #{basic_block_pallas.7} parent=0 // loop_footer
    %s16 = sadd.s32 1, %s12
  $region7: #{basic_block_pallas.7} parent=0 // loop_footer_branch
    %11 = sbr.rel target = $region3
  $region8: #{basic_block_pallas.7} parent=0 // loop_exit
    _

// kernel: basic_block_pallas.4
$region0: #{basic_block_pallas.4}
  #allocation0 [shape = 'u32[]', space=smem, size = 0x4, offset = 0x4, fixed_abs, tag = 'smem constant byte address 0x4 - core index']
  #allocation1 [shape = 'u32[72,128]{1,0:T(1,128)}', space=vmem, size = 0x9000, scoped, tag = 'internal scratch']
  #allocation2 [shape = 'f32[144,128]{1,0:T(8,128)}', space=vmem, size = 0x12000, scoped, tag = 'scratch operand']
  #allocation3 [shape = 'f32[144,128]{1,0:T(8,128)}', space=vmem, size = 0x12000, scoped, tag = 'scratch operand']
  %s0 = inlined_call_operand.vmem [shape: f32[2,324,128], index: 0, kind: input, shape index: {}]
  %s1 = inlined_call_operand.vmem [shape: bf16[9,128,128], index: 1, kind: input, shape index: {}]
  %s2 = inlined_call_operand.vmem [shape: f32[144,1], index: 2, kind: input, shape index: {}]
  %s3 = inlined_call_operand.vmem [shape: bf16[1,128,128], index: 3, kind: input, shape index: {}]
  %s4 = inlined_call_operand.vmem [shape: bf16[2,144,128], index: 4, kind: output, shape index: {0}]
  %s5 = inlined_call_operand.vmem [shape: f32[2,1,2,128], index: 5, kind: output, shape index: {1}]
  %s6 = inlined_call_operand.vmem [shape: bf16[2,144,128], index: 6, kind: output, shape index: {2}]
  %s7 = inlined_call_operand.vmem [shape: f32[2,1,2,128], index: 7, kind: output, shape index: {3}]
  %8 = xla_tuple %s4, %s5, %s6, %s7
  %s9 = sld [smem:[#allocation0]]
  $region73: #{basic_block_pallas.4} parent=0
    _
  %s11 = ssub.s32 1, %s9
  %s12 = scalar_select 0, %s11, %s9
  loop: start=0, step=1, limit=4
  $region2: #{basic_block_pallas.4} parent=0 // loop_pre_header
    _
  $region3: #{basic_block_pallas.4} parent=0 // loop_header
    %s14 = sphi 0, %s18
    %p15 = scmp.ge.s32.totalorder %s14, 4
    %s21 = sphi 0, %s40
    %s22 = sphi 0, %s36
    %s23 = sphi 0, %s32
    %s24 = sphi 0, %s21
    %s25 = sphi 0, %s22
    %s26 = sphi 0, %s23
    %s27 = sphi 0, %s24
    %s28 = sphi 0, %s25
    %s29 = sphi 0, %s26
    %s43 = sphi 0, %s45
    %s46 = sphi 0, %s43
    %s47 = sphi 0, %s46
    %s63 = sphi 0, %s47
    %s69 = sphi 0, %s71
    %s72 = sphi 0, %s69
    %s73 = sphi 0, %s72
    %s89 = sphi 0, %s73
    %s95 = sphi 0, %s97
    %s98 = sphi 0, %s95
    %s99 = sphi 0, %s98
    %s115 = sphi 0, %s99
    %s121 = sphi 0, %s123
    %s124 = sphi 0, %s121
    %s125 = sphi 0, %s124
    %s141 = sphi 0, %s125
    %s151 = sphi 0, %s153
    %s154 = sphi 0, %s151
    %s155 = sphi 0, %s154
    %s171 = sphi 0, %s155
    %s181 = sphi 0, %s183
    %s184 = sphi 0, %s181
    %s185 = sphi 0, %s184
    %s201 = sphi 0, %s185
    %s211 = sphi 0, %s213
    %s214 = sphi 0, %s211
    %s215 = sphi 0, %s214
    %s231 = sphi 0, %s215
    %s241 = sphi 0, %s243
    %s244 = sphi 0, %s241
    %s245 = sphi 0, %s244
    %s261 = sphi 0, %s245
  $region4: #{basic_block_pallas.4} parent=0 // loop_header_branch
    %17 = sbr.rel (%p15) target = $region8
  $region5: #{basic_block_pallas.4} parent=0 // loop_body
    %s19 = ssub.s32 %s14, 1
    %s20 = ssub.s32 %s14, 2
    %s30 = sadd.s32 1, %s23
    %p31 = scmp.ge.s32.totalorder %s30, 1
    %s32 = scalar_select %p31, 0, %s30
    %s33 = sadd.s32 1, %s22
    %s34 = scalar_select %p31, %s33, %s22
    %p35 = scmp.ge.s32.totalorder %s34, 1
    %s36 = scalar_select %p35, 0, %s34
    %s37 = sadd.s32 1, %s21
    %s38 = scalar_select %p35, %s37, %s21
    %p39 = scmp.ge.s32.totalorder %s38, 2
    %s40 = scalar_select %p39, 0, %s38
    %s41 = ssub.s32 %s21, %s40
    %p42 = scmp.eq.s32.totalorder %s41, 0
    %s44 = sadd.s32 %s43, 1
    %s45 = scalar_select %p42, %s43, %s44
    %p48 = pneg %p42
    %p49 = scmp.eq.s32.totalorder %s14, 1
    %p50 = por %p48, %p49
    %p51 = scmp.ne.s32.totalorder %s43, %s46
    %p52 = scmp.eq.s32.totalorder %s14, 0
    %p53 = por %p51, %p52
    %p54 = scmp.ne.s32.totalorder %s43, %s46
    %p55 = scmp.eq.s32.totalorder %s19, 1
    %p56 = por %p54, %p55
    %p57 = scmp.ne.s32.totalorder %s46, %s47
    %p58 = scmp.eq.s32.totalorder %s19, 0
    %p59 = por %p57, %p58
    %p60 = scmp.ne.s32.totalorder %s46, %s47
    %p61 = scmp.eq.s32.totalorder %s20, 1
    %p62 = por %p60, %p61
    %p64 = scmp.ne.s32.totalorder %s47, %s63
    %p65 = scmp.eq.s32.totalorder %s20, 0
    %p66 = por %p64, %p65
    %s67 = ssub.s32 %s23, %s32
    %p68 = scmp.eq.s32.totalorder %s67, 0
    %s70 = sadd.s32 %s69, 1
    %s71 = scalar_select %p68, %s69, %s70
    %p74 = pneg %p68
    %p75 = scmp.eq.s32.totalorder %s14, 1
    %p76 = por %p74, %p75
    %p77 = scmp.ne.s32.totalorder %s69, %s72
    %p78 = scmp.eq.s32.totalorder %s14, 0
    %p79 = por %p77, %p78
    %p80 = scmp.ne.s32.totalorder %s69, %s72
    %p81 = scmp.eq.s32.totalorder %s19, 1
    %p82 = por %p80, %p81
    %p83 = scmp.ne.s32.totalorder %s72, %s73
    %p84 = scmp.eq.s32.totalorder %s19, 0
    %p85 = por %p83, %p84
    %p86 = scmp.ne.s32.totalorder %s72, %s73
    %p87 = scmp.eq.s32.totalorder %s20, 1
    %p88 = por %p86, %p87
    %p90 = scmp.ne.s32.totalorder %s73, %s89
    %p91 = scmp.eq.s32.totalorder %s20, 0
    %p92 = por %p90, %p91
    %s93 = ssub.s32 %s22, %s36
    %p94 = scmp.eq.s32.totalorder %s93, 0
    %s96 = sadd.s32 %s95, 1
    %s97 = scalar_select %p94, %s95, %s96
    %p100 = pneg %p94
    %p101 = scmp.eq.s32.totalorder %s14, 1
    %p102 = por %p100, %p101
    %p103 = scmp.ne.s32.totalorder %s95, %s98
    %p104 = scmp.eq.s32.totalorder %s14, 0
    %p105 = por %p103, %p104
    %p106 = scmp.ne.s32.totalorder %s95, %s98
    %p107 = scmp.eq.s32.totalorder %s19, 1
    %p108 = por %p106, %p107
    %p109 = scmp.ne.s32.totalorder %s98, %s99
    %p110 = scmp.eq.s32.totalorder %s19, 0
    %p111 = por %p109, %p110
    %p112 = scmp.ne.s32.totalorder %s98, %s99
    %p113 = scmp.eq.s32.totalorder %s20, 1
    %p114 = por %p112, %p113
    %p116 = scmp.ne.s32.totalorder %s99, %s115
    %p117 = scmp.eq.s32.totalorder %s20, 0
    %p118 = por %p116, %p117
    %s119 = ssub.s32 %s23, %s32
    %p120 = scmp.eq.s32.totalorder %s119, 0
    %s122 = sadd.s32 %s121, 1
    %s123 = scalar_select %p120, %s121, %s122
    %p126 = pneg %p120
    %p127 = scmp.eq.s32.totalorder %s14, 1
    %p128 = por %p126, %p127
    %p129 = scmp.ne.s32.totalorder %s121, %s124
    %p130 = scmp.eq.s32.totalorder %s14, 0
    %p131 = por %p129, %p130
    %p132 = scmp.ne.s32.totalorder %s121, %s124
    %p133 = scmp.eq.s32.totalorder %s19, 1
    %p134 = por %p132, %p133
    %p135 = scmp.ne.s32.totalorder %s124, %s125
    %p136 = scmp.eq.s32.totalorder %s19, 0
    %p137 = por %p135, %p136
    %p138 = scmp.ne.s32.totalorder %s124, %s125
    %p139 = scmp.eq.s32.totalorder %s20, 1
    %p140 = por %p138, %p139
    %p142 = scmp.ne.s32.totalorder %s125, %s141
    %p143 = scmp.eq.s32.totalorder %s20, 0
    %p144 = por %p142, %p143
    %s145 = ssub.s32 %s21, %s40
    %s146 = ssub.s32 %s22, %s36
    %s147 = sor.u32 %s145, %s146
    %s148 = ssub.s32 %s23, %s32
    %s149 = sor.u32 %s147, %s148
    %p150 = scmp.eq.s32.totalorder %s149, 0
    %s152 = sadd.s32 %s151, 1
    %s153 = scalar_select %p150, %s151, %s152
    %p156 = pneg %p150
    %p157 = scmp.eq.s32.totalorder %s14, 1
    %p158 = por %p156, %p157
    %p159 = scmp.ne.s32.totalorder %s151, %s154
    %p160 = scmp.eq.s32.totalorder %s14, 0
    %p161 = por %p159, %p160
    %p162 = scmp.ne.s32.totalorder %s151, %s154
    %p163 = scmp.eq.s32.totalorder %s19, 1
    %p164 = por %p162, %p163
    %p165 = scmp.ne.s32.totalorder %s154, %s155
    %p166 = scmp.eq.s32.totalorder %s19, 0
    %p167 = por %p165, %p166
    %p168 = scmp.ne.s32.totalorder %s154, %s155
    %p169 = scmp.eq.s32.totalorder %s20, 1
    %p170 = por %p168, %p169
    %p172 = scmp.ne.s32.totalorder %s155, %s171
    %p173 = scmp.eq.s32.totalorder %s20, 0
    %p174 = por %p172, %p173
    %s175 = ssub.s32 %s21, %s40
    %s176 = ssub.s32 %s22, %s36
    %s177 = sor.u32 %s175, %s176
    %s178 = ssub.s32 %s23, %s32
    %s179 = sor.u32 %s177, %s178
    %p180 = scmp.eq.s32.totalorder %s179, 0
    %s182 = sadd.s32 %s181, 1
    %s183 = scalar_select %p180, %s181, %s182
    %p186 = pneg %p180
    %p187 = scmp.eq.s32.totalorder %s14, 1
    %p188 = por %p186, %p187
    %p189 = scmp.ne.s32.totalorder %s181, %s184
    %p190 = scmp.eq.s32.totalorder %s14, 0
    %p191 = por %p189, %p190
    %p192 = scmp.ne.s32.totalorder %s181, %s184
    %p193 = scmp.eq.s32.totalorder %s19, 1
    %p194 = por %p192, %p193
    %p195 = scmp.ne.s32.totalorder %s184, %s185
    %p196 = scmp.eq.s32.totalorder %s19, 0
    %p197 = por %p195, %p196
    %p198 = scmp.ne.s32.totalorder %s184, %s185
    %p199 = scmp.eq.s32.totalorder %s20, 1
    %p200 = por %p198, %p199
    %p202 = scmp.ne.s32.totalorder %s185, %s201
    %p203 = scmp.eq.s32.totalorder %s20, 0
    %p204 = por %p202, %p203
    %s205 = ssub.s32 %s21, %s40
    %s206 = ssub.s32 %s22, %s36
    %s207 = sor.u32 %s205, %s206
    %s208 = ssub.s32 %s23, %s32
    %s209 = sor.u32 %s207, %s208
    %p210 = scmp.eq.s32.totalorder %s209, 0
    %s212 = sadd.s32 %s211, 1
    %s213 = scalar_select %p210, %s211, %s212
    %p216 = pneg %p210
    %p217 = scmp.eq.s32.totalorder %s14, 1
    %p218 = por %p216, %p217
    %p219 = scmp.ne.s32.totalorder %s211, %s214
    %p220 = scmp.eq.s32.totalorder %s14, 0
    %p221 = por %p219, %p220
    %p222 = scmp.ne.s32.totalorder %s211, %s214
    %p223 = scmp.eq.s32.totalorder %s19, 1
    %p224 = por %p222, %p223
    %p225 = scmp.ne.s32.totalorder %s214, %s215
    %p226 = scmp.eq.s32.totalorder %s19, 0
    %p227 = por %p225, %p226
    %p228 = scmp.ne.s32.totalorder %s214, %s215
    %p229 = scmp.eq.s32.totalorder %s20, 1
    %p230 = por %p228, %p229
    %p232 = scmp.ne.s32.totalorder %s215, %s231
    %p233 = scmp.eq.s32.totalorder %s20, 0
    %p234 = por %p232, %p233
    %s235 = ssub.s32 %s21, %s40
    %s236 = ssub.s32 %s22, %s36
    %s237 = sor.u32 %s235, %s236
    %s238 = ssub.s32 %s23, %s32
    %s239 = sor.u32 %s237, %s238
    %p240 = scmp.eq.s32.totalorder %s239, 0
    %s242 = sadd.s32 %s241, 1
    %s243 = scalar_select %p240, %s241, %s242
    %p246 = pneg %p240
    %p247 = scmp.eq.s32.totalorder %s14, 1
    %p248 = por %p246, %p247
    %p249 = scmp.ne.s32.totalorder %s241, %s244
    %p250 = scmp.eq.s32.totalorder %s14, 0
    %p251 = por %p249, %p250
    %p252 = scmp.ne.s32.totalorder %s241, %s244
    %p253 = scmp.eq.s32.totalorder %s19, 1
    %p254 = por %p252, %p253
    %p255 = scmp.ne.s32.totalorder %s244, %s245
    %p256 = scmp.eq.s32.totalorder %s19, 0
    %p257 = por %p255, %p256
    %p258 = scmp.ne.s32.totalorder %s244, %s245
    %p259 = scmp.eq.s32.totalorder %s20, 1
    %p260 = por %p258, %p259
    %p262 = scmp.ne.s32.totalorder %s245, %s261
    %p263 = scmp.eq.s32.totalorder %s20, 0
    %p264 = por %p262, %p263
    %p265 = scmp.le.s32.totalorder 1, %s14
    %p266 = scmp.lt.s32.totalorder %s14, 3
    %p267 = pnand %p265, %p266
    %p268 = pneg %p267
    // Predicated region
    $region9: #{basic_block_pallas.4} parent=5 // pred_check
      _
    $region10: #{basic_block_pallas.4} parent=5 // pred_check_branch
      %270 = sbr.rel (%p267) target = $region12
    $region11: #{basic_block_pallas.4} parent=5 // pred_region
      %s271 = ssub.s32 %s14, 1
      // Predicated region
      $region13: #{basic_block_pallas.4} parent=11 // pred_check
        %p272 = pneg %p85
      $region14: #{basic_block_pallas.4} parent=11 // pred_check_branch
        %274 = sbr.rel (%p272) target = $region16
      $region15: #{basic_block_pallas.4} parent=11 // pred_region
        %p275 = scmp.lt.s32.totalorder %s26, 0
        %s276 = scalar_select %p275, %s26, 0
        %s277 = smul.addr %s276, 4
        %s278 = scalar_lea.vmem %s1, %s277
      $region16: #{basic_block_pallas.4} parent=11 // pred_fallthru
        _
      // Predicated region
      $region17: #{basic_block_pallas.4} parent=11 // pred_check
        %p279 = pneg %p111
      $region18: #{basic_block_pallas.4} parent=11 // pred_check_branch
        %281 = sbr.rel (%p279) target = $region20
      $region19: #{basic_block_pallas.4} parent=11 // pred_region
        %s282 = smul.u32 18, %s25
        %p283 = scmp.lt.s32.totalorder %s282, 17
        %s284 = scalar_select %p283, %s282, 17
        %s285 = smul.addr %s284, 8
        %s286 = scalar_lea.vmem %s2, %s285
        %s287 = smul.u32 18, %s25
      $region20: #{basic_block_pallas.4} parent=11 // pred_fallthru
        _
      // Predicated region
      $region21: #{basic_block_pallas.4} parent=11 // pred_check
        %p288 = pneg %p137
      $region22: #{basic_block_pallas.4} parent=11 // pred_check_branch
        %290 = sbr.rel (%p288) target = $region24
      $region23: #{basic_block_pallas.4} parent=11 // pred_region
        %p291 = scmp.lt.s32.totalorder %s26, 0
        %s292 = scalar_select %p291, %s26, 0
        %s293 = smul.addr %s292, 4
        %s294 = scalar_lea.vmem %s3, %s293
      $region24: #{basic_block_pallas.4} parent=11 // pred_fallthru
        _
    $region12: #{basic_block_pallas.4} parent=5 // pred_fallthru
      _
    %p295 = scmp.lt.s32.totalorder %s14, 2
    // Predicated region
    $region25: #{basic_block_pallas.4} parent=5 // pred_check
      %p296 = pneg %p295
    $region26: #{basic_block_pallas.4} parent=5 // pred_check_branch
      %298 = sbr.rel (%p296) target = $region28
    $region27: #{basic_block_pallas.4} parent=5 // pred_region
      // Predicated region
      $region29: #{basic_block_pallas.4} parent=27 // pred_check
        %p299 = pneg %p53
      $region30: #{basic_block_pallas.4} parent=27 // pred_check_branch
        %301 = sbr.rel (%p299) target = $region32
      $region31: #{basic_block_pallas.4} parent=27 // pred_region
        %p302 = scmp.lt.s32.totalorder %s21, 1
        %s303 = scalar_select %p302, %s21, 1
        %s304 = smul.addr %s303, 41
        %s305 = smul.addr %s304, 8
        %s306 = scalar_lea.vmem %s0, %s305
      $region32: #{basic_block_pallas.4} parent=27 // pred_fallthru
        _
    $region28: #{basic_block_pallas.4} parent=5 // pred_fallthru
      _
    %p307 = scmp.le.s32.totalorder 1, %s14
    %p308 = scmp.lt.s32.totalorder %s14, 3
    %p309 = pnand %p307, %p308
    %p310 = pneg %p309
    // Predicated region
    $region33: #{basic_block_pallas.4} parent=5 // pred_check
      _
    $region34: #{basic_block_pallas.4} parent=5 // pred_check_branch
      %312 = sbr.rel (%p309) target = $region36
    $region35: #{basic_block_pallas.4} parent=5 // pred_region
      %s313 = ssub.s32 %s14, 1
      %p314 = scmp.lt.s32.totalorder %s24, 1
      %s315 = scalar_select %p314, %s24, 1
      %s316 = smul.addr %s315, 41
      %s317 = smul.addr %s316, 8
      %s318 = scalar_lea.vmem %s0, %s317
      %p319 = pneg %p59
      %p320 = pneg %p56
      %p321 = scmp.lt.s32.totalorder %s26, 0
      %s322 = scalar_select %p321, %s26, 0
      %s323 = smul.addr %s322, 4
      %s324 = scalar_lea.vmem %s1, %s323
      %p325 = pneg %p85
      %p326 = pneg %p82
      %s327 = smul.u32 18, %s25
      %p328 = scmp.lt.s32.totalorder %s327, 17
      %s329 = scalar_select %p328, %s327, 17
      %s330 = smul.addr %s329, 8
      %s331 = scalar_lea.vmem %s2, %s330
      %p332 = pneg %p111
      %p333 = pneg %p108
      %p334 = scmp.lt.s32.totalorder %s26, 0
      %s335 = scalar_select %p334, %s26, 0
      %s336 = smul.addr %s335, 4
      %s337 = scalar_lea.vmem %s3, %s336
      %p338 = pneg %p137
      %p339 = pneg %p134
      %p340 = pneg %p167
      %p341 = pneg %p164
      %s342 = smul.u32 18, %s25
      %p343 = scmp.lt.s32.totalorder %s24, 1
      %s344 = scalar_select %p343, %s24, 1
      %p345 = scmp.lt.s32.totalorder %s342, 17
      %s346 = scalar_select %p345, %s342, 17
      %p347 = scmp.lt.s32.totalorder %s26, 0
      %s348 = scalar_select %p347, %s26, 0
      %s349 = sadd.s32 %s348, %s346
      %s350 = smul.addr %s344, 18
      %s351 = sadd.s32 %s349, %s350
      %s352 = smul.addr %s351, 4
      %s353 = scalar_lea.vmem %s4, %s352
      %p354 = pneg %p197
      %p355 = pneg %p194
      %p356 = scmp.lt.s32.totalorder %s24, 1
      %s357 = scalar_select %p356, %s24, 1
      %p358 = scmp.lt.s32.totalorder %s25, 0
      %s359 = scalar_select %p358, %s25, 0
      %p360 = scmp.lt.s32.totalorder %s26, 0
      %s361 = scalar_select %p360, %s26, 0
      %s362 = sadd.s32 %s361, %s359
      %s363 = sadd.s32 %s362, %s357
      %s364 = smul.addr %s363, 2
      %s365 = scalar_lea.vmem %s5, %s364
      %p366 = pneg %p227
      %p367 = pneg %p224
      %s368 = smul.u32 18, %s25
      %p369 = scmp.lt.s32.totalorder %s24, 1
      %s370 = scalar_select %p369, %s24, 1
      %p371 = scmp.lt.s32.totalorder %s368, 17
      %s372 = scalar_select %p371, %s368, 17
      %p373 = scmp.lt.s32.totalorder %s26, 0
      %s374 = scalar_select %p373, %s26, 0
      %s375 = sadd.s32 %s374, %s372
      %s376 = smul.addr %s370, 18
      %s377 = sadd.s32 %s375, %s376
      %s378 = smul.addr %s377, 4
      %s379 = scalar_lea.vmem %s6, %s378
      %p380 = pneg %p257
      %p381 = pneg %p254
      %p382 = scmp.lt.s32.totalorder %s24, 1
      %s383 = scalar_select %p382, %s24, 1
      %p384 = scmp.lt.s32.totalorder %s25, 0
      %s385 = scalar_select %p384, %s25, 0
      %p386 = scmp.lt.s32.totalorder %s26, 0
      %s387 = scalar_select %p386, %s26, 0
      %s388 = sadd.s32 %s387, %s385
      %s389 = sadd.s32 %s388, %s383
      %s390 = smul.addr %s389, 2
      %s391 = scalar_lea.vmem %s7, %s390
      %p392 = scmp.lt.s32.totalorder %s24, 1
      %s393 = scalar_select %p392, %s24, 1
      %s394 = smul.addr %s393, 41
      %s395 = smul.addr %s394, 8
      %s396 = scalar_lea.vmem %s0, %s395
      %p397 = scmp.lt.s32.totalorder %s26, 0
      %s398 = scalar_select %p397, %s26, 0
      %s399 = smul.addr %s398, 4
      %s400 = scalar_lea.vmem %s1, %s399
      %s401 = smul.u32 18, %s25
      %p402 = scmp.lt.s32.totalorder %s401, 17
      %s403 = scalar_select %p402, %s401, 17
      %s404 = smul.addr %s403, 8
      %s405 = scalar_lea.vmem %s2, %s404
      %s406 = smul.u32 18, %s25
      %p407 = scmp.lt.s32.totalorder %s26, 0
      %s408 = scalar_select %p407, %s26, 0
      %s409 = smul.addr %s408, 4
      %s410 = scalar_lea.vmem %s3, %s409
      %s411 = smul.u32 18, %s25
      %p412 = scmp.lt.s32.totalorder %s24, 1
      %s413 = scalar_select %p412, %s24, 1
      %p414 = scmp.lt.s32.totalorder %s411, 17
      %s415 = scalar_select %p414, %s411, 17
      %p416 = scmp.lt.s32.totalorder %s26, 0
      %s417 = scalar_select %p416, %s26, 0
      %s418 = sadd.s32 %s417, %s415
      %s419 = smul.addr %s413, 18
      %s420 = sadd.s32 %s418, %s419
      %s421 = smul.addr %s420, 4
      %s422 = scalar_lea.vmem %s4, %s421
      %s423 = smul.u32 18, %s25
      %p424 = scmp.lt.s32.totalorder %s24, 1
      %s425 = scalar_select %p424, %s24, 1
      %p426 = scmp.lt.s32.totalorder %s25, 0
      %s427 = scalar_select %p426, %s25, 0
      %p428 = scmp.lt.s32.totalorder %s26, 0
      %s429 = scalar_select %p428, %s26, 0
      %s430 = sadd.s32 %s429, %s427
      %s431 = sadd.s32 %s430, %s425
      %s432 = smul.addr %s431, 2
      %s433 = scalar_lea.vmem %s5, %s432
      %s434 = smul.u32 18, %s25
      %p435 = scmp.lt.s32.totalorder %s24, 1
      %s436 = scalar_select %p435, %s24, 1
      %p437 = scmp.lt.s32.totalorder %s434, 17
      %s438 = scalar_select %p437, %s434, 17
      %p439 = scmp.lt.s32.totalorder %s26, 0
      %s440 = scalar_select %p439, %s26, 0
      %s441 = sadd.s32 %s440, %s438
      %s442 = smul.addr %s436, 18
      %s443 = sadd.s32 %s441, %s442
      %s444 = smul.addr %s443, 4
      %s445 = scalar_lea.vmem %s6, %s444
      %s446 = smul.u32 18, %s25
      %p447 = scmp.lt.s32.totalorder %s24, 1
      %s448 = scalar_select %p447, %s24, 1
      %p449 = scmp.lt.s32.totalorder %s25, 0
      %s450 = scalar_select %p449, %s25, 0
      %p451 = scmp.lt.s32.totalorder %s26, 0
      %s452 = scalar_select %p451, %s26, 0
      %s453 = sadd.s32 %s452, %s450
      %s454 = sadd.s32 %s453, %s448
      %s455 = smul.addr %s454, 2
      %s456 = scalar_lea.vmem %s7, %s455
      %s457 = smul.u32 %s25, 144
      %s458 = scalar_lea.vmem %s396, %s457
      %v459 = vld [vmem:[%s458] sm:$0xff]
      %v460 = vld [vmem:[%s458 + $0x8] sm:$0xff]
      %v461 = vld [vmem:[%s458 + $0x10] sm:$0xff]
      %v462 = vld [vmem:[%s458 + $0x18] sm:$0xff]
      %v463 = vld [vmem:[%s458 + $0x20] sm:$0xff]
      %v464 = vld [vmem:[%s458 + $0x28] sm:$0xff]
      %v465 = vld [vmem:[%s458 + $0x30] sm:$0xff]
      %v466 = vld [vmem:[%s458 + $0x38] sm:$0xff]
      %v467 = vld [vmem:[%s458 + $0x40] sm:$0xff]
      %v468 = vld [vmem:[%s458 + $0x48] sm:$0xff]
      %v469 = vld [vmem:[%s458 + $0x50] sm:$0xff]
      %v470 = vld [vmem:[%s458 + $0x58] sm:$0xff]
      %v471 = vld [vmem:[%s458 + $0x60] sm:$0xff]
      %v472 = vld [vmem:[%s458 + $0x68] sm:$0xff]
      %v473 = vld [vmem:[%s458 + $0x70] sm:$0xff]
      %v474 = vld [vmem:[%s458 + $0x78] sm:$0xff]
      %v475 = vld [vmem:[%s458 + $0x80] sm:$0xff]
      %v476 = vld [vmem:[%s458 + $0x88] sm:$0xff]
      %v477 = vpack.c.bf16 %v460, %v459
      %v478 = vpack.c.bf16 %v462, %v461
      %v479 = vpack.c.bf16 %v464, %v463
      %v480 = vpack.c.bf16 %v466, %v465
      %v481 = vpack.c.bf16 %v468, %v467
      %v482 = vpack.c.bf16 %v470, %v469
      %v483 = vpack.c.bf16 %v472, %v471
      %v484 = vpack.c.bf16 %v474, %v473
      %v485 = vpack.c.bf16 %v476, %v475
      %v486 = vld [vmem:[%s400] sm:$0xf]
      %v487 = vld [vmem:[%s400 + $0x4] sm:$0xf]
      %v488 = vld [vmem:[%s400 + $0x8] sm:$0xf]
      %v489 = vld [vmem:[%s400 + $0xc] sm:$0xf]
      %v490 = vld [vmem:[%s400 + $0x10] sm:$0xf]
      %v491 = vld [vmem:[%s400 + $0x14] sm:$0xf]
      %v492 = vld [vmem:[%s400 + $0x18] sm:$0xf]
      %v493 = vld [vmem:[%s400 + $0x1c] sm:$0xf]
      %v494 = vld [vmem:[%s400 + $0x20] sm:$0xf]
      %v495 = vld [vmem:[%s400 + $0x24] sm:$0xf]
      %v496 = vld [vmem:[%s400 + $0x28] sm:$0xf]
      %v497 = vld [vmem:[%s400 + $0x2c] sm:$0xf]
      %v498 = vld [vmem:[%s400 + $0x30] sm:$0xf]
      %v499 = vld [vmem:[%s400 + $0x34] sm:$0xf]
      %v500 = vld [vmem:[%s400 + $0x38] sm:$0xf]
      %v501 = vld [vmem:[%s400 + $0x3c] sm:$0xf]
      %v518 = vunpack.c.l.b16 %v486
      %v519 = vunpack.c.l.b16 %v487
      %v520 = vunpack.c.l.b16 %v488
      %v521 = vunpack.c.l.b16 %v489
      %v522 = vunpack.c.l.b16 %v490
      %v523 = vunpack.c.l.b16 %v491
      %v524 = vunpack.c.l.b16 %v492
      %v525 = vunpack.c.l.b16 %v493
      %v526 = vunpack.c.l.b16 %v494
      %v527 = vunpack.c.l.b16 %v495
      %v528 = vunpack.c.l.b16 %v496
      %v529 = vunpack.c.l.b16 %v497
      %v530 = vunpack.c.l.b16 %v498
      %v531 = vunpack.c.l.b16 %v499
      %v532 = vunpack.c.l.b16 %v500
      %v533 = vunpack.c.l.b16 %v501
      %v534 = vpack.c.b16 %v519, %v518
      %v535 = vpack.c.b16 %v521, %v520
      %v536 = vpack.c.b16 %v523, %v522
      %v537 = vpack.c.b16 %v525, %v524
      %v538 = vpack.c.b16 %v527, %v526
      %v539 = vpack.c.b16 %v529, %v528
      %v540 = vpack.c.b16 %v531, %v530
      %v541 = vpack.c.b16 %v533, %v532
      %550 = vmatpush.bf16.msra.mxu0 %v541
      %551 = vmatpush.bf16.msra.mxu0 %v540
      %552 = vmatpush.bf16.msra.mxu0 %v539
      %553 = vmatpush.bf16.msra.mxu0 %v538
      %554 = vmatpush.bf16.msra.mxu0 %v537
      %555 = vmatpush.bf16.msra.mxu0 %v536
      %556 = vmatpush.bf16.msra.mxu0 %v535
      %557 = vmatpush.bf16.msra.mxu0 %v534
      %558 = vmatmul.bf16.gmra.mxu0 %v477
      %v559 = vpop.f32.mrf.mxu0
      %v560 = vadd.f32 0.0, %v559
      %v561 = vpop.f32.mrf.mxu0
      %v562 = vadd.f32 0.0, %v561
      %563 = vmatmul.bf16.gmra.mxu0 %v478
      %v564 = vpop.f32.mrf.mxu0
      %v565 = vadd.f32 0.0, %v564
      %v566 = vpop.f32.mrf.mxu0
      %v567 = vadd.f32 0.0, %v566
      %568 = vmatmul.bf16.gmra.mxu0 %v479
      %v569 = vpop.f32.mrf.mxu0
      %v570 = vadd.f32 0.0, %v569
      %v571 = vpop.f32.mrf.mxu0
      %v572 = vadd.f32 0.0, %v571
      %573 = vmatmul.bf16.gmra.mxu0 %v480
      %v574 = vpop.f32.mrf.mxu0
      %v575 = vadd.f32 0.0, %v574
      %v576 = vpop.f32.mrf.mxu0
      %v577 = vadd.f32 0.0, %v576
      %578 = vmatmul.bf16.gmra.mxu0 %v481
      %v579 = vpop.f32.mrf.mxu0
      %v580 = vadd.f32 0.0, %v579
      %v581 = vpop.f32.mrf.mxu0
      %v582 = vadd.f32 0.0, %v581
      %583 = vmatmul.bf16.gmra.mxu0 %v482
      %v584 = vpop.f32.mrf.mxu0
      %v585 = vadd.f32 0.0, %v584
      %v586 = vpop.f32.mrf.mxu0
      %v587 = vadd.f32 0.0, %v586
      %588 = vmatmul.bf16.gmra.mxu0 %v483
      %v589 = vpop.f32.mrf.mxu0
      %v590 = vadd.f32 0.0, %v589
      %v591 = vpop.f32.mrf.mxu0
      %v592 = vadd.f32 0.0, %v591
      %593 = vmatmul.bf16.gmra.mxu0 %v484
      %v594 = vpop.f32.mrf.mxu0
      %v595 = vadd.f32 0.0, %v594
      %v596 = vpop.f32.mrf.mxu0
      %v597 = vadd.f32 0.0, %v596
      %598 = vmatmul.bf16.gmra.mxu0 %v485
      %v599 = vpop.f32.mrf.mxu0
      %v600 = vadd.f32 0.0, %v599
      %v601 = vpop.f32.mrf.mxu0
      %v602 = vadd.f32 0.0, %v601
      %603 = vdwg.mxu0
      %604 = vst [vmem:[#allocation2] sm:$0xff] %v560
      %605 = vst [vmem:[#allocation2 + $0x8] sm:$0xff] %v562
      %606 = vst [vmem:[#allocation2 + $0x10] sm:$0xff] %v565
      %607 = vst [vmem:[#allocation2 + $0x18] sm:$0xff] %v567
      %608 = vst [vmem:[#allocation2 + $0x20] sm:$0xff] %v570
      %609 = vst [vmem:[#allocation2 + $0x28] sm:$0xff] %v572
      %610 = vst [vmem:[#allocation2 + $0x30] sm:$0xff] %v575
      %611 = vst [vmem:[#allocation2 + $0x38] sm:$0xff] %v577
      %612 = vst [vmem:[#allocation2 + $0x40] sm:$0xff] %v580
      %613 = vst [vmem:[#allocation2 + $0x48] sm:$0xff] %v582
      %614 = vst [vmem:[#allocation2 + $0x50] sm:$0xff] %v585
      %615 = vst [vmem:[#allocation2 + $0x58] sm:$0xff] %v587
      %616 = vst [vmem:[#allocation2 + $0x60] sm:$0xff] %v590
      %617 = vst [vmem:[#allocation2 + $0x68] sm:$0xff] %v592
      %618 = vst [vmem:[#allocation2 + $0x70] sm:$0xff] %v595
      %619 = vst [vmem:[#allocation2 + $0x78] sm:$0xff] %v597
      %620 = vst [vmem:[#allocation2 + $0x80] sm:$0xff] %v600
      %621 = vst [vmem:[#allocation2 + $0x88] sm:$0xff] %v602
      %s622 = sadd.s32 %s457, 9
      %s623 = scalar_lea.vmem %s396, %s622
      %v624 = vld [vmem:[%s623] sm:$0xff]
      %v625 = vld [vmem:[%s623 + $0x8] sm:$0xff]
      %v626 = vld [vmem:[%s623 + $0x10] sm:$0xff]
      %v627 = vld [vmem:[%s623 + $0x18] sm:$0xff]
      %v628 = vld [vmem:[%s623 + $0x20] sm:$0xff]
      %v629 = vld [vmem:[%s623 + $0x28] sm:$0xff]
      %v630 = vld [vmem:[%s623 + $0x30] sm:$0xff]
      %v631 = vld [vmem:[%s623 + $0x38] sm:$0xff]
      %v632 = vld [vmem:[%s623 + $0x40] sm:$0xff]
      %v633 = vld [vmem:[%s623 + $0x48] sm:$0xff]
      %v634 = vld [vmem:[%s623 + $0x50] sm:$0xff]
      %v635 = vld [vmem:[%s623 + $0x58] sm:$0xff]
      %v636 = vld [vmem:[%s623 + $0x60] sm:$0xff]
      %v637 = vld [vmem:[%s623 + $0x68] sm:$0xff]
      %v638 = vld [vmem:[%s623 + $0x70] sm:$0xff]
      %v639 = vld [vmem:[%s623 + $0x78] sm:$0xff]
      %v640 = vld [vmem:[%s623 + $0x80] sm:$0xff]
      %v641 = vld [vmem:[%s623 + $0x88] sm:$0xff]
      %v642 = vpack.c.bf16 %v625, %v624
      %v643 = vpack.c.bf16 %v627, %v626
      %v644 = vpack.c.bf16 %v629, %v628
      %v645 = vpack.c.bf16 %v631, %v630
      %v646 = vpack.c.bf16 %v633, %v632
      %v647 = vpack.c.bf16 %v635, %v634
      %v648 = vpack.c.bf16 %v637, %v636
      %v649 = vpack.c.bf16 %v639, %v638
      %v650 = vpack.c.bf16 %v641, %v640
      %s651 = scalar_lea.vmem %s400, 64
      %v652 = vld [vmem:[%s651] sm:$0xf]
      %v653 = vld [vmem:[%s651 + $0x4] sm:$0xf]
      %v654 = vld [vmem:[%s651 + $0x8] sm:$0xf]
      %v655 = vld [vmem:[%s651 + $0xc] sm:$0xf]
      %v656 = vld [vmem:[%s651 + $0x10] sm:$0xf]
      %v657 = vld [vmem:[%s651 + $0x14] sm:$0xf]
      %v658 = vld [vmem:[%s651 + $0x18] sm:$0xf]
      %v659 = vld [vmem:[%s651 + $0x1c] sm:$0xf]
      %v660 = vld [vmem:[%s651 + $0x20] sm:$0xf]
      %v661 = vld [vmem:[%s651 + $0x24] sm:$0xf]
      %v662 = vld [vmem:[%s651 + $0x28] sm:$0xf]
      %v663 = vld [vmem:[%s651 + $0x2c] sm:$0xf]
      %v664 = vld [vmem:[%s651 + $0x30] sm:$0xf]
      %v665 = vld [vmem:[%s651 + $0x34] sm:$0xf]
      %v666 = vld [vmem:[%s651 + $0x38] sm:$0xf]
      %v667 = vld [vmem:[%s651 + $0x3c] sm:$0xf]
      %v684 = vunpack.c.l.b16 %v652
      %v685 = vunpack.c.l.b16 %v653
      %v686 = vunpack.c.l.b16 %v654
      %v687 = vunpack.c.l.b16 %v655
      %v688 = vunpack.c.l.b16 %v656
      %v689 = vunpack.c.l.b16 %v657
      %v690 = vunpack.c.l.b16 %v658
      %v691 = vunpack.c.l.b16 %v659
      %v692 = vunpack.c.l.b16 %v660
      %v693 = vunpack.c.l.b16 %v661
      %v694 = vunpack.c.l.b16 %v662
      %v695 = vunpack.c.l.b16 %v663
      %v696 = vunpack.c.l.b16 %v664
      %v697 = vunpack.c.l.b16 %v665
      %v698 = vunpack.c.l.b16 %v666
      %v699 = vunpack.c.l.b16 %v667
      %v700 = vpack.c.b16 %v685, %v684
      %v701 = vpack.c.b16 %v687, %v686
      %v702 = vpack.c.b16 %v689, %v688
      %v703 = vpack.c.b16 %v691, %v690
      %v704 = vpack.c.b16 %v693, %v692
      %v705 = vpack.c.b16 %v695, %v694
      %v706 = vpack.c.b16 %v697, %v696
      %v707 = vpack.c.b16 %v699, %v698
      %716 = vmatpush.bf16.msra.mxu0 %v707
      %717 = vmatpush.bf16.msra.mxu0 %v706
      %718 = vmatpush.bf16.msra.mxu0 %v705
      %719 = vmatpush.bf16.msra.mxu0 %v704
      %720 = vmatpush.bf16.msra.mxu0 %v703
      %721 = vmatpush.bf16.msra.mxu0 %v702
      %722 = vmatpush.bf16.msra.mxu0 %v701
      %723 = vmatpush.bf16.msra.mxu0 %v700
      %724 = vmatmul.bf16.gmra.mxu0 %v642
      %v725 = vpop.f32.mrf.mxu0
      %v726 = vadd.f32 0.0, %v725
      %v727 = vpop.f32.mrf.mxu0
      %v728 = vadd.f32 0.0, %v727
      %729 = vmatmul.bf16.gmra.mxu0 %v643
      %v730 = vpop.f32.mrf.mxu0
      %v731 = vadd.f32 0.0, %v730
      %v732 = vpop.f32.mrf.mxu0
      %v733 = vadd.f32 0.0, %v732
      %734 = vmatmul.bf16.gmra.mxu0 %v644
      %v735 = vpop.f32.mrf.mxu0
      %v736 = vadd.f32 0.0, %v735
      %v737 = vpop.f32.mrf.mxu0
      %v738 = vadd.f32 0.0, %v737
      %739 = vmatmul.bf16.gmra.mxu0 %v645
      %v740 = vpop.f32.mrf.mxu0
      %v741 = vadd.f32 0.0, %v740
      %v742 = vpop.f32.mrf.mxu0
      %v743 = vadd.f32 0.0, %v742
      %744 = vmatmul.bf16.gmra.mxu0 %v646
      %v745 = vpop.f32.mrf.mxu0
      %v746 = vadd.f32 0.0, %v745
      %v747 = vpop.f32.mrf.mxu0
      %v748 = vadd.f32 0.0, %v747
      %749 = vmatmul.bf16.gmra.mxu0 %v647
      %v750 = vpop.f32.mrf.mxu0
      %v751 = vadd.f32 0.0, %v750
      %v752 = vpop.f32.mrf.mxu0
      %v753 = vadd.f32 0.0, %v752
      %754 = vmatmul.bf16.gmra.mxu0 %v648
      %v755 = vpop.f32.mrf.mxu0
      %v756 = vadd.f32 0.0, %v755
      %v757 = vpop.f32.mrf.mxu0
      %v758 = vadd.f32 0.0, %v757
      %759 = vmatmul.bf16.gmra.mxu0 %v649
      %v760 = vpop.f32.mrf.mxu0
      %v761 = vadd.f32 0.0, %v760
      %v762 = vpop.f32.mrf.mxu0
      %v763 = vadd.f32 0.0, %v762
      %764 = vmatmul.bf16.gmra.mxu0 %v650
      %v765 = vpop.f32.mrf.mxu0
      %v766 = vadd.f32 0.0, %v765
      %v767 = vpop.f32.mrf.mxu0
      %v768 = vadd.f32 0.0, %v767
      %769 = vdwg.mxu0
      %v770 = vld [vmem:[#allocation2] sm:$0xff]
      %v771 = vld [vmem:[#allocation2 + $0x8] sm:$0xff]
      %v772 = vld [vmem:[#allocation2 + $0x10] sm:$0xff]
      %v773 = vld [vmem:[#allocation2 + $0x18] sm:$0xff]
      %v774 = vld [vmem:[#allocation2 + $0x20] sm:$0xff]
      %v775 = vld [vmem:[#allocation2 + $0x28] sm:$0xff]
      %v776 = vld [vmem:[#allocation2 + $0x30] sm:$0xff]
      %v777 = vld [vmem:[#allocation2 + $0x38] sm:$0xff]
      %v778 = vld [vmem:[#allocation2 + $0x40] sm:$0xff]
      %v779 = vld [vmem:[#allocation2 + $0x48] sm:$0xff]
      %v780 = vld [vmem:[#allocation2 + $0x50] sm:$0xff]
      %v781 = vld [vmem:[#allocation2 + $0x58] sm:$0xff]
      %v782 = vld [vmem:[#allocation2 + $0x60] sm:$0xff]
      %v783 = vld [vmem:[#allocation2 + $0x68] sm:$0xff]
      %v784 = vld [vmem:[#allocation2 + $0x70] sm:$0xff]
      %v785 = vld [vmem:[#allocation2 + $0x78] sm:$0xff]
      %v786 = vld [vmem:[#allocation2 + $0x80] sm:$0xff]
      %v787 = vld [vmem:[#allocation2 + $0x88] sm:$0xff]
      %v788 = vadd.f32 %v770, %v726
      %v789 = vadd.f32 %v771, %v728
      %v790 = vadd.f32 %v772, %v731
      %v791 = vadd.f32 %v773, %v733
      %v792 = vadd.f32 %v774, %v736
      %v793 = vadd.f32 %v775, %v738
      %v794 = vadd.f32 %v776, %v741
      %v795 = vadd.f32 %v777, %v743
      %v796 = vadd.f32 %v778, %v746
      %v797 = vadd.f32 %v779, %v748
      %v798 = vadd.f32 %v780, %v751
      %v799 = vadd.f32 %v781, %v753
      %v800 = vadd.f32 %v782, %v756
      %v801 = vadd.f32 %v783, %v758
      %v802 = vadd.f32 %v784, %v761
      %v803 = vadd.f32 %v785, %v763
      %v804 = vadd.f32 %v786, %v766
      %v805 = vadd.f32 %v787, %v768
      %806 = vst [vmem:[#allocation2] sm:$0xff] %v788
      %807 = vst [vmem:[#allocation2 + $0x8] sm:$0xff] %v789
      %808 = vst [vmem:[#allocation2 + $0x10] sm:$0xff] %v790
      %809 = vst [vmem:[#allocation2 + $0x18] sm:$0xff] %v791
      %810 = vst [vmem:[#allocation2 + $0x20] sm:$0xff] %v792
      %811 = vst [vmem:[#allocation2 + $0x28] sm:$0xff] %v793
      %812 = vst [vmem:[#allocation2 + $0x30] sm:$0xff] %v794
      %813 = vst [vmem:[#allocation2 + $0x38] sm:$0xff] %v795
      %814 = vst [vmem:[#allocation2 + $0x40] sm:$0xff] %v796
      %815 = vst [vmem:[#allocation2 + $0x48] sm:$0xff] %v797
      %816 = vst [vmem:[#allocation2 + $0x50] sm:$0xff] %v798
      %817 = vst [vmem:[#allocation2 + $0x58] sm:$0xff] %v799
      %818 = vst [vmem:[#allocation2 + $0x60] sm:$0xff] %v800
      %819 = vst [vmem:[#allocation2 + $0x68] sm:$0xff] %v801
      %820 = vst [vmem:[#allocation2 + $0x70] sm:$0xff] %v802
      %821 = vst [vmem:[#allocation2 + $0x78] sm:$0xff] %v803
      %822 = vst [vmem:[#allocation2 + $0x80] sm:$0xff] %v804
      %823 = vst [vmem:[#allocation2 + $0x88] sm:$0xff] %v805
      %s824 = sadd.s32 %s457, 1
      %s825 = scalar_lea.vmem %s396, %s824
      %v826 = vld [vmem:[%s825] sm:$0xff]
      %v827 = vld [vmem:[%s825 + $0x8] sm:$0xff]
      %v828 = vld [vmem:[%s825 + $0x10] sm:$0xff]
      %v829 = vld [vmem:[%s825 + $0x18] sm:$0xff]
      %v830 = vld [vmem:[%s825 + $0x20] sm:$0xff]
      %v831 = vld [vmem:[%s825 + $0x28] sm:$0xff]
      %v832 = vld [vmem:[%s825 + $0x30] sm:$0xff]
      %v833 = vld [vmem:[%s825 + $0x38] sm:$0xff]
      %v834 = vld [vmem:[%s825 + $0x40] sm:$0xff]
      %v835 = vld [vmem:[%s825 + $0x48] sm:$0xff]
      %v836 = vld [vmem:[%s825 + $0x50] sm:$0xff]
      %v837 = vld [vmem:[%s825 + $0x58] sm:$0xff]
      %v838 = vld [vmem:[%s825 + $0x60] sm:$0xff]
      %v839 = vld [vmem:[%s825 + $0x68] sm:$0xff]
      %v840 = vld [vmem:[%s825 + $0x70] sm:$0xff]
      %v841 = vld [vmem:[%s825 + $0x78] sm:$0xff]
      %v842 = vld [vmem:[%s825 + $0x80] sm:$0xff]
      %v843 = vld [vmem:[%s825 + $0x88] sm:$0xff]
      %v844 = vpack.c.bf16 %v827, %v826
      %v845 = vpack.c.bf16 %v829, %v828
      %v846 = vpack.c.bf16 %v831, %v830
      %v847 = vpack.c.bf16 %v833, %v832
      %v848 = vpack.c.bf16 %v835, %v834
      %v849 = vpack.c.bf16 %v837, %v836
      %v850 = vpack.c.bf16 %v839, %v838
      %v851 = vpack.c.bf16 %v841, %v840
      %v852 = vpack.c.bf16 %v843, %v842
      %s853 = scalar_lea.vmem %s400, 128
      %v854 = vld [vmem:[%s853] sm:$0xf]
      %v855 = vld [vmem:[%s853 + $0x4] sm:$0xf]
      %v856 = vld [vmem:[%s853 + $0x8] sm:$0xf]
      %v857 = vld [vmem:[%s853 + $0xc] sm:$0xf]
      %v858 = vld [vmem:[%s853 + $0x10] sm:$0xf]
      %v859 = vld [vmem:[%s853 + $0x14] sm:$0xf]
      %v860 = vld [vmem:[%s853 + $0x18] sm:$0xf]
      %v861 = vld [vmem:[%s853 + $0x1c] sm:$0xf]
      %v862 = vld [vmem:[%s853 + $0x20] sm:$0xf]
      %v863 = vld [vmem:[%s853 + $0x24] sm:$0xf]
      %v864 = vld [vmem:[%s853 + $0x28] sm:$0xf]
      %v865 = vld [vmem:[%s853 + $0x2c] sm:$0xf]
      %v866 = vld [vmem:[%s853 + $0x30] sm:$0xf]
      %v867 = vld [vmem:[%s853 + $0x34] sm:$0xf]
      %v868 = vld [vmem:[%s853 + $0x38] sm:$0xf]
      %v869 = vld [vmem:[%s853 + $0x3c] sm:$0xf]
      %v886 = vunpack.c.l.b16 %v854
      %v887 = vunpack.c.l.b16 %v855
      %v888 = vunpack.c.l.b16 %v856
      %v889 = vunpack.c.l.b16 %v857
      %v890 = vunpack.c.l.b16 %v858
      %v891 = vunpack.c.l.b16 %v859
      %v892 = vunpack.c.l.b16 %v860
      %v893 = vunpack.c.l.b16 %v861
      %v894 = vunpack.c.l.b16 %v862
      %v895 = vunpack.c.l.b16 %v863
      %v896 = vunpack.c.l.b16 %v864
      %v897 = vunpack.c.l.b16 %v865
      %v898 = vunpack.c.l.b16 %v866
      %v899 = vunpack.c.l.b16 %v867
      %v900 = vunpack.c.l.b16 %v868
      %v901 = vunpack.c.l.b16 %v869
      %v902 = vpack.c.b16 %v887, %v886
      %v903 = vpack.c.b16 %v889, %v888
      %v904 = vpack.c.b16 %v891, %v890
      %v905 = vpack.c.b16 %v893, %v892
      %v906 = vpack.c.b16 %v895, %v894
      %v907 = vpack.c.b16 %v897, %v896
      %v908 = vpack.c.b16 %v899, %v898
      %v909 = vpack.c.b16 %v901, %v900
      %918 = vmatpush.bf16.msra.mxu0 %v909
      %919 = vmatpush.bf16.msra.mxu0 %v908
      %920 = vmatpush.bf16.msra.mxu0 %v907
      %921 = vmatpush.bf16.msra.mxu0 %v906
      %922 = vmatpush.bf16.msra.mxu0 %v905
      %923 = vmatpush.bf16.msra.mxu0 %v904
      %924 = vmatpush.bf16.msra.mxu0 %v903
      %925 = vmatpush.bf16.msra.mxu0 %v902
      %926 = vmatmul.bf16.gmra.mxu0 %v844
      %v927 = vpop.f32.mrf.mxu0
      %v928 = vadd.f32 0.0, %v927
      %v929 = vpop.f32.mrf.mxu0
      %v930 = vadd.f32 0.0, %v929
      %931 = vmatmul.bf16.gmra.mxu0 %v845
      %v932 = vpop.f32.mrf.mxu0
      %v933 = vadd.f32 0.0, %v932
      %v934 = vpop.f32.mrf.mxu0
      %v935 = vadd.f32 0.0, %v934
      %936 = vmatmul.bf16.gmra.mxu0 %v846
      %v937 = vpop.f32.mrf.mxu0
      %v938 = vadd.f32 0.0, %v937
      %v939 = vpop.f32.mrf.mxu0
      %v940 = vadd.f32 0.0, %v939
      %941 = vmatmul.bf16.gmra.mxu0 %v847
      %v942 = vpop.f32.mrf.mxu0
      %v943 = vadd.f32 0.0, %v942
      %v944 = vpop.f32.mrf.mxu0
      %v945 = vadd.f32 0.0, %v944
      %946 = vmatmul.bf16.gmra.mxu0 %v848
      %v947 = vpop.f32.mrf.mxu0
      %v948 = vadd.f32 0.0, %v947
      %v949 = vpop.f32.mrf.mxu0
      %v950 = vadd.f32 0.0, %v949
      %951 = vmatmul.bf16.gmra.mxu0 %v849
      %v952 = vpop.f32.mrf.mxu0
      %v953 = vadd.f32 0.0, %v952
      %v954 = vpop.f32.mrf.mxu0
      %v955 = vadd.f32 0.0, %v954
      %956 = vmatmul.bf16.gmra.mxu0 %v850
      %v957 = vpop.f32.mrf.mxu0
      %v958 = vadd.f32 0.0, %v957
      %v959 = vpop.f32.mrf.mxu0
      %v960 = vadd.f32 0.0, %v959
      %961 = vmatmul.bf16.gmra.mxu0 %v851
      %v962 = vpop.f32.mrf.mxu0
      %v963 = vadd.f32 0.0, %v962
      %v964 = vpop.f32.mrf.mxu0
      %v965 = vadd.f32 0.0, %v964
      %966 = vmatmul.bf16.gmra.mxu0 %v852
      %v967 = vpop.f32.mrf.mxu0
      %v968 = vadd.f32 0.0, %v967
      %v969 = vpop.f32.mrf.mxu0
      %v970 = vadd.f32 0.0, %v969
      %971 = vdwg.mxu0
      %v972 = vld [vmem:[#allocation2] sm:$0xff]
      %v973 = vld [vmem:[#allocation2 + $0x8] sm:$0xff]
      %v974 = vld [vmem:[#allocation2 + $0x10] sm:$0xff]
      %v975 = vld [vmem:[#allocation2 + $0x18] sm:$0xff]
      %v976 = vld [vmem:[#allocation2 + $0x20] sm:$0xff]
      %v977 = vld [vmem:[#allocation2 + $0x28] sm:$0xff]
      %v978 = vld [vmem:[#allocation2 + $0x30] sm:$0xff]
      %v979 = vld [vmem:[#allocation2 + $0x38] sm:$0xff]
      %v980 = vld [vmem:[#allocation2 + $0x40] sm:$0xff]
      %v981 = vld [vmem:[#allocation2 + $0x48] sm:$0xff]
      %v982 = vld [vmem:[#allocation2 + $0x50] sm:$0xff]
      %v983 = vld [vmem:[#allocation2 + $0x58] sm:$0xff]
      %v984 = vld [vmem:[#allocation2 + $0x60] sm:$0xff]
      %v985 = vld [vmem:[#allocation2 + $0x68] sm:$0xff]
      %v986 = vld [vmem:[#allocation2 + $0x70] sm:$0xff]
      %v987 = vld [vmem:[#allocation2 + $0x78] sm:$0xff]
      %v988 = vld [vmem:[#allocation2 + $0x80] sm:$0xff]
      %v989 = vld [vmem:[#allocation2 + $0x88] sm:$0xff]
      %v990 = vadd.f32 %v972, %v928
      %v991 = vadd.f32 %v973, %v930
      %v992 = vadd.f32 %v974, %v933
      %v993 = vadd.f32 %v975, %v935
      %v994 = vadd.f32 %v976, %v938
      %v995 = vadd.f32 %v977, %v940
      %v996 = vadd.f32 %v978, %v943
      %v997 = vadd.f32 %v979, %v945
      %v998 = vadd.f32 %v980, %v948
      %v999 = vadd.f32 %v981, %v950
      %v1000 = vadd.f32 %v982, %v953
      %v1001 = vadd.f32 %v983, %v955
      %v1002 = vadd.f32 %v984, %v958
      %v1003 = vadd.f32 %v985, %v960
      %v1004 = vadd.f32 %v986, %v963
      %v1005 = vadd.f32 %v987, %v965
      %v1006 = vadd.f32 %v988, %v968
      %v1007 = vadd.f32 %v989, %v970
      %1008 = vst [vmem:[#allocation2] sm:$0xff] %v990
      %1009 = vst [vmem:[#allocation2 + $0x8] sm:$0xff] %v991
      %1010 = vst [vmem:[#allocation2 + $0x10] sm:$0xff] %v992
      %1011 = vst [vmem:[#allocation2 + $0x18] sm:$0xff] %v993
      %1012 = vst [vmem:[#allocation2 + $0x20] sm:$0xff] %v994
      %1013 = vst [vmem:[#allocation2 + $0x28] sm:$0xff] %v995
      %1014 = vst [vmem:[#allocation2 + $0x30] sm:$0xff] %v996
      %1015 = vst [vmem:[#allocation2 + $0x38] sm:$0xff] %v997
      %1016 = vst [vmem:[#allocation2 + $0x40] sm:$0xff] %v998
      %1017 = vst [vmem:[#allocation2 + $0x48] sm:$0xff] %v999
      %1018 = vst [vmem:[#allocation2 + $0x50] sm:$0xff] %v1000
      %1019 = vst [vmem:[#allocation2 + $0x58] sm:$0xff] %v1001
      %1020 = vst [vmem:[#allocation2 + $0x60] sm:$0xff] %v1002
      %1021 = vst [vmem:[#allocation2 + $0x68] sm:$0xff] %v1003
      %1022 = vst [vmem:[#allocation2 + $0x70] sm:$0xff] %v1004
      %1023 = vst [vmem:[#allocation2 + $0x78] sm:$0xff] %v1005
      %1024 = vst [vmem:[#allocation2 + $0x80] sm:$0xff] %v1006
      %1025 = vst [vmem:[#allocation2 + $0x88] sm:$0xff] %v1007
      %s1026 = sadd.s32 %s457, 162
      %s1027 = scalar_lea.vmem %s396, %s1026
      %v1028 = vld [vmem:[%s1027] sm:$0xff]
      %v1029 = vld [vmem:[%s1027 + $0x8] sm:$0xff]
      %v1030 = vld [vmem:[%s1027 + $0x10] sm:$0xff]
      %v1031 = vld [vmem:[%s1027 + $0x18] sm:$0xff]
      %v1032 = vld [vmem:[%s1027 + $0x20] sm:$0xff]
      %v1033 = vld [vmem:[%s1027 + $0x28] sm:$0xff]
      %v1034 = vld [vmem:[%s1027 + $0x30] sm:$0xff]
      %v1035 = vld [vmem:[%s1027 + $0x38] sm:$0xff]
      %v1036 = vld [vmem:[%s1027 + $0x40] sm:$0xff]
      %v1037 = vld [vmem:[%s1027 + $0x48] sm:$0xff]
      %v1038 = vld [vmem:[%s1027 + $0x50] sm:$0xff]
      %v1039 = vld [vmem:[%s1027 + $0x58] sm:$0xff]
      %v1040 = vld [vmem:[%s1027 + $0x60] sm:$0xff]
      %v1041 = vld [vmem:[%s1027 + $0x68] sm:$0xff]
      %v1042 = vld [vmem:[%s1027 + $0x70] sm:$0xff]
      %v1043 = vld [vmem:[%s1027 + $0x78] sm:$0xff]
      %v1044 = vld [vmem:[%s1027 + $0x80] sm:$0xff]
      %v1045 = vld [vmem:[%s1027 + $0x88] sm:$0xff]
      %v1046 = vpack.c.bf16 %v1029, %v1028
      %v1047 = vpack.c.bf16 %v1031, %v1030
      %v1048 = vpack.c.bf16 %v1033, %v1032
      %v1049 = vpack.c.bf16 %v1035, %v1034
      %v1050 = vpack.c.bf16 %v1037, %v1036
      %v1051 = vpack.c.bf16 %v1039, %v1038
      %v1052 = vpack.c.bf16 %v1041, %v1040
      %v1053 = vpack.c.bf16 %v1043, %v1042
      %v1054 = vpack.c.bf16 %v1045, %v1044
      %s1055 = scalar_lea.vmem %s400, 192
      %v1056 = vld [vmem:[%s1055] sm:$0xf]
      %v1057 = vld [vmem:[%s1055 + $0x4] sm:$0xf]
      %v1058 = vld [vmem:[%s1055 + $0x8] sm:$0xf]
      %v1059 = vld [vmem:[%s1055 + $0xc] sm:$0xf]
      %v1060 = vld [vmem:[%s1055 + $0x10] sm:$0xf]
      %v1061 = vld [vmem:[%s1055 + $0x14] sm:$0xf]
      %v1062 = vld [vmem:[%s1055 + $0x18] sm:$0xf]
      %v1063 = vld [vmem:[%s1055 + $0x1c] sm:$0xf]
      %v1064 = vld [vmem:[%s1055 + $0x20] sm:$0xf]
      %v1065 = vld [vmem:[%s1055 + $0x24] sm:$0xf]
      %v1066 = vld [vmem:[%s1055 + $0x28] sm:$0xf]
      %v1067 = vld [vmem:[%s1055 + $0x2c] sm:$0xf]
      %v1068 = vld [vmem:[%s1055 + $0x30] sm:$0xf]
      %v1069 = vld [vmem:[%s1055 + $0x34] sm:$0xf]
      %v1070 = vld [vmem:[%s1055 + $0x38] sm:$0xf]
      %v1071 = vld [vmem:[%s1055 + $0x3c] sm:$0xf]
      %v1088 = vunpack.c.l.b16 %v1056
      %v1089 = vunpack.c.l.b16 %v1057
      %v1090 = vunpack.c.l.b16 %v1058
      %v1091 = vunpack.c.l.b16 %v1059
      %v1092 = vunpack.c.l.b16 %v1060
      %v1093 = vunpack.c.l.b16 %v1061
      %v1094 = vunpack.c.l.b16 %v1062
      %v1095 = vunpack.c.l.b16 %v1063
      %v1096 = vunpack.c.l.b16 %v1064
      %v1097 = vunpack.c.l.b16 %v1065
      %v1098 = vunpack.c.l.b16 %v1066
      %v1099 = vunpack.c.l.b16 %v1067
      %v1100 = vunpack.c.l.b16 %v1068
      %v1101 = vunpack.c.l.b16 %v1069
      %v1102 = vunpack.c.l.b16 %v1070
      %v1103 = vunpack.c.l.b16 %v1071
      %v1104 = vpack.c.b16 %v1089, %v1088
      %v1105 = vpack.c.b16 %v1091, %v1090
      %v1106 = vpack.c.b16 %v1093, %v1092
      %v1107 = vpack.c.b16 %v1095, %v1094
      %v1108 = vpack.c.b16 %v1097, %v1096
      %v1109 = vpack.c.b16 %v1099, %v1098
      %v1110 = vpack.c.b16 %v1101, %v1100
      %v1111 = vpack.c.b16 %v1103, %v1102
      %1120 = vmatpush.bf16.msra.mxu0 %v1111
      %1121 = vmatpush.bf16.msra.mxu0 %v1110
      %1122 = vmatpush.bf16.msra.mxu0 %v1109
      %1123 = vmatpush.bf16.msra.mxu0 %v1108
      %1124 = vmatpush.bf16.msra.mxu0 %v1107
      %1125 = vmatpush.bf16.msra.mxu0 %v1106
      %1126 = vmatpush.bf16.msra.mxu0 %v1105
      %1127 = vmatpush.bf16.msra.mxu0 %v1104
      %1128 = vmatmul.bf16.gmra.mxu0 %v1046
      %v1129 = vpop.f32.mrf.mxu0
      %v1130 = vadd.f32 0.0, %v1129
      %v1131 = vpop.f32.mrf.mxu0
      %v1132 = vadd.f32 0.0, %v1131
      %1133 = vmatmul.bf16.gmra.mxu0 %v1047
      %v1134 = vpop.f32.mrf.mxu0
      %v1135 = vadd.f32 0.0, %v1134
      %v1136 = vpop.f32.mrf.mxu0
      %v1137 = vadd.f32 0.0, %v1136
      %1138 = vmatmul.bf16.gmra.mxu0 %v1048
      %v1139 = vpop.f32.mrf.mxu0
      %v1140 = vadd.f32 0.0, %v1139
      %v1141 = vpop.f32.mrf.mxu0
      %v1142 = vadd.f32 0.0, %v1141
      %1143 = vmatmul.bf16.gmra.mxu0 %v1049
      %v1144 = vpop.f32.mrf.mxu0
      %v1145 = vadd.f32 0.0, %v1144
      %v1146 = vpop.f32.mrf.mxu0
      %v1147 = vadd.f32 0.0, %v1146
      %1148 = vmatmul.bf16.gmra.mxu0 %v1050
      %v1149 = vpop.f32.mrf.mxu0
      %v1150 = vadd.f32 0.0, %v1149
      %v1151 = vpop.f32.mrf.mxu0
      %v1152 = vadd.f32 0.0, %v1151
      %1153 = vmatmul.bf16.gmra.mxu0 %v1051
      %v1154 = vpop.f32.mrf.mxu0
      %v1155 = vadd.f32 0.0, %v1154
      %v1156 = vpop.f32.mrf.mxu0
      %v1157 = vadd.f32 0.0, %v1156
      %1158 = vmatmul.bf16.gmra.mxu0 %v1052
      %v1159 = vpop.f32.mrf.mxu0
      %v1160 = vadd.f32 0.0, %v1159
      %v1161 = vpop.f32.mrf.mxu0
      %v1162 = vadd.f32 0.0, %v1161
      %1163 = vmatmul.bf16.gmra.mxu0 %v1053
      %v1164 = vpop.f32.mrf.mxu0
      %v1165 = vadd.f32 0.0, %v1164
      %v1166 = vpop.f32.mrf.mxu0
      %v1167 = vadd.f32 0.0, %v1166
      %1168 = vmatmul.bf16.gmra.mxu0 %v1054
      %v1169 = vpop.f32.mrf.mxu0
      %v1170 = vadd.f32 0.0, %v1169
      %v1171 = vpop.f32.mrf.mxu0
      %v1172 = vadd.f32 0.0, %v1171
      %1173 = vdwg.mxu0
      %v1174 = vld [vmem:[#allocation2] sm:$0xff]
      %v1175 = vld [vmem:[#allocation2 + $0x8] sm:$0xff]
      %v1176 = vld [vmem:[#allocation2 + $0x10] sm:$0xff]
      %v1177 = vld [vmem:[#allocation2 + $0x18] sm:$0xff]
      %v1178 = vld [vmem:[#allocation2 + $0x20] sm:$0xff]
      %v1179 = vld [vmem:[#allocation2 + $0x28] sm:$0xff]
      %v1180 = vld [vmem:[#allocation2 + $0x30] sm:$0xff]
      %v1181 = vld [vmem:[#allocation2 + $0x38] sm:$0xff]
      %v1182 = vld [vmem:[#allocation2 + $0x40] sm:$0xff]
      %v1183 = vld [vmem:[#allocation2 + $0x48] sm:$0xff]
      %v1184 = vld [vmem:[#allocation2 + $0x50] sm:$0xff]
      %v1185 = vld [vmem:[#allocation2 + $0x58] sm:$0xff]
      %v1186 = vld [vmem:[#allocation2 + $0x60] sm:$0xff]
      %v1187 = vld [vmem:[#allocation2 + $0x68] sm:$0xff]
      %v1188 = vld [vmem:[#allocation2 + $0x70] sm:$0xff]
      %v1189 = vld [vmem:[#allocation2 + $0x78] sm:$0xff]
      %v1190 = vld [vmem:[#allocation2 + $0x80] sm:$0xff]
      %v1191 = vld [vmem:[#allocation2 + $0x88] sm:$0xff]
      %v1192 = vadd.f32 %v1174, %v1130
      %v1193 = vadd.f32 %v1175, %v1132
      %v1194 = vadd.f32 %v1176, %v1135
      %v1195 = vadd.f32 %v1177, %v1137
      %v1196 = vadd.f32 %v1178, %v1140
      %v1197 = vadd.f32 %v1179, %v1142
      %v1198 = vadd.f32 %v1180, %v1145
      %v1199 = vadd.f32 %v1181, %v1147
      %v1200 = vadd.f32 %v1182, %v1150
      %v1201 = vadd.f32 %v1183, %v1152
      %v1202 = vadd.f32 %v1184, %v1155
      %v1203 = vadd.f32 %v1185, %v1157
      %v1204 = vadd.f32 %v1186, %v1160
      %v1205 = vadd.f32 %v1187, %v1162
      %v1206 = vadd.f32 %v1188, %v1165
      %v1207 = vadd.f32 %v1189, %v1167
      %v1208 = vadd.f32 %v1190, %v1170
      %v1209 = vadd.f32 %v1191, %v1172
      %1210 = vst [vmem:[#allocation2] sm:$0xff] %v1192
      %1211 = vst [vmem:[#allocation2 + $0x8] sm:$0xff] %v1193
      %1212 = vst [vmem:[#allocation2 + $0x10] sm:$0xff] %v1194
      %1213 = vst [vmem:[#allocation2 + $0x18] sm:$0xff] %v1195
      %1214 = vst [vmem:[#allocation2 + $0x20] sm:$0xff] %v1196
      %1215 = vst [vmem:[#allocation2 + $0x28] sm:$0xff] %v1197
      %1216 = vst [vmem:[#allocation2 + $0x30] sm:$0xff] %v1198
      %1217 = vst [vmem:[#allocation2 + $0x38] sm:$0xff] %v1199
      %1218 = vst [vmem:[#allocation2 + $0x40] sm:$0xff] %v1200
      %1219 = vst [vmem:[#allocation2 + $0x48] sm:$0xff] %v1201
      %1220 = vst [vmem:[#allocation2 + $0x50] sm:$0xff] %v1202
      %1221 = vst [vmem:[#allocation2 + $0x58] sm:$0xff] %v1203
      %1222 = vst [vmem:[#allocation2 + $0x60] sm:$0xff] %v1204
      %1223 = vst [vmem:[#allocation2 + $0x68] sm:$0xff] %v1205
      %1224 = vst [vmem:[#allocation2 + $0x70] sm:$0xff] %v1206
      %1225 = vst [vmem:[#allocation2 + $0x78] sm:$0xff] %v1207
      %1226 = vst [vmem:[#allocation2 + $0x80] sm:$0xff] %v1208
      %1227 = vst [vmem:[#allocation2 + $0x88] sm:$0xff] %v1209
      %s1228 = sadd.s32 %s457, 171
      %s1229 = scalar_lea.vmem %s396, %s1228
      %v1230 = vld [vmem:[%s1229] sm:$0xff]
      %v1231 = vld [vmem:[%s1229 + $0x8] sm:$0xff]
      %v1232 = vld [vmem:[%s1229 + $0x10] sm:$0xff]
      %v1233 = vld [vmem:[%s1229 + $0x18] sm:$0xff]
      %v1234 = vld [vmem:[%s1229 + $0x20] sm:$0xff]
      %v1235 = vld [vmem:[%s1229 + $0x28] sm:$0xff]
      %v1236 = vld [vmem:[%s1229 + $0x30] sm:$0xff]
      %v1237 = vld [vmem:[%s1229 + $0x38] sm:$0xff]
      %v1238 = vld [vmem:[%s1229 + $0x40] sm:$0xff]
      %v1239 = vld [vmem:[%s1229 + $0x48] sm:$0xff]
      %v1240 = vld [vmem:[%s1229 + $0x50] sm:$0xff]
      %v1241 = vld [vmem:[%s1229 + $0x58] sm:$0xff]
      %v1242 = vld [vmem:[%s1229 + $0x60] sm:$0xff]
      %v1243 = vld [vmem:[%s1229 + $0x68] sm:$0xff]
      %v1244 = vld [vmem:[%s1229 + $0x70] sm:$0xff]
      %v1245 = vld [vmem:[%s1229 + $0x78] sm:$0xff]
      %v1246 = vld [vmem:[%s1229 + $0x80] sm:$0xff]
      %v1247 = vld [vmem:[%s1229 + $0x88] sm:$0xff]
      %v1248 = vpack.c.bf16 %v1231, %v1230
      %v1249 = vpack.c.bf16 %v1233, %v1232
      %v1250 = vpack.c.bf16 %v1235, %v1234
      %v1251 = vpack.c.bf16 %v1237, %v1236
      %v1252 = vpack.c.bf16 %v1239, %v1238
      %v1253 = vpack.c.bf16 %v1241, %v1240
      %v1254 = vpack.c.bf16 %v1243, %v1242
      %v1255 = vpack.c.bf16 %v1245, %v1244
      %v1256 = vpack.c.bf16 %v1247, %v1246
      %s1257 = scalar_lea.vmem %s400, 256
      %v1258 = vld [vmem:[%s1257] sm:$0xf]
      %v1259 = vld [vmem:[%s1257 + $0x4] sm:$0xf]
      %v1260 = vld [vmem:[%s1257 + $0x8] sm:$0xf]
      %v1261 = vld [vmem:[%s1257 + $0xc] sm:$0xf]
      %v1262 = vld [vmem:[%s1257 + $0x10] sm:$0xf]
      %v1263 = vld [vmem:[%s1257 + $0x14] sm:$0xf]
      %v1264 = vld [vmem:[%s1257 + $0x18] sm:$0xf]
      %v1265 = vld [vmem:[%s1257 + $0x1c] sm:$0xf]
      %v1266 = vld [vmem:[%s1257 + $0x20] sm:$0xf]
      %v1267 = vld [vmem:[%s1257 + $0x24] sm:$0xf]
      %v1268 = vld [vmem:[%s1257 + $0x28] sm:$0xf]
      %v1269 = vld [vmem:[%s1257 + $0x2c] sm:$0xf]
      %v1270 = vld [vmem:[%s1257 + $0x30] sm:$0xf]
      %v1271 = vld [vmem:[%s1257 + $0x34] sm:$0xf]
      %v1272 = vld [vmem:[%s1257 + $0x38] sm:$0xf]
      %v1273 = vld [vmem:[%s1257 + $0x3c] sm:$0xf]
      %v1290 = vunpack.c.l.b16 %v1258
      %v1291 = vunpack.c.l.b16 %v1259
      %v1292 = vunpack.c.l.b16 %v1260
      %v1293 = vunpack.c.l.b16 %v1261
      %v1294 = vunpack.c.l.b16 %v1262
      %v1295 = vunpack.c.l.b16 %v1263
      %v1296 = vunpack.c.l.b16 %v1264
      %v1297 = vunpack.c.l.b16 %v1265
      %v1298 = vunpack.c.l.b16 %v1266
      %v1299 = vunpack.c.l.b16 %v1267
      %v1300 = vunpack.c.l.b16 %v1268
      %v1301 = vunpack.c.l.b16 %v1269
      %v1302 = vunpack.c.l.b16 %v1270
      %v1303 = vunpack.c.l.b16 %v1271
      %v1304 = vunpack.c.l.b16 %v1272
      %v1305 = vunpack.c.l.b16 %v1273
      %v1306 = vpack.c.b16 %v1291, %v1290
      %v1307 = vpack.c.b16 %v1293, %v1292
      %v1308 = vpack.c.b16 %v1295, %v1294
      %v1309 = vpack.c.b16 %v1297, %v1296
      %v1310 = vpack.c.b16 %v1299, %v1298
      %v1311 = vpack.c.b16 %v1301, %v1300
      %v1312 = vpack.c.b16 %v1303, %v1302
      %v1313 = vpack.c.b16 %v1305, %v1304
      %1322 = vmatpush.bf16.msra.mxu0 %v1313
      %1323 = vmatpush.bf16.msra.mxu0 %v1312
      %1324 = vmatpush.bf16.msra.mxu0 %v1311
      %1325 = vmatpush.bf16.msra.mxu0 %v1310
      %1326 = vmatpush.bf16.msra.mxu0 %v1309
      %1327 = vmatpush.bf16.msra.mxu0 %v1308
      %1328 = vmatpush.bf16.msra.mxu0 %v1307
      %1329 = vmatpush.bf16.msra.mxu0 %v1306
      %1330 = vmatmul.bf16.gmra.mxu0 %v1248
      %v1331 = vpop.f32.mrf.mxu0
      %v1332 = vadd.f32 0.0, %v1331
      %v1333 = vpop.f32.mrf.mxu0
      %v1334 = vadd.f32 0.0, %v1333
      %1335 = vmatmul.bf16.gmra.mxu0 %v1249
      %v1336 = vpop.f32.mrf.mxu0
      %v1337 = vadd.f32 0.0, %v1336
      %v1338 = vpop.f32.mrf.mxu0
      %v1339 = vadd.f32 0.0, %v1338
      %1340 = vmatmul.bf16.gmra.mxu0 %v1250
      %v1341 = vpop.f32.mrf.mxu0
      %v1342 = vadd.f32 0.0, %v1341
      %v1343 = vpop.f32.mrf.mxu0
      %v1344 = vadd.f32 0.0, %v1343
      %1345 = vmatmul.bf16.gmra.mxu0 %v1251
      %v1346 = vpop.f32.mrf.mxu0
      %v1347 = vadd.f32 0.0, %v1346
      %v1348 = vpop.f32.mrf.mxu0
      %v1349 = vadd.f32 0.0, %v1348
      %1350 = vmatmul.bf16.gmra.mxu0 %v1252
      %v1351 = vpop.f32.mrf.mxu0
      %v1352 = vadd.f32 0.0, %v1351
      %v1353 = vpop.f32.mrf.mxu0
      %v1354 = vadd.f32 0.0, %v1353
      %1355 = vmatmul.bf16.gmra.mxu0 %v1253
      %v1356 = vpop.f32.mrf.mxu0
      %v1357 = vadd.f32 0.0, %v1356
      %v1358 = vpop.f32.mrf.mxu0
      %v1359 = vadd.f32 0.0, %v1358
      %1360 = vmatmul.bf16.gmra.mxu0 %v1254
      %v1361 = vpop.f32.mrf.mxu0
      %v1362 = vadd.f32 0.0, %v1361
      %v1363 = vpop.f32.mrf.mxu0
      %v1364 = vadd.f32 0.0, %v1363
      %1365 = vmatmul.bf16.gmra.mxu0 %v1255
      %v1366 = vpop.f32.mrf.mxu0
      %v1367 = vadd.f32 0.0, %v1366
      %v1368 = vpop.f32.mrf.mxu0
      %v1369 = vadd.f32 0.0, %v1368
      %1370 = vmatmul.bf16.gmra.mxu0 %v1256
      %v1371 = vpop.f32.mrf.mxu0
      %v1372 = vadd.f32 0.0, %v1371
      %v1373 = vpop.f32.mrf.mxu0
      %v1374 = vadd.f32 0.0, %v1373
      %1375 = vdwg.mxu0
      %v1376 = vld [vmem:[#allocation2] sm:$0xff]
      %v1377 = vld [vmem:[#allocation2 + $0x8] sm:$0xff]
      %v1378 = vld [vmem:[#allocation2 + $0x10] sm:$0xff]
      %v1379 = vld [vmem:[#allocation2 + $0x18] sm:$0xff]
      %v1380 = vld [vmem:[#allocation2 + $0x20] sm:$0xff]
      %v1381 = vld [vmem:[#allocation2 + $0x28] sm:$0xff]
      %v1382 = vld [vmem:[#allocation2 + $0x30] sm:$0xff]
      %v1383 = vld [vmem:[#allocation2 + $0x38] sm:$0xff]
      %v1384 = vld [vmem:[#allocation2 + $0x40] sm:$0xff]
      %v1385 = vld [vmem:[#allocation2 + $0x48] sm:$0xff]
      %v1386 = vld [vmem:[#allocation2 + $0x50] sm:$0xff]
      %v1387 = vld [vmem:[#allocation2 + $0x58] sm:$0xff]
      %v1388 = vld [vmem:[#allocation2 + $0x60] sm:$0xff]
      %v1389 = vld [vmem:[#allocation2 + $0x68] sm:$0xff]
      %v1390 = vld [vmem:[#allocation2 + $0x70] sm:$0xff]
      %v1391 = vld [vmem:[#allocation2 + $0x78] sm:$0xff]
      %v1392 = vld [vmem:[#allocation2 + $0x80] sm:$0xff]
      %v1393 = vld [vmem:[#allocation2 + $0x88] sm:$0xff]
      %v1394 = vadd.f32 %v1376, %v1332
      %v1395 = vadd.f32 %v1377, %v1334
      %v1396 = vadd.f32 %v1378, %v1337
      %v1397 = vadd.f32 %v1379, %v1339
      %v1398 = vadd.f32 %v1380, %v1342
      %v1399 = vadd.f32 %v1381, %v1344
      %v1400 = vadd.f32 %v1382, %v1347
      %v1401 = vadd.f32 %v1383, %v1349
      %v1402 = vadd.f32 %v1384, %v1352
      %v1403 = vadd.f32 %v1385, %v1354
      %v1404 = vadd.f32 %v1386, %v1357
      %v1405 = vadd.f32 %v1387, %v1359
      %v1406 = vadd.f32 %v1388, %v1362
      %v1407 = vadd.f32 %v1389, %v1364
      %v1408 = vadd.f32 %v1390, %v1367
      %v1409 = vadd.f32 %v1391, %v1369
      %v1410 = vadd.f32 %v1392, %v1372
      %v1411 = vadd.f32 %v1393, %v1374
      %1412 = vst [vmem:[#allocation2] sm:$0xff] %v1394
      %1413 = vst [vmem:[#allocation2 + $0x8] sm:$0xff] %v1395
      %1414 = vst [vmem:[#allocation2 + $0x10] sm:$0xff] %v1396
      %1415 = vst [vmem:[#allocation2 + $0x18] sm:$0xff] %v1397
      %1416 = vst [vmem:[#allocation2 + $0x20] sm:$0xff] %v1398
      %1417 = vst [vmem:[#allocation2 + $0x28] sm:$0xff] %v1399
      %1418 = vst [vmem:[#allocation2 + $0x30] sm:$0xff] %v1400
      %1419 = vst [vmem:[#allocation2 + $0x38] sm:$0xff] %v1401
      %1420 = vst [vmem:[#allocation2 + $0x40] sm:$0xff] %v1402
      %1421 = vst [vmem:[#allocation2 + $0x48] sm:$0xff] %v1403
      %1422 = vst [vmem:[#allocation2 + $0x50] sm:$0xff] %v1404
      %1423 = vst [vmem:[#allocation2 + $0x58] sm:$0xff] %v1405
      %1424 = vst [vmem:[#allocation2 + $0x60] sm:$0xff] %v1406
      %1425 = vst [vmem:[#allocation2 + $0x68] sm:$0xff] %v1407
      %1426 = vst [vmem:[#allocation2 + $0x70] sm:$0xff] %v1408
      %1427 = vst [vmem:[#allocation2 + $0x78] sm:$0xff] %v1409
      %1428 = vst [vmem:[#allocation2 + $0x80] sm:$0xff] %v1410
      %1429 = vst [vmem:[#allocation2 + $0x88] sm:$0xff] %v1411
      %v1430 = vld [vmem:[%s410] sm:$0xf]
      %v1431 = vld [vmem:[%s410 + $0x4] sm:$0xf]
      %v1432 = vld [vmem:[%s410 + $0x8] sm:$0xf]
      %v1433 = vld [vmem:[%s410 + $0xc] sm:$0xf]
      %v1434 = vld [vmem:[%s410 + $0x10] sm:$0xf]
      %v1435 = vld [vmem:[%s410 + $0x14] sm:$0xf]
      %v1436 = vld [vmem:[%s410 + $0x18] sm:$0xf]
      %v1437 = vld [vmem:[%s410 + $0x1c] sm:$0xf]
      %v1438 = vld [vmem:[%s410 + $0x20] sm:$0xf]
      %v1439 = vld [vmem:[%s410 + $0x24] sm:$0xf]
      %v1440 = vld [vmem:[%s410 + $0x28] sm:$0xf]
      %v1441 = vld [vmem:[%s410 + $0x2c] sm:$0xf]
      %v1442 = vld [vmem:[%s410 + $0x30] sm:$0xf]
      %v1443 = vld [vmem:[%s410 + $0x34] sm:$0xf]
      %v1444 = vld [vmem:[%s410 + $0x38] sm:$0xf]
      %v1445 = vld [vmem:[%s410 + $0x3c] sm:$0xf]
      %v1462 = vunpack.c.l.b16 %v1430
      %v1463 = vunpack.c.l.b16 %v1431
      %v1464 = vunpack.c.l.b16 %v1432
      %v1465 = vunpack.c.l.b16 %v1433
      %v1466 = vunpack.c.l.b16 %v1434
      %v1467 = vunpack.c.l.b16 %v1435
      %v1468 = vunpack.c.l.b16 %v1436
      %v1469 = vunpack.c.l.b16 %v1437
      %v1470 = vunpack.c.l.b16 %v1438
      %v1471 = vunpack.c.l.b16 %v1439
      %v1472 = vunpack.c.l.b16 %v1440
      %v1473 = vunpack.c.l.b16 %v1441
      %v1474 = vunpack.c.l.b16 %v1442
      %v1475 = vunpack.c.l.b16 %v1443
      %v1476 = vunpack.c.l.b16 %v1444
      %v1477 = vunpack.c.l.b16 %v1445
      %v1478 = vpack.c.b16 %v1463, %v1462
      %v1479 = vpack.c.b16 %v1465, %v1464
      %v1480 = vpack.c.b16 %v1467, %v1466
      %v1481 = vpack.c.b16 %v1469, %v1468
      %v1482 = vpack.c.b16 %v1471, %v1470
      %v1483 = vpack.c.b16 %v1473, %v1472
      %v1484 = vpack.c.b16 %v1475, %v1474
      %v1485 = vpack.c.b16 %v1477, %v1476
      %1494 = vmatpush.bf16.msra.mxu0 %v1485
      %1495 = vmatpush.bf16.msra.mxu0 %v1484
      %1496 = vmatpush.bf16.msra.mxu0 %v1483
      %1497 = vmatpush.bf16.msra.mxu0 %v1482
      %1498 = vmatpush.bf16.msra.mxu0 %v1481
      %1499 = vmatpush.bf16.msra.mxu0 %v1480
      %1500 = vmatpush.bf16.msra.mxu0 %v1479
      %1501 = vmatpush.bf16.msra.mxu0 %v1478
      %1502 = vmatmul.bf16.gmra.mxu0 %v1248
      %v1503 = vpop.f32.mrf.mxu0
      %v1504 = vadd.f32 0.0, %v1503
      %v1505 = vpop.f32.mrf.mxu0
      %v1506 = vadd.f32 0.0, %v1505
      %1507 = vmatmul.bf16.gmra.mxu0 %v1249
      %v1508 = vpop.f32.mrf.mxu0
      %v1509 = vadd.f32 0.0, %v1508
      %v1510 = vpop.f32.mrf.mxu0
      %v1511 = vadd.f32 0.0, %v1510
      %1512 = vmatmul.bf16.gmra.mxu0 %v1250
      %v1513 = vpop.f32.mrf.mxu0
      %v1514 = vadd.f32 0.0, %v1513
      %v1515 = vpop.f32.mrf.mxu0
      %v1516 = vadd.f32 0.0, %v1515
      %1517 = vmatmul.bf16.gmra.mxu0 %v1251
      %v1518 = vpop.f32.mrf.mxu0
      %v1519 = vadd.f32 0.0, %v1518
      %v1520 = vpop.f32.mrf.mxu0
      %v1521 = vadd.f32 0.0, %v1520
      %1522 = vmatmul.bf16.gmra.mxu0 %v1252
      %v1523 = vpop.f32.mrf.mxu0
      %v1524 = vadd.f32 0.0, %v1523
      %v1525 = vpop.f32.mrf.mxu0
      %v1526 = vadd.f32 0.0, %v1525
      %1527 = vmatmul.bf16.gmra.mxu0 %v1253
      %v1528 = vpop.f32.mrf.mxu0
      %v1529 = vadd.f32 0.0, %v1528
      %v1530 = vpop.f32.mrf.mxu0
      %v1531 = vadd.f32 0.0, %v1530
      %1532 = vmatmul.bf16.gmra.mxu0 %v1254
      %v1533 = vpop.f32.mrf.mxu0
      %v1534 = vadd.f32 0.0, %v1533
      %v1535 = vpop.f32.mrf.mxu0
      %v1536 = vadd.f32 0.0, %v1535
      %1537 = vmatmul.bf16.gmra.mxu0 %v1255
      %v1538 = vpop.f32.mrf.mxu0
      %v1539 = vadd.f32 0.0, %v1538
      %v1540 = vpop.f32.mrf.mxu0
      %v1541 = vadd.f32 0.0, %v1540
      %1542 = vmatmul.bf16.gmra.mxu0 %v1256
      %v1543 = vpop.f32.mrf.mxu0
      %v1544 = vadd.f32 0.0, %v1543
      %v1545 = vpop.f32.mrf.mxu0
      %v1546 = vadd.f32 0.0, %v1545
      %1547 = vdwg.mxu0
      %1548 = vst [vmem:[#allocation3] sm:$0xff] %v1504
      %1549 = vst [vmem:[#allocation3 + $0x8] sm:$0xff] %v1506
      %1550 = vst [vmem:[#allocation3 + $0x10] sm:$0xff] %v1509
      %1551 = vst [vmem:[#allocation3 + $0x18] sm:$0xff] %v1511
      %1552 = vst [vmem:[#allocation3 + $0x20] sm:$0xff] %v1514
      %1553 = vst [vmem:[#allocation3 + $0x28] sm:$0xff] %v1516
      %1554 = vst [vmem:[#allocation3 + $0x30] sm:$0xff] %v1519
      %1555 = vst [vmem:[#allocation3 + $0x38] sm:$0xff] %v1521
      %1556 = vst [vmem:[#allocation3 + $0x40] sm:$0xff] %v1524
      %1557 = vst [vmem:[#allocation3 + $0x48] sm:$0xff] %v1526
      %1558 = vst [vmem:[#allocation3 + $0x50] sm:$0xff] %v1529
      %1559 = vst [vmem:[#allocation3 + $0x58] sm:$0xff] %v1531
      %1560 = vst [vmem:[#allocation3 + $0x60] sm:$0xff] %v1534
      %1561 = vst [vmem:[#allocation3 + $0x68] sm:$0xff] %v1536
      %1562 = vst [vmem:[#allocation3 + $0x70] sm:$0xff] %v1539
      %1563 = vst [vmem:[#allocation3 + $0x78] sm:$0xff] %v1541
      %1564 = vst [vmem:[#allocation3 + $0x80] sm:$0xff] %v1544
      %1565 = vst [vmem:[#allocation3 + $0x88] sm:$0xff] %v1546
      %s1566 = sadd.s32 %s457, 163
      %s1567 = scalar_lea.vmem %s396, %s1566
      %v1568 = vld [vmem:[%s1567] sm:$0xff]
      %v1569 = vld [vmem:[%s1567 + $0x8] sm:$0xff]
      %v1570 = vld [vmem:[%s1567 + $0x10] sm:$0xff]
      %v1571 = vld [vmem:[%s1567 + $0x18] sm:$0xff]
      %v1572 = vld [vmem:[%s1567 + $0x20] sm:$0xff]
      %v1573 = vld [vmem:[%s1567 + $0x28] sm:$0xff]
      %v1574 = vld [vmem:[%s1567 + $0x30] sm:$0xff]
      %v1575 = vld [vmem:[%s1567 + $0x38] sm:$0xff]
      %v1576 = vld [vmem:[%s1567 + $0x40] sm:$0xff]
      %v1577 = vld [vmem:[%s1567 + $0x48] sm:$0xff]
      %v1578 = vld [vmem:[%s1567 + $0x50] sm:$0xff]
      %v1579 = vld [vmem:[%s1567 + $0x58] sm:$0xff]
      %v1580 = vld [vmem:[%s1567 + $0x60] sm:$0xff]
      %v1581 = vld [vmem:[%s1567 + $0x68] sm:$0xff]
      %v1582 = vld [vmem:[%s1567 + $0x70] sm:$0xff]
      %v1583 = vld [vmem:[%s1567 + $0x78] sm:$0xff]
      %v1584 = vld [vmem:[%s1567 + $0x80] sm:$0xff]
      %v1585 = vld [vmem:[%s1567 + $0x88] sm:$0xff]
      %v1586 = vpack.c.bf16 %v1569, %v1568
      %v1587 = vpack.c.bf16 %v1571, %v1570
      %v1588 = vpack.c.bf16 %v1573, %v1572
      %v1589 = vpack.c.bf16 %v1575, %v1574
      %v1590 = vpack.c.bf16 %v1577, %v1576
      %v1591 = vpack.c.bf16 %v1579, %v1578
      %v1592 = vpack.c.bf16 %v1581, %v1580
      %v1593 = vpack.c.bf16 %v1583, %v1582
      %v1594 = vpack.c.bf16 %v1585, %v1584
      %s1595 = scalar_lea.vmem %s400, 320
      %v1596 = vld [vmem:[%s1595] sm:$0xf]
      %v1597 = vld [vmem:[%s1595 + $0x4] sm:$0xf]
      %v1598 = vld [vmem:[%s1595 + $0x8] sm:$0xf]
      %v1599 = vld [vmem:[%s1595 + $0xc] sm:$0xf]
      %v1600 = vld [vmem:[%s1595 + $0x10] sm:$0xf]
      %v1601 = vld [vmem:[%s1595 + $0x14] sm:$0xf]
      %v1602 = vld [vmem:[%s1595 + $0x18] sm:$0xf]
      %v1603 = vld [vmem:[%s1595 + $0x1c] sm:$0xf]
      %v1604 = vld [vmem:[%s1595 + $0x20] sm:$0xf]
      %v1605 = vld [vmem:[%s1595 + $0x24] sm:$0xf]
      %v1606 = vld [vmem:[%s1595 + $0x28] sm:$0xf]
      %v1607 = vld [vmem:[%s1595 + $0x2c] sm:$0xf]
      %v1608 = vld [vmem:[%s1595 + $0x30] sm:$0xf]
      %v1609 = vld [vmem:[%s1595 + $0x34] sm:$0xf]
      %v1610 = vld [vmem:[%s1595 + $0x38] sm:$0xf]
      %v1611 = vld [vmem:[%s1595 + $0x3c] sm:$0xf]
      %v1628 = vunpack.c.l.b16 %v1596
      %v1629 = vunpack.c.l.b16 %v1597
      %v1630 = vunpack.c.l.b16 %v1598
      %v1631 = vunpack.c.l.b16 %v1599
      %v1632 = vunpack.c.l.b16 %v1600
      %v1633 = vunpack.c.l.b16 %v1601
      %v1634 = vunpack.c.l.b16 %v1602
      %v1635 = vunpack.c.l.b16 %v1603
      %v1636 = vunpack.c.l.b16 %v1604
      %v1637 = vunpack.c.l.b16 %v1605
      %v1638 = vunpack.c.l.b16 %v1606
      %v1639 = vunpack.c.l.b16 %v1607
      %v1640 = vunpack.c.l.b16 %v1608
      %v1641 = vunpack.c.l.b16 %v1609
      %v1642 = vunpack.c.l.b16 %v1610
      %v1643 = vunpack.c.l.b16 %v1611
      %v1644 = vpack.c.b16 %v1629, %v1628
      %v1645 = vpack.c.b16 %v1631, %v1630
      %v1646 = vpack.c.b16 %v1633, %v1632
      %v1647 = vpack.c.b16 %v1635, %v1634
      %v1648 = vpack.c.b16 %v1637, %v1636
      %v1649 = vpack.c.b16 %v1639, %v1638
      %v1650 = vpack.c.b16 %v1641, %v1640
      %v1651 = vpack.c.b16 %v1643, %v1642
      %1660 = vmatpush.bf16.msra.mxu0 %v1651
      %1661 = vmatpush.bf16.msra.mxu0 %v1650
      %1662 = vmatpush.bf16.msra.mxu0 %v1649
      %1663 = vmatpush.bf16.msra.mxu0 %v1648
      %1664 = vmatpush.bf16.msra.mxu0 %v1647
      %1665 = vmatpush.bf16.msra.mxu0 %v1646
      %1666 = vmatpush.bf16.msra.mxu0 %v1645
      %1667 = vmatpush.bf16.msra.mxu0 %v1644
      %1668 = vmatmul.bf16.gmra.mxu0 %v1586
      %v1669 = vpop.f32.mrf.mxu0
      %v1670 = vadd.f32 0.0, %v1669
      %v1671 = vpop.f32.mrf.mxu0
      %v1672 = vadd.f32 0.0, %v1671
      %1673 = vmatmul.bf16.gmra.mxu0 %v1587
      %v1674 = vpop.f32.mrf.mxu0
      %v1675 = vadd.f32 0.0, %v1674
      %v1676 = vpop.f32.mrf.mxu0
      %v1677 = vadd.f32 0.0, %v1676
      %1678 = vmatmul.bf16.gmra.mxu0 %v1588
      %v1679 = vpop.f32.mrf.mxu0
      %v1680 = vadd.f32 0.0, %v1679
      %v1681 = vpop.f32.mrf.mxu0
      %v1682 = vadd.f32 0.0, %v1681
      %1683 = vmatmul.bf16.gmra.mxu0 %v1589
      %v1684 = vpop.f32.mrf.mxu0
      %v1685 = vadd.f32 0.0, %v1684
      %v1686 = vpop.f32.mrf.mxu0
      %v1687 = vadd.f32 0.0, %v1686
      %1688 = vmatmul.bf16.gmra.mxu0 %v1590
      %v1689 = vpop.f32.mrf.mxu0
      %v1690 = vadd.f32 0.0, %v1689
      %v1691 = vpop.f32.mrf.mxu0
      %v1692 = vadd.f32 0.0, %v1691
      %1693 = vmatmul.bf16.gmra.mxu0 %v1591
      %v1694 = vpop.f32.mrf.mxu0
      %v1695 = vadd.f32 0.0, %v1694
      %v1696 = vpop.f32.mrf.mxu0
      %v1697 = vadd.f32 0.0, %v1696
      %1698 = vmatmul.bf16.gmra.mxu0 %v1592
      %v1699 = vpop.f32.mrf.mxu0
      %v1700 = vadd.f32 0.0, %v1699
      %v1701 = vpop.f32.mrf.mxu0
      %v1702 = vadd.f32 0.0, %v1701
      %1703 = vmatmul.bf16.gmra.mxu0 %v1593
      %v1704 = vpop.f32.mrf.mxu0
      %v1705 = vadd.f32 0.0, %v1704
      %v1706 = vpop.f32.mrf.mxu0
      %v1707 = vadd.f32 0.0, %v1706
      %1708 = vmatmul.bf16.gmra.mxu0 %v1594
      %v1709 = vpop.f32.mrf.mxu0
      %v1710 = vadd.f32 0.0, %v1709
      %v1711 = vpop.f32.mrf.mxu0
      %v1712 = vadd.f32 0.0, %v1711
      %1713 = vdwg.mxu0
      %v1714 = vld [vmem:[#allocation2] sm:$0xff]
      %v1715 = vld [vmem:[#allocation2 + $0x8] sm:$0xff]
      %v1716 = vld [vmem:[#allocation2 + $0x10] sm:$0xff]
      %v1717 = vld [vmem:[#allocation2 + $0x18] sm:$0xff]
      %v1718 = vld [vmem:[#allocation2 + $0x20] sm:$0xff]
      %v1719 = vld [vmem:[#allocation2 + $0x28] sm:$0xff]
      %v1720 = vld [vmem:[#allocation2 + $0x30] sm:$0xff]
      %v1721 = vld [vmem:[#allocation2 + $0x38] sm:$0xff]
      %v1722 = vld [vmem:[#allocation2 + $0x40] sm:$0xff]
      %v1723 = vld [vmem:[#allocation2 + $0x48] sm:$0xff]
      %v1724 = vld [vmem:[#allocation2 + $0x50] sm:$0xff]
      %v1725 = vld [vmem:[#allocation2 + $0x58] sm:$0xff]
      %v1726 = vld [vmem:[#allocation2 + $0x60] sm:$0xff]
      %v1727 = vld [vmem:[#allocation2 + $0x68] sm:$0xff]
      %v1728 = vld [vmem:[#allocation2 + $0x70] sm:$0xff]
      %v1729 = vld [vmem:[#allocation2 + $0x78] sm:$0xff]
      %v1730 = vld [vmem:[#allocation2 + $0x80] sm:$0xff]
      %v1731 = vld [vmem:[#allocation2 + $0x88] sm:$0xff]
      %v1732 = vadd.f32 %v1714, %v1670
      %v1733 = vadd.f32 %v1715, %v1672
      %v1734 = vadd.f32 %v1716, %v1675
      %v1735 = vadd.f32 %v1717, %v1677
      %v1736 = vadd.f32 %v1718, %v1680
      %v1737 = vadd.f32 %v1719, %v1682
      %v1738 = vadd.f32 %v1720, %v1685
      %v1739 = vadd.f32 %v1721, %v1687
      %v1740 = vadd.f32 %v1722, %v1690
      %v1741 = vadd.f32 %v1723, %v1692
      %v1742 = vadd.f32 %v1724, %v1695
      %v1743 = vadd.f32 %v1725, %v1697
      %v1744 = vadd.f32 %v1726, %v1700
      %v1745 = vadd.f32 %v1727, %v1702
      %v1746 = vadd.f32 %v1728, %v1705
      %v1747 = vadd.f32 %v1729, %v1707
      %v1748 = vadd.f32 %v1730, %v1710
      %v1749 = vadd.f32 %v1731, %v1712
      %1750 = vst [vmem:[#allocation2] sm:$0xff] %v1732
      %1751 = vst [vmem:[#allocation2 + $0x8] sm:$0xff] %v1733
      %1752 = vst [vmem:[#allocation2 + $0x10] sm:$0xff] %v1734
      %1753 = vst [vmem:[#allocation2 + $0x18] sm:$0xff] %v1735
      %1754 = vst [vmem:[#allocation2 + $0x20] sm:$0xff] %v1736
      %1755 = vst [vmem:[#allocation2 + $0x28] sm:$0xff] %v1737
      %1756 = vst [vmem:[#allocation2 + $0x30] sm:$0xff] %v1738
      %1757 = vst [vmem:[#allocation2 + $0x38] sm:$0xff] %v1739
      %1758 = vst [vmem:[#allocation2 + $0x40] sm:$0xff] %v1740
      %1759 = vst [vmem:[#allocation2 + $0x48] sm:$0xff] %v1741
      %1760 = vst [vmem:[#allocation2 + $0x50] sm:$0xff] %v1742
      %1761 = vst [vmem:[#allocation2 + $0x58] sm:$0xff] %v1743
      %1762 = vst [vmem:[#allocation2 + $0x60] sm:$0xff] %v1744
      %1763 = vst [vmem:[#allocation2 + $0x68] sm:$0xff] %v1745
      %1764 = vst [vmem:[#allocation2 + $0x70] sm:$0xff] %v1746
      %1765 = vst [vmem:[#allocation2 + $0x78] sm:$0xff] %v1747
      %1766 = vst [vmem:[#allocation2 + $0x80] sm:$0xff] %v1748
      %1767 = vst [vmem:[#allocation2 + $0x88] sm:$0xff] %v1749
      %s1768 = sadd.s32 %s457, 18
      %s1769 = scalar_lea.vmem %s396, %s1768
      %v1770 = vld [vmem:[%s1769] sm:$0xff]
      %v1771 = vld [vmem:[%s1769 + $0x8] sm:$0xff]
      %v1772 = vld [vmem:[%s1769 + $0x10] sm:$0xff]
      %v1773 = vld [vmem:[%s1769 + $0x18] sm:$0xff]
      %v1774 = vld [vmem:[%s1769 + $0x20] sm:$0xff]
      %v1775 = vld [vmem:[%s1769 + $0x28] sm:$0xff]
      %v1776 = vld [vmem:[%s1769 + $0x30] sm:$0xff]
      %v1777 = vld [vmem:[%s1769 + $0x38] sm:$0xff]
      %v1778 = vld [vmem:[%s1769 + $0x40] sm:$0xff]
      %v1779 = vld [vmem:[%s1769 + $0x48] sm:$0xff]
      %v1780 = vld [vmem:[%s1769 + $0x50] sm:$0xff]
      %v1781 = vld [vmem:[%s1769 + $0x58] sm:$0xff]
      %v1782 = vld [vmem:[%s1769 + $0x60] sm:$0xff]
      %v1783 = vld [vmem:[%s1769 + $0x68] sm:$0xff]
      %v1784 = vld [vmem:[%s1769 + $0x70] sm:$0xff]
      %v1785 = vld [vmem:[%s1769 + $0x78] sm:$0xff]
      %v1786 = vld [vmem:[%s1769 + $0x80] sm:$0xff]
      %v1787 = vld [vmem:[%s1769 + $0x88] sm:$0xff]
      %v1788 = vpack.c.bf16 %v1771, %v1770
      %v1789 = vpack.c.bf16 %v1773, %v1772
      %v1790 = vpack.c.bf16 %v1775, %v1774
      %v1791 = vpack.c.bf16 %v1777, %v1776
      %v1792 = vpack.c.bf16 %v1779, %v1778
      %v1793 = vpack.c.bf16 %v1781, %v1780
      %v1794 = vpack.c.bf16 %v1783, %v1782
      %v1795 = vpack.c.bf16 %v1785, %v1784
      %v1796 = vpack.c.bf16 %v1787, %v1786
      %s1797 = scalar_lea.vmem %s400, 384
      %v1798 = vld [vmem:[%s1797] sm:$0xf]
      %v1799 = vld [vmem:[%s1797 + $0x4] sm:$0xf]
      %v1800 = vld [vmem:[%s1797 + $0x8] sm:$0xf]
      %v1801 = vld [vmem:[%s1797 + $0xc] sm:$0xf]
      %v1802 = vld [vmem:[%s1797 + $0x10] sm:$0xf]
      %v1803 = vld [vmem:[%s1797 + $0x14] sm:$0xf]
      %v1804 = vld [vmem:[%s1797 + $0x18] sm:$0xf]
      %v1805 = vld [vmem:[%s1797 + $0x1c] sm:$0xf]
      %v1806 = vld [vmem:[%s1797 + $0x20] sm:$0xf]
      %v1807 = vld [vmem:[%s1797 + $0x24] sm:$0xf]
      %v1808 = vld [vmem:[%s1797 + $0x28] sm:$0xf]
      %v1809 = vld [vmem:[%s1797 + $0x2c] sm:$0xf]
      %v1810 = vld [vmem:[%s1797 + $0x30] sm:$0xf]
      %v1811 = vld [vmem:[%s1797 + $0x34] sm:$0xf]
      %v1812 = vld [vmem:[%s1797 + $0x38] sm:$0xf]
      %v1813 = vld [vmem:[%s1797 + $0x3c] sm:$0xf]
      %v1830 = vunpack.c.l.b16 %v1798
      %v1831 = vunpack.c.l.b16 %v1799
      %v1832 = vunpack.c.l.b16 %v1800
      %v1833 = vunpack.c.l.b16 %v1801
      %v1834 = vunpack.c.l.b16 %v1802
      %v1835 = vunpack.c.l.b16 %v1803
      %v1836 = vunpack.c.l.b16 %v1804
      %v1837 = vunpack.c.l.b16 %v1805
      %v1838 = vunpack.c.l.b16 %v1806
      %v1839 = vunpack.c.l.b16 %v1807
      %v1840 = vunpack.c.l.b16 %v1808
      %v1841 = vunpack.c.l.b16 %v1809
      %v1842 = vunpack.c.l.b16 %v1810
      %v1843 = vunpack.c.l.b16 %v1811
      %v1844 = vunpack.c.l.b16 %v1812
      %v1845 = vunpack.c.l.b16 %v1813
      %v1846 = vpack.c.b16 %v1831, %v1830
      %v1847 = vpack.c.b16 %v1833, %v1832
      %v1848 = vpack.c.b16 %v1835, %v1834
      %v1849 = vpack.c.b16 %v1837, %v1836
      %v1850 = vpack.c.b16 %v1839, %v1838
      %v1851 = vpack.c.b16 %v1841, %v1840
      %v1852 = vpack.c.b16 %v1843, %v1842
      %v1853 = vpack.c.b16 %v1845, %v1844
      %1862 = vmatpush.bf16.msra.mxu0 %v1853
      %1863 = vmatpush.bf16.msra.mxu0 %v1852
      %1864 = vmatpush.bf16.msra.mxu0 %v1851
      %1865 = vmatpush.bf16.msra.mxu0 %v1850
      %1866 = vmatpush.bf16.msra.mxu0 %v1849
      %1867 = vmatpush.bf16.msra.mxu0 %v1848
      %1868 = vmatpush.bf16.msra.mxu0 %v1847
      %1869 = vmatpush.bf16.msra.mxu0 %v1846
      %1870 = vmatmul.bf16.gmra.mxu0 %v1788
      %v1871 = vpop.f32.mrf.mxu0
      %v1872 = vadd.f32 0.0, %v1871
      %v1873 = vpop.f32.mrf.mxu0
      %v1874 = vadd.f32 0.0, %v1873
      %1875 = vmatmul.bf16.gmra.mxu0 %v1789
      %v1876 = vpop.f32.mrf.mxu0
      %v1877 = vadd.f32 0.0, %v1876
      %v1878 = vpop.f32.mrf.mxu0
      %v1879 = vadd.f32 0.0, %v1878
      %1880 = vmatmul.bf16.gmra.mxu0 %v1790
      %v1881 = vpop.f32.mrf.mxu0
      %v1882 = vadd.f32 0.0, %v1881
      %v1883 = vpop.f32.mrf.mxu0
      %v1884 = vadd.f32 0.0, %v1883
      %1885 = vmatmul.bf16.gmra.mxu0 %v1791
      %v1886 = vpop.f32.mrf.mxu0
      %v1887 = vadd.f32 0.0, %v1886
      %v1888 = vpop.f32.mrf.mxu0
      %v1889 = vadd.f32 0.0, %v1888
      %1890 = vmatmul.bf16.gmra.mxu0 %v1792
      %v1891 = vpop.f32.mrf.mxu0
      %v1892 = vadd.f32 0.0, %v1891
      %v1893 = vpop.f32.mrf.mxu0
      %v1894 = vadd.f32 0.0, %v1893
      %1895 = vmatmul.bf16.gmra.mxu0 %v1793
      %v1896 = vpop.f32.mrf.mxu0
      %v1897 = vadd.f32 0.0, %v1896
      %v1898 = vpop.f32.mrf.mxu0
      %v1899 = vadd.f32 0.0, %v1898
      %1900 = vmatmul.bf16.gmra.mxu0 %v1794
      %v1901 = vpop.f32.mrf.mxu0
      %v1902 = vadd.f32 0.0, %v1901
      %v1903 = vpop.f32.mrf.mxu0
      %v1904 = vadd.f32 0.0, %v1903
      %1905 = vmatmul.bf16.gmra.mxu0 %v1795
      %v1906 = vpop.f32.mrf.mxu0
      %v1907 = vadd.f32 0.0, %v1906
      %v1908 = vpop.f32.mrf.mxu0
      %v1909 = vadd.f32 0.0, %v1908
      %1910 = vmatmul.bf16.gmra.mxu0 %v1796
      %v1911 = vpop.f32.mrf.mxu0
      %v1912 = vadd.f32 0.0, %v1911
      %v1913 = vpop.f32.mrf.mxu0
      %v1914 = vadd.f32 0.0, %v1913
      %1915 = vdwg.mxu0
      %v1916 = vld [vmem:[#allocation2] sm:$0xff]
      %v1917 = vld [vmem:[#allocation2 + $0x8] sm:$0xff]
      %v1918 = vld [vmem:[#allocation2 + $0x10] sm:$0xff]
      %v1919 = vld [vmem:[#allocation2 + $0x18] sm:$0xff]
      %v1920 = vld [vmem:[#allocation2 + $0x20] sm:$0xff]
      %v1921 = vld [vmem:[#allocation2 + $0x28] sm:$0xff]
      %v1922 = vld [vmem:[#allocation2 + $0x30] sm:$0xff]
      %v1923 = vld [vmem:[#allocation2 + $0x38] sm:$0xff]
      %v1924 = vld [vmem:[#allocation2 + $0x40] sm:$0xff]
      %v1925 = vld [vmem:[#allocation2 + $0x48] sm:$0xff]
      %v1926 = vld [vmem:[#allocation2 + $0x50] sm:$0xff]
      %v1927 = vld [vmem:[#allocation2 + $0x58] sm:$0xff]
      %v1928 = vld [vmem:[#allocation2 + $0x60] sm:$0xff]
      %v1929 = vld [vmem:[#allocation2 + $0x68] sm:$0xff]
      %v1930 = vld [vmem:[#allocation2 + $0x70] sm:$0xff]
      %v1931 = vld [vmem:[#allocation2 + $0x78] sm:$0xff]
      %v1932 = vld [vmem:[#allocation2 + $0x80] sm:$0xff]
      %v1933 = vld [vmem:[#allocation2 + $0x88] sm:$0xff]
      %v1934 = vadd.f32 %v1916, %v1872
      %v1935 = vadd.f32 %v1917, %v1874
      %v1936 = vadd.f32 %v1918, %v1877
      %v1937 = vadd.f32 %v1919, %v1879
      %v1938 = vadd.f32 %v1920, %v1882
      %v1939 = vadd.f32 %v1921, %v1884
      %v1940 = vadd.f32 %v1922, %v1887
      %v1941 = vadd.f32 %v1923, %v1889
      %v1942 = vadd.f32 %v1924, %v1892
      %v1943 = vadd.f32 %v1925, %v1894
      %v1944 = vadd.f32 %v1926, %v1897
      %v1945 = vadd.f32 %v1927, %v1899
      %v1946 = vadd.f32 %v1928, %v1902
      %v1947 = vadd.f32 %v1929, %v1904
      %v1948 = vadd.f32 %v1930, %v1907
      %v1949 = vadd.f32 %v1931, %v1909
      %v1950 = vadd.f32 %v1932, %v1912
      %v1951 = vadd.f32 %v1933, %v1914
      %1952 = vst [vmem:[#allocation2] sm:$0xff] %v1934
      %1953 = vst [vmem:[#allocation2 + $0x8] sm:$0xff] %v1935
      %1954 = vst [vmem:[#allocation2 + $0x10] sm:$0xff] %v1936
      %1955 = vst [vmem:[#allocation2 + $0x18] sm:$0xff] %v1937
      %1956 = vst [vmem:[#allocation2 + $0x20] sm:$0xff] %v1938
      %1957 = vst [vmem:[#allocation2 + $0x28] sm:$0xff] %v1939
      %1958 = vst [vmem:[#allocation2 + $0x30] sm:$0xff] %v1940
      %1959 = vst [vmem:[#allocation2 + $0x38] sm:$0xff] %v1941
      %1960 = vst [vmem:[#allocation2 + $0x40] sm:$0xff] %v1942
      %1961 = vst [vmem:[#allocation2 + $0x48] sm:$0xff] %v1943
      %1962 = vst [vmem:[#allocation2 + $0x50] sm:$0xff] %v1944
      %1963 = vst [vmem:[#allocation2 + $0x58] sm:$0xff] %v1945
      %1964 = vst [vmem:[#allocation2 + $0x60] sm:$0xff] %v1946
      %1965 = vst [vmem:[#allocation2 + $0x68] sm:$0xff] %v1947
      %1966 = vst [vmem:[#allocation2 + $0x70] sm:$0xff] %v1948
      %1967 = vst [vmem:[#allocation2 + $0x78] sm:$0xff] %v1949
      %1968 = vst [vmem:[#allocation2 + $0x80] sm:$0xff] %v1950
      %1969 = vst [vmem:[#allocation2 + $0x88] sm:$0xff] %v1951
      %s1970 = sadd.s32 %s457, 27
      %s1971 = scalar_lea.vmem %s396, %s1970
      %v1972 = vld [vmem:[%s1971] sm:$0xff]
      %v1973 = vld [vmem:[%s1971 + $0x8] sm:$0xff]
      %v1974 = vld [vmem:[%s1971 + $0x10] sm:$0xff]
      %v1975 = vld [vmem:[%s1971 + $0x18] sm:$0xff]
      %v1976 = vld [vmem:[%s1971 + $0x20] sm:$0xff]
      %v1977 = vld [vmem:[%s1971 + $0x28] sm:$0xff]
      %v1978 = vld [vmem:[%s1971 + $0x30] sm:$0xff]
      %v1979 = vld [vmem:[%s1971 + $0x38] sm:$0xff]
      %v1980 = vld [vmem:[%s1971 + $0x40] sm:$0xff]
      %v1981 = vld [vmem:[%s1971 + $0x48] sm:$0xff]
      %v1982 = vld [vmem:[%s1971 + $0x50] sm:$0xff]
      %v1983 = vld [vmem:[%s1971 + $0x58] sm:$0xff]
      %v1984 = vld [vmem:[%s1971 + $0x60] sm:$0xff]
      %v1985 = vld [vmem:[%s1971 + $0x68] sm:$0xff]
      %v1986 = vld [vmem:[%s1971 + $0x70] sm:$0xff]
      %v1987 = vld [vmem:[%s1971 + $0x78] sm:$0xff]
      %v1988 = vld [vmem:[%s1971 + $0x80] sm:$0xff]
      %v1989 = vld [vmem:[%s1971 + $0x88] sm:$0xff]
      %v1990 = vpack.c.bf16 %v1973, %v1972
      %v1991 = vpack.c.bf16 %v1975, %v1974
      %v1992 = vpack.c.bf16 %v1977, %v1976
      %v1993 = vpack.c.bf16 %v1979, %v1978
      %v1994 = vpack.c.bf16 %v1981, %v1980
      %v1995 = vpack.c.bf16 %v1983, %v1982
      %v1996 = vpack.c.bf16 %v1985, %v1984
      %v1997 = vpack.c.bf16 %v1987, %v1986
      %v1998 = vpack.c.bf16 %v1989, %v1988
      %s1999 = scalar_lea.vmem %s400, 448
      %v2000 = vld [vmem:[%s1999] sm:$0xf]
      %v2001 = vld [vmem:[%s1999 + $0x4] sm:$0xf]
      %v2002 = vld [vmem:[%s1999 + $0x8] sm:$0xf]
      %v2003 = vld [vmem:[%s1999 + $0xc] sm:$0xf]
      %v2004 = vld [vmem:[%s1999 + $0x10] sm:$0xf]
      %v2005 = vld [vmem:[%s1999 + $0x14] sm:$0xf]
      %v2006 = vld [vmem:[%s1999 + $0x18] sm:$0xf]
      %v2007 = vld [vmem:[%s1999 + $0x1c] sm:$0xf]
      %v2008 = vld [vmem:[%s1999 + $0x20] sm:$0xf]
      %v2009 = vld [vmem:[%s1999 + $0x24] sm:$0xf]
      %v2010 = vld [vmem:[%s1999 + $0x28] sm:$0xf]
      %v2011 = vld [vmem:[%s1999 + $0x2c] sm:$0xf]
      %v2012 = vld [vmem:[%s1999 + $0x30] sm:$0xf]
      %v2013 = vld [vmem:[%s1999 + $0x34] sm:$0xf]
      %v2014 = vld [vmem:[%s1999 + $0x38] sm:$0xf]
      %v2015 = vld [vmem:[%s1999 + $0x3c] sm:$0xf]
      %v2032 = vunpack.c.l.b16 %v2000
      %v2033 = vunpack.c.l.b16 %v2001
      %v2034 = vunpack.c.l.b16 %v2002
      %v2035 = vunpack.c.l.b16 %v2003
      %v2036 = vunpack.c.l.b16 %v2004
      %v2037 = vunpack.c.l.b16 %v2005
      %v2038 = vunpack.c.l.b16 %v2006
      %v2039 = vunpack.c.l.b16 %v2007
      %v2040 = vunpack.c.l.b16 %v2008
      %v2041 = vunpack.c.l.b16 %v2009
      %v2042 = vunpack.c.l.b16 %v2010
      %v2043 = vunpack.c.l.b16 %v2011
      %v2044 = vunpack.c.l.b16 %v2012
      %v2045 = vunpack.c.l.b16 %v2013
      %v2046 = vunpack.c.l.b16 %v2014
      %v2047 = vunpack.c.l.b16 %v2015
      %v2048 = vpack.c.b16 %v2033, %v2032
      %v2049 = vpack.c.b16 %v2035, %v2034
      %v2050 = vpack.c.b16 %v2037, %v2036
      %v2051 = vpack.c.b16 %v2039, %v2038
      %v2052 = vpack.c.b16 %v2041, %v2040
      %v2053 = vpack.c.b16 %v2043, %v2042
      %v2054 = vpack.c.b16 %v2045, %v2044
      %v2055 = vpack.c.b16 %v2047, %v2046
      %2064 = vmatpush.bf16.msra.mxu0 %v2055
      %2065 = vmatpush.bf16.msra.mxu0 %v2054
      %2066 = vmatpush.bf16.msra.mxu0 %v2053
      %2067 = vmatpush.bf16.msra.mxu0 %v2052
      %2068 = vmatpush.bf16.msra.mxu0 %v2051
      %2069 = vmatpush.bf16.msra.mxu0 %v2050
      %2070 = vmatpush.bf16.msra.mxu0 %v2049
      %2071 = vmatpush.bf16.msra.mxu0 %v2048
      %2072 = vmatmul.bf16.gmra.mxu0 %v1990
      %v2073 = vpop.f32.mrf.mxu0
      %v2074 = vadd.f32 0.0, %v2073
      %v2075 = vpop.f32.mrf.mxu0
      %v2076 = vadd.f32 0.0, %v2075
      %2077 = vmatmul.bf16.gmra.mxu0 %v1991
      %v2078 = vpop.f32.mrf.mxu0
      %v2079 = vadd.f32 0.0, %v2078
      %v2080 = vpop.f32.mrf.mxu0
      %v2081 = vadd.f32 0.0, %v2080
      %2082 = vmatmul.bf16.gmra.mxu0 %v1992
      %v2083 = vpop.f32.mrf.mxu0
      %v2084 = vadd.f32 0.0, %v2083
      %v2085 = vpop.f32.mrf.mxu0
      %v2086 = vadd.f32 0.0, %v2085
      %2087 = vmatmul.bf16.gmra.mxu0 %v1993
      %v2088 = vpop.f32.mrf.mxu0
      %v2089 = vadd.f32 0.0, %v2088
      %v2090 = vpop.f32.mrf.mxu0
      %v2091 = vadd.f32 0.0, %v2090
      %2092 = vmatmul.bf16.gmra.mxu0 %v1994
      %v2093 = vpop.f32.mrf.mxu0
      %v2094 = vadd.f32 0.0, %v2093
      %v2095 = vpop.f32.mrf.mxu0
      %v2096 = vadd.f32 0.0, %v2095
      %2097 = vmatmul.bf16.gmra.mxu0 %v1995
      %v2098 = vpop.f32.mrf.mxu0
      %v2099 = vadd.f32 0.0, %v2098
      %v2100 = vpop.f32.mrf.mxu0
      %v2101 = vadd.f32 0.0, %v2100
      %2102 = vmatmul.bf16.gmra.mxu0 %v1996
      %v2103 = vpop.f32.mrf.mxu0
      %v2104 = vadd.f32 0.0, %v2103
      %v2105 = vpop.f32.mrf.mxu0
      %v2106 = vadd.f32 0.0, %v2105
      %2107 = vmatmul.bf16.gmra.mxu0 %v1997
      %v2108 = vpop.f32.mrf.mxu0
      %v2109 = vadd.f32 0.0, %v2108
      %v2110 = vpop.f32.mrf.mxu0
      %v2111 = vadd.f32 0.0, %v2110
      %2112 = vmatmul.bf16.gmra.mxu0 %v1998
      %v2113 = vpop.f32.mrf.mxu0
      %v2114 = vadd.f32 0.0, %v2113
      %v2115 = vpop.f32.mrf.mxu0
      %v2116 = vadd.f32 0.0, %v2115
      %2117 = vdwg.mxu0
      %v2118 = vld [vmem:[#allocation2] sm:$0xff]
      %v2119 = vld [vmem:[#allocation2 + $0x8] sm:$0xff]
      %v2120 = vld [vmem:[#allocation2 + $0x10] sm:$0xff]
      %v2121 = vld [vmem:[#allocation2 + $0x18] sm:$0xff]
      %v2122 = vld [vmem:[#allocation2 + $0x20] sm:$0xff]
      %v2123 = vld [vmem:[#allocation2 + $0x28] sm:$0xff]
      %v2124 = vld [vmem:[#allocation2 + $0x30] sm:$0xff]
      %v2125 = vld [vmem:[#allocation2 + $0x38] sm:$0xff]
      %v2126 = vld [vmem:[#allocation2 + $0x40] sm:$0xff]
      %v2127 = vld [vmem:[#allocation2 + $0x48] sm:$0xff]
      %v2128 = vld [vmem:[#allocation2 + $0x50] sm:$0xff]
      %v2129 = vld [vmem:[#allocation2 + $0x58] sm:$0xff]
      %v2130 = vld [vmem:[#allocation2 + $0x60] sm:$0xff]
      %v2131 = vld [vmem:[#allocation2 + $0x68] sm:$0xff]
      %v2132 = vld [vmem:[#allocation2 + $0x70] sm:$0xff]
      %v2133 = vld [vmem:[#allocation2 + $0x78] sm:$0xff]
      %v2134 = vld [vmem:[#allocation2 + $0x80] sm:$0xff]
      %v2135 = vld [vmem:[#allocation2 + $0x88] sm:$0xff]
      %v2136 = vadd.f32 %v2118, %v2074
      %v2137 = vadd.f32 %v2119, %v2076
      %v2138 = vadd.f32 %v2120, %v2079
      %v2139 = vadd.f32 %v2121, %v2081
      %v2140 = vadd.f32 %v2122, %v2084
      %v2141 = vadd.f32 %v2123, %v2086
      %v2142 = vadd.f32 %v2124, %v2089
      %v2143 = vadd.f32 %v2125, %v2091
      %v2144 = vadd.f32 %v2126, %v2094
      %v2145 = vadd.f32 %v2127, %v2096
      %v2146 = vadd.f32 %v2128, %v2099
      %v2147 = vadd.f32 %v2129, %v2101
      %v2148 = vadd.f32 %v2130, %v2104
      %v2149 = vadd.f32 %v2131, %v2106
      %v2150 = vadd.f32 %v2132, %v2109
      %v2151 = vadd.f32 %v2133, %v2111
      %v2152 = vadd.f32 %v2134, %v2114
      %v2153 = vadd.f32 %v2135, %v2116
      %2154 = vst [vmem:[#allocation2] sm:$0xff] %v2136
      %2155 = vst [vmem:[#allocation2 + $0x8] sm:$0xff] %v2137
      %2156 = vst [vmem:[#allocation2 + $0x10] sm:$0xff] %v2138
      %2157 = vst [vmem:[#allocation2 + $0x18] sm:$0xff] %v2139
      %2158 = vst [vmem:[#allocation2 + $0x20] sm:$0xff] %v2140
      %2159 = vst [vmem:[#allocation2 + $0x28] sm:$0xff] %v2141
      %2160 = vst [vmem:[#allocation2 + $0x30] sm:$0xff] %v2142
      %2161 = vst [vmem:[#allocation2 + $0x38] sm:$0xff] %v2143
      %2162 = vst [vmem:[#allocation2 + $0x40] sm:$0xff] %v2144
      %2163 = vst [vmem:[#allocation2 + $0x48] sm:$0xff] %v2145
      %2164 = vst [vmem:[#allocation2 + $0x50] sm:$0xff] %v2146
      %2165 = vst [vmem:[#allocation2 + $0x58] sm:$0xff] %v2147
      %2166 = vst [vmem:[#allocation2 + $0x60] sm:$0xff] %v2148
      %2167 = vst [vmem:[#allocation2 + $0x68] sm:$0xff] %v2149
      %2168 = vst [vmem:[#allocation2 + $0x70] sm:$0xff] %v2150
      %2169 = vst [vmem:[#allocation2 + $0x78] sm:$0xff] %v2151
      %2170 = vst [vmem:[#allocation2 + $0x80] sm:$0xff] %v2152
      %2171 = vst [vmem:[#allocation2 + $0x88] sm:$0xff] %v2153
      %s2172 = sadd.s32 %s457, 19
      %s2173 = scalar_lea.vmem %s396, %s2172
      %v2174 = vld [vmem:[%s2173] sm:$0xff]
      %v2175 = vld [vmem:[%s2173 + $0x8] sm:$0xff]
      %v2176 = vld [vmem:[%s2173 + $0x10] sm:$0xff]
      %v2177 = vld [vmem:[%s2173 + $0x18] sm:$0xff]
      %v2178 = vld [vmem:[%s2173 + $0x20] sm:$0xff]
      %v2179 = vld [vmem:[%s2173 + $0x28] sm:$0xff]
      %v2180 = vld [vmem:[%s2173 + $0x30] sm:$0xff]
      %v2181 = vld [vmem:[%s2173 + $0x38] sm:$0xff]
      %v2182 = vld [vmem:[%s2173 + $0x40] sm:$0xff]
      %v2183 = vld [vmem:[%s2173 + $0x48] sm:$0xff]
      %v2184 = vld [vmem:[%s2173 + $0x50] sm:$0xff]
      %v2185 = vld [vmem:[%s2173 + $0x58] sm:$0xff]
      %v2186 = vld [vmem:[%s2173 + $0x60] sm:$0xff]
      %v2187 = vld [vmem:[%s2173 + $0x68] sm:$0xff]
      %v2188 = vld [vmem:[%s2173 + $0x70] sm:$0xff]
      %v2189 = vld [vmem:[%s2173 + $0x78] sm:$0xff]
      %v2190 = vld [vmem:[%s2173 + $0x80] sm:$0xff]
      %v2191 = vld [vmem:[%s2173 + $0x88] sm:$0xff]
      %v2192 = vpack.c.bf16 %v2175, %v2174
      %v2193 = vpack.c.bf16 %v2177, %v2176
      %v2194 = vpack.c.bf16 %v2179, %v2178
      %v2195 = vpack.c.bf16 %v2181, %v2180
      %v2196 = vpack.c.bf16 %v2183, %v2182
      %v2197 = vpack.c.bf16 %v2185, %v2184
      %v2198 = vpack.c.bf16 %v2187, %v2186
      %v2199 = vpack.c.bf16 %v2189, %v2188
      %v2200 = vpack.c.bf16 %v2191, %v2190
      %s2201 = scalar_lea.vmem %s400, 512
      %v2202 = vld [vmem:[%s2201] sm:$0xf]
      %v2203 = vld [vmem:[%s2201 + $0x4] sm:$0xf]
      %v2204 = vld [vmem:[%s2201 + $0x8] sm:$0xf]
      %v2205 = vld [vmem:[%s2201 + $0xc] sm:$0xf]
      %v2206 = vld [vmem:[%s2201 + $0x10] sm:$0xf]
      %v2207 = vld [vmem:[%s2201 + $0x14] sm:$0xf]
      %v2208 = vld [vmem:[%s2201 + $0x18] sm:$0xf]
      %v2209 = vld [vmem:[%s2201 + $0x1c] sm:$0xf]
      %v2210 = vld [vmem:[%s2201 + $0x20] sm:$0xf]
      %v2211 = vld [vmem:[%s2201 + $0x24] sm:$0xf]
      %v2212 = vld [vmem:[%s2201 + $0x28] sm:$0xf]
      %v2213 = vld [vmem:[%s2201 + $0x2c] sm:$0xf]
      %v2214 = vld [vmem:[%s2201 + $0x30] sm:$0xf]
      %v2215 = vld [vmem:[%s2201 + $0x34] sm:$0xf]
      %v2216 = vld [vmem:[%s2201 + $0x38] sm:$0xf]
      %v2217 = vld [vmem:[%s2201 + $0x3c] sm:$0xf]
      %v2234 = vunpack.c.l.b16 %v2202
      %v2235 = vunpack.c.l.b16 %v2203
      %v2236 = vunpack.c.l.b16 %v2204
      %v2237 = vunpack.c.l.b16 %v2205
      %v2238 = vunpack.c.l.b16 %v2206
      %v2239 = vunpack.c.l.b16 %v2207
      %v2240 = vunpack.c.l.b16 %v2208
      %v2241 = vunpack.c.l.b16 %v2209
      %v2242 = vunpack.c.l.b16 %v2210
      %v2243 = vunpack.c.l.b16 %v2211
      %v2244 = vunpack.c.l.b16 %v2212
      %v2245 = vunpack.c.l.b16 %v2213
      %v2246 = vunpack.c.l.b16 %v2214
      %v2247 = vunpack.c.l.b16 %v2215
      %v2248 = vunpack.c.l.b16 %v2216
      %v2249 = vunpack.c.l.b16 %v2217
      %v2250 = vpack.c.b16 %v2235, %v2234
      %v2251 = vpack.c.b16 %v2237, %v2236
      %v2252 = vpack.c.b16 %v2239, %v2238
      %v2253 = vpack.c.b16 %v2241, %v2240
      %v2254 = vpack.c.b16 %v2243, %v2242
      %v2255 = vpack.c.b16 %v2245, %v2244
      %v2256 = vpack.c.b16 %v2247, %v2246
      %v2257 = vpack.c.b16 %v2249, %v2248
      %2266 = vmatpush.bf16.msra.mxu0 %v2257
      %2267 = vmatpush.bf16.msra.mxu0 %v2256
      %2268 = vmatpush.bf16.msra.mxu0 %v2255
      %2269 = vmatpush.bf16.msra.mxu0 %v2254
      %2270 = vmatpush.bf16.msra.mxu0 %v2253
      %2271 = vmatpush.bf16.msra.mxu0 %v2252
      %2272 = vmatpush.bf16.msra.mxu0 %v2251
      %2273 = vmatpush.bf16.msra.mxu0 %v2250
      %2274 = vmatmul.bf16.gmra.mxu0 %v2192
      %v2275 = vpop.f32.mrf.mxu0
      %v2276 = vadd.f32 0.0, %v2275
      %v2277 = vpop.f32.mrf.mxu0
      %v2278 = vadd.f32 0.0, %v2277
      %2279 = vmatmul.bf16.gmra.mxu0 %v2193
      %v2280 = vpop.f32.mrf.mxu0
      %v2281 = vadd.f32 0.0, %v2280
      %v2282 = vpop.f32.mrf.mxu0
      %v2283 = vadd.f32 0.0, %v2282
      %2284 = vmatmul.bf16.gmra.mxu0 %v2194
      %v2285 = vpop.f32.mrf.mxu0
      %v2286 = vadd.f32 0.0, %v2285
      %v2287 = vpop.f32.mrf.mxu0
      %v2288 = vadd.f32 0.0, %v2287
      %2289 = vmatmul.bf16.gmra.mxu0 %v2195
      %v2290 = vpop.f32.mrf.mxu0
      %v2291 = vadd.f32 0.0, %v2290
      %v2292 = vpop.f32.mrf.mxu0
      %v2293 = vadd.f32 0.0, %v2292
      %2294 = vmatmul.bf16.gmra.mxu0 %v2196
      %v2295 = vpop.f32.mrf.mxu0
      %v2296 = vadd.f32 0.0, %v2295
      %v2297 = vpop.f32.mrf.mxu0
      %v2298 = vadd.f32 0.0, %v2297
      %2299 = vmatmul.bf16.gmra.mxu0 %v2197
      %v2300 = vpop.f32.mrf.mxu0
      %v2301 = vadd.f32 0.0, %v2300
      %v2302 = vpop.f32.mrf.mxu0
      %v2303 = vadd.f32 0.0, %v2302
      %2304 = vmatmul.bf16.gmra.mxu0 %v2198
      %v2305 = vpop.f32.mrf.mxu0
      %v2306 = vadd.f32 0.0, %v2305
      %v2307 = vpop.f32.mrf.mxu0
      %v2308 = vadd.f32 0.0, %v2307
      %2309 = vmatmul.bf16.gmra.mxu0 %v2199
      %v2310 = vpop.f32.mrf.mxu0
      %v2311 = vadd.f32 0.0, %v2310
      %v2312 = vpop.f32.mrf.mxu0
      %v2313 = vadd.f32 0.0, %v2312
      %2314 = vmatmul.bf16.gmra.mxu0 %v2200
      %v2315 = vpop.f32.mrf.mxu0
      %v2316 = vadd.f32 0.0, %v2315
      %v2317 = vpop.f32.mrf.mxu0
      %v2318 = vadd.f32 0.0, %v2317
      %2319 = vdwg.mxu0
      %v2320 = vld [vmem:[#allocation2] sm:$0xff]
      %v2321 = vld [vmem:[#allocation2 + $0x8] sm:$0xff]
      %v2322 = vld [vmem:[#allocation2 + $0x10] sm:$0xff]
      %v2323 = vld [vmem:[#allocation2 + $0x18] sm:$0xff]
      %v2324 = vld [vmem:[#allocation2 + $0x20] sm:$0xff]
      %v2325 = vld [vmem:[#allocation2 + $0x28] sm:$0xff]
      %v2326 = vld [vmem:[#allocation2 + $0x30] sm:$0xff]
      %v2327 = vld [vmem:[#allocation2 + $0x38] sm:$0xff]
      %v2328 = vld [vmem:[#allocation2 + $0x40] sm:$0xff]
      %v2329 = vld [vmem:[#allocation2 + $0x48] sm:$0xff]
      %v2330 = vld [vmem:[#allocation2 + $0x50] sm:$0xff]
      %v2331 = vld [vmem:[#allocation2 + $0x58] sm:$0xff]
      %v2332 = vld [vmem:[#allocation2 + $0x60] sm:$0xff]
      %v2333 = vld [vmem:[#allocation2 + $0x68] sm:$0xff]
      %v2334 = vld [vmem:[#allocation2 + $0x70] sm:$0xff]
      %v2335 = vld [vmem:[#allocation2 + $0x78] sm:$0xff]
      %v2336 = vld [vmem:[#allocation2 + $0x80] sm:$0xff]
      %v2337 = vld [vmem:[#allocation2 + $0x88] sm:$0xff]
      %v2338 = vadd.f32 %v2320, %v2276
      %v2339 = vadd.f32 %v2321, %v2278
      %v2340 = vadd.f32 %v2322, %v2281
      %v2341 = vadd.f32 %v2323, %v2283
      %v2342 = vadd.f32 %v2324, %v2286
      %v2343 = vadd.f32 %v2325, %v2288
      %v2344 = vadd.f32 %v2326, %v2291
      %v2345 = vadd.f32 %v2327, %v2293
      %v2346 = vadd.f32 %v2328, %v2296
      %v2347 = vadd.f32 %v2329, %v2298
      %v2348 = vadd.f32 %v2330, %v2301
      %v2349 = vadd.f32 %v2331, %v2303
      %v2350 = vadd.f32 %v2332, %v2306
      %v2351 = vadd.f32 %v2333, %v2308
      %v2352 = vadd.f32 %v2334, %v2311
      %v2353 = vadd.f32 %v2335, %v2313
      %v2354 = vadd.f32 %v2336, %v2316
      %v2355 = vadd.f32 %v2337, %v2318
      %2356 = vst [vmem:[#allocation2] sm:$0xff] %v2338
      %2357 = vst [vmem:[#allocation2 + $0x8] sm:$0xff] %v2339
      %2358 = vst [vmem:[#allocation2 + $0x10] sm:$0xff] %v2340
      %2359 = vst [vmem:[#allocation2 + $0x18] sm:$0xff] %v2341
      %2360 = vst [vmem:[#allocation2 + $0x20] sm:$0xff] %v2342
      %2361 = vst [vmem:[#allocation2 + $0x28] sm:$0xff] %v2343
      %2362 = vst [vmem:[#allocation2 + $0x30] sm:$0xff] %v2344
      %2363 = vst [vmem:[#allocation2 + $0x38] sm:$0xff] %v2345
      %2364 = vst [vmem:[#allocation2 + $0x40] sm:$0xff] %v2346
      %2365 = vst [vmem:[#allocation2 + $0x48] sm:$0xff] %v2347
      %2366 = vst [vmem:[#allocation2 + $0x50] sm:$0xff] %v2348
      %2367 = vst [vmem:[#allocation2 + $0x58] sm:$0xff] %v2349
      %2368 = vst [vmem:[#allocation2 + $0x60] sm:$0xff] %v2350
      %2369 = vst [vmem:[#allocation2 + $0x68] sm:$0xff] %v2351
      %2370 = vst [vmem:[#allocation2 + $0x70] sm:$0xff] %v2352
      %2371 = vst [vmem:[#allocation2 + $0x78] sm:$0xff] %v2353
      %2372 = vst [vmem:[#allocation2 + $0x80] sm:$0xff] %v2354
      %2373 = vst [vmem:[#allocation2 + $0x88] sm:$0xff] %v2355
      %v2374 = vld [vmem:[%s405] sm:$0xff]
      %v2375 = vld [vmem:[%s405 + $0x8] sm:$0xff]
      %v2376 = vld [vmem:[%s405 + $0x10] sm:$0xff]
      %v2377 = vld [vmem:[%s405 + $0x18] sm:$0xff]
      %v2378 = vld [vmem:[%s405 + $0x20] sm:$0xff]
      %v2379 = vld [vmem:[%s405 + $0x28] sm:$0xff]
      %v2380 = vld [vmem:[%s405 + $0x30] sm:$0xff]
      %v2381 = vld [vmem:[%s405 + $0x38] sm:$0xff]
      %v2382 = vld [vmem:[%s405 + $0x40] sm:$0xff]
      %v2383 = vld [vmem:[%s405 + $0x48] sm:$0xff]
      %v2384 = vld [vmem:[%s405 + $0x50] sm:$0xff]
      %v2385 = vld [vmem:[%s405 + $0x58] sm:$0xff]
      %v2386 = vld [vmem:[%s405 + $0x60] sm:$0xff]
      %v2387 = vld [vmem:[%s405 + $0x68] sm:$0xff]
      %v2388 = vld [vmem:[%s405 + $0x70] sm:$0xff]
      %v2389 = vld [vmem:[%s405 + $0x78] sm:$0xff]
      %v2390 = vld [vmem:[%s405 + $0x80] sm:$0xff]
      %v2391 = vld [vmem:[%s405 + $0x88] sm:$0xff]
      %v2392 = vld [vmem:[#allocation2] sm:$0xff]
      %v2393 = vld [vmem:[#allocation2 + $0x8] sm:$0xff]
      %v2394 = vld [vmem:[#allocation2 + $0x10] sm:$0xff]
      %v2395 = vld [vmem:[#allocation2 + $0x18] sm:$0xff]
      %v2396 = vld [vmem:[#allocation2 + $0x20] sm:$0xff]
      %v2397 = vld [vmem:[#allocation2 + $0x28] sm:$0xff]
      %v2398 = vld [vmem:[#allocation2 + $0x30] sm:$0xff]
      %v2399 = vld [vmem:[#allocation2 + $0x38] sm:$0xff]
      %v2400 = vld [vmem:[#allocation2 + $0x40] sm:$0xff]
      %v2401 = vld [vmem:[#allocation2 + $0x48] sm:$0xff]
      %v2402 = vld [vmem:[#allocation2 + $0x50] sm:$0xff]
      %v2403 = vld [vmem:[#allocation2 + $0x58] sm:$0xff]
      %v2404 = vld [vmem:[#allocation2 + $0x60] sm:$0xff]
      %v2405 = vld [vmem:[#allocation2 + $0x68] sm:$0xff]
      %v2406 = vld [vmem:[#allocation2 + $0x70] sm:$0xff]
      %v2407 = vld [vmem:[#allocation2 + $0x78] sm:$0xff]
      %v2408 = vld [vmem:[#allocation2 + $0x80] sm:$0xff]
      %v2409 = vld [vmem:[#allocation2 + $0x88] sm:$0xff]
      %2411 = vset.pattern.permute.xlu0 0
      %2412 = vperm.xlu0 %2411, %v2374
      %v2413 = vpop.permute.xlu0 %2412
      %2416 = vset.pattern.permute.xlu0 0
      %2417 = vperm.xlu0 %2416, %v2375
      %v2418 = vpop.permute.xlu0 %2417
      %2421 = vset.pattern.permute.xlu0 0
      %2422 = vperm.xlu0 %2421, %v2376
      %v2423 = vpop.permute.xlu0 %2422
      %2426 = vset.pattern.permute.xlu0 0
      %2427 = vperm.xlu0 %2426, %v2377
      %v2428 = vpop.permute.xlu0 %2427
      %2431 = vset.pattern.permute.xlu0 0
      %2432 = vperm.xlu0 %2431, %v2378
      %v2433 = vpop.permute.xlu0 %2432
      %2436 = vset.pattern.permute.xlu0 0
      %2437 = vperm.xlu0 %2436, %v2379
      %v2438 = vpop.permute.xlu0 %2437
      %2441 = vset.pattern.permute.xlu0 0
      %2442 = vperm.xlu0 %2441, %v2380
      %v2443 = vpop.permute.xlu0 %2442
      %2446 = vset.pattern.permute.xlu0 0
      %2447 = vperm.xlu0 %2446, %v2381
      %v2448 = vpop.permute.xlu0 %2447
      %2451 = vset.pattern.permute.xlu0 0
      %2452 = vperm.xlu0 %2451, %v2382
      %v2453 = vpop.permute.xlu0 %2452
      %2456 = vset.pattern.permute.xlu0 0
      %2457 = vperm.xlu0 %2456, %v2383
      %v2458 = vpop.permute.xlu0 %2457
      %2461 = vset.pattern.permute.xlu0 0
      %2462 = vperm.xlu0 %2461, %v2384
      %v2463 = vpop.permute.xlu0 %2462
      %2466 = vset.pattern.permute.xlu0 0
      %2467 = vperm.xlu0 %2466, %v2385
      %v2468 = vpop.permute.xlu0 %2467
      %2471 = vset.pattern.permute.xlu0 0
      %2472 = vperm.xlu0 %2471, %v2386
      %v2473 = vpop.permute.xlu0 %2472
      %2476 = vset.pattern.permute.xlu0 0
      %2477 = vperm.xlu0 %2476, %v2387
      %v2478 = vpop.permute.xlu0 %2477
      %2481 = vset.pattern.permute.xlu0 0
      %2482 = vperm.xlu0 %2481, %v2388
      %v2483 = vpop.permute.xlu0 %2482
      %2486 = vset.pattern.permute.xlu0 0
      %2487 = vperm.xlu0 %2486, %v2389
      %v2488 = vpop.permute.xlu0 %2487
      %2491 = vset.pattern.permute.xlu0 0
      %2492 = vperm.xlu0 %2491, %v2390
      %v2493 = vpop.permute.xlu0 %2492
      %2496 = vset.pattern.permute.xlu0 0
      %2497 = vperm.xlu0 %2496, %v2391
      %v2498 = vpop.permute.xlu0 %2497
      %v2500 = vmul.f32 %v2392, %v2413
      %v2501 = vmul.f32 %v2393, %v2418
      %v2502 = vmul.f32 %v2394, %v2423
      %v2503 = vmul.f32 %v2395, %v2428
      %v2504 = vmul.f32 %v2396, %v2433
      %v2505 = vmul.f32 %v2397, %v2438
      %v2506 = vmul.f32 %v2398, %v2443
      %v2507 = vmul.f32 %v2399, %v2448
      %v2508 = vmul.f32 %v2400, %v2453
      %v2509 = vmul.f32 %v2401, %v2458
      %v2510 = vmul.f32 %v2402, %v2463
      %v2511 = vmul.f32 %v2403, %v2468
      %v2512 = vmul.f32 %v2404, %v2473
      %v2513 = vmul.f32 %v2405, %v2478
      %v2514 = vmul.f32 %v2406, %v2483
      %v2515 = vmul.f32 %v2407, %v2488
      %v2516 = vmul.f32 %v2408, %v2493
      %v2517 = vmul.f32 %v2409, %v2498
      %v2518 = vpack.c.bf16 %v2500, %v2500
      %v2519 = vpack.c.bf16 %v2501, %v2501
      %v2520 = vpack.c.bf16 %v2502, %v2502
      %v2521 = vpack.c.bf16 %v2503, %v2503
      %v2522 = vpack.c.bf16 %v2504, %v2504
      %v2523 = vpack.c.bf16 %v2505, %v2505
      %v2524 = vpack.c.bf16 %v2506, %v2506
      %v2525 = vpack.c.bf16 %v2507, %v2507
      %v2526 = vpack.c.bf16 %v2508, %v2508
      %v2527 = vpack.c.bf16 %v2509, %v2509
      %v2528 = vpack.c.bf16 %v2510, %v2510
      %v2529 = vpack.c.bf16 %v2511, %v2511
      %v2530 = vpack.c.bf16 %v2512, %v2512
      %v2531 = vpack.c.bf16 %v2513, %v2513
      %v2532 = vpack.c.bf16 %v2514, %v2514
      %v2533 = vpack.c.bf16 %v2515, %v2515
      %v2534 = vpack.c.bf16 %v2516, %v2516
      %v2535 = vpack.c.bf16 %v2517, %v2517
      %2536 = vst [vmem:[%s422] sm:$0xf] %v2518
      %2537 = vst [vmem:[%s422 + $0x4] sm:$0xf] %v2519
      %2538 = vst [vmem:[%s422 + $0x8] sm:$0xf] %v2520
      %2539 = vst [vmem:[%s422 + $0xc] sm:$0xf] %v2521
      %2540 = vst [vmem:[%s422 + $0x10] sm:$0xf] %v2522
      %2541 = vst [vmem:[%s422 + $0x14] sm:$0xf] %v2523
      %2542 = vst [vmem:[%s422 + $0x18] sm:$0xf] %v2524
      %2543 = vst [vmem:[%s422 + $0x1c] sm:$0xf] %v2525
      %2544 = vst [vmem:[%s422 + $0x20] sm:$0xf] %v2526
      %2545 = vst [vmem:[%s422 + $0x24] sm:$0xf] %v2527
      %2546 = vst [vmem:[%s422 + $0x28] sm:$0xf] %v2528
      %2547 = vst [vmem:[%s422 + $0x2c] sm:$0xf] %v2529
      %2548 = vst [vmem:[%s422 + $0x30] sm:$0xf] %v2530
      %2549 = vst [vmem:[%s422 + $0x34] sm:$0xf] %v2531
      %2550 = vst [vmem:[%s422 + $0x38] sm:$0xf] %v2532
      %2551 = vst [vmem:[%s422 + $0x3c] sm:$0xf] %v2533
      %2552 = vst [vmem:[%s422 + $0x40] sm:$0xf] %v2534
      %2553 = vst [vmem:[%s422 + $0x44] sm:$0xf] %v2535
      %v2554 = vadd.f32 %v2500, %v2501
      %v2555 = vadd.f32 %v2554, %v2502
      %v2556 = vadd.f32 %v2555, %v2503
      %v2557 = vadd.f32 %v2556, %v2504
      %v2558 = vadd.f32 %v2557, %v2505
      %v2559 = vadd.f32 %v2558, %v2506
      %v2560 = vadd.f32 %v2559, %v2507
      %v2561 = vadd.f32 %v2560, %v2508
      %v2562 = vadd.f32 %v2561, %v2509
      %v2563 = vadd.f32 %v2562, %v2510
      %v2564 = vadd.f32 %v2563, %v2511
      %v2565 = vadd.f32 %v2564, %v2512
      %v2566 = vadd.f32 %v2565, %v2513
      %v2567 = vadd.f32 %v2566, %v2514
      %v2568 = vadd.f32 %v2567, %v2515
      %v2569 = vadd.f32 %v2568, %v2516
      %v2570 = vadd.f32 %v2569, %v2517
      %v2571 = vrot.slane %v2570, 4
      %v2572 = vadd.f32 %v2570, %v2571
      %v2573 = vrot.slane %v2572, 2
      %v2574 = vadd.f32 %v2572, %v2573
      %v2575 = vrot.slane %v2574, 1
      %v2576 = vadd.f32 %v2574, %v2575
      %2577 = vst [vmem:[%s433] sm:$0x1] %v2576
      %v2578 = vmul.f32 %v2500, %v2500
      %v2579 = vmul.f32 %v2501, %v2501
      %v2580 = vmul.f32 %v2502, %v2502
      %v2581 = vmul.f32 %v2503, %v2503
      %v2582 = vmul.f32 %v2504, %v2504
      %v2583 = vmul.f32 %v2505, %v2505
      %v2584 = vmul.f32 %v2506, %v2506
      %v2585 = vmul.f32 %v2507, %v2507
      %v2586 = vmul.f32 %v2508, %v2508
      %v2587 = vmul.f32 %v2509, %v2509
      %v2588 = vmul.f32 %v2510, %v2510
      %v2589 = vmul.f32 %v2511, %v2511
      %v2590 = vmul.f32 %v2512, %v2512
      %v2591 = vmul.f32 %v2513, %v2513
      %v2592 = vmul.f32 %v2514, %v2514
      %v2593 = vmul.f32 %v2515, %v2515
      %v2594 = vmul.f32 %v2516, %v2516
      %v2595 = vmul.f32 %v2517, %v2517
      %v2596 = vadd.f32 %v2578, %v2579
      %v2597 = vadd.f32 %v2596, %v2580
      %v2598 = vadd.f32 %v2597, %v2581
      %v2599 = vadd.f32 %v2598, %v2582
      %v2600 = vadd.f32 %v2599, %v2583
      %v2601 = vadd.f32 %v2600, %v2584
      %v2602 = vadd.f32 %v2601, %v2585
      %v2603 = vadd.f32 %v2602, %v2586
      %v2604 = vadd.f32 %v2603, %v2587
      %v2605 = vadd.f32 %v2604, %v2588
      %v2606 = vadd.f32 %v2605, %v2589
      %v2607 = vadd.f32 %v2606, %v2590
      %v2608 = vadd.f32 %v2607, %v2591
      %v2609 = vadd.f32 %v2608, %v2592
      %v2610 = vadd.f32 %v2609, %v2593
      %v2611 = vadd.f32 %v2610, %v2594
      %v2612 = vadd.f32 %v2611, %v2595
      %v2613 = vrot.slane %v2612, 4
      %v2614 = vadd.f32 %v2612, %v2613
      %v2615 = vrot.slane %v2614, 2
      %v2616 = vadd.f32 %v2614, %v2615
      %v2617 = vrot.slane %v2616, 1
      %v2618 = vadd.f32 %v2616, %v2617
      %2619 = vst [vmem:[%s433 + $0x1] sm:$0x1] %v2618
      %v2620 = vld [vmem:[#allocation3] sm:$0xff]
      %v2621 = vld [vmem:[#allocation3 + $0x8] sm:$0xff]
      %v2622 = vld [vmem:[#allocation3 + $0x10] sm:$0xff]
      %v2623 = vld [vmem:[#allocation3 + $0x18] sm:$0xff]
      %v2624 = vld [vmem:[#allocation3 + $0x20] sm:$0xff]
      %v2625 = vld [vmem:[#allocation3 + $0x28] sm:$0xff]
      %v2626 = vld [vmem:[#allocation3 + $0x30] sm:$0xff]
      %v2627 = vld [vmem:[#allocation3 + $0x38] sm:$0xff]
      %v2628 = vld [vmem:[#allocation3 + $0x40] sm:$0xff]
      %v2629 = vld [vmem:[#allocation3 + $0x48] sm:$0xff]
      %v2630 = vld [vmem:[#allocation3 + $0x50] sm:$0xff]
      %v2631 = vld [vmem:[#allocation3 + $0x58] sm:$0xff]
      %v2632 = vld [vmem:[#allocation3 + $0x60] sm:$0xff]
      %v2633 = vld [vmem:[#allocation3 + $0x68] sm:$0xff]
      %v2634 = vld [vmem:[#allocation3 + $0x70] sm:$0xff]
      %v2635 = vld [vmem:[#allocation3 + $0x78] sm:$0xff]
      %v2636 = vld [vmem:[#allocation3 + $0x80] sm:$0xff]
      %v2637 = vld [vmem:[#allocation3 + $0x88] sm:$0xff]
      %v2638 = vmul.f32 %v2620, %v2413
      %v2639 = vmul.f32 %v2621, %v2418
      %v2640 = vmul.f32 %v2622, %v2423
      %v2641 = vmul.f32 %v2623, %v2428
      %v2642 = vmul.f32 %v2624, %v2433
      %v2643 = vmul.f32 %v2625, %v2438
      %v2644 = vmul.f32 %v2626, %v2443
      %v2645 = vmul.f32 %v2627, %v2448
      %v2646 = vmul.f32 %v2628, %v2453
      %v2647 = vmul.f32 %v2629, %v2458
      %v2648 = vmul.f32 %v2630, %v2463
      %v2649 = vmul.f32 %v2631, %v2468
      %v2650 = vmul.f32 %v2632, %v2473
      %v2651 = vmul.f32 %v2633, %v2478
      %v2652 = vmul.f32 %v2634, %v2483
      %v2653 = vmul.f32 %v2635, %v2488
      %v2654 = vmul.f32 %v2636, %v2493
      %v2655 = vmul.f32 %v2637, %v2498
      %v2656 = vpack.c.bf16 %v2638, %v2638
      %v2657 = vpack.c.bf16 %v2639, %v2639
      %v2658 = vpack.c.bf16 %v2640, %v2640
      %v2659 = vpack.c.bf16 %v2641, %v2641
      %v2660 = vpack.c.bf16 %v2642, %v2642
      %v2661 = vpack.c.bf16 %v2643, %v2643
      %v2662 = vpack.c.bf16 %v2644, %v2644
      %v2663 = vpack.c.bf16 %v2645, %v2645
      %v2664 = vpack.c.bf16 %v2646, %v2646
      %v2665 = vpack.c.bf16 %v2647, %v2647
      %v2666 = vpack.c.bf16 %v2648, %v2648
      %v2667 = vpack.c.bf16 %v2649, %v2649
      %v2668 = vpack.c.bf16 %v2650, %v2650
      %v2669 = vpack.c.bf16 %v2651, %v2651
      %v2670 = vpack.c.bf16 %v2652, %v2652
      %v2671 = vpack.c.bf16 %v2653, %v2653
      %v2672 = vpack.c.bf16 %v2654, %v2654
      %v2673 = vpack.c.bf16 %v2655, %v2655
      %2674 = vst [vmem:[%s445] sm:$0xf] %v2656
      %2675 = vst [vmem:[%s445 + $0x4] sm:$0xf] %v2657
      %2676 = vst [vmem:[%s445 + $0x8] sm:$0xf] %v2658
      %2677 = vst [vmem:[%s445 + $0xc] sm:$0xf] %v2659
      %2678 = vst [vmem:[%s445 + $0x10] sm:$0xf] %v2660
      %2679 = vst [vmem:[%s445 + $0x14] sm:$0xf] %v2661
      %2680 = vst [vmem:[%s445 + $0x18] sm:$0xf] %v2662
      %2681 = vst [vmem:[%s445 + $0x1c] sm:$0xf] %v2663
      %2682 = vst [vmem:[%s445 + $0x20] sm:$0xf] %v2664
      %2683 = vst [vmem:[%s445 + $0x24] sm:$0xf] %v2665
      %2684 = vst [vmem:[%s445 + $0x28] sm:$0xf] %v2666
      %2685 = vst [vmem:[%s445 + $0x2c] sm:$0xf] %v2667
      %2686 = vst [vmem:[%s445 + $0x30] sm:$0xf] %v2668
      %2687 = vst [vmem:[%s445 + $0x34] sm:$0xf] %v2669
      %2688 = vst [vmem:[%s445 + $0x38] sm:$0xf] %v2670
      %2689 = vst [vmem:[%s445 + $0x3c] sm:$0xf] %v2671
      %2690 = vst [vmem:[%s445 + $0x40] sm:$0xf] %v2672
      %2691 = vst [vmem:[%s445 + $0x44] sm:$0xf] %v2673
      %v2692 = vadd.f32 %v2638, %v2639
      %v2693 = vadd.f32 %v2692, %v2640
      %v2694 = vadd.f32 %v2693, %v2641
      %v2695 = vadd.f32 %v2694, %v2642
      %v2696 = vadd.f32 %v2695, %v2643
      %v2697 = vadd.f32 %v2696, %v2644
      %v2698 = vadd.f32 %v2697, %v2645
      %v2699 = vadd.f32 %v2698, %v2646
      %v2700 = vadd.f32 %v2699, %v2647
      %v2701 = vadd.f32 %v2700, %v2648
      %v2702 = vadd.f32 %v2701, %v2649
      %v2703 = vadd.f32 %v2702, %v2650
      %v2704 = vadd.f32 %v2703, %v2651
      %v2705 = vadd.f32 %v2704, %v2652
      %v2706 = vadd.f32 %v2705, %v2653
      %v2707 = vadd.f32 %v2706, %v2654
      %v2708 = vadd.f32 %v2707, %v2655
      %v2709 = vrot.slane %v2708, 4
      %v2710 = vadd.f32 %v2708, %v2709
      %v2711 = vrot.slane %v2710, 2
      %v2712 = vadd.f32 %v2710, %v2711
      %v2713 = vrot.slane %v2712, 1
      %v2714 = vadd.f32 %v2712, %v2713
      %2715 = vst [vmem:[%s456] sm:$0x1] %v2714
      %v2716 = vmul.f32 %v2638, %v2638
      %v2717 = vmul.f32 %v2639, %v2639
      %v2718 = vmul.f32 %v2640, %v2640
      %v2719 = vmul.f32 %v2641, %v2641
      %v2720 = vmul.f32 %v2642, %v2642
      %v2721 = vmul.f32 %v2643, %v2643
      %v2722 = vmul.f32 %v2644, %v2644
      %v2723 = vmul.f32 %v2645, %v2645
      %v2724 = vmul.f32 %v2646, %v2646
      %v2725 = vmul.f32 %v2647, %v2647
      %v2726 = vmul.f32 %v2648, %v2648
      %v2727 = vmul.f32 %v2649, %v2649
      %v2728 = vmul.f32 %v2650, %v2650
      %v2729 = vmul.f32 %v2651, %v2651
      %v2730 = vmul.f32 %v2652, %v2652
      %v2731 = vmul.f32 %v2653, %v2653
      %v2732 = vmul.f32 %v2654, %v2654
      %v2733 = vmul.f32 %v2655, %v2655
      %v2734 = vadd.f32 %v2716, %v2717
      %v2735 = vadd.f32 %v2734, %v2718
      %v2736 = vadd.f32 %v2735, %v2719
      %v2737 = vadd.f32 %v2736, %v2720
      %v2738 = vadd.f32 %v2737, %v2721
      %v2739 = vadd.f32 %v2738, %v2722
      %v2740 = vadd.f32 %v2739, %v2723
      %v2741 = vadd.f32 %v2740, %v2724
      %v2742 = vadd.f32 %v2741, %v2725
      %v2743 = vadd.f32 %v2742, %v2726
      %v2744 = vadd.f32 %v2743, %v2727
      %v2745 = vadd.f32 %v2744, %v2728
      %v2746 = vadd.f32 %v2745, %v2729
      %v2747 = vadd.f32 %v2746, %v2730
      %v2748 = vadd.f32 %v2747, %v2731
      %v2749 = vadd.f32 %v2748, %v2732
      %v2750 = vadd.f32 %v2749, %v2733
      %v2751 = vrot.slane %v2750, 4
      %v2752 = vadd.f32 %v2750, %v2751
      %v2753 = vrot.slane %v2752, 2
      %v2754 = vadd.f32 %v2752, %v2753
      %v2755 = vrot.slane %v2754, 1
      %v2756 = vadd.f32 %v2754, %v2755
      %2757 = vst [vmem:[%s456 + $0x1] sm:$0x1] %v2756
      %s2758 = smul.u32 18, %s25
      %p2759 = scmp.lt.s32.totalorder %s24, 1
      %s2760 = scalar_select %p2759, %s24, 1
      %p2761 = scmp.lt.s32.totalorder %s2758, 17
      %s2762 = scalar_select %p2761, %s2758, 17
      %p2763 = scmp.lt.s32.totalorder %s26, 0
      %s2764 = scalar_select %p2763, %s26, 0
      %s2765 = sadd.s32 %s2764, %s2762
      %s2766 = smul.addr %s2760, 18
      %s2767 = sadd.s32 %s2765, %s2766
      %s2768 = smul.addr %s2767, 4
      %s2769 = scalar_lea.vmem %s4, %s2768
      %p2770 = scmp.lt.s32.totalorder %s24, 1
      %s2771 = scalar_select %p2770, %s24, 1
      %p2772 = scmp.lt.s32.totalorder %s25, 0
      %s2773 = scalar_select %p2772, %s25, 0
      %p2774 = scmp.lt.s32.totalorder %s26, 0
      %s2775 = scalar_select %p2774, %s26, 0
      %s2776 = sadd.s32 %s2775, %s2773
      %s2777 = sadd.s32 %s2776, %s2771
      %s2778 = smul.addr %s2777, 2
      %s2779 = scalar_lea.vmem %s5, %s2778
      %s2780 = smul.u32 18, %s25
      %p2781 = scmp.lt.s32.totalorder %s24, 1
      %s2782 = scalar_select %p2781, %s24, 1
      %p2783 = scmp.lt.s32.totalorder %s2780, 17
      %s2784 = scalar_select %p2783, %s2780, 17
      %p2785 = scmp.lt.s32.totalorder %s26, 0
      %s2786 = scalar_select %p2785, %s26, 0
      %s2787 = sadd.s32 %s2786, %s2784
      %s2788 = smul.addr %s2782, 18
      %s2789 = sadd.s32 %s2787, %s2788
      %s2790 = smul.addr %s2789, 4
      %s2791 = scalar_lea.vmem %s6, %s2790
      %p2792 = scmp.lt.s32.totalorder %s24, 1
      %s2793 = scalar_select %p2792, %s24, 1
      %p2794 = scmp.lt.s32.totalorder %s25, 0
      %s2795 = scalar_select %p2794, %s25, 0
      %p2796 = scmp.lt.s32.totalorder %s26, 0
      %s2797 = scalar_select %p2796, %s26, 0
      %s2798 = sadd.s32 %s2797, %s2795
      %s2799 = sadd.s32 %s2798, %s2793
      %s2800 = smul.addr %s2799, 2
      %s2801 = scalar_lea.vmem %s7, %s2800
      // Predicated region
      $region37: #{basic_block_pallas.4} parent=35 // pred_check
        %p2802 = pneg %p164
      $region38: #{basic_block_pallas.4} parent=35 // pred_check_branch
        %2804 = sbr.rel (%p2802) target = $region40
      $region39: #{basic_block_pallas.4} parent=35 // pred_region
        %s2805 = smul.u32 18, %s25
      $region40: #{basic_block_pallas.4} parent=35 // pred_fallthru
        _
      // Predicated region
      $region41: #{basic_block_pallas.4} parent=35 // pred_check
        %p2806 = pneg %p194
      $region42: #{basic_block_pallas.4} parent=35 // pred_check_branch
        %2808 = sbr.rel (%p2806) target = $region44
      $region43: #{basic_block_pallas.4} parent=35 // pred_region
        _
      $region44: #{basic_block_pallas.4} parent=35 // pred_fallthru
        _
      // Predicated region
      $region45: #{basic_block_pallas.4} parent=35 // pred_check
        %p2809 = pneg %p224
      $region46: #{basic_block_pallas.4} parent=35 // pred_check_branch
        %2811 = sbr.rel (%p2809) target = $region48
      $region47: #{basic_block_pallas.4} parent=35 // pred_region
        %s2812 = smul.u32 18, %s25
      $region48: #{basic_block_pallas.4} parent=35 // pred_fallthru
        _
      // Predicated region
      $region49: #{basic_block_pallas.4} parent=35 // pred_check
        %p2813 = pneg %p254
      $region50: #{basic_block_pallas.4} parent=35 // pred_check_branch
        %2815 = sbr.rel (%p2813) target = $region52
      $region51: #{basic_block_pallas.4} parent=35 // pred_region
        _
      $region52: #{basic_block_pallas.4} parent=35 // pred_fallthru
        _
    $region36: #{basic_block_pallas.4} parent=5 // pred_fallthru
      _
    %p2816 = scmp.le.s32.totalorder 2, %s14
    // Predicated region
    $region53: #{basic_block_pallas.4} parent=5 // pred_check
      %p2817 = pneg %p2816
    $region54: #{basic_block_pallas.4} parent=5 // pred_check_branch
      %2819 = sbr.rel (%p2817) target = $region56
    $region55: #{basic_block_pallas.4} parent=5 // pred_region
      %s2820 = ssub.s32 %s14, 2
      // Predicated region
      $region57: #{basic_block_pallas.4} parent=55 // pred_check
        %p2821 = pneg %p170
      $region58: #{basic_block_pallas.4} parent=55 // pred_check_branch
        %2823 = sbr.rel (%p2821) target = $region60
      $region59: #{basic_block_pallas.4} parent=55 // pred_region
        %s2824 = smul.u32 18, %s28
        %p2825 = scmp.lt.s32.totalorder %s27, 1
        %s2826 = scalar_select %p2825, %s27, 1
        %p2827 = scmp.lt.s32.totalorder %s2824, 17
        %s2828 = scalar_select %p2827, %s2824, 17
        %p2829 = scmp.lt.s32.totalorder %s29, 0
        %s2830 = scalar_select %p2829, %s29, 0
        %s2831 = sadd.s32 %s2830, %s2828
        %s2832 = smul.addr %s2826, 18
        %s2833 = sadd.s32 %s2831, %s2832
        %s2834 = smul.addr %s2833, 4
        %s2835 = scalar_lea.vmem %s4, %s2834
      $region60: #{basic_block_pallas.4} parent=55 // pred_fallthru
        _
      // Predicated region
      $region61: #{basic_block_pallas.4} parent=55 // pred_check
        %p2836 = pneg %p200
      $region62: #{basic_block_pallas.4} parent=55 // pred_check_branch
        %2838 = sbr.rel (%p2836) target = $region64
      $region63: #{basic_block_pallas.4} parent=55 // pred_region
        %p2839 = scmp.lt.s32.totalorder %s27, 1
        %s2840 = scalar_select %p2839, %s27, 1
        %p2841 = scmp.lt.s32.totalorder %s28, 0
        %s2842 = scalar_select %p2841, %s28, 0
        %p2843 = scmp.lt.s32.totalorder %s29, 0
        %s2844 = scalar_select %p2843, %s29, 0
        %s2845 = sadd.s32 %s2844, %s2842
        %s2846 = sadd.s32 %s2845, %s2840
        %s2847 = smul.addr %s2846, 2
        %s2848 = scalar_lea.vmem %s5, %s2847
      $region64: #{basic_block_pallas.4} parent=55 // pred_fallthru
        _
      // Predicated region
      $region65: #{basic_block_pallas.4} parent=55 // pred_check
        %p2849 = pneg %p230
      $region66: #{basic_block_pallas.4} parent=55 // pred_check_branch
        %2851 = sbr.rel (%p2849) target = $region68
      $region67: #{basic_block_pallas.4} parent=55 // pred_region
        %s2852 = smul.u32 18, %s28
        %p2853 = scmp.lt.s32.totalorder %s27, 1
        %s2854 = scalar_select %p2853, %s27, 1
        %p2855 = scmp.lt.s32.totalorder %s2852, 17
        %s2856 = scalar_select %p2855, %s2852, 17
        %p2857 = scmp.lt.s32.totalorder %s29, 0
        %s2858 = scalar_select %p2857, %s29, 0
        %s2859 = sadd.s32 %s2858, %s2856
        %s2860 = smul.addr %s2854, 18
        %s2861 = sadd.s32 %s2859, %s2860
        %s2862 = smul.addr %s2861, 4
        %s2863 = scalar_lea.vmem %s6, %s2862
      $region68: #{basic_block_pallas.4} parent=55 // pred_fallthru
        _
      // Predicated region
      $region69: #{basic_block_pallas.4} parent=55 // pred_check
        %p2864 = pneg %p260
      $region70: #{basic_block_pallas.4} parent=55 // pred_check_branch
        %2866 = sbr.rel (%p2864) target = $region72
      $region71: #{basic_block_pallas.4} parent=55 // pred_region
        %p2867 = scmp.lt.s32.totalorder %s27, 1
        %s2868 = scalar_select %p2867, %s27, 1
        %p2869 = scmp.lt.s32.totalorder %s28, 0
        %s2870 = scalar_select %p2869, %s28, 0
        %p2871 = scmp.lt.s32.totalorder %s29, 0
        %s2872 = scalar_select %p2871, %s29, 0
        %s2873 = sadd.s32 %s2872, %s2870
        %s2874 = sadd.s32 %s2873, %s2868
        %s2875 = smul.addr %s2874, 2
        %s2876 = scalar_lea.vmem %s7, %s2875
      $region72: #{basic_block_pallas.4} parent=55 // pred_fallthru
        _
    $region56: #{basic_block_pallas.4} parent=5 // pred_fallthru
      _
  $region6: #{basic_block_pallas.4} parent=0 // loop_footer
    %s18 = sadd.s32 1, %s14
  $region7: #{basic_block_pallas.4} parent=0 // loop_footer_branch
    %13 = sbr.rel target = $region3
  $region8: #{basic_block_pallas.4} parent=0 // loop_exit
    _

// kernel: basic_block_pallas.6
$region0: #{basic_block_pallas.6}
  #allocation0 [shape = 'u32[]', space=smem, size = 0x4, offset = 0x4, fixed_abs, tag = 'smem constant byte address 0x4 - core index']
  #allocation1 [shape = 'u32[72,128]{1,0:T(1,128)}', space=vmem, size = 0x9000, scoped, tag = 'internal scratch']
  #allocation2 [shape = 'f32[80,128]{1,0:T(8,128)}', space=vmem, size = 0xa000, scoped, tag = 'scratch operand']
  %s0 = inlined_call_operand.vmem [shape: f32[2,102,128], index: 0, kind: input, shape index: {}]
  %s1 = inlined_call_operand.vmem [shape: bf16[9,128,128], index: 1, kind: input, shape index: {}]
  %s2 = inlined_call_operand.vmem [shape: f32[80,1], index: 2, kind: input, shape index: {}]
  %s3 = inlined_call_operand.vmem [shape: bf16[2,80,128], index: 3, kind: output, shape index: {0}]
  %s4 = inlined_call_operand.vmem [shape: f32[2,1,2,128], index: 4, kind: output, shape index: {1}]
  %5 = xla_tuple %s3, %s4
  %s6 = sld [smem:[#allocation0]]
  $region53: #{basic_block_pallas.6} parent=0
    _
  %s8 = ssub.s32 1, %s6
  %s9 = scalar_select 0, %s8, %s6
  loop: start=0, step=1, limit=4
  $region2: #{basic_block_pallas.6} parent=0 // loop_pre_header
    _
  $region3: #{basic_block_pallas.6} parent=0 // loop_header
    %s11 = sphi 0, %s15
    %p12 = scmp.ge.s32.totalorder %s11, 4
    %s18 = sphi 0, %s37
    %s19 = sphi 0, %s33
    %s20 = sphi 0, %s29
    %s21 = sphi 0, %s18
    %s22 = sphi 0, %s19
    %s23 = sphi 0, %s20
    %s24 = sphi 0, %s21
    %s25 = sphi 0, %s22
    %s26 = sphi 0, %s23
    %s40 = sphi 0, %s42
    %s43 = sphi 0, %s40
    %s44 = sphi 0, %s43
    %s60 = sphi 0, %s44
    %s66 = sphi 0, %s68
    %s69 = sphi 0, %s66
    %s70 = sphi 0, %s69
    %s86 = sphi 0, %s70
    %s92 = sphi 0, %s94
    %s95 = sphi 0, %s92
    %s96 = sphi 0, %s95
    %s112 = sphi 0, %s96
    %s122 = sphi 0, %s124
    %s125 = sphi 0, %s122
    %s126 = sphi 0, %s125
    %s142 = sphi 0, %s126
    %s152 = sphi 0, %s154
    %s155 = sphi 0, %s152
    %s156 = sphi 0, %s155
    %s172 = sphi 0, %s156
  $region4: #{basic_block_pallas.6} parent=0 // loop_header_branch
    %14 = sbr.rel (%p12) target = $region8
  $region5: #{basic_block_pallas.6} parent=0 // loop_body
    %s16 = ssub.s32 %s11, 1
    %s17 = ssub.s32 %s11, 2
    %s27 = sadd.s32 1, %s20
    %p28 = scmp.ge.s32.totalorder %s27, 1
    %s29 = scalar_select %p28, 0, %s27
    %s30 = sadd.s32 1, %s19
    %s31 = scalar_select %p28, %s30, %s19
    %p32 = scmp.ge.s32.totalorder %s31, 1
    %s33 = scalar_select %p32, 0, %s31
    %s34 = sadd.s32 1, %s18
    %s35 = scalar_select %p32, %s34, %s18
    %p36 = scmp.ge.s32.totalorder %s35, 2
    %s37 = scalar_select %p36, 0, %s35
    %s38 = ssub.s32 %s18, %s37
    %p39 = scmp.eq.s32.totalorder %s38, 0
    %s41 = sadd.s32 %s40, 1
    %s42 = scalar_select %p39, %s40, %s41
    %p45 = pneg %p39
    %p46 = scmp.eq.s32.totalorder %s11, 1
    %p47 = por %p45, %p46
    %p48 = scmp.ne.s32.totalorder %s40, %s43
    %p49 = scmp.eq.s32.totalorder %s11, 0
    %p50 = por %p48, %p49
    %p51 = scmp.ne.s32.totalorder %s40, %s43
    %p52 = scmp.eq.s32.totalorder %s16, 1
    %p53 = por %p51, %p52
    %p54 = scmp.ne.s32.totalorder %s43, %s44
    %p55 = scmp.eq.s32.totalorder %s16, 0
    %p56 = por %p54, %p55
    %p57 = scmp.ne.s32.totalorder %s43, %s44
    %p58 = scmp.eq.s32.totalorder %s17, 1
    %p59 = por %p57, %p58
    %p61 = scmp.ne.s32.totalorder %s44, %s60
    %p62 = scmp.eq.s32.totalorder %s17, 0
    %p63 = por %p61, %p62
    %s64 = ssub.s32 %s20, %s29
    %p65 = scmp.eq.s32.totalorder %s64, 0
    %s67 = sadd.s32 %s66, 1
    %s68 = scalar_select %p65, %s66, %s67
    %p71 = pneg %p65
    %p72 = scmp.eq.s32.totalorder %s11, 1
    %p73 = por %p71, %p72
    %p74 = scmp.ne.s32.totalorder %s66, %s69
    %p75 = scmp.eq.s32.totalorder %s11, 0
    %p76 = por %p74, %p75
    %p77 = scmp.ne.s32.totalorder %s66, %s69
    %p78 = scmp.eq.s32.totalorder %s16, 1
    %p79 = por %p77, %p78
    %p80 = scmp.ne.s32.totalorder %s69, %s70
    %p81 = scmp.eq.s32.totalorder %s16, 0
    %p82 = por %p80, %p81
    %p83 = scmp.ne.s32.totalorder %s69, %s70
    %p84 = scmp.eq.s32.totalorder %s17, 1
    %p85 = por %p83, %p84
    %p87 = scmp.ne.s32.totalorder %s70, %s86
    %p88 = scmp.eq.s32.totalorder %s17, 0
    %p89 = por %p87, %p88
    %s90 = ssub.s32 %s19, %s33
    %p91 = scmp.eq.s32.totalorder %s90, 0
    %s93 = sadd.s32 %s92, 1
    %s94 = scalar_select %p91, %s92, %s93
    %p97 = pneg %p91
    %p98 = scmp.eq.s32.totalorder %s11, 1
    %p99 = por %p97, %p98
    %p100 = scmp.ne.s32.totalorder %s92, %s95
    %p101 = scmp.eq.s32.totalorder %s11, 0
    %p102 = por %p100, %p101
    %p103 = scmp.ne.s32.totalorder %s92, %s95
    %p104 = scmp.eq.s32.totalorder %s16, 1
    %p105 = por %p103, %p104
    %p106 = scmp.ne.s32.totalorder %s95, %s96
    %p107 = scmp.eq.s32.totalorder %s16, 0
    %p108 = por %p106, %p107
    %p109 = scmp.ne.s32.totalorder %s95, %s96
    %p110 = scmp.eq.s32.totalorder %s17, 1
    %p111 = por %p109, %p110
    %p113 = scmp.ne.s32.totalorder %s96, %s112
    %p114 = scmp.eq.s32.totalorder %s17, 0
    %p115 = por %p113, %p114
    %s116 = ssub.s32 %s18, %s37
    %s117 = ssub.s32 %s19, %s33
    %s118 = sor.u32 %s116, %s117
    %s119 = ssub.s32 %s20, %s29
    %s120 = sor.u32 %s118, %s119
    %p121 = scmp.eq.s32.totalorder %s120, 0
    %s123 = sadd.s32 %s122, 1
    %s124 = scalar_select %p121, %s122, %s123
    %p127 = pneg %p121
    %p128 = scmp.eq.s32.totalorder %s11, 1
    %p129 = por %p127, %p128
    %p130 = scmp.ne.s32.totalorder %s122, %s125
    %p131 = scmp.eq.s32.totalorder %s11, 0
    %p132 = por %p130, %p131
    %p133 = scmp.ne.s32.totalorder %s122, %s125
    %p134 = scmp.eq.s32.totalorder %s16, 1
    %p135 = por %p133, %p134
    %p136 = scmp.ne.s32.totalorder %s125, %s126
    %p137 = scmp.eq.s32.totalorder %s16, 0
    %p138 = por %p136, %p137
    %p139 = scmp.ne.s32.totalorder %s125, %s126
    %p140 = scmp.eq.s32.totalorder %s17, 1
    %p141 = por %p139, %p140
    %p143 = scmp.ne.s32.totalorder %s126, %s142
    %p144 = scmp.eq.s32.totalorder %s17, 0
    %p145 = por %p143, %p144
    %s146 = ssub.s32 %s18, %s37
    %s147 = ssub.s32 %s19, %s33
    %s148 = sor.u32 %s146, %s147
    %s149 = ssub.s32 %s20, %s29
    %s150 = sor.u32 %s148, %s149
    %p151 = scmp.eq.s32.totalorder %s150, 0
    %s153 = sadd.s32 %s152, 1
    %s154 = scalar_select %p151, %s152, %s153
    %p157 = pneg %p151
    %p158 = scmp.eq.s32.totalorder %s11, 1
    %p159 = por %p157, %p158
    %p160 = scmp.ne.s32.totalorder %s152, %s155
    %p161 = scmp.eq.s32.totalorder %s11, 0
    %p162 = por %p160, %p161
    %p163 = scmp.ne.s32.totalorder %s152, %s155
    %p164 = scmp.eq.s32.totalorder %s16, 1
    %p165 = por %p163, %p164
    %p166 = scmp.ne.s32.totalorder %s155, %s156
    %p167 = scmp.eq.s32.totalorder %s16, 0
    %p168 = por %p166, %p167
    %p169 = scmp.ne.s32.totalorder %s155, %s156
    %p170 = scmp.eq.s32.totalorder %s17, 1
    %p171 = por %p169, %p170
    %p173 = scmp.ne.s32.totalorder %s156, %s172
    %p174 = scmp.eq.s32.totalorder %s17, 0
    %p175 = por %p173, %p174
    %p176 = scmp.le.s32.totalorder 1, %s11
    %p177 = scmp.lt.s32.totalorder %s11, 3
    %p178 = pnand %p176, %p177
    %p179 = pneg %p178
    // Predicated region
    $region9: #{basic_block_pallas.6} parent=5 // pred_check
      _
    $region10: #{basic_block_pallas.6} parent=5 // pred_check_branch
      %181 = sbr.rel (%p178) target = $region12
    $region11: #{basic_block_pallas.6} parent=5 // pred_region
      %s182 = ssub.s32 %s11, 1
      // Predicated region
      $region13: #{basic_block_pallas.6} parent=11 // pred_check
        %p183 = pneg %p82
      $region14: #{basic_block_pallas.6} parent=11 // pred_check_branch
        %185 = sbr.rel (%p183) target = $region16
      $region15: #{basic_block_pallas.6} parent=11 // pred_region
        %p186 = scmp.lt.s32.totalorder %s23, 0
        %s187 = scalar_select %p186, %s23, 0
        %s188 = smul.addr %s187, 4
        %s189 = scalar_lea.vmem %s1, %s188
      $region16: #{basic_block_pallas.6} parent=11 // pred_fallthru
        _
      // Predicated region
      $region17: #{basic_block_pallas.6} parent=11 // pred_check
        %p190 = pneg %p108
      $region18: #{basic_block_pallas.6} parent=11 // pred_check_branch
        %192 = sbr.rel (%p190) target = $region20
      $region19: #{basic_block_pallas.6} parent=11 // pred_region
        %s193 = smul.u32 10, %s22
        %p194 = scmp.lt.s32.totalorder %s193, 9
        %s195 = scalar_select %p194, %s193, 9
        %s196 = smul.addr %s195, 8
        %s197 = scalar_lea.vmem %s2, %s196
        %s198 = smul.u32 10, %s22
      $region20: #{basic_block_pallas.6} parent=11 // pred_fallthru
        _
    $region12: #{basic_block_pallas.6} parent=5 // pred_fallthru
      _
    %p199 = scmp.lt.s32.totalorder %s11, 2
    // Predicated region
    $region21: #{basic_block_pallas.6} parent=5 // pred_check
      %p200 = pneg %p199
    $region22: #{basic_block_pallas.6} parent=5 // pred_check_branch
      %202 = sbr.rel (%p200) target = $region24
    $region23: #{basic_block_pallas.6} parent=5 // pred_region
      // Predicated region
      $region25: #{basic_block_pallas.6} parent=23 // pred_check
        %p203 = pneg %p50
      $region26: #{basic_block_pallas.6} parent=23 // pred_check_branch
        %205 = sbr.rel (%p203) target = $region28
      $region27: #{basic_block_pallas.6} parent=23 // pred_region
        %p206 = scmp.lt.s32.totalorder %s18, 1
        %s207 = scalar_select %p206, %s18, 1
        %s208 = smul.addr %s207, 13
        %s209 = smul.addr %s208, 8
        %s210 = scalar_lea.vmem %s0, %s209
      $region28: #{basic_block_pallas.6} parent=23 // pred_fallthru
        _
    $region24: #{basic_block_pallas.6} parent=5 // pred_fallthru
      _
    %p211 = scmp.le.s32.totalorder 1, %s11
    %p212 = scmp.lt.s32.totalorder %s11, 3
    %p213 = pnand %p211, %p212
    %p214 = pneg %p213
    // Predicated region
    $region29: #{basic_block_pallas.6} parent=5 // pred_check
      _
    $region30: #{basic_block_pallas.6} parent=5 // pred_check_branch
      %216 = sbr.rel (%p213) target = $region32
    $region31: #{basic_block_pallas.6} parent=5 // pred_region
      %s217 = ssub.s32 %s11, 1
      %p218 = scmp.lt.s32.totalorder %s21, 1
      %s219 = scalar_select %p218, %s21, 1
      %s220 = smul.addr %s219, 13
      %s221 = smul.addr %s220, 8
      %s222 = scalar_lea.vmem %s0, %s221
      %p223 = pneg %p56
      %p224 = pneg %p53
      %p225 = scmp.lt.s32.totalorder %s23, 0
      %s226 = scalar_select %p225, %s23, 0
      %s227 = smul.addr %s226, 4
      %s228 = scalar_lea.vmem %s1, %s227
      %p229 = pneg %p82
      %p230 = pneg %p79
      %s231 = smul.u32 10, %s22
      %p232 = scmp.lt.s32.totalorder %s231, 9
      %s233 = scalar_select %p232, %s231, 9
      %s234 = smul.addr %s233, 8
      %s235 = scalar_lea.vmem %s2, %s234
      %p236 = pneg %p108
      %p237 = pneg %p105
      %p238 = pneg %p138
      %p239 = pneg %p135
      %s240 = smul.u32 10, %s22
      %p241 = scmp.lt.s32.totalorder %s21, 1
      %s242 = scalar_select %p241, %s21, 1
      %p243 = scmp.lt.s32.totalorder %s240, 9
      %s244 = scalar_select %p243, %s240, 9
      %p245 = scmp.lt.s32.totalorder %s23, 0
      %s246 = scalar_select %p245, %s23, 0
      %s247 = sadd.s32 %s246, %s244
      %s248 = smul.addr %s242, 10
      %s249 = sadd.s32 %s247, %s248
      %s250 = smul.addr %s249, 4
      %s251 = scalar_lea.vmem %s3, %s250
      %p252 = pneg %p168
      %p253 = pneg %p165
      %p254 = scmp.lt.s32.totalorder %s21, 1
      %s255 = scalar_select %p254, %s21, 1
      %p256 = scmp.lt.s32.totalorder %s22, 0
      %s257 = scalar_select %p256, %s22, 0
      %p258 = scmp.lt.s32.totalorder %s23, 0
      %s259 = scalar_select %p258, %s23, 0
      %s260 = sadd.s32 %s259, %s257
      %s261 = sadd.s32 %s260, %s255
      %s262 = smul.addr %s261, 2
      %s263 = scalar_lea.vmem %s4, %s262
      %p264 = scmp.lt.s32.totalorder %s21, 1
      %s265 = scalar_select %p264, %s21, 1
      %s266 = smul.addr %s265, 13
      %s267 = smul.addr %s266, 8
      %s268 = scalar_lea.vmem %s0, %s267
      %p269 = scmp.lt.s32.totalorder %s23, 0
      %s270 = scalar_select %p269, %s23, 0
      %s271 = smul.addr %s270, 4
      %s272 = scalar_lea.vmem %s1, %s271
      %s273 = smul.u32 10, %s22
      %p274 = scmp.lt.s32.totalorder %s273, 9
      %s275 = scalar_select %p274, %s273, 9
      %s276 = smul.addr %s275, 8
      %s277 = scalar_lea.vmem %s2, %s276
      %s278 = smul.u32 10, %s22
      %s279 = smul.u32 10, %s22
      %p280 = scmp.lt.s32.totalorder %s21, 1
      %s281 = scalar_select %p280, %s21, 1
      %p282 = scmp.lt.s32.totalorder %s279, 9
      %s283 = scalar_select %p282, %s279, 9
      %p284 = scmp.lt.s32.totalorder %s23, 0
      %s285 = scalar_select %p284, %s23, 0
      %s286 = sadd.s32 %s285, %s283
      %s287 = smul.addr %s281, 10
      %s288 = sadd.s32 %s286, %s287
      %s289 = smul.addr %s288, 4
      %s290 = scalar_lea.vmem %s3, %s289
      %s291 = smul.u32 10, %s22
      %p292 = scmp.lt.s32.totalorder %s21, 1
      %s293 = scalar_select %p292, %s21, 1
      %p294 = scmp.lt.s32.totalorder %s22, 0
      %s295 = scalar_select %p294, %s22, 0
      %p296 = scmp.lt.s32.totalorder %s23, 0
      %s297 = scalar_select %p296, %s23, 0
      %s298 = sadd.s32 %s297, %s295
      %s299 = sadd.s32 %s298, %s293
      %s300 = smul.addr %s299, 2
      %s301 = scalar_lea.vmem %s4, %s300
      %s302 = smul.u32 %s22, 80
      %s303 = scalar_lea.vmem %s268, %s302
      %v304 = vld [vmem:[%s303] sm:$0xff]
      %v305 = vld [vmem:[%s303 + $0x8] sm:$0xff]
      %v306 = vld [vmem:[%s303 + $0x10] sm:$0xff]
      %v307 = vld [vmem:[%s303 + $0x18] sm:$0xff]
      %v308 = vld [vmem:[%s303 + $0x20] sm:$0xff]
      %v309 = vld [vmem:[%s303 + $0x28] sm:$0xff]
      %v310 = vld [vmem:[%s303 + $0x30] sm:$0xff]
      %v311 = vld [vmem:[%s303 + $0x38] sm:$0xff]
      %v312 = vld [vmem:[%s303 + $0x40] sm:$0xff]
      %v313 = vld [vmem:[%s303 + $0x48] sm:$0xff]
      %v314 = vpack.c.bf16 %v305, %v304
      %v315 = vpack.c.bf16 %v307, %v306
      %v316 = vpack.c.bf16 %v309, %v308
      %v317 = vpack.c.bf16 %v311, %v310
      %v318 = vpack.c.bf16 %v313, %v312
      %v319 = vld [vmem:[%s272] sm:$0xf]
      %v320 = vld [vmem:[%s272 + $0x4] sm:$0xf]
      %v321 = vld [vmem:[%s272 + $0x8] sm:$0xf]
      %v322 = vld [vmem:[%s272 + $0xc] sm:$0xf]
      %v323 = vld [vmem:[%s272 + $0x10] sm:$0xf]
      %v324 = vld [vmem:[%s272 + $0x14] sm:$0xf]
      %v325 = vld [vmem:[%s272 + $0x18] sm:$0xf]
      %v326 = vld [vmem:[%s272 + $0x1c] sm:$0xf]
      %v327 = vld [vmem:[%s272 + $0x20] sm:$0xf]
      %v328 = vld [vmem:[%s272 + $0x24] sm:$0xf]
      %v329 = vld [vmem:[%s272 + $0x28] sm:$0xf]
      %v330 = vld [vmem:[%s272 + $0x2c] sm:$0xf]
      %v331 = vld [vmem:[%s272 + $0x30] sm:$0xf]
      %v332 = vld [vmem:[%s272 + $0x34] sm:$0xf]
      %v333 = vld [vmem:[%s272 + $0x38] sm:$0xf]
      %v334 = vld [vmem:[%s272 + $0x3c] sm:$0xf]
      %v351 = vunpack.c.l.b16 %v319
      %v352 = vunpack.c.l.b16 %v320
      %v353 = vunpack.c.l.b16 %v321
      %v354 = vunpack.c.l.b16 %v322
      %v355 = vunpack.c.l.b16 %v323
      %v356 = vunpack.c.l.b16 %v324
      %v357 = vunpack.c.l.b16 %v325
      %v358 = vunpack.c.l.b16 %v326
      %v359 = vunpack.c.l.b16 %v327
      %v360 = vunpack.c.l.b16 %v328
      %v361 = vunpack.c.l.b16 %v329
      %v362 = vunpack.c.l.b16 %v330
      %v363 = vunpack.c.l.b16 %v331
      %v364 = vunpack.c.l.b16 %v332
      %v365 = vunpack.c.l.b16 %v333
      %v366 = vunpack.c.l.b16 %v334
      %v367 = vpack.c.b16 %v352, %v351
      %v368 = vpack.c.b16 %v354, %v353
      %v369 = vpack.c.b16 %v356, %v355
      %v370 = vpack.c.b16 %v358, %v357
      %v371 = vpack.c.b16 %v360, %v359
      %v372 = vpack.c.b16 %v362, %v361
      %v373 = vpack.c.b16 %v364, %v363
      %v374 = vpack.c.b16 %v366, %v365
      %383 = vmatpush.bf16.msra.mxu0 %v374
      %384 = vmatpush.bf16.msra.mxu0 %v373
      %385 = vmatpush.bf16.msra.mxu0 %v372
      %386 = vmatpush.bf16.msra.mxu0 %v371
      %387 = vmatpush.bf16.msra.mxu0 %v370
      %388 = vmatpush.bf16.msra.mxu0 %v369
      %389 = vmatpush.bf16.msra.mxu0 %v368
      %390 = vmatpush.bf16.msra.mxu0 %v367
      %391 = vmatmul.bf16.gmra.mxu0 %v314
      %v392 = vpop.f32.mrf.mxu0
      %v393 = vadd.f32 0.0, %v392
      %v394 = vpop.f32.mrf.mxu0
      %v395 = vadd.f32 0.0, %v394
      %396 = vmatmul.bf16.gmra.mxu0 %v315
      %v397 = vpop.f32.mrf.mxu0
      %v398 = vadd.f32 0.0, %v397
      %v399 = vpop.f32.mrf.mxu0
      %v400 = vadd.f32 0.0, %v399
      %401 = vmatmul.bf16.gmra.mxu0 %v316
      %v402 = vpop.f32.mrf.mxu0
      %v403 = vadd.f32 0.0, %v402
      %v404 = vpop.f32.mrf.mxu0
      %v405 = vadd.f32 0.0, %v404
      %406 = vmatmul.bf16.gmra.mxu0 %v317
      %v407 = vpop.f32.mrf.mxu0
      %v408 = vadd.f32 0.0, %v407
      %v409 = vpop.f32.mrf.mxu0
      %v410 = vadd.f32 0.0, %v409
      %411 = vmatmul.bf16.gmra.mxu0 %v318
      %v412 = vpop.f32.mrf.mxu0
      %v413 = vadd.f32 0.0, %v412
      %v414 = vpop.f32.mrf.mxu0
      %v415 = vadd.f32 0.0, %v414
      %416 = vdwg.mxu0
      %417 = vst [vmem:[#allocation2] sm:$0xff] %v393
      %418 = vst [vmem:[#allocation2 + $0x8] sm:$0xff] %v395
      %419 = vst [vmem:[#allocation2 + $0x10] sm:$0xff] %v398
      %420 = vst [vmem:[#allocation2 + $0x18] sm:$0xff] %v400
      %421 = vst [vmem:[#allocation2 + $0x20] sm:$0xff] %v403
      %422 = vst [vmem:[#allocation2 + $0x28] sm:$0xff] %v405
      %423 = vst [vmem:[#allocation2 + $0x30] sm:$0xff] %v408
      %424 = vst [vmem:[#allocation2 + $0x38] sm:$0xff] %v410
      %425 = vst [vmem:[#allocation2 + $0x40] sm:$0xff] %v413
      %426 = vst [vmem:[#allocation2 + $0x48] sm:$0xff] %v415
      %s427 = sadd.s32 %s302, 1
      %s428 = scalar_lea.vmem %s268, %s427
      %v429 = vld [vmem:[%s428] sm:$0xff]
      %v430 = vld [vmem:[%s428 + $0x8] sm:$0xff]
      %v431 = vld [vmem:[%s428 + $0x10] sm:$0xff]
      %v432 = vld [vmem:[%s428 + $0x18] sm:$0xff]
      %v433 = vld [vmem:[%s428 + $0x20] sm:$0xff]
      %v434 = vld [vmem:[%s428 + $0x28] sm:$0xff]
      %v435 = vld [vmem:[%s428 + $0x30] sm:$0xff]
      %v436 = vld [vmem:[%s428 + $0x38] sm:$0xff]
      %v437 = vld [vmem:[%s428 + $0x40] sm:$0xff]
      %v438 = vld [vmem:[%s428 + $0x48] sm:$0xff]
      %v439 = vpack.c.bf16 %v430, %v429
      %v440 = vpack.c.bf16 %v432, %v431
      %v441 = vpack.c.bf16 %v434, %v433
      %v442 = vpack.c.bf16 %v436, %v435
      %v443 = vpack.c.bf16 %v438, %v437
      %s444 = scalar_lea.vmem %s272, 64
      %v445 = vld [vmem:[%s444] sm:$0xf]
      %v446 = vld [vmem:[%s444 + $0x4] sm:$0xf]
      %v447 = vld [vmem:[%s444 + $0x8] sm:$0xf]
      %v448 = vld [vmem:[%s444 + $0xc] sm:$0xf]
      %v449 = vld [vmem:[%s444 + $0x10] sm:$0xf]
      %v450 = vld [vmem:[%s444 + $0x14] sm:$0xf]
      %v451 = vld [vmem:[%s444 + $0x18] sm:$0xf]
      %v452 = vld [vmem:[%s444 + $0x1c] sm:$0xf]
      %v453 = vld [vmem:[%s444 + $0x20] sm:$0xf]
      %v454 = vld [vmem:[%s444 + $0x24] sm:$0xf]
      %v455 = vld [vmem:[%s444 + $0x28] sm:$0xf]
      %v456 = vld [vmem:[%s444 + $0x2c] sm:$0xf]
      %v457 = vld [vmem:[%s444 + $0x30] sm:$0xf]
      %v458 = vld [vmem:[%s444 + $0x34] sm:$0xf]
      %v459 = vld [vmem:[%s444 + $0x38] sm:$0xf]
      %v460 = vld [vmem:[%s444 + $0x3c] sm:$0xf]
      %v477 = vunpack.c.l.b16 %v445
      %v478 = vunpack.c.l.b16 %v446
      %v479 = vunpack.c.l.b16 %v447
      %v480 = vunpack.c.l.b16 %v448
      %v481 = vunpack.c.l.b16 %v449
      %v482 = vunpack.c.l.b16 %v450
      %v483 = vunpack.c.l.b16 %v451
      %v484 = vunpack.c.l.b16 %v452
      %v485 = vunpack.c.l.b16 %v453
      %v486 = vunpack.c.l.b16 %v454
      %v487 = vunpack.c.l.b16 %v455
      %v488 = vunpack.c.l.b16 %v456
      %v489 = vunpack.c.l.b16 %v457
      %v490 = vunpack.c.l.b16 %v458
      %v491 = vunpack.c.l.b16 %v459
      %v492 = vunpack.c.l.b16 %v460
      %v493 = vpack.c.b16 %v478, %v477
      %v494 = vpack.c.b16 %v480, %v479
      %v495 = vpack.c.b16 %v482, %v481
      %v496 = vpack.c.b16 %v484, %v483
      %v497 = vpack.c.b16 %v486, %v485
      %v498 = vpack.c.b16 %v488, %v487
      %v499 = vpack.c.b16 %v490, %v489
      %v500 = vpack.c.b16 %v492, %v491
      %509 = vmatpush.bf16.msra.mxu0 %v500
      %510 = vmatpush.bf16.msra.mxu0 %v499
      %511 = vmatpush.bf16.msra.mxu0 %v498
      %512 = vmatpush.bf16.msra.mxu0 %v497
      %513 = vmatpush.bf16.msra.mxu0 %v496
      %514 = vmatpush.bf16.msra.mxu0 %v495
      %515 = vmatpush.bf16.msra.mxu0 %v494
      %516 = vmatpush.bf16.msra.mxu0 %v493
      %517 = vmatmul.bf16.gmra.mxu0 %v439
      %v518 = vpop.f32.mrf.mxu0
      %v519 = vadd.f32 0.0, %v518
      %v520 = vpop.f32.mrf.mxu0
      %v521 = vadd.f32 0.0, %v520
      %522 = vmatmul.bf16.gmra.mxu0 %v440
      %v523 = vpop.f32.mrf.mxu0
      %v524 = vadd.f32 0.0, %v523
      %v525 = vpop.f32.mrf.mxu0
      %v526 = vadd.f32 0.0, %v525
      %527 = vmatmul.bf16.gmra.mxu0 %v441
      %v528 = vpop.f32.mrf.mxu0
      %v529 = vadd.f32 0.0, %v528
      %v530 = vpop.f32.mrf.mxu0
      %v531 = vadd.f32 0.0, %v530
      %532 = vmatmul.bf16.gmra.mxu0 %v442
      %v533 = vpop.f32.mrf.mxu0
      %v534 = vadd.f32 0.0, %v533
      %v535 = vpop.f32.mrf.mxu0
      %v536 = vadd.f32 0.0, %v535
      %537 = vmatmul.bf16.gmra.mxu0 %v443
      %v538 = vpop.f32.mrf.mxu0
      %v539 = vadd.f32 0.0, %v538
      %v540 = vpop.f32.mrf.mxu0
      %v541 = vadd.f32 0.0, %v540
      %542 = vdwg.mxu0
      %v543 = vld [vmem:[#allocation2] sm:$0xff]
      %v544 = vld [vmem:[#allocation2 + $0x8] sm:$0xff]
      %v545 = vld [vmem:[#allocation2 + $0x10] sm:$0xff]
      %v546 = vld [vmem:[#allocation2 + $0x18] sm:$0xff]
      %v547 = vld [vmem:[#allocation2 + $0x20] sm:$0xff]
      %v548 = vld [vmem:[#allocation2 + $0x28] sm:$0xff]
      %v549 = vld [vmem:[#allocation2 + $0x30] sm:$0xff]
      %v550 = vld [vmem:[#allocation2 + $0x38] sm:$0xff]
      %v551 = vld [vmem:[#allocation2 + $0x40] sm:$0xff]
      %v552 = vld [vmem:[#allocation2 + $0x48] sm:$0xff]
      %v553 = vadd.f32 %v543, %v519
      %v554 = vadd.f32 %v544, %v521
      %v555 = vadd.f32 %v545, %v524
      %v556 = vadd.f32 %v546, %v526
      %v557 = vadd.f32 %v547, %v529
      %v558 = vadd.f32 %v548, %v531
      %v559 = vadd.f32 %v549, %v534
      %v560 = vadd.f32 %v550, %v536
      %v561 = vadd.f32 %v551, %v539
      %v562 = vadd.f32 %v552, %v541
      %563 = vst [vmem:[#allocation2] sm:$0xff] %v553
      %564 = vst [vmem:[#allocation2 + $0x8] sm:$0xff] %v554
      %565 = vst [vmem:[#allocation2 + $0x10] sm:$0xff] %v555
      %566 = vst [vmem:[#allocation2 + $0x18] sm:$0xff] %v556
      %567 = vst [vmem:[#allocation2 + $0x20] sm:$0xff] %v557
      %568 = vst [vmem:[#allocation2 + $0x28] sm:$0xff] %v558
      %569 = vst [vmem:[#allocation2 + $0x30] sm:$0xff] %v559
      %570 = vst [vmem:[#allocation2 + $0x38] sm:$0xff] %v560
      %571 = vst [vmem:[#allocation2 + $0x40] sm:$0xff] %v561
      %572 = vst [vmem:[#allocation2 + $0x48] sm:$0xff] %v562
      %s573 = sadd.s32 %s302, 2
      %s574 = scalar_lea.vmem %s268, %s573
      %v575 = vld [vmem:[%s574] sm:$0xff]
      %v576 = vld [vmem:[%s574 + $0x8] sm:$0xff]
      %v577 = vld [vmem:[%s574 + $0x10] sm:$0xff]
      %v578 = vld [vmem:[%s574 + $0x18] sm:$0xff]
      %v579 = vld [vmem:[%s574 + $0x20] sm:$0xff]
      %v580 = vld [vmem:[%s574 + $0x28] sm:$0xff]
      %v581 = vld [vmem:[%s574 + $0x30] sm:$0xff]
      %v582 = vld [vmem:[%s574 + $0x38] sm:$0xff]
      %v583 = vld [vmem:[%s574 + $0x40] sm:$0xff]
      %v584 = vld [vmem:[%s574 + $0x48] sm:$0xff]
      %v585 = vpack.c.bf16 %v576, %v575
      %v586 = vpack.c.bf16 %v578, %v577
      %v587 = vpack.c.bf16 %v580, %v579
      %v588 = vpack.c.bf16 %v582, %v581
      %v589 = vpack.c.bf16 %v584, %v583
      %s590 = scalar_lea.vmem %s272, 128
      %v591 = vld [vmem:[%s590] sm:$0xf]
      %v592 = vld [vmem:[%s590 + $0x4] sm:$0xf]
      %v593 = vld [vmem:[%s590 + $0x8] sm:$0xf]
      %v594 = vld [vmem:[%s590 + $0xc] sm:$0xf]
      %v595 = vld [vmem:[%s590 + $0x10] sm:$0xf]
      %v596 = vld [vmem:[%s590 + $0x14] sm:$0xf]
      %v597 = vld [vmem:[%s590 + $0x18] sm:$0xf]
      %v598 = vld [vmem:[%s590 + $0x1c] sm:$0xf]
      %v599 = vld [vmem:[%s590 + $0x20] sm:$0xf]
      %v600 = vld [vmem:[%s590 + $0x24] sm:$0xf]
      %v601 = vld [vmem:[%s590 + $0x28] sm:$0xf]
      %v602 = vld [vmem:[%s590 + $0x2c] sm:$0xf]
      %v603 = vld [vmem:[%s590 + $0x30] sm:$0xf]
      %v604 = vld [vmem:[%s590 + $0x34] sm:$0xf]
      %v605 = vld [vmem:[%s590 + $0x38] sm:$0xf]
      %v606 = vld [vmem:[%s590 + $0x3c] sm:$0xf]
      %v623 = vunpack.c.l.b16 %v591
      %v624 = vunpack.c.l.b16 %v592
      %v625 = vunpack.c.l.b16 %v593
      %v626 = vunpack.c.l.b16 %v594
      %v627 = vunpack.c.l.b16 %v595
      %v628 = vunpack.c.l.b16 %v596
      %v629 = vunpack.c.l.b16 %v597
      %v630 = vunpack.c.l.b16 %v598
      %v631 = vunpack.c.l.b16 %v599
      %v632 = vunpack.c.l.b16 %v600
      %v633 = vunpack.c.l.b16 %v601
      %v634 = vunpack.c.l.b16 %v602
      %v635 = vunpack.c.l.b16 %v603
      %v636 = vunpack.c.l.b16 %v604
      %v637 = vunpack.c.l.b16 %v605
      %v638 = vunpack.c.l.b16 %v606
      %v639 = vpack.c.b16 %v624, %v623
      %v640 = vpack.c.b16 %v626, %v625
      %v641 = vpack.c.b16 %v628, %v627
      %v642 = vpack.c.b16 %v630, %v629
      %v643 = vpack.c.b16 %v632, %v631
      %v644 = vpack.c.b16 %v634, %v633
      %v645 = vpack.c.b16 %v636, %v635
      %v646 = vpack.c.b16 %v638, %v637
      %655 = vmatpush.bf16.msra.mxu0 %v646
      %656 = vmatpush.bf16.msra.mxu0 %v645
      %657 = vmatpush.bf16.msra.mxu0 %v644
      %658 = vmatpush.bf16.msra.mxu0 %v643
      %659 = vmatpush.bf16.msra.mxu0 %v642
      %660 = vmatpush.bf16.msra.mxu0 %v641
      %661 = vmatpush.bf16.msra.mxu0 %v640
      %662 = vmatpush.bf16.msra.mxu0 %v639
      %663 = vmatmul.bf16.gmra.mxu0 %v585
      %v664 = vpop.f32.mrf.mxu0
      %v665 = vadd.f32 0.0, %v664
      %v666 = vpop.f32.mrf.mxu0
      %v667 = vadd.f32 0.0, %v666
      %668 = vmatmul.bf16.gmra.mxu0 %v586
      %v669 = vpop.f32.mrf.mxu0
      %v670 = vadd.f32 0.0, %v669
      %v671 = vpop.f32.mrf.mxu0
      %v672 = vadd.f32 0.0, %v671
      %673 = vmatmul.bf16.gmra.mxu0 %v587
      %v674 = vpop.f32.mrf.mxu0
      %v675 = vadd.f32 0.0, %v674
      %v676 = vpop.f32.mrf.mxu0
      %v677 = vadd.f32 0.0, %v676
      %678 = vmatmul.bf16.gmra.mxu0 %v588
      %v679 = vpop.f32.mrf.mxu0
      %v680 = vadd.f32 0.0, %v679
      %v681 = vpop.f32.mrf.mxu0
      %v682 = vadd.f32 0.0, %v681
      %683 = vmatmul.bf16.gmra.mxu0 %v589
      %v684 = vpop.f32.mrf.mxu0
      %v685 = vadd.f32 0.0, %v684
      %v686 = vpop.f32.mrf.mxu0
      %v687 = vadd.f32 0.0, %v686
      %688 = vdwg.mxu0
      %v689 = vld [vmem:[#allocation2] sm:$0xff]
      %v690 = vld [vmem:[#allocation2 + $0x8] sm:$0xff]
      %v691 = vld [vmem:[#allocation2 + $0x10] sm:$0xff]
      %v692 = vld [vmem:[#allocation2 + $0x18] sm:$0xff]
      %v693 = vld [vmem:[#allocation2 + $0x20] sm:$0xff]
      %v694 = vld [vmem:[#allocation2 + $0x28] sm:$0xff]
      %v695 = vld [vmem:[#allocation2 + $0x30] sm:$0xff]
      %v696 = vld [vmem:[#allocation2 + $0x38] sm:$0xff]
      %v697 = vld [vmem:[#allocation2 + $0x40] sm:$0xff]
      %v698 = vld [vmem:[#allocation2 + $0x48] sm:$0xff]
      %v699 = vadd.f32 %v689, %v665
      %v700 = vadd.f32 %v690, %v667
      %v701 = vadd.f32 %v691, %v670
      %v702 = vadd.f32 %v692, %v672
      %v703 = vadd.f32 %v693, %v675
      %v704 = vadd.f32 %v694, %v677
      %v705 = vadd.f32 %v695, %v680
      %v706 = vadd.f32 %v696, %v682
      %v707 = vadd.f32 %v697, %v685
      %v708 = vadd.f32 %v698, %v687
      %709 = vst [vmem:[#allocation2] sm:$0xff] %v699
      %710 = vst [vmem:[#allocation2 + $0x8] sm:$0xff] %v700
      %711 = vst [vmem:[#allocation2 + $0x10] sm:$0xff] %v701
      %712 = vst [vmem:[#allocation2 + $0x18] sm:$0xff] %v702
      %713 = vst [vmem:[#allocation2 + $0x20] sm:$0xff] %v703
      %714 = vst [vmem:[#allocation2 + $0x28] sm:$0xff] %v704
      %715 = vst [vmem:[#allocation2 + $0x30] sm:$0xff] %v705
      %716 = vst [vmem:[#allocation2 + $0x38] sm:$0xff] %v706
      %717 = vst [vmem:[#allocation2 + $0x40] sm:$0xff] %v707
      %718 = vst [vmem:[#allocation2 + $0x48] sm:$0xff] %v708
      %s719 = sadd.s32 %s302, 10
      %s720 = scalar_lea.vmem %s268, %s719
      %v721 = vld [vmem:[%s720] sm:$0xff]
      %v722 = vld [vmem:[%s720 + $0x8] sm:$0xff]
      %v723 = vld [vmem:[%s720 + $0x10] sm:$0xff]
      %v724 = vld [vmem:[%s720 + $0x18] sm:$0xff]
      %v725 = vld [vmem:[%s720 + $0x20] sm:$0xff]
      %v726 = vld [vmem:[%s720 + $0x28] sm:$0xff]
      %v727 = vld [vmem:[%s720 + $0x30] sm:$0xff]
      %v728 = vld [vmem:[%s720 + $0x38] sm:$0xff]
      %v729 = vld [vmem:[%s720 + $0x40] sm:$0xff]
      %v730 = vld [vmem:[%s720 + $0x48] sm:$0xff]
      %v731 = vpack.c.bf16 %v722, %v721
      %v732 = vpack.c.bf16 %v724, %v723
      %v733 = vpack.c.bf16 %v726, %v725
      %v734 = vpack.c.bf16 %v728, %v727
      %v735 = vpack.c.bf16 %v730, %v729
      %s736 = scalar_lea.vmem %s272, 192
      %v737 = vld [vmem:[%s736] sm:$0xf]
      %v738 = vld [vmem:[%s736 + $0x4] sm:$0xf]
      %v739 = vld [vmem:[%s736 + $0x8] sm:$0xf]
      %v740 = vld [vmem:[%s736 + $0xc] sm:$0xf]
      %v741 = vld [vmem:[%s736 + $0x10] sm:$0xf]
      %v742 = vld [vmem:[%s736 + $0x14] sm:$0xf]
      %v743 = vld [vmem:[%s736 + $0x18] sm:$0xf]
      %v744 = vld [vmem:[%s736 + $0x1c] sm:$0xf]
      %v745 = vld [vmem:[%s736 + $0x20] sm:$0xf]
      %v746 = vld [vmem:[%s736 + $0x24] sm:$0xf]
      %v747 = vld [vmem:[%s736 + $0x28] sm:$0xf]
      %v748 = vld [vmem:[%s736 + $0x2c] sm:$0xf]
      %v749 = vld [vmem:[%s736 + $0x30] sm:$0xf]
      %v750 = vld [vmem:[%s736 + $0x34] sm:$0xf]
      %v751 = vld [vmem:[%s736 + $0x38] sm:$0xf]
      %v752 = vld [vmem:[%s736 + $0x3c] sm:$0xf]
      %v769 = vunpack.c.l.b16 %v737
      %v770 = vunpack.c.l.b16 %v738
      %v771 = vunpack.c.l.b16 %v739
      %v772 = vunpack.c.l.b16 %v740
      %v773 = vunpack.c.l.b16 %v741
      %v774 = vunpack.c.l.b16 %v742
      %v775 = vunpack.c.l.b16 %v743
      %v776 = vunpack.c.l.b16 %v744
      %v777 = vunpack.c.l.b16 %v745
      %v778 = vunpack.c.l.b16 %v746
      %v779 = vunpack.c.l.b16 %v747
      %v780 = vunpack.c.l.b16 %v748
      %v781 = vunpack.c.l.b16 %v749
      %v782 = vunpack.c.l.b16 %v750
      %v783 = vunpack.c.l.b16 %v751
      %v784 = vunpack.c.l.b16 %v752
      %v785 = vpack.c.b16 %v770, %v769
      %v786 = vpack.c.b16 %v772, %v771
      %v787 = vpack.c.b16 %v774, %v773
      %v788 = vpack.c.b16 %v776, %v775
      %v789 = vpack.c.b16 %v778, %v777
      %v790 = vpack.c.b16 %v780, %v779
      %v791 = vpack.c.b16 %v782, %v781
      %v792 = vpack.c.b16 %v784, %v783
      %801 = vmatpush.bf16.msra.mxu0 %v792
      %802 = vmatpush.bf16.msra.mxu0 %v791
      %803 = vmatpush.bf16.msra.mxu0 %v790
      %804 = vmatpush.bf16.msra.mxu0 %v789
      %805 = vmatpush.bf16.msra.mxu0 %v788
      %806 = vmatpush.bf16.msra.mxu0 %v787
      %807 = vmatpush.bf16.msra.mxu0 %v786
      %808 = vmatpush.bf16.msra.mxu0 %v785
      %809 = vmatmul.bf16.gmra.mxu0 %v731
      %v810 = vpop.f32.mrf.mxu0
      %v811 = vadd.f32 0.0, %v810
      %v812 = vpop.f32.mrf.mxu0
      %v813 = vadd.f32 0.0, %v812
      %814 = vmatmul.bf16.gmra.mxu0 %v732
      %v815 = vpop.f32.mrf.mxu0
      %v816 = vadd.f32 0.0, %v815
      %v817 = vpop.f32.mrf.mxu0
      %v818 = vadd.f32 0.0, %v817
      %819 = vmatmul.bf16.gmra.mxu0 %v733
      %v820 = vpop.f32.mrf.mxu0
      %v821 = vadd.f32 0.0, %v820
      %v822 = vpop.f32.mrf.mxu0
      %v823 = vadd.f32 0.0, %v822
      %824 = vmatmul.bf16.gmra.mxu0 %v734
      %v825 = vpop.f32.mrf.mxu0
      %v826 = vadd.f32 0.0, %v825
      %v827 = vpop.f32.mrf.mxu0
      %v828 = vadd.f32 0.0, %v827
      %829 = vmatmul.bf16.gmra.mxu0 %v735
      %v830 = vpop.f32.mrf.mxu0
      %v831 = vadd.f32 0.0, %v830
      %v832 = vpop.f32.mrf.mxu0
      %v833 = vadd.f32 0.0, %v832
      %834 = vdwg.mxu0
      %v835 = vld [vmem:[#allocation2] sm:$0xff]
      %v836 = vld [vmem:[#allocation2 + $0x8] sm:$0xff]
      %v837 = vld [vmem:[#allocation2 + $0x10] sm:$0xff]
      %v838 = vld [vmem:[#allocation2 + $0x18] sm:$0xff]
      %v839 = vld [vmem:[#allocation2 + $0x20] sm:$0xff]
      %v840 = vld [vmem:[#allocation2 + $0x28] sm:$0xff]
      %v841 = vld [vmem:[#allocation2 + $0x30] sm:$0xff]
      %v842 = vld [vmem:[#allocation2 + $0x38] sm:$0xff]
      %v843 = vld [vmem:[#allocation2 + $0x40] sm:$0xff]
      %v844 = vld [vmem:[#allocation2 + $0x48] sm:$0xff]
      %v845 = vadd.f32 %v835, %v811
      %v846 = vadd.f32 %v836, %v813
      %v847 = vadd.f32 %v837, %v816
      %v848 = vadd.f32 %v838, %v818
      %v849 = vadd.f32 %v839, %v821
      %v850 = vadd.f32 %v840, %v823
      %v851 = vadd.f32 %v841, %v826
      %v852 = vadd.f32 %v842, %v828
      %v853 = vadd.f32 %v843, %v831
      %v854 = vadd.f32 %v844, %v833
      %855 = vst [vmem:[#allocation2] sm:$0xff] %v845
      %856 = vst [vmem:[#allocation2 + $0x8] sm:$0xff] %v846
      %857 = vst [vmem:[#allocation2 + $0x10] sm:$0xff] %v847
      %858 = vst [vmem:[#allocation2 + $0x18] sm:$0xff] %v848
      %859 = vst [vmem:[#allocation2 + $0x20] sm:$0xff] %v849
      %860 = vst [vmem:[#allocation2 + $0x28] sm:$0xff] %v850
      %861 = vst [vmem:[#allocation2 + $0x30] sm:$0xff] %v851
      %862 = vst [vmem:[#allocation2 + $0x38] sm:$0xff] %v852
      %863 = vst [vmem:[#allocation2 + $0x40] sm:$0xff] %v853
      %864 = vst [vmem:[#allocation2 + $0x48] sm:$0xff] %v854
      %s865 = sadd.s32 %s302, 11
      %s866 = scalar_lea.vmem %s268, %s865
      %v867 = vld [vmem:[%s866] sm:$0xff]
      %v868 = vld [vmem:[%s866 + $0x8] sm:$0xff]
      %v869 = vld [vmem:[%s866 + $0x10] sm:$0xff]
      %v870 = vld [vmem:[%s866 + $0x18] sm:$0xff]
      %v871 = vld [vmem:[%s866 + $0x20] sm:$0xff]
      %v872 = vld [vmem:[%s866 + $0x28] sm:$0xff]
      %v873 = vld [vmem:[%s866 + $0x30] sm:$0xff]
      %v874 = vld [vmem:[%s866 + $0x38] sm:$0xff]
      %v875 = vld [vmem:[%s866 + $0x40] sm:$0xff]
      %v876 = vld [vmem:[%s866 + $0x48] sm:$0xff]
      %v877 = vpack.c.bf16 %v868, %v867
      %v878 = vpack.c.bf16 %v870, %v869
      %v879 = vpack.c.bf16 %v872, %v871
      %v880 = vpack.c.bf16 %v874, %v873
      %v881 = vpack.c.bf16 %v876, %v875
      %s882 = scalar_lea.vmem %s272, 256
      %v883 = vld [vmem:[%s882] sm:$0xf]
      %v884 = vld [vmem:[%s882 + $0x4] sm:$0xf]
      %v885 = vld [vmem:[%s882 + $0x8] sm:$0xf]
      %v886 = vld [vmem:[%s882 + $0xc] sm:$0xf]
      %v887 = vld [vmem:[%s882 + $0x10] sm:$0xf]
      %v888 = vld [vmem:[%s882 + $0x14] sm:$0xf]
      %v889 = vld [vmem:[%s882 + $0x18] sm:$0xf]
      %v890 = vld [vmem:[%s882 + $0x1c] sm:$0xf]
      %v891 = vld [vmem:[%s882 + $0x20] sm:$0xf]
      %v892 = vld [vmem:[%s882 + $0x24] sm:$0xf]
      %v893 = vld [vmem:[%s882 + $0x28] sm:$0xf]
      %v894 = vld [vmem:[%s882 + $0x2c] sm:$0xf]
      %v895 = vld [vmem:[%s882 + $0x30] sm:$0xf]
      %v896 = vld [vmem:[%s882 + $0x34] sm:$0xf]
      %v897 = vld [vmem:[%s882 + $0x38] sm:$0xf]
      %v898 = vld [vmem:[%s882 + $0x3c] sm:$0xf]
      %v915 = vunpack.c.l.b16 %v883
      %v916 = vunpack.c.l.b16 %v884
      %v917 = vunpack.c.l.b16 %v885
      %v918 = vunpack.c.l.b16 %v886
      %v919 = vunpack.c.l.b16 %v887
      %v920 = vunpack.c.l.b16 %v888
      %v921 = vunpack.c.l.b16 %v889
      %v922 = vunpack.c.l.b16 %v890
      %v923 = vunpack.c.l.b16 %v891
      %v924 = vunpack.c.l.b16 %v892
      %v925 = vunpack.c.l.b16 %v893
      %v926 = vunpack.c.l.b16 %v894
      %v927 = vunpack.c.l.b16 %v895
      %v928 = vunpack.c.l.b16 %v896
      %v929 = vunpack.c.l.b16 %v897
      %v930 = vunpack.c.l.b16 %v898
      %v931 = vpack.c.b16 %v916, %v915
      %v932 = vpack.c.b16 %v918, %v917
      %v933 = vpack.c.b16 %v920, %v919
      %v934 = vpack.c.b16 %v922, %v921
      %v935 = vpack.c.b16 %v924, %v923
      %v936 = vpack.c.b16 %v926, %v925
      %v937 = vpack.c.b16 %v928, %v927
      %v938 = vpack.c.b16 %v930, %v929
      %947 = vmatpush.bf16.msra.mxu0 %v938
      %948 = vmatpush.bf16.msra.mxu0 %v937
      %949 = vmatpush.bf16.msra.mxu0 %v936
      %950 = vmatpush.bf16.msra.mxu0 %v935
      %951 = vmatpush.bf16.msra.mxu0 %v934
      %952 = vmatpush.bf16.msra.mxu0 %v933
      %953 = vmatpush.bf16.msra.mxu0 %v932
      %954 = vmatpush.bf16.msra.mxu0 %v931
      %955 = vmatmul.bf16.gmra.mxu0 %v877
      %v956 = vpop.f32.mrf.mxu0
      %v957 = vadd.f32 0.0, %v956
      %v958 = vpop.f32.mrf.mxu0
      %v959 = vadd.f32 0.0, %v958
      %960 = vmatmul.bf16.gmra.mxu0 %v878
      %v961 = vpop.f32.mrf.mxu0
      %v962 = vadd.f32 0.0, %v961
      %v963 = vpop.f32.mrf.mxu0
      %v964 = vadd.f32 0.0, %v963
      %965 = vmatmul.bf16.gmra.mxu0 %v879
      %v966 = vpop.f32.mrf.mxu0
      %v967 = vadd.f32 0.0, %v966
      %v968 = vpop.f32.mrf.mxu0
      %v969 = vadd.f32 0.0, %v968
      %970 = vmatmul.bf16.gmra.mxu0 %v880
      %v971 = vpop.f32.mrf.mxu0
      %v972 = vadd.f32 0.0, %v971
      %v973 = vpop.f32.mrf.mxu0
      %v974 = vadd.f32 0.0, %v973
      %975 = vmatmul.bf16.gmra.mxu0 %v881
      %v976 = vpop.f32.mrf.mxu0
      %v977 = vadd.f32 0.0, %v976
      %v978 = vpop.f32.mrf.mxu0
      %v979 = vadd.f32 0.0, %v978
      %980 = vdwg.mxu0
      %v981 = vld [vmem:[#allocation2] sm:$0xff]
      %v982 = vld [vmem:[#allocation2 + $0x8] sm:$0xff]
      %v983 = vld [vmem:[#allocation2 + $0x10] sm:$0xff]
      %v984 = vld [vmem:[#allocation2 + $0x18] sm:$0xff]
      %v985 = vld [vmem:[#allocation2 + $0x20] sm:$0xff]
      %v986 = vld [vmem:[#allocation2 + $0x28] sm:$0xff]
      %v987 = vld [vmem:[#allocation2 + $0x30] sm:$0xff]
      %v988 = vld [vmem:[#allocation2 + $0x38] sm:$0xff]
      %v989 = vld [vmem:[#allocation2 + $0x40] sm:$0xff]
      %v990 = vld [vmem:[#allocation2 + $0x48] sm:$0xff]
      %v991 = vadd.f32 %v981, %v957
      %v992 = vadd.f32 %v982, %v959
      %v993 = vadd.f32 %v983, %v962
      %v994 = vadd.f32 %v984, %v964
      %v995 = vadd.f32 %v985, %v967
      %v996 = vadd.f32 %v986, %v969
      %v997 = vadd.f32 %v987, %v972
      %v998 = vadd.f32 %v988, %v974
      %v999 = vadd.f32 %v989, %v977
      %v1000 = vadd.f32 %v990, %v979
      %1001 = vst [vmem:[#allocation2] sm:$0xff] %v991
      %1002 = vst [vmem:[#allocation2 + $0x8] sm:$0xff] %v992
      %1003 = vst [vmem:[#allocation2 + $0x10] sm:$0xff] %v993
      %1004 = vst [vmem:[#allocation2 + $0x18] sm:$0xff] %v994
      %1005 = vst [vmem:[#allocation2 + $0x20] sm:$0xff] %v995
      %1006 = vst [vmem:[#allocation2 + $0x28] sm:$0xff] %v996
      %1007 = vst [vmem:[#allocation2 + $0x30] sm:$0xff] %v997
      %1008 = vst [vmem:[#allocation2 + $0x38] sm:$0xff] %v998
      %1009 = vst [vmem:[#allocation2 + $0x40] sm:$0xff] %v999
      %1010 = vst [vmem:[#allocation2 + $0x48] sm:$0xff] %v1000
      %s1011 = sadd.s32 %s302, 12
      %s1012 = scalar_lea.vmem %s268, %s1011
      %v1013 = vld [vmem:[%s1012] sm:$0xff]
      %v1014 = vld [vmem:[%s1012 + $0x8] sm:$0xff]
      %v1015 = vld [vmem:[%s1012 + $0x10] sm:$0xff]
      %v1016 = vld [vmem:[%s1012 + $0x18] sm:$0xff]
      %v1017 = vld [vmem:[%s1012 + $0x20] sm:$0xff]
      %v1018 = vld [vmem:[%s1012 + $0x28] sm:$0xff]
      %v1019 = vld [vmem:[%s1012 + $0x30] sm:$0xff]
      %v1020 = vld [vmem:[%s1012 + $0x38] sm:$0xff]
      %v1021 = vld [vmem:[%s1012 + $0x40] sm:$0xff]
      %v1022 = vld [vmem:[%s1012 + $0x48] sm:$0xff]
      %v1023 = vpack.c.bf16 %v1014, %v1013
      %v1024 = vpack.c.bf16 %v1016, %v1015
      %v1025 = vpack.c.bf16 %v1018, %v1017
      %v1026 = vpack.c.bf16 %v1020, %v1019
      %v1027 = vpack.c.bf16 %v1022, %v1021
      %s1028 = scalar_lea.vmem %s272, 320
      %v1029 = vld [vmem:[%s1028] sm:$0xf]
      %v1030 = vld [vmem:[%s1028 + $0x4] sm:$0xf]
      %v1031 = vld [vmem:[%s1028 + $0x8] sm:$0xf]
      %v1032 = vld [vmem:[%s1028 + $0xc] sm:$0xf]
      %v1033 = vld [vmem:[%s1028 + $0x10] sm:$0xf]
      %v1034 = vld [vmem:[%s1028 + $0x14] sm:$0xf]
      %v1035 = vld [vmem:[%s1028 + $0x18] sm:$0xf]
      %v1036 = vld [vmem:[%s1028 + $0x1c] sm:$0xf]
      %v1037 = vld [vmem:[%s1028 + $0x20] sm:$0xf]
      %v1038 = vld [vmem:[%s1028 + $0x24] sm:$0xf]
      %v1039 = vld [vmem:[%s1028 + $0x28] sm:$0xf]
      %v1040 = vld [vmem:[%s1028 + $0x2c] sm:$0xf]
      %v1041 = vld [vmem:[%s1028 + $0x30] sm:$0xf]
      %v1042 = vld [vmem:[%s1028 + $0x34] sm:$0xf]
      %v1043 = vld [vmem:[%s1028 + $0x38] sm:$0xf]
      %v1044 = vld [vmem:[%s1028 + $0x3c] sm:$0xf]
      %v1061 = vunpack.c.l.b16 %v1029
      %v1062 = vunpack.c.l.b16 %v1030
      %v1063 = vunpack.c.l.b16 %v1031
      %v1064 = vunpack.c.l.b16 %v1032
      %v1065 = vunpack.c.l.b16 %v1033
      %v1066 = vunpack.c.l.b16 %v1034
      %v1067 = vunpack.c.l.b16 %v1035
      %v1068 = vunpack.c.l.b16 %v1036
      %v1069 = vunpack.c.l.b16 %v1037
      %v1070 = vunpack.c.l.b16 %v1038
      %v1071 = vunpack.c.l.b16 %v1039
      %v1072 = vunpack.c.l.b16 %v1040
      %v1073 = vunpack.c.l.b16 %v1041
      %v1074 = vunpack.c.l.b16 %v1042
      %v1075 = vunpack.c.l.b16 %v1043
      %v1076 = vunpack.c.l.b16 %v1044
      %v1077 = vpack.c.b16 %v1062, %v1061
      %v1078 = vpack.c.b16 %v1064, %v1063
      %v1079 = vpack.c.b16 %v1066, %v1065
      %v1080 = vpack.c.b16 %v1068, %v1067
      %v1081 = vpack.c.b16 %v1070, %v1069
      %v1082 = vpack.c.b16 %v1072, %v1071
      %v1083 = vpack.c.b16 %v1074, %v1073
      %v1084 = vpack.c.b16 %v1076, %v1075
      %1093 = vmatpush.bf16.msra.mxu0 %v1084
      %1094 = vmatpush.bf16.msra.mxu0 %v1083
      %1095 = vmatpush.bf16.msra.mxu0 %v1082
      %1096 = vmatpush.bf16.msra.mxu0 %v1081
      %1097 = vmatpush.bf16.msra.mxu0 %v1080
      %1098 = vmatpush.bf16.msra.mxu0 %v1079
      %1099 = vmatpush.bf16.msra.mxu0 %v1078
      %1100 = vmatpush.bf16.msra.mxu0 %v1077
      %1101 = vmatmul.bf16.gmra.mxu0 %v1023
      %v1102 = vpop.f32.mrf.mxu0
      %v1103 = vadd.f32 0.0, %v1102
      %v1104 = vpop.f32.mrf.mxu0
      %v1105 = vadd.f32 0.0, %v1104
      %1106 = vmatmul.bf16.gmra.mxu0 %v1024
      %v1107 = vpop.f32.mrf.mxu0
      %v1108 = vadd.f32 0.0, %v1107
      %v1109 = vpop.f32.mrf.mxu0
      %v1110 = vadd.f32 0.0, %v1109
      %1111 = vmatmul.bf16.gmra.mxu0 %v1025
      %v1112 = vpop.f32.mrf.mxu0
      %v1113 = vadd.f32 0.0, %v1112
      %v1114 = vpop.f32.mrf.mxu0
      %v1115 = vadd.f32 0.0, %v1114
      %1116 = vmatmul.bf16.gmra.mxu0 %v1026
      %v1117 = vpop.f32.mrf.mxu0
      %v1118 = vadd.f32 0.0, %v1117
      %v1119 = vpop.f32.mrf.mxu0
      %v1120 = vadd.f32 0.0, %v1119
      %1121 = vmatmul.bf16.gmra.mxu0 %v1027
      %v1122 = vpop.f32.mrf.mxu0
      %v1123 = vadd.f32 0.0, %v1122
      %v1124 = vpop.f32.mrf.mxu0
      %v1125 = vadd.f32 0.0, %v1124
      %1126 = vdwg.mxu0
      %v1127 = vld [vmem:[#allocation2] sm:$0xff]
      %v1128 = vld [vmem:[#allocation2 + $0x8] sm:$0xff]
      %v1129 = vld [vmem:[#allocation2 + $0x10] sm:$0xff]
      %v1130 = vld [vmem:[#allocation2 + $0x18] sm:$0xff]
      %v1131 = vld [vmem:[#allocation2 + $0x20] sm:$0xff]
      %v1132 = vld [vmem:[#allocation2 + $0x28] sm:$0xff]
      %v1133 = vld [vmem:[#allocation2 + $0x30] sm:$0xff]
      %v1134 = vld [vmem:[#allocation2 + $0x38] sm:$0xff]
      %v1135 = vld [vmem:[#allocation2 + $0x40] sm:$0xff]
      %v1136 = vld [vmem:[#allocation2 + $0x48] sm:$0xff]
      %v1137 = vadd.f32 %v1127, %v1103
      %v1138 = vadd.f32 %v1128, %v1105
      %v1139 = vadd.f32 %v1129, %v1108
      %v1140 = vadd.f32 %v1130, %v1110
      %v1141 = vadd.f32 %v1131, %v1113
      %v1142 = vadd.f32 %v1132, %v1115
      %v1143 = vadd.f32 %v1133, %v1118
      %v1144 = vadd.f32 %v1134, %v1120
      %v1145 = vadd.f32 %v1135, %v1123
      %v1146 = vadd.f32 %v1136, %v1125
      %1147 = vst [vmem:[#allocation2] sm:$0xff] %v1137
      %1148 = vst [vmem:[#allocation2 + $0x8] sm:$0xff] %v1138
      %1149 = vst [vmem:[#allocation2 + $0x10] sm:$0xff] %v1139
      %1150 = vst [vmem:[#allocation2 + $0x18] sm:$0xff] %v1140
      %1151 = vst [vmem:[#allocation2 + $0x20] sm:$0xff] %v1141
      %1152 = vst [vmem:[#allocation2 + $0x28] sm:$0xff] %v1142
      %1153 = vst [vmem:[#allocation2 + $0x30] sm:$0xff] %v1143
      %1154 = vst [vmem:[#allocation2 + $0x38] sm:$0xff] %v1144
      %1155 = vst [vmem:[#allocation2 + $0x40] sm:$0xff] %v1145
      %1156 = vst [vmem:[#allocation2 + $0x48] sm:$0xff] %v1146
      %s1157 = sadd.s32 %s302, 20
      %s1158 = scalar_lea.vmem %s268, %s1157
      %v1159 = vld [vmem:[%s1158] sm:$0xff]
      %v1160 = vld [vmem:[%s1158 + $0x8] sm:$0xff]
      %v1161 = vld [vmem:[%s1158 + $0x10] sm:$0xff]
      %v1162 = vld [vmem:[%s1158 + $0x18] sm:$0xff]
      %v1163 = vld [vmem:[%s1158 + $0x20] sm:$0xff]
      %v1164 = vld [vmem:[%s1158 + $0x28] sm:$0xff]
      %v1165 = vld [vmem:[%s1158 + $0x30] sm:$0xff]
      %v1166 = vld [vmem:[%s1158 + $0x38] sm:$0xff]
      %v1167 = vld [vmem:[%s1158 + $0x40] sm:$0xff]
      %v1168 = vld [vmem:[%s1158 + $0x48] sm:$0xff]
      %v1169 = vpack.c.bf16 %v1160, %v1159
      %v1170 = vpack.c.bf16 %v1162, %v1161
      %v1171 = vpack.c.bf16 %v1164, %v1163
      %v1172 = vpack.c.bf16 %v1166, %v1165
      %v1173 = vpack.c.bf16 %v1168, %v1167
      %s1174 = scalar_lea.vmem %s272, 384
      %v1175 = vld [vmem:[%s1174] sm:$0xf]
      %v1176 = vld [vmem:[%s1174 + $0x4] sm:$0xf]
      %v1177 = vld [vmem:[%s1174 + $0x8] sm:$0xf]
      %v1178 = vld [vmem:[%s1174 + $0xc] sm:$0xf]
      %v1179 = vld [vmem:[%s1174 + $0x10] sm:$0xf]
      %v1180 = vld [vmem:[%s1174 + $0x14] sm:$0xf]
      %v1181 = vld [vmem:[%s1174 + $0x18] sm:$0xf]
      %v1182 = vld [vmem:[%s1174 + $0x1c] sm:$0xf]
      %v1183 = vld [vmem:[%s1174 + $0x20] sm:$0xf]
      %v1184 = vld [vmem:[%s1174 + $0x24] sm:$0xf]
      %v1185 = vld [vmem:[%s1174 + $0x28] sm:$0xf]
      %v1186 = vld [vmem:[%s1174 + $0x2c] sm:$0xf]
      %v1187 = vld [vmem:[%s1174 + $0x30] sm:$0xf]
      %v1188 = vld [vmem:[%s1174 + $0x34] sm:$0xf]
      %v1189 = vld [vmem:[%s1174 + $0x38] sm:$0xf]
      %v1190 = vld [vmem:[%s1174 + $0x3c] sm:$0xf]
      %v1207 = vunpack.c.l.b16 %v1175
      %v1208 = vunpack.c.l.b16 %v1176
      %v1209 = vunpack.c.l.b16 %v1177
      %v1210 = vunpack.c.l.b16 %v1178
      %v1211 = vunpack.c.l.b16 %v1179
      %v1212 = vunpack.c.l.b16 %v1180
      %v1213 = vunpack.c.l.b16 %v1181
      %v1214 = vunpack.c.l.b16 %v1182
      %v1215 = vunpack.c.l.b16 %v1183
      %v1216 = vunpack.c.l.b16 %v1184
      %v1217 = vunpack.c.l.b16 %v1185
      %v1218 = vunpack.c.l.b16 %v1186
      %v1219 = vunpack.c.l.b16 %v1187
      %v1220 = vunpack.c.l.b16 %v1188
      %v1221 = vunpack.c.l.b16 %v1189
      %v1222 = vunpack.c.l.b16 %v1190
      %v1223 = vpack.c.b16 %v1208, %v1207
      %v1224 = vpack.c.b16 %v1210, %v1209
      %v1225 = vpack.c.b16 %v1212, %v1211
      %v1226 = vpack.c.b16 %v1214, %v1213
      %v1227 = vpack.c.b16 %v1216, %v1215
      %v1228 = vpack.c.b16 %v1218, %v1217
      %v1229 = vpack.c.b16 %v1220, %v1219
      %v1230 = vpack.c.b16 %v1222, %v1221
      %1239 = vmatpush.bf16.msra.mxu0 %v1230
      %1240 = vmatpush.bf16.msra.mxu0 %v1229
      %1241 = vmatpush.bf16.msra.mxu0 %v1228
      %1242 = vmatpush.bf16.msra.mxu0 %v1227
      %1243 = vmatpush.bf16.msra.mxu0 %v1226
      %1244 = vmatpush.bf16.msra.mxu0 %v1225
      %1245 = vmatpush.bf16.msra.mxu0 %v1224
      %1246 = vmatpush.bf16.msra.mxu0 %v1223
      %1247 = vmatmul.bf16.gmra.mxu0 %v1169
      %v1248 = vpop.f32.mrf.mxu0
      %v1249 = vadd.f32 0.0, %v1248
      %v1250 = vpop.f32.mrf.mxu0
      %v1251 = vadd.f32 0.0, %v1250
      %1252 = vmatmul.bf16.gmra.mxu0 %v1170
      %v1253 = vpop.f32.mrf.mxu0
      %v1254 = vadd.f32 0.0, %v1253
      %v1255 = vpop.f32.mrf.mxu0
      %v1256 = vadd.f32 0.0, %v1255
      %1257 = vmatmul.bf16.gmra.mxu0 %v1171
      %v1258 = vpop.f32.mrf.mxu0
      %v1259 = vadd.f32 0.0, %v1258
      %v1260 = vpop.f32.mrf.mxu0
      %v1261 = vadd.f32 0.0, %v1260
      %1262 = vmatmul.bf16.gmra.mxu0 %v1172
      %v1263 = vpop.f32.mrf.mxu0
      %v1264 = vadd.f32 0.0, %v1263
      %v1265 = vpop.f32.mrf.mxu0
      %v1266 = vadd.f32 0.0, %v1265
      %1267 = vmatmul.bf16.gmra.mxu0 %v1173
      %v1268 = vpop.f32.mrf.mxu0
      %v1269 = vadd.f32 0.0, %v1268
      %v1270 = vpop.f32.mrf.mxu0
      %v1271 = vadd.f32 0.0, %v1270
      %1272 = vdwg.mxu0
      %v1273 = vld [vmem:[#allocation2] sm:$0xff]
      %v1274 = vld [vmem:[#allocation2 + $0x8] sm:$0xff]
      %v1275 = vld [vmem:[#allocation2 + $0x10] sm:$0xff]
      %v1276 = vld [vmem:[#allocation2 + $0x18] sm:$0xff]
      %v1277 = vld [vmem:[#allocation2 + $0x20] sm:$0xff]
      %v1278 = vld [vmem:[#allocation2 + $0x28] sm:$0xff]
      %v1279 = vld [vmem:[#allocation2 + $0x30] sm:$0xff]
      %v1280 = vld [vmem:[#allocation2 + $0x38] sm:$0xff]
      %v1281 = vld [vmem:[#allocation2 + $0x40] sm:$0xff]
      %v1282 = vld [vmem:[#allocation2 + $0x48] sm:$0xff]
      %v1283 = vadd.f32 %v1273, %v1249
      %v1284 = vadd.f32 %v1274, %v1251
      %v1285 = vadd.f32 %v1275, %v1254
      %v1286 = vadd.f32 %v1276, %v1256
      %v1287 = vadd.f32 %v1277, %v1259
      %v1288 = vadd.f32 %v1278, %v1261
      %v1289 = vadd.f32 %v1279, %v1264
      %v1290 = vadd.f32 %v1280, %v1266
      %v1291 = vadd.f32 %v1281, %v1269
      %v1292 = vadd.f32 %v1282, %v1271
      %1293 = vst [vmem:[#allocation2] sm:$0xff] %v1283
      %1294 = vst [vmem:[#allocation2 + $0x8] sm:$0xff] %v1284
      %1295 = vst [vmem:[#allocation2 + $0x10] sm:$0xff] %v1285
      %1296 = vst [vmem:[#allocation2 + $0x18] sm:$0xff] %v1286
      %1297 = vst [vmem:[#allocation2 + $0x20] sm:$0xff] %v1287
      %1298 = vst [vmem:[#allocation2 + $0x28] sm:$0xff] %v1288
      %1299 = vst [vmem:[#allocation2 + $0x30] sm:$0xff] %v1289
      %1300 = vst [vmem:[#allocation2 + $0x38] sm:$0xff] %v1290
      %1301 = vst [vmem:[#allocation2 + $0x40] sm:$0xff] %v1291
      %1302 = vst [vmem:[#allocation2 + $0x48] sm:$0xff] %v1292
      %s1303 = sadd.s32 %s302, 21
      %s1304 = scalar_lea.vmem %s268, %s1303
      %v1305 = vld [vmem:[%s1304] sm:$0xff]
      %v1306 = vld [vmem:[%s1304 + $0x8] sm:$0xff]
      %v1307 = vld [vmem:[%s1304 + $0x10] sm:$0xff]
      %v1308 = vld [vmem:[%s1304 + $0x18] sm:$0xff]
      %v1309 = vld [vmem:[%s1304 + $0x20] sm:$0xff]
      %v1310 = vld [vmem:[%s1304 + $0x28] sm:$0xff]
      %v1311 = vld [vmem:[%s1304 + $0x30] sm:$0xff]
      %v1312 = vld [vmem:[%s1304 + $0x38] sm:$0xff]
      %v1313 = vld [vmem:[%s1304 + $0x40] sm:$0xff]
      %v1314 = vld [vmem:[%s1304 + $0x48] sm:$0xff]
      %v1315 = vpack.c.bf16 %v1306, %v1305
      %v1316 = vpack.c.bf16 %v1308, %v1307
      %v1317 = vpack.c.bf16 %v1310, %v1309
      %v1318 = vpack.c.bf16 %v1312, %v1311
      %v1319 = vpack.c.bf16 %v1314, %v1313
      %s1320 = scalar_lea.vmem %s272, 448
      %v1321 = vld [vmem:[%s1320] sm:$0xf]
      %v1322 = vld [vmem:[%s1320 + $0x4] sm:$0xf]
      %v1323 = vld [vmem:[%s1320 + $0x8] sm:$0xf]
      %v1324 = vld [vmem:[%s1320 + $0xc] sm:$0xf]
      %v1325 = vld [vmem:[%s1320 + $0x10] sm:$0xf]
      %v1326 = vld [vmem:[%s1320 + $0x14] sm:$0xf]
      %v1327 = vld [vmem:[%s1320 + $0x18] sm:$0xf]
      %v1328 = vld [vmem:[%s1320 + $0x1c] sm:$0xf]
      %v1329 = vld [vmem:[%s1320 + $0x20] sm:$0xf]
      %v1330 = vld [vmem:[%s1320 + $0x24] sm:$0xf]
      %v1331 = vld [vmem:[%s1320 + $0x28] sm:$0xf]
      %v1332 = vld [vmem:[%s1320 + $0x2c] sm:$0xf]
      %v1333 = vld [vmem:[%s1320 + $0x30] sm:$0xf]
      %v1334 = vld [vmem:[%s1320 + $0x34] sm:$0xf]
      %v1335 = vld [vmem:[%s1320 + $0x38] sm:$0xf]
      %v1336 = vld [vmem:[%s1320 + $0x3c] sm:$0xf]
      %v1353 = vunpack.c.l.b16 %v1321
      %v1354 = vunpack.c.l.b16 %v1322
      %v1355 = vunpack.c.l.b16 %v1323
      %v1356 = vunpack.c.l.b16 %v1324
      %v1357 = vunpack.c.l.b16 %v1325
      %v1358 = vunpack.c.l.b16 %v1326
      %v1359 = vunpack.c.l.b16 %v1327
      %v1360 = vunpack.c.l.b16 %v1328
      %v1361 = vunpack.c.l.b16 %v1329
      %v1362 = vunpack.c.l.b16 %v1330
      %v1363 = vunpack.c.l.b16 %v1331
      %v1364 = vunpack.c.l.b16 %v1332
      %v1365 = vunpack.c.l.b16 %v1333
      %v1366 = vunpack.c.l.b16 %v1334
      %v1367 = vunpack.c.l.b16 %v1335
      %v1368 = vunpack.c.l.b16 %v1336
      %v1369 = vpack.c.b16 %v1354, %v1353
      %v1370 = vpack.c.b16 %v1356, %v1355
      %v1371 = vpack.c.b16 %v1358, %v1357
      %v1372 = vpack.c.b16 %v1360, %v1359
      %v1373 = vpack.c.b16 %v1362, %v1361
      %v1374 = vpack.c.b16 %v1364, %v1363
      %v1375 = vpack.c.b16 %v1366, %v1365
      %v1376 = vpack.c.b16 %v1368, %v1367
      %1385 = vmatpush.bf16.msra.mxu0 %v1376
      %1386 = vmatpush.bf16.msra.mxu0 %v1375
      %1387 = vmatpush.bf16.msra.mxu0 %v1374
      %1388 = vmatpush.bf16.msra.mxu0 %v1373
      %1389 = vmatpush.bf16.msra.mxu0 %v1372
      %1390 = vmatpush.bf16.msra.mxu0 %v1371
      %1391 = vmatpush.bf16.msra.mxu0 %v1370
      %1392 = vmatpush.bf16.msra.mxu0 %v1369
      %1393 = vmatmul.bf16.gmra.mxu0 %v1315
      %v1394 = vpop.f32.mrf.mxu0
      %v1395 = vadd.f32 0.0, %v1394
      %v1396 = vpop.f32.mrf.mxu0
      %v1397 = vadd.f32 0.0, %v1396
      %1398 = vmatmul.bf16.gmra.mxu0 %v1316
      %v1399 = vpop.f32.mrf.mxu0
      %v1400 = vadd.f32 0.0, %v1399
      %v1401 = vpop.f32.mrf.mxu0
      %v1402 = vadd.f32 0.0, %v1401
      %1403 = vmatmul.bf16.gmra.mxu0 %v1317
      %v1404 = vpop.f32.mrf.mxu0
      %v1405 = vadd.f32 0.0, %v1404
      %v1406 = vpop.f32.mrf.mxu0
      %v1407 = vadd.f32 0.0, %v1406
      %1408 = vmatmul.bf16.gmra.mxu0 %v1318
      %v1409 = vpop.f32.mrf.mxu0
      %v1410 = vadd.f32 0.0, %v1409
      %v1411 = vpop.f32.mrf.mxu0
      %v1412 = vadd.f32 0.0, %v1411
      %1413 = vmatmul.bf16.gmra.mxu0 %v1319
      %v1414 = vpop.f32.mrf.mxu0
      %v1415 = vadd.f32 0.0, %v1414
      %v1416 = vpop.f32.mrf.mxu0
      %v1417 = vadd.f32 0.0, %v1416
      %1418 = vdwg.mxu0
      %v1419 = vld [vmem:[#allocation2] sm:$0xff]
      %v1420 = vld [vmem:[#allocation2 + $0x8] sm:$0xff]
      %v1421 = vld [vmem:[#allocation2 + $0x10] sm:$0xff]
      %v1422 = vld [vmem:[#allocation2 + $0x18] sm:$0xff]
      %v1423 = vld [vmem:[#allocation2 + $0x20] sm:$0xff]
      %v1424 = vld [vmem:[#allocation2 + $0x28] sm:$0xff]
      %v1425 = vld [vmem:[#allocation2 + $0x30] sm:$0xff]
      %v1426 = vld [vmem:[#allocation2 + $0x38] sm:$0xff]
      %v1427 = vld [vmem:[#allocation2 + $0x40] sm:$0xff]
      %v1428 = vld [vmem:[#allocation2 + $0x48] sm:$0xff]
      %v1429 = vadd.f32 %v1419, %v1395
      %v1430 = vadd.f32 %v1420, %v1397
      %v1431 = vadd.f32 %v1421, %v1400
      %v1432 = vadd.f32 %v1422, %v1402
      %v1433 = vadd.f32 %v1423, %v1405
      %v1434 = vadd.f32 %v1424, %v1407
      %v1435 = vadd.f32 %v1425, %v1410
      %v1436 = vadd.f32 %v1426, %v1412
      %v1437 = vadd.f32 %v1427, %v1415
      %v1438 = vadd.f32 %v1428, %v1417
      %1439 = vst [vmem:[#allocation2] sm:$0xff] %v1429
      %1440 = vst [vmem:[#allocation2 + $0x8] sm:$0xff] %v1430
      %1441 = vst [vmem:[#allocation2 + $0x10] sm:$0xff] %v1431
      %1442 = vst [vmem:[#allocation2 + $0x18] sm:$0xff] %v1432
      %1443 = vst [vmem:[#allocation2 + $0x20] sm:$0xff] %v1433
      %1444 = vst [vmem:[#allocation2 + $0x28] sm:$0xff] %v1434
      %1445 = vst [vmem:[#allocation2 + $0x30] sm:$0xff] %v1435
      %1446 = vst [vmem:[#allocation2 + $0x38] sm:$0xff] %v1436
      %1447 = vst [vmem:[#allocation2 + $0x40] sm:$0xff] %v1437
      %1448 = vst [vmem:[#allocation2 + $0x48] sm:$0xff] %v1438
      %s1449 = sadd.s32 %s302, 22
      %s1450 = scalar_lea.vmem %s268, %s1449
      %v1451 = vld [vmem:[%s1450] sm:$0xff]
      %v1452 = vld [vmem:[%s1450 + $0x8] sm:$0xff]
      %v1453 = vld [vmem:[%s1450 + $0x10] sm:$0xff]
      %v1454 = vld [vmem:[%s1450 + $0x18] sm:$0xff]
      %v1455 = vld [vmem:[%s1450 + $0x20] sm:$0xff]
      %v1456 = vld [vmem:[%s1450 + $0x28] sm:$0xff]
      %v1457 = vld [vmem:[%s1450 + $0x30] sm:$0xff]
      %v1458 = vld [vmem:[%s1450 + $0x38] sm:$0xff]
      %v1459 = vld [vmem:[%s1450 + $0x40] sm:$0xff]
      %v1460 = vld [vmem:[%s1450 + $0x48] sm:$0xff]
      %v1461 = vpack.c.bf16 %v1452, %v1451
      %v1462 = vpack.c.bf16 %v1454, %v1453
      %v1463 = vpack.c.bf16 %v1456, %v1455
      %v1464 = vpack.c.bf16 %v1458, %v1457
      %v1465 = vpack.c.bf16 %v1460, %v1459
      %s1466 = scalar_lea.vmem %s272, 512
      %v1467 = vld [vmem:[%s1466] sm:$0xf]
      %v1468 = vld [vmem:[%s1466 + $0x4] sm:$0xf]
      %v1469 = vld [vmem:[%s1466 + $0x8] sm:$0xf]
      %v1470 = vld [vmem:[%s1466 + $0xc] sm:$0xf]
      %v1471 = vld [vmem:[%s1466 + $0x10] sm:$0xf]
      %v1472 = vld [vmem:[%s1466 + $0x14] sm:$0xf]
      %v1473 = vld [vmem:[%s1466 + $0x18] sm:$0xf]
      %v1474 = vld [vmem:[%s1466 + $0x1c] sm:$0xf]
      %v1475 = vld [vmem:[%s1466 + $0x20] sm:$0xf]
      %v1476 = vld [vmem:[%s1466 + $0x24] sm:$0xf]
      %v1477 = vld [vmem:[%s1466 + $0x28] sm:$0xf]
      %v1478 = vld [vmem:[%s1466 + $0x2c] sm:$0xf]
      %v1479 = vld [vmem:[%s1466 + $0x30] sm:$0xf]
      %v1480 = vld [vmem:[%s1466 + $0x34] sm:$0xf]
      %v1481 = vld [vmem:[%s1466 + $0x38] sm:$0xf]
      %v1482 = vld [vmem:[%s1466 + $0x3c] sm:$0xf]
      %v1499 = vunpack.c.l.b16 %v1467
      %v1500 = vunpack.c.l.b16 %v1468
      %v1501 = vunpack.c.l.b16 %v1469
      %v1502 = vunpack.c.l.b16 %v1470
      %v1503 = vunpack.c.l.b16 %v1471
      %v1504 = vunpack.c.l.b16 %v1472
      %v1505 = vunpack.c.l.b16 %v1473
      %v1506 = vunpack.c.l.b16 %v1474
      %v1507 = vunpack.c.l.b16 %v1475
      %v1508 = vunpack.c.l.b16 %v1476
      %v1509 = vunpack.c.l.b16 %v1477
      %v1510 = vunpack.c.l.b16 %v1478
      %v1511 = vunpack.c.l.b16 %v1479
      %v1512 = vunpack.c.l.b16 %v1480
      %v1513 = vunpack.c.l.b16 %v1481
      %v1514 = vunpack.c.l.b16 %v1482
      %v1515 = vpack.c.b16 %v1500, %v1499
      %v1516 = vpack.c.b16 %v1502, %v1501
      %v1517 = vpack.c.b16 %v1504, %v1503
      %v1518 = vpack.c.b16 %v1506, %v1505
      %v1519 = vpack.c.b16 %v1508, %v1507
      %v1520 = vpack.c.b16 %v1510, %v1509
      %v1521 = vpack.c.b16 %v1512, %v1511
      %v1522 = vpack.c.b16 %v1514, %v1513
      %1531 = vmatpush.bf16.msra.mxu0 %v1522
      %1532 = vmatpush.bf16.msra.mxu0 %v1521
      %1533 = vmatpush.bf16.msra.mxu0 %v1520
      %1534 = vmatpush.bf16.msra.mxu0 %v1519
      %1535 = vmatpush.bf16.msra.mxu0 %v1518
      %1536 = vmatpush.bf16.msra.mxu0 %v1517
      %1537 = vmatpush.bf16.msra.mxu0 %v1516
      %1538 = vmatpush.bf16.msra.mxu0 %v1515
      %1539 = vmatmul.bf16.gmra.mxu0 %v1461
      %v1540 = vpop.f32.mrf.mxu0
      %v1541 = vadd.f32 0.0, %v1540
      %v1542 = vpop.f32.mrf.mxu0
      %v1543 = vadd.f32 0.0, %v1542
      %1544 = vmatmul.bf16.gmra.mxu0 %v1462
      %v1545 = vpop.f32.mrf.mxu0
      %v1546 = vadd.f32 0.0, %v1545
      %v1547 = vpop.f32.mrf.mxu0
      %v1548 = vadd.f32 0.0, %v1547
      %1549 = vmatmul.bf16.gmra.mxu0 %v1463
      %v1550 = vpop.f32.mrf.mxu0
      %v1551 = vadd.f32 0.0, %v1550
      %v1552 = vpop.f32.mrf.mxu0
      %v1553 = vadd.f32 0.0, %v1552
      %1554 = vmatmul.bf16.gmra.mxu0 %v1464
      %v1555 = vpop.f32.mrf.mxu0
      %v1556 = vadd.f32 0.0, %v1555
      %v1557 = vpop.f32.mrf.mxu0
      %v1558 = vadd.f32 0.0, %v1557
      %1559 = vmatmul.bf16.gmra.mxu0 %v1465
      %v1560 = vpop.f32.mrf.mxu0
      %v1561 = vadd.f32 0.0, %v1560
      %v1562 = vpop.f32.mrf.mxu0
      %v1563 = vadd.f32 0.0, %v1562
      %1564 = vdwg.mxu0
      %v1565 = vld [vmem:[#allocation2] sm:$0xff]
      %v1566 = vld [vmem:[#allocation2 + $0x8] sm:$0xff]
      %v1567 = vld [vmem:[#allocation2 + $0x10] sm:$0xff]
      %v1568 = vld [vmem:[#allocation2 + $0x18] sm:$0xff]
      %v1569 = vld [vmem:[#allocation2 + $0x20] sm:$0xff]
      %v1570 = vld [vmem:[#allocation2 + $0x28] sm:$0xff]
      %v1571 = vld [vmem:[#allocation2 + $0x30] sm:$0xff]
      %v1572 = vld [vmem:[#allocation2 + $0x38] sm:$0xff]
      %v1573 = vld [vmem:[#allocation2 + $0x40] sm:$0xff]
      %v1574 = vld [vmem:[#allocation2 + $0x48] sm:$0xff]
      %v1575 = vadd.f32 %v1565, %v1541
      %v1576 = vadd.f32 %v1566, %v1543
      %v1577 = vadd.f32 %v1567, %v1546
      %v1578 = vadd.f32 %v1568, %v1548
      %v1579 = vadd.f32 %v1569, %v1551
      %v1580 = vadd.f32 %v1570, %v1553
      %v1581 = vadd.f32 %v1571, %v1556
      %v1582 = vadd.f32 %v1572, %v1558
      %v1583 = vadd.f32 %v1573, %v1561
      %v1584 = vadd.f32 %v1574, %v1563
      %1585 = vst [vmem:[#allocation2] sm:$0xff] %v1575
      %1586 = vst [vmem:[#allocation2 + $0x8] sm:$0xff] %v1576
      %1587 = vst [vmem:[#allocation2 + $0x10] sm:$0xff] %v1577
      %1588 = vst [vmem:[#allocation2 + $0x18] sm:$0xff] %v1578
      %1589 = vst [vmem:[#allocation2 + $0x20] sm:$0xff] %v1579
      %1590 = vst [vmem:[#allocation2 + $0x28] sm:$0xff] %v1580
      %1591 = vst [vmem:[#allocation2 + $0x30] sm:$0xff] %v1581
      %1592 = vst [vmem:[#allocation2 + $0x38] sm:$0xff] %v1582
      %1593 = vst [vmem:[#allocation2 + $0x40] sm:$0xff] %v1583
      %1594 = vst [vmem:[#allocation2 + $0x48] sm:$0xff] %v1584
      %v1595 = vld [vmem:[%s277] sm:$0xff]
      %v1596 = vld [vmem:[%s277 + $0x8] sm:$0xff]
      %v1597 = vld [vmem:[%s277 + $0x10] sm:$0xff]
      %v1598 = vld [vmem:[%s277 + $0x18] sm:$0xff]
      %v1599 = vld [vmem:[%s277 + $0x20] sm:$0xff]
      %v1600 = vld [vmem:[%s277 + $0x28] sm:$0xff]
      %v1601 = vld [vmem:[%s277 + $0x30] sm:$0xff]
      %v1602 = vld [vmem:[%s277 + $0x38] sm:$0xff]
      %v1603 = vld [vmem:[%s277 + $0x40] sm:$0xff]
      %v1604 = vld [vmem:[%s277 + $0x48] sm:$0xff]
      %v1605 = vld [vmem:[#allocation2] sm:$0xff]
      %v1606 = vld [vmem:[#allocation2 + $0x8] sm:$0xff]
      %v1607 = vld [vmem:[#allocation2 + $0x10] sm:$0xff]
      %v1608 = vld [vmem:[#allocation2 + $0x18] sm:$0xff]
      %v1609 = vld [vmem:[#allocation2 + $0x20] sm:$0xff]
      %v1610 = vld [vmem:[#allocation2 + $0x28] sm:$0xff]
      %v1611 = vld [vmem:[#allocation2 + $0x30] sm:$0xff]
      %v1612 = vld [vmem:[#allocation2 + $0x38] sm:$0xff]
      %v1613 = vld [vmem:[#allocation2 + $0x40] sm:$0xff]
      %v1614 = vld [vmem:[#allocation2 + $0x48] sm:$0xff]
      %1616 = vset.pattern.permute.xlu0 0
      %1617 = vperm.xlu0 %1616, %v1595
      %v1618 = vpop.permute.xlu0 %1617
      %1621 = vset.pattern.permute.xlu0 0
      %1622 = vperm.xlu0 %1621, %v1596
      %v1623 = vpop.permute.xlu0 %1622
      %1626 = vset.pattern.permute.xlu0 0
      %1627 = vperm.xlu0 %1626, %v1597
      %v1628 = vpop.permute.xlu0 %1627
      %1631 = vset.pattern.permute.xlu0 0
      %1632 = vperm.xlu0 %1631, %v1598
      %v1633 = vpop.permute.xlu0 %1632
      %1636 = vset.pattern.permute.xlu0 0
      %1637 = vperm.xlu0 %1636, %v1599
      %v1638 = vpop.permute.xlu0 %1637
      %1641 = vset.pattern.permute.xlu0 0
      %1642 = vperm.xlu0 %1641, %v1600
      %v1643 = vpop.permute.xlu0 %1642
      %1646 = vset.pattern.permute.xlu0 0
      %1647 = vperm.xlu0 %1646, %v1601
      %v1648 = vpop.permute.xlu0 %1647
      %1651 = vset.pattern.permute.xlu0 0
      %1652 = vperm.xlu0 %1651, %v1602
      %v1653 = vpop.permute.xlu0 %1652
      %1656 = vset.pattern.permute.xlu0 0
      %1657 = vperm.xlu0 %1656, %v1603
      %v1658 = vpop.permute.xlu0 %1657
      %1661 = vset.pattern.permute.xlu0 0
      %1662 = vperm.xlu0 %1661, %v1604
      %v1663 = vpop.permute.xlu0 %1662
      %v1665 = vmul.f32 %v1605, %v1618
      %v1666 = vmul.f32 %v1606, %v1623
      %v1667 = vmul.f32 %v1607, %v1628
      %v1668 = vmul.f32 %v1608, %v1633
      %v1669 = vmul.f32 %v1609, %v1638
      %v1670 = vmul.f32 %v1610, %v1643
      %v1671 = vmul.f32 %v1611, %v1648
      %v1672 = vmul.f32 %v1612, %v1653
      %v1673 = vmul.f32 %v1613, %v1658
      %v1674 = vmul.f32 %v1614, %v1663
      %v1675 = vpack.c.bf16 %v1665, %v1665
      %v1676 = vpack.c.bf16 %v1666, %v1666
      %v1677 = vpack.c.bf16 %v1667, %v1667
      %v1678 = vpack.c.bf16 %v1668, %v1668
      %v1679 = vpack.c.bf16 %v1669, %v1669
      %v1680 = vpack.c.bf16 %v1670, %v1670
      %v1681 = vpack.c.bf16 %v1671, %v1671
      %v1682 = vpack.c.bf16 %v1672, %v1672
      %v1683 = vpack.c.bf16 %v1673, %v1673
      %v1684 = vpack.c.bf16 %v1674, %v1674
      %1685 = vst [vmem:[%s290] sm:$0xf] %v1675
      %1686 = vst [vmem:[%s290 + $0x4] sm:$0xf] %v1676
      %1687 = vst [vmem:[%s290 + $0x8] sm:$0xf] %v1677
      %1688 = vst [vmem:[%s290 + $0xc] sm:$0xf] %v1678
      %1689 = vst [vmem:[%s290 + $0x10] sm:$0xf] %v1679
      %1690 = vst [vmem:[%s290 + $0x14] sm:$0xf] %v1680
      %1691 = vst [vmem:[%s290 + $0x18] sm:$0xf] %v1681
      %1692 = vst [vmem:[%s290 + $0x1c] sm:$0xf] %v1682
      %1693 = vst [vmem:[%s290 + $0x20] sm:$0xf] %v1683
      %1694 = vst [vmem:[%s290 + $0x24] sm:$0xf] %v1684
      %v1695 = vadd.f32 %v1665, %v1666
      %v1696 = vadd.f32 %v1695, %v1667
      %v1697 = vadd.f32 %v1696, %v1668
      %v1698 = vadd.f32 %v1697, %v1669
      %v1699 = vadd.f32 %v1698, %v1670
      %v1700 = vadd.f32 %v1699, %v1671
      %v1701 = vadd.f32 %v1700, %v1672
      %v1702 = vadd.f32 %v1701, %v1673
      %v1703 = vadd.f32 %v1702, %v1674
      %v1704 = vrot.slane %v1703, 4
      %v1705 = vadd.f32 %v1703, %v1704
      %v1706 = vrot.slane %v1705, 2
      %v1707 = vadd.f32 %v1705, %v1706
      %v1708 = vrot.slane %v1707, 1
      %v1709 = vadd.f32 %v1707, %v1708
      %1710 = vst [vmem:[%s301] sm:$0x1] %v1709
      %v1711 = vmul.f32 %v1665, %v1665
      %v1712 = vmul.f32 %v1666, %v1666
      %v1713 = vmul.f32 %v1667, %v1667
      %v1714 = vmul.f32 %v1668, %v1668
      %v1715 = vmul.f32 %v1669, %v1669
      %v1716 = vmul.f32 %v1670, %v1670
      %v1717 = vmul.f32 %v1671, %v1671
      %v1718 = vmul.f32 %v1672, %v1672
      %v1719 = vmul.f32 %v1673, %v1673
      %v1720 = vmul.f32 %v1674, %v1674
      %v1721 = vadd.f32 %v1711, %v1712
      %v1722 = vadd.f32 %v1721, %v1713
      %v1723 = vadd.f32 %v1722, %v1714
      %v1724 = vadd.f32 %v1723, %v1715
      %v1725 = vadd.f32 %v1724, %v1716
      %v1726 = vadd.f32 %v1725, %v1717
      %v1727 = vadd.f32 %v1726, %v1718
      %v1728 = vadd.f32 %v1727, %v1719
      %v1729 = vadd.f32 %v1728, %v1720
      %v1730 = vrot.slane %v1729, 4
      %v1731 = vadd.f32 %v1729, %v1730
      %v1732 = vrot.slane %v1731, 2
      %v1733 = vadd.f32 %v1731, %v1732
      %v1734 = vrot.slane %v1733, 1
      %v1735 = vadd.f32 %v1733, %v1734
      %1736 = vst [vmem:[%s301 + $0x1] sm:$0x1] %v1735
      %s1737 = smul.u32 10, %s22
      %p1738 = scmp.lt.s32.totalorder %s21, 1
      %s1739 = scalar_select %p1738, %s21, 1
      %p1740 = scmp.lt.s32.totalorder %s1737, 9
      %s1741 = scalar_select %p1740, %s1737, 9
      %p1742 = scmp.lt.s32.totalorder %s23, 0
      %s1743 = scalar_select %p1742, %s23, 0
      %s1744 = sadd.s32 %s1743, %s1741
      %s1745 = smul.addr %s1739, 10
      %s1746 = sadd.s32 %s1744, %s1745
      %s1747 = smul.addr %s1746, 4
      %s1748 = scalar_lea.vmem %s3, %s1747
      %p1749 = scmp.lt.s32.totalorder %s21, 1
      %s1750 = scalar_select %p1749, %s21, 1
      %p1751 = scmp.lt.s32.totalorder %s22, 0
      %s1752 = scalar_select %p1751, %s22, 0
      %p1753 = scmp.lt.s32.totalorder %s23, 0
      %s1754 = scalar_select %p1753, %s23, 0
      %s1755 = sadd.s32 %s1754, %s1752
      %s1756 = sadd.s32 %s1755, %s1750
      %s1757 = smul.addr %s1756, 2
      %s1758 = scalar_lea.vmem %s4, %s1757
      // Predicated region
      $region33: #{basic_block_pallas.6} parent=31 // pred_check
        %p1759 = pneg %p135
      $region34: #{basic_block_pallas.6} parent=31 // pred_check_branch
        %1761 = sbr.rel (%p1759) target = $region36
      $region35: #{basic_block_pallas.6} parent=31 // pred_region
        %s1762 = smul.u32 10, %s22
      $region36: #{basic_block_pallas.6} parent=31 // pred_fallthru
        _
      // Predicated region
      $region37: #{basic_block_pallas.6} parent=31 // pred_check
        %p1763 = pneg %p165
      $region38: #{basic_block_pallas.6} parent=31 // pred_check_branch
        %1765 = sbr.rel (%p1763) target = $region40
      $region39: #{basic_block_pallas.6} parent=31 // pred_region
        _
      $region40: #{basic_block_pallas.6} parent=31 // pred_fallthru
        _
    $region32: #{basic_block_pallas.6} parent=5 // pred_fallthru
      _
    %p1766 = scmp.le.s32.totalorder 2, %s11
    // Predicated region
    $region41: #{basic_block_pallas.6} parent=5 // pred_check
      %p1767 = pneg %p1766
    $region42: #{basic_block_pallas.6} parent=5 // pred_check_branch
      %1769 = sbr.rel (%p1767) target = $region44
    $region43: #{basic_block_pallas.6} parent=5 // pred_region
      %s1770 = ssub.s32 %s11, 2
      // Predicated region
      $region45: #{basic_block_pallas.6} parent=43 // pred_check
        %p1771 = pneg %p141
      $region46: #{basic_block_pallas.6} parent=43 // pred_check_branch
        %1773 = sbr.rel (%p1771) target = $region48
      $region47: #{basic_block_pallas.6} parent=43 // pred_region
        %s1774 = smul.u32 10, %s25
        %p1775 = scmp.lt.s32.totalorder %s24, 1
        %s1776 = scalar_select %p1775, %s24, 1
        %p1777 = scmp.lt.s32.totalorder %s1774, 9
        %s1778 = scalar_select %p1777, %s1774, 9
        %p1779 = scmp.lt.s32.totalorder %s26, 0
        %s1780 = scalar_select %p1779, %s26, 0
        %s1781 = sadd.s32 %s1780, %s1778
        %s1782 = smul.addr %s1776, 10
        %s1783 = sadd.s32 %s1781, %s1782
        %s1784 = smul.addr %s1783, 4
        %s1785 = scalar_lea.vmem %s3, %s1784
      $region48: #{basic_block_pallas.6} parent=43 // pred_fallthru
        _
      // Predicated region
      $region49: #{basic_block_pallas.6} parent=43 // pred_check
        %p1786 = pneg %p171
      $region50: #{basic_block_pallas.6} parent=43 // pred_check_branch
        %1788 = sbr.rel (%p1786) target = $region52
      $region51: #{basic_block_pallas.6} parent=43 // pred_region
        %p1789 = scmp.lt.s32.totalorder %s24, 1
        %s1790 = scalar_select %p1789, %s24, 1
        %p1791 = scmp.lt.s32.totalorder %s25, 0
        %s1792 = scalar_select %p1791, %s25, 0
        %p1793 = scmp.lt.s32.totalorder %s26, 0
        %s1794 = scalar_select %p1793, %s26, 0
        %s1795 = sadd.s32 %s1794, %s1792
        %s1796 = sadd.s32 %s1795, %s1790
        %s1797 = smul.addr %s1796, 2
        %s1798 = scalar_lea.vmem %s4, %s1797
      $region52: #{basic_block_pallas.6} parent=43 // pred_fallthru
        _
    $region44: #{basic_block_pallas.6} parent=5 // pred_fallthru
      _
  $region6: #{basic_block_pallas.6} parent=0 // loop_footer
    %s15 = sadd.s32 1, %s11
  $region7: #{basic_block_pallas.6} parent=0 // loop_footer_branch
    %10 = sbr.rel target = $region3
  $region8: #{basic_block_pallas.6} parent=0 // loop_exit
    _

</llo_original>
